<compile_context>
chip_gen: v6e
topology: v6e:2x2x1
jax: 0.10.0
libtpu: 0.0.40
codegen_flags: <defaults>
</compile_context>

<pallas_src>
import functools
import math

import jax
import jax.numpy as jnp
from jax import lax
from jax.experimental import pallas as pl
from jax.experimental.pallas import tpu as pltpu


# ----------------------------------------------------------------------------
# The single fused kernel
# ----------------------------------------------------------------------------
def _fused_kernel(*refs, T, B, H, heads):
    (x2d_ref, xmean_ref,
     wih1_ref, whh1_ref, bg1_ref,
     wih2_ref, whh2_ref, bg2_ref,
     resw_ref, resb_ref,
     wqkv_ref, bqkv_ref, wo_ref, bo_ref,
     lng_ref, lnb_ref, fcw_ref, fcb_ref,
     a_ref, gx_ref,
     gresw_ref, gresb_ref,
     gw1_ref, gb1_ref, gw2_ref, gb2_ref, gw3_ref, gb3_ref, gw4_ref, gb4_ref,
     bn4s_ref, bn4t_ref, glng_ref, glnb_ref, gfcw_ref, gfcb_ref,
     fitw_ref, fibw_ref, fib_ref,
     fwv_ref, fbv_ref, fwo_ref, fbo_ref,
     flng_ref, flnb_ref, finw_ref, finb_ref,
     out_ref,
     xg_sc, hf_sc, hb_sc) = refs

    f32 = jnp.float32
    E = 2 * H

    def layernorm(x, g, b, eps=1e-5):
        mu = jnp.mean(x, axis=-1, keepdims=True)
        var = jnp.mean(jnp.square(x - mu), axis=-1, keepdims=True)
        return (x - mu) * lax.rsqrt(var + eps) * g + b

    # ------------------- bidirectional LSTM (both layers in VMEM) -----------
    def bilstm_layer(x2d, wih_r, whh_r, bg_r):
        # Hoisted input projection (+ bias) for all timesteps, both directions.
        xg = jnp.dot(x2d, wih_r[...], preferred_element_type=f32) + bg_r[...]
        xg_sc[...] = xg.reshape(T, B, 8 * H)
        whh = whh_r[...]                       # (2H, 8H) block-diagonal packed

        def cell(g4, c_prev):
            # gate column order inside each 4H block: [i | f | o | g]
            s = jax.nn.sigmoid(g4[:, 0:3 * H])
            gg = jnp.tanh(g4[:, 3 * H:4 * H])
            c = s[:, H:2 * H] * c_prev + s[:, 0:H] * gg
            h = s[:, 2 * H:3 * H] * jnp.tanh(c)
            return h, c

        def step(t, carry):
            hcat, c_f, c_b = carry             # states live in vregs (carries)
            rt = T - 1 - t
            hh = jnp.dot(hcat, whh, preferred_element_type=f32)  # one packed matmul
            g_f = hh[:, 0:4 * H] + xg_sc[t][:, 0:4 * H]
            g_b = hh[:, 4 * H:8 * H] + xg_sc[rt][:, 4 * H:8 * H]
            h_f, c_f = cell(g_f, c_f)
            h_b, c_b = cell(g_b, c_b)
            hf_sc[t] = h_f                     # forward output at time t
            hb_sc[rt] = h_b                    # backward output at time rt
            return jnp.concatenate([h_f, h_b], axis=-1), c_f, c_b

        init = (jnp.zeros((B, 2 * H), f32),
                jnp.zeros((B, H), f32),
                jnp.zeros((B, H), f32))
        lax.fori_loop(0, T, step, init, unroll=True)
        return jnp.concatenate([hf_sc[...], hb_sc[...]], axis=-1)  # (T, B, 2H)

    h1 = bilstm_layer(x2d_ref[...], wih1_ref, whh1_ref, bg1_ref)
    h2 = bilstm_layer(h1.reshape(T * B, E), wih2_ref, whh2_ref, bg2_ref)

    # ------------------- MHA + residual + LayerNorm + fc --------------------
    # batch-major (B*T, E) slab for a single QKV matmul (scale folded into Wq)
    seq2 = jnp.concatenate([h2[:, b, :] for b in range(B)], axis=0)
    qkv = (jnp.dot(seq2, wqkv_ref[...], preferred_element_type=f32)
           + bqkv_ref[...]).reshape(B, T, 3 * E)
    wo = wo_ref[...]
    dh = E // heads
    attn_mean = jnp.zeros((B, E), f32)
    for hd in range(heads):                    # 4 static iterations
        lo = hd * dh
        qh = qkv[:, :, lo:lo + dh]
        kh = qkv[:, :, E + lo:E + lo + dh]
        vh = qkv[:, :, 2 * E + lo:2 * E + lo + dh]
        s = jnp.einsum('bqd,bkd->bqk', qh, kh, preferred_element_type=f32)
        s = s - jnp.max(s, axis=-1, keepdims=True)
        p = jnp.exp(s)
        p = p * pl.reciprocal(jnp.sum(p, axis=-1, keepdims=True), approx=True)
        ctx = jnp.einsum('bqk,bkd->bqd', p, vh, preferred_element_type=f32)
        # time-mean commutes with the (linear) output projection; accumulate
        # per-head partial sums instead of concatenating head contexts.
        attn_mean = attn_mean + jnp.dot(jnp.mean(ctx, axis=1), wo[lo:lo + dh, :],
                                        preferred_element_type=f32)
    attn_mean = attn_mean + bo_ref[...]
    id_mean = (jnp.dot(xmean_ref[...], resw_ref[...], preferred_element_type=f32)
               + resb_ref[...])                # mean over time commutes w/ linear
    y = layernorm(attn_mean + id_mean, lng_ref[...], lnb_ref[...])
    lstm_out = jnp.dot(y, fcw_ref[...], preferred_element_type=f32) + fcb_ref[...]

    # ------------------- GCN branch (bn1-3 folded into conv weights) --------
    a = a_ref[...]                             # A_hat loaded once, reused 4x
    gx = gx_ref[...]
    g_id = jnp.dot(gx, gresw_ref[...], preferred_element_type=f32) + gresb_ref[...]

    def gconv(hh, w_r, b_r):
        hw = jnp.dot(hh, w_r[...], preferred_element_type=f32)
        return jnp.dot(a, hw, preferred_element_type=f32) + b_r[...]

    def lrelu(z):
        return jnp.where(z >= 0, z, 0.01 * z)

    g = lrelu(gconv(gx, gw1_ref, gb1_ref))
    g = lrelu(gconv(g, gw2_ref, gb2_ref))
    g = lrelu(gconv(g, gw3_ref, gb3_ref))
    g = gconv(g, gw4_ref, gb4_ref) + g_id
    g = g * bn4s_ref[...] + bn4t_ref[...]      # eval-mode bn4 affine
    g = layernorm(g, glng_ref[...], glnb_ref[...])
    g = jnp.dot(g, gfcw_ref[...], preferred_element_type=f32) + gfcb_ref[...]
    gcn_row = jnp.mean(g, axis=0, keepdims=True)      # (1, C) node mean

    # ------------------- fusion head -----------------------------------------
    # concat([lstm_out, repeat(gcn_row)]) @ fi_w == lstm_out@fi_top + gcn_row@fi_bot
    gcn_term = jnp.dot(gcn_row, fibw_ref[...], preferred_element_type=f32) + fib_ref[...]
    comb = jnp.dot(lstm_out, fitw_ref[...], preferred_element_type=f32) + gcn_term
    # length-1 self-attention: softmax over a single key == 1, so it reduces
    # exactly to (x @ Wv + bv) @ Wo + bo.
    v = jnp.dot(comb, fwv_ref[...], preferred_element_type=f32) + fbv_ref[...]
    attn = jnp.dot(v, fwo_ref[...], preferred_element_type=f32) + fbo_ref[...]
    y = layernorm(attn, flng_ref[...], flnb_ref[...])
    out_ref[...] = (jnp.dot(y, finw_ref[...], preferred_element_type=f32)
                    + finb_ref[...]).astype(out_ref.dtype)


# ----------------------------------------------------------------------------
# Wrapper: one pallas_call for the whole model
# ----------------------------------------------------------------------------
def lstm_gcn_forward(lstm_x, gcn_x, a_hat, params):
    B, T, Din = lstm_x.shape
    H = params["l1"]["whh"].shape[0] // 2

    # Tiny input prep in the wrapper (time-major 2D slab + residual time-mean).
    x_tm2d = jnp.transpose(lstm_x, (1, 0, 2)).reshape(T * B, Din)
    x_mean = jnp.mean(lstm_x, axis=1)

    args = (
        x_tm2d, x_mean,
        params["l1"]["wih"], params["l1"]["whh"], params["l1"]["b"],
        params["l2"]["wih"], params["l2"]["whh"], params["l2"]["b"],
        params["res_w"], params["res_b"],
        params["wqkv"], params["bqkv"], params["wo"], params["bo"],
        params["ln_g"], params["ln_b"], params["fc_w"], params["fc_b"],
        a_hat, gcn_x,
        params["g_res_w"], params["g_res_b"],
        params["gw1"], params["gb1"], params["gw2"], params["gb2"],
        params["gw3"], params["gb3"], params["gw4"], params["gb4"],
        params["bn4_s"], params["bn4_t"], params["g_ln_g"], params["g_ln_b"],
        params["gfc_w"], params["gfc_b"],
        params["fi_top"], params["fi_bot"], params["fi_b"],
        params["f_wv"], params["f_bv"], params["f_wo"], params["f_bo"],
        params["f_ln_g"], params["f_ln_b"], params["final_w"], params["final_b"],
    )
    return pl.pallas_call(
        functools.partial(_fused_kernel, T=T, B=B, H=H, heads=4),
        out_shape=jax.ShapeDtypeStruct((B, 1), jnp.float32),
        scratch_shapes=[
            pltpu.VMEM((T, B, 8 * H), jnp.float32),   # hoisted input projection
            pltpu.VMEM((T, B, H), jnp.float32),       # forward hidden sequence
            pltpu.VMEM((T, B, H), jnp.float32),       # backward hidden sequence
        ],
    )(*args)


# ----------------------------------------------------------------------------
# Parameter init (weights self-initialized; packing done once, offline)
# ----------------------------------------------------------------------------
class KeyGen:
    def __init__(self, key):
        self.key = key

    def __call__(self):
        self.key, sub = jax.random.split(self.key)
        return sub


def _w(kg, shape, scale=0.1):
    return scale * jax.random.normal(kg(), shape, dtype=jnp.float32)


def _reorder_ifog(w):
    # PyTorch gate column order (i, f, g, o) -> packed order (i, f, o, g)
    H = w.shape[-1] // 4
    return jnp.concatenate(
        [w[..., 0:H], w[..., H:2 * H], w[..., 3 * H:4 * H], w[..., 2 * H:3 * H]],
        axis=-1)


def _pack_bilstm_layer(kg, din, H):
    # Per-direction weights generated directly in x@W orientation.
    # NOTE: the single bias per direction represents b_ih + b_hh (sum them when
    # loading real PyTorch weights).
    wih_f = _w(kg, (din, 4 * H)); whh_f = _w(kg, (H, 4 * H)); b_f = _w(kg, (4 * H,))
    wih_b = _w(kg, (din, 4 * H)); whh_b = _w(kg, (H, 4 * H)); b_b = _w(kg, (4 * H,))
    wih = jnp.concatenate([_reorder_ifog(wih_f), _reorder_ifog(wih_b)], axis=1)
    whh = jnp.zeros((2 * H, 8 * H), jnp.float32)
    whh = whh.at[0:H, 0:4 * H].set(_reorder_ifog(whh_f))
    whh = whh.at[H:2 * H, 4 * H:8 * H].set(_reorder_ifog(whh_b))
    b = jnp.concatenate([_reorder_ifog(b_f), _reorder_ifog(b_b)]).reshape(1, 8 * H)
    return dict(wih=wih, whh=whh, b=b)


def _mha_pack(kg, E, heads):
    dh = E // heads
    scale = 1.0 / math.sqrt(dh)
    wq = _w(kg, (E, E)); bq = _w(kg, (E,))
    wk = _w(kg, (E, E)); bk = _w(kg, (E,))
    wv = _w(kg, (E, E)); bv = _w(kg, (E,))
    wo = _w(kg, (E, E)); bo = _w(kg, (E,))
    return dict(
        wqkv=jnp.concatenate([wq * scale, wk, wv], axis=1),      # 1/sqrt(dh) folded
        bqkv=jnp.concatenate([bq * scale, bk, bv]).reshape(1, 3 * E),
        wo=wo, bo=bo.reshape(1, E),
        wv=wv, bv=bv.reshape(1, E),
    )


def _bn_eval(dim, eps=1e-5):
    # eval-mode BatchNorm1d with fresh running stats (mean=0, var=1)
    gamma = jnp.ones((dim,), jnp.float32)
    beta = jnp.zeros((dim,), jnp.float32)
    mean = jnp.zeros((dim,), jnp.float32)
    var = jnp.ones((dim,), jnp.float32)
    s = gamma / jnp.sqrt(var + eps)
    t = beta - mean * s
    return s, t


def init_params(kg, lstm_in, H, gcn_in, gcn_hid, gcn_out, C):
    # NOTE: the fused kernel is laid out for exactly 2 bidirectional LSTM layers.
    E = 2 * H
    heads = 4
    p = {}

    # ---- LSTMModel ----
    p["l1"] = _pack_bilstm_layer(kg, lstm_in, H)
    p["l2"] = _pack_bilstm_layer(kg, 2 * H, H)
    p["res_w"] = _w(kg, (lstm_in, E))
    p["res_b"] = _w(kg, (E,)).reshape(1, E)
    mha = _mha_pack(kg, E, heads)
    p["wqkv"], p["bqkv"], p["wo"], p["bo"] = mha["wqkv"], mha["bqkv"], mha["wo"], mha["bo"]
    p["ln_g"] = jnp.ones((1, E), jnp.float32)
    p["ln_b"] = jnp.zeros((1, E), jnp.float32)
    p["fc_w"] = _w(kg, (E, C))
    p["fc_b"] = _w(kg, (C,)).reshape(1, C)

    # ---- GCNModel (bn1-3 folded into conv weights) ----
    def conv_bn(din, dout):
        w = _w(kg, (din, dout)); b = _w(kg, (dout,))
        s, t = _bn_eval(dout)
        return w * s[None, :], (b * s + t).reshape(1, dout)

    p["gw1"], p["gb1"] = conv_bn(gcn_in, gcn_hid)
    p["gw2"], p["gb2"] = conv_bn(gcn_hid, gcn_hid)
    p["gw3"], p["gb3"] = conv_bn(gcn_hid, gcn_hid)
    p["gw4"] = _w(kg, (gcn_hid, gcn_out))
    p["gb4"] = _w(kg, (gcn_out,)).reshape(1, gcn_out)
    s4, t4 = _bn_eval(gcn_out)                 # bn4 hits (conv4 + identity): keep explicit
    p["bn4_s"] = s4.reshape(1, gcn_out)
    p["bn4_t"] = t4.reshape(1, gcn_out)
    p["g_res_w"] = _w(kg, (gcn_in, gcn_out))
    p["g_res_b"] = _w(kg, (gcn_out,)).reshape(1, gcn_out)
    p["g_ln_g"] = jnp.ones((1, gcn_out), jnp.float32)
    p["g_ln_b"] = jnp.zeros((1, gcn_out), jnp.float32)
    p["gfc_w"] = _w(kg, (gcn_out, C))
    p["gfc_b"] = _w(kg, (C,)).reshape(1, C)

    # ---- fusion head ----
    fi_w = _w(kg, (2 * C, 2 * C))
    p["fi_top"] = fi_w[0:C, :]                 # multiplies lstm_out
    p["fi_bot"] = fi_w[C:2 * C, :]             # multiplies the repeated gcn row
    p["fi_b"] = _w(kg, (2 * C,)).reshape(1, 2 * C)
    fmha = _mha_pack(kg, 2 * C, heads)         # only Wv/Wo matter for seq length 1
    p["f_wv"], p["f_bv"], p["f_wo"], p["f_bo"] = fmha["wv"], fmha["bv"], fmha["wo"], fmha["bo"]
    p["f_ln_g"] = jnp.ones((1, 2 * C), jnp.float32)
    p["f_ln_b"] = jnp.zeros((1, 2 * C), jnp.float32)
    p["final_w"] = _w(kg, (2 * C, 1))
    p["final_b"] = _w(kg, (1,)).reshape(1, 1)
    return p


def build_normalized_adj(edge_index, num_nodes):
    # GCNConv default: add self-loops, symmetric normalization D^-1/2 (A+I) D^-1/2
    src, dst = edge_index[0], edge_index[1]
    a = jnp.zeros((num_nodes, num_nodes), jnp.float32)
    a = a.at[dst, src].set(1.0)
    a = a + jnp.eye(num_nodes, dtype=jnp.float32)
    deg = jnp.sum(a, axis=1)
    dinv = 1.0 / jnp.sqrt(jnp.maximum(deg, 1e-12))
    return dinv[:, None] * a * dinv[None, :]


# ----------------------------------------------------------------------------
# Main
# ----------------------------------------------------------------------------
if __name__ == "__main__":
    B, T = 2, 8                   # lstm batch / sequence
    LSTM_IN, LSTM_H = 8, 32       # 2 bidirectional layers (hardwired in the kernel)
    N_NODES = 10
    GCN_IN, GCN_HID, GCN_OUT = 16, 32, 24
    COMBINED = 32                 # combined_output_dim

    kg = KeyGen(jax.random.PRNGKey(0))
    params = init_params(kg, LSTM_IN, LSTM_H, GCN_IN, GCN_HID, GCN_OUT, COMBINED)

    lstm_x = jax.random.normal(kg(), (B, T, LSTM_IN), dtype=jnp.float32)
    gcn_x = jax.random.normal(kg(), (N_NODES, GCN_IN), dtype=jnp.float32)

    # Synthetic bidirectional ring graph.
    # TODO(synk): real graph_edges.csv edge list not reproduced in-script.
    src = jnp.arange(N_NODES, dtype=jnp.int32)
    dst = (src + 1) % N_NODES
    edge_index = jnp.stack(
        [jnp.concatenate([src, dst]), jnp.concatenate([dst, src])], axis=0)
    a_hat = build_normalized_adj(edge_index, N_NODES)

    fwd = jax.jit(lstm_gcn_forward)
    out = jax.block_until_ready(fwd(lstm_x, gcn_x, a_hat, params))
    assert out.shape == (B, 1), out.shape
    assert bool(jnp.all(jnp.isfinite(out)))
    print("KERNEL_OK")
</pallas_src>

<mosaic_0001>
module attributes {stable_mosaic.version = 11 : i64} {
  func.func @_fused_kernel(%arg0: memref<16x8xf32, #tpu.memory_space<vmem>>, %arg1: memref<2x8xf32, #tpu.memory_space<vmem>>, %arg2: memref<8x256xf32, #tpu.memory_space<vmem>>, %arg3: memref<64x256xf32, #tpu.memory_space<vmem>>, %arg4: memref<1x256xf32, #tpu.memory_space<vmem>>, %arg5: memref<64x256xf32, #tpu.memory_space<vmem>>, %arg6: memref<64x256xf32, #tpu.memory_space<vmem>>, %arg7: memref<1x256xf32, #tpu.memory_space<vmem>>, %arg8: memref<8x64xf32, #tpu.memory_space<vmem>>, %arg9: memref<1x64xf32, #tpu.memory_space<vmem>>, %arg10: memref<64x192xf32, #tpu.memory_space<vmem>>, %arg11: memref<1x192xf32, #tpu.memory_space<vmem>>, %arg12: memref<64x64xf32, #tpu.memory_space<vmem>>, %arg13: memref<1x64xf32, #tpu.memory_space<vmem>>, %arg14: memref<1x64xf32, #tpu.memory_space<vmem>>, %arg15: memref<1x64xf32, #tpu.memory_space<vmem>>, %arg16: memref<64x32xf32, #tpu.memory_space<vmem>>, %arg17: memref<1x32xf32, #tpu.memory_space<vmem>>, %arg18: memref<10x10xf32, #tpu.memory_space<vmem>>, %arg19: memref<10x16xf32, #tpu.memory_space<vmem>>, %arg20: memref<16x24xf32, #tpu.memory_space<vmem>>, %arg21: memref<1x24xf32, #tpu.memory_space<vmem>>, %arg22: memref<16x32xf32, #tpu.memory_space<vmem>>, %arg23: memref<1x32xf32, #tpu.memory_space<vmem>>, %arg24: memref<32x32xf32, #tpu.memory_space<vmem>>, %arg25: memref<1x32xf32, #tpu.memory_space<vmem>>, %arg26: memref<32x32xf32, #tpu.memory_space<vmem>>, %arg27: memref<1x32xf32, #tpu.memory_space<vmem>>, %arg28: memref<32x24xf32, #tpu.memory_space<vmem>>, %arg29: memref<1x24xf32, #tpu.memory_space<vmem>>, %arg30: memref<1x24xf32, #tpu.memory_space<vmem>>, %arg31: memref<1x24xf32, #tpu.memory_space<vmem>>, %arg32: memref<1x24xf32, #tpu.memory_space<vmem>>, %arg33: memref<1x24xf32, #tpu.memory_space<vmem>>, %arg34: memref<24x32xf32, #tpu.memory_space<vmem>>, %arg35: memref<1x32xf32, #tpu.memory_space<vmem>>, %arg36: memref<32x64xf32, #tpu.memory_space<vmem>>, %arg37: memref<32x64xf32, #tpu.memory_space<vmem>>, %arg38: memref<1x64xf32, #tpu.memory_space<vmem>>, %arg39: memref<64x64xf32, #tpu.memory_space<vmem>>, %arg40: memref<1x64xf32, #tpu.memory_space<vmem>>, %arg41: memref<64x64xf32, #tpu.memory_space<vmem>>, %arg42: memref<1x64xf32, #tpu.memory_space<vmem>>, %arg43: memref<1x64xf32, #tpu.memory_space<vmem>>, %arg44: memref<1x64xf32, #tpu.memory_space<vmem>>, %arg45: memref<64x1xf32, #tpu.memory_space<vmem>>, %arg46: memref<1x1xf32, #tpu.memory_space<vmem>>, %arg47: memref<2x1xf32, #tpu.memory_space<vmem>>, %arg48: memref<8x2x256xf32, #tpu.memory_space<vmem>>, %arg49: memref<8x2x32xf32, #tpu.memory_space<vmem>>, %arg50: memref<8x2x32xf32, #tpu.memory_space<vmem>>) attributes {dimension_semantics = [], scalar_prefetch = 0 : i64, scratch_operands = 3 : i64, tpu.core_type = #tpu.core_type<tc>} {
    %c0 = arith.constant 0 : index
    %c0_0 = arith.constant 0 : index
    %0 = vector.load %arg0[%c0, %c0_0] : memref<16x8xf32, #tpu.memory_space<vmem>>, vector<16x8xf32>
    %c0_1 = arith.constant 0 : index
    %c0_2 = arith.constant 0 : index
    %1 = vector.load %arg2[%c0_1, %c0_2] : memref<8x256xf32, #tpu.memory_space<vmem>>, vector<8x256xf32>
    %cst = arith.constant dense<0.000000e+00> : vector<16x256xf32>
    %2 = tpu.matmul %0, %1, %cst {dimension_numbers = #tpu.dot_dimension_numbers<[1], [0], [0], [1], [0, 0, 1, 1], [], []>} : vector<16x8xf32>, vector<8x256xf32>, vector<16x256xf32> -> vector<16x256xf32>
    %c0_3 = arith.constant 0 : index
    %c0_4 = arith.constant 0 : index
    %3 = vector.load %arg4[%c0_3, %c0_4] : memref<1x256xf32, #tpu.memory_space<vmem>>, vector<1x256xf32>
    %4 = vector.broadcast %3 : vector<1x256xf32> to vector<16x256xf32>
    %5 = arith.addf %2, %4 : vector<16x256xf32>
    %6 = vector.shape_cast %5 : vector<16x256xf32> to vector<8x2x256xf32>
    %c0_5 = arith.constant 0 : index
    %c0_6 = arith.constant 0 : index
    %c0_7 = arith.constant 0 : index
    %7 = vector.load %arg48[%c0_5, %c0_6, %c0_7] : memref<8x2x256xf32, #tpu.memory_space<vmem>>, vector<8x2x256xf32>
    tpu.vector_store %arg48[%c0_5, %c0_6, %c0_7], %6 {strides = array<i32>} : memref<8x2x256xf32, #tpu.memory_space<vmem>>, vector<8x2x256xf32>,
    %c0_8 = arith.constant 0 : index
    %c0_9 = arith.constant 0 : index
    %8 = vector.load %arg3[%c0_8, %c0_9] : memref<64x256xf32, #tpu.memory_space<vmem>>, vector<64x256xf32>
    %cst_10 = arith.constant 0.000000e+00 : f32
    %9 = vector.broadcast %cst_10 : f32 to vector<2x64xf32>
    %cst_11 = arith.constant 0.000000e+00 : f32
    %10 = vector.broadcast %cst_11 : f32 to vector<2x32xf32>
    %cst_12 = arith.constant 0.000000e+00 : f32
    %11 = vector.broadcast %cst_12 : f32 to vector<2x32xf32>
    %c0_i32 = arith.constant 0 : i32
    %c7_i32 = arith.constant 7 : i32
    %12 = arith.subi %c7_i32, %c0_i32 : i32
    %cst_13 = arith.constant dense<0.000000e+00> : vector<2x256xf32>
    %13 = tpu.matmul %9, %8, %cst_13 {dimension_numbers = #tpu.dot_dimension_numbers<[1], [0], [0], [1], [0, 0, 1, 1], [], []>} : vector<2x64xf32>, vector<64x256xf32>, vector<2x256xf32> -> vector<2x256xf32>
    %14 = vector.extract_strided_slice %13 {offsets = [0, 0], sizes = [2, 128], strides = [1, 1]} : vector<2x256xf32> to vector<2x128xf32>
    %15 = arith.index_cast %c0_i32 : i32 to index
    %c0_14 = arith.constant 0 : index
    %c0_15 = arith.constant 0 : index
    %16 = vector.load %arg48[%15, %c0_14, %c0_15] : memref<8x2x256xf32, #tpu.memory_space<vmem>>, vector<1x2x256xf32>
    %17 = vector.shape_cast %16 : vector<1x2x256xf32> to vector<2x256xf32>
    %18 = vector.extract_strided_slice %17 {offsets = [0, 0], sizes = [2, 128], strides = [1, 1]} : vector<2x256xf32> to vector<2x128xf32>
    %19 = arith.addf %14, %18 : vector<2x128xf32>
    %20 = vector.extract_strided_slice %13 {offsets = [0, 128], sizes = [2, 128], strides = [1, 1]} : vector<2x256xf32> to vector<2x128xf32>
    %21 = arith.index_cast %12 : i32 to index
    %c0_16 = arith.constant 0 : index
    %c0_17 = arith.constant 0 : index
    %22 = vector.load %arg48[%21, %c0_16, %c0_17] : memref<8x2x256xf32, #tpu.memory_space<vmem>>, vector<1x2x256xf32>
    %23 = vector.shape_cast %22 : vector<1x2x256xf32> to vector<2x256xf32>
    %24 = vector.extract_strided_slice %23 {offsets = [0, 128], sizes = [2, 128], strides = [1, 1]} : vector<2x256xf32> to vector<2x128xf32>
    %25 = arith.addf %20, %24 : vector<2x128xf32>
    %26 = vector.extract_strided_slice %19 {offsets = [0, 0], sizes = [2, 96], strides = [1, 1]} : vector<2x128xf32> to vector<2x96xf32>
    %27 = arith.negf %26 : vector<2x96xf32>
    %28 = math.exp %27 : vector<2x96xf32>
    %cst_18 = arith.constant 1.000000e+00 : f32
    %29 = vector.broadcast %cst_18 : f32 to vector<2x96xf32>
    %30 = arith.addf %29, %28 : vector<2x96xf32>
    %31 = arith.divf %29, %30 : vector<2x96xf32>
    %32 = vector.extract_strided_slice %19 {offsets = [0, 96], sizes = [2, 32], strides = [1, 1]} : vector<2x128xf32> to vector<2x32xf32>
    %33 = math.tanh %32 : vector<2x32xf32>
    %34 = vector.extract_strided_slice %31 {offsets = [0, 32], sizes = [2, 32], strides = [1, 1]} : vector<2x96xf32> to vector<2x32xf32>
    %35 = arith.mulf %34, %10 : vector<2x32xf32>
    %36 = vector.extract_strided_slice %31 {offsets = [0, 0], sizes = [2, 32], strides = [1, 1]} : vector<2x96xf32> to vector<2x32xf32>
    %37 = arith.mulf %36, %33 : vector<2x32xf32>
    %38 = arith.addf %35, %37 : vector<2x32xf32>
    %39 = vector.extract_strided_slice %31 {offsets = [0, 64], sizes = [2, 32], strides = [1, 1]} : vector<2x96xf32> to vector<2x32xf32>
    %40 = math.tanh %38 : vector<2x32xf32>
    %41 = arith.mulf %39, %40 : vector<2x32xf32>
    %42 = vector.extract_strided_slice %25 {offsets = [0, 0], sizes = [2, 96], strides = [1, 1]} : vector<2x128xf32> to vector<2x96xf32>
    %43 = arith.negf %42 : vector<2x96xf32>
    %44 = math.exp %43 : vector<2x96xf32>
    %cst_19 = arith.constant 1.000000e+00 : f32
    %45 = vector.broadcast %cst_19 : f32 to vector<2x96xf32>
    %46 = arith.addf %45, %44 : vector<2x96xf32>
    %47 = arith.divf %45, %46 : vector<2x96xf32>
    %48 = vector.extract_strided_slice %25 {offsets = [0, 96], sizes = [2, 32], strides = [1, 1]} : vector<2x128xf32> to vector<2x32xf32>
    %49 = math.tanh %48 : vector<2x32xf32>
    %50 = vector.extract_strided_slice %47 {offsets = [0, 32], sizes = [2, 32], strides = [1, 1]} : vector<2x96xf32> to vector<2x32xf32>
    %51 = arith.mulf %50, %11 : vector<2x32xf32>
    %52 = vector.extract_strided_slice %47 {offsets = [0, 0], sizes = [2, 32], strides = [1, 1]} : vector<2x96xf32> to vector<2x32xf32>
    %53 = arith.mulf %52, %49 : vector<2x32xf32>
    %54 = arith.addf %51, %53 : vector<2x32xf32>
    %55 = vector.extract_strided_slice %47 {offsets = [0, 64], sizes = [2, 32], strides = [1, 1]} : vector<2x96xf32> to vector<2x32xf32>
    %56 = math.tanh %54 : vector<2x32xf32>
    %57 = arith.mulf %55, %56 : vector<2x32xf32>
    %58 = arith.index_cast %c0_i32 : i32 to index
    %c0_20 = arith.constant 0 : index
    %c0_21 = arith.constant 0 : index
    %59 = vector.load %arg49[%58, %c0_20, %c0_21] : memref<8x2x32xf32, #tpu.memory_space<vmem>>, vector<1x2x32xf32>
    %60 = vector.shape_cast %59 : vector<1x2x32xf32> to vector<2x32xf32>
    %61 = vector.shape_cast %41 : vector<2x32xf32> to vector<1x2x32xf32>
    tpu.vector_store %arg49[%58, %c0_20, %c0_21], %61 {strides = array<i32>} : memref<8x2x32xf32, #tpu.memory_space<vmem>>, vector<1x2x32xf32>,
    %62 = arith.index_cast %12 : i32 to index
    %c0_22 = arith.constant 0 : index
    %c0_23 = arith.constant 0 : index
    %63 = vector.load %arg50[%62, %c0_22, %c0_23] : memref<8x2x32xf32, #tpu.memory_space<vmem>>, vector<1x2x32xf32>
    %64 = vector.shape_cast %63 : vector<1x2x32xf32> to vector<2x32xf32>
    %65 = vector.shape_cast %57 : vector<2x32xf32> to vector<1x2x32xf32>
    tpu.vector_store %arg50[%62, %c0_22, %c0_23], %65 {strides = array<i32>} : memref<8x2x32xf32, #tpu.memory_space<vmem>>, vector<1x2x32xf32>,
    %66 = tpu.concatenate %41, %57 in 1 : vector<2x32xf32>, vector<2x32xf32> -> vector<2x64xf32>
    %c1_i32 = arith.constant 1 : i32
    %c7_i32_24 = arith.constant 7 : i32
    %67 = arith.subi %c7_i32_24, %c1_i32 : i32
    %cst_25 = arith.constant dense<0.000000e+00> : vector<2x256xf32>
    %68 = tpu.matmul %66, %8, %cst_25 {dimension_numbers = #tpu.dot_dimension_numbers<[1], [0], [0], [1], [0, 0, 1, 1], [], []>} : vector<2x64xf32>, vector<64x256xf32>, vector<2x256xf32> -> vector<2x256xf32>
    %69 = vector.extract_strided_slice %68 {offsets = [0, 0], sizes = [2, 128], strides = [1, 1]} : vector<2x256xf32> to vector<2x128xf32>
    %70 = arith.index_cast %c1_i32 : i32 to index
    %c0_26 = arith.constant 0 : index
    %c0_27 = arith.constant 0 : index
    %71 = vector.load %arg48[%70, %c0_26, %c0_27] : memref<8x2x256xf32, #tpu.memory_space<vmem>>, vector<1x2x256xf32>
    %72 = vector.shape_cast %71 : vector<1x2x256xf32> to vector<2x256xf32>
    %73 = vector.extract_strided_slice %72 {offsets = [0, 0], sizes = [2, 128], strides = [1, 1]} : vector<2x256xf32> to vector<2x128xf32>
    %74 = arith.addf %69, %73 : vector<2x128xf32>
    %75 = vector.extract_strided_slice %68 {offsets = [0, 128], sizes = [2, 128], strides = [1, 1]} : vector<2x256xf32> to vector<2x128xf32>
    %76 = arith.index_cast %67 : i32 to index
    %c0_28 = arith.constant 0 : index
    %c0_29 = arith.constant 0 : index
    %77 = vector.load %arg48[%76, %c0_28, %c0_29] : memref<8x2x256xf32, #tpu.memory_space<vmem>>, vector<1x2x256xf32>
    %78 = vector.shape_cast %77 : vector<1x2x256xf32> to vector<2x256xf32>
    %79 = vector.extract_strided_slice %78 {offsets = [0, 128], sizes = [2, 128], strides = [1, 1]} : vector<2x256xf32> to vector<2x128xf32>
    %80 = arith.addf %75, %79 : vector<2x128xf32>
    %81 = vector.extract_strided_slice %74 {offsets = [0, 0], sizes = [2, 96], strides = [1, 1]} : vector<2x128xf32> to vector<2x96xf32>
    %82 = arith.negf %81 : vector<2x96xf32>
    %83 = math.exp %82 : vector<2x96xf32>
    %cst_30 = arith.constant 1.000000e+00 : f32
    %84 = vector.broadcast %cst_30 : f32 to vector<2x96xf32>
    %85 = arith.addf %84, %83 : vector<2x96xf32>
    %86 = arith.divf %84, %85 : vector<2x96xf32>
    %87 = vector.extract_strided_slice %74 {offsets = [0, 96], sizes = [2, 32], strides = [1, 1]} : vector<2x128xf32> to vector<2x32xf32>
    %88 = math.tanh %87 : vector<2x32xf32>
    %89 = vector.extract_strided_slice %86 {offsets = [0, 32], sizes = [2, 32], strides = [1, 1]} : vector<2x96xf32> to vector<2x32xf32>
    %90 = arith.mulf %89, %38 : vector<2x32xf32>
    %91 = vector.extract_strided_slice %86 {offsets = [0, 0], sizes = [2, 32], strides = [1, 1]} : vector<2x96xf32> to vector<2x32xf32>
    %92 = arith.mulf %91, %88 : vector<2x32xf32>
    %93 = arith.addf %90, %92 : vector<2x32xf32>
    %94 = vector.extract_strided_slice %86 {offsets = [0, 64], sizes = [2, 32], strides = [1, 1]} : vector<2x96xf32> to vector<2x32xf32>
    %95 = math.tanh %93 : vector<2x32xf32>
    %96 = arith.mulf %94, %95 : vector<2x32xf32>
    %97 = vector.extract_strided_slice %80 {offsets = [0, 0], sizes = [2, 96], strides = [1, 1]} : vector<2x128xf32> to vector<2x96xf32>
    %98 = arith.negf %97 : vector<2x96xf32>
    %99 = math.exp %98 : vector<2x96xf32>
    %cst_31 = arith.constant 1.000000e+00 : f32
    %100 = vector.broadcast %cst_31 : f32 to vector<2x96xf32>
    %101 = arith.addf %100, %99 : vector<2x96xf32>
    %102 = arith.divf %100, %101 : vector<2x96xf32>
    %103 = vector.extract_strided_slice %80 {offsets = [0, 96], sizes = [2, 32], strides = [1, 1]} : vector<2x128xf32> to vector<2x32xf32>
    %104 = math.tanh %103 : vector<2x32xf32>
    %105 = vector.extract_strided_slice %102 {offsets = [0, 32], sizes = [2, 32], strides = [1, 1]} : vector<2x96xf32> to vector<2x32xf32>
    %106 = arith.mulf %105, %54 : vector<2x32xf32>
    %107 = vector.extract_strided_slice %102 {offsets = [0, 0], sizes = [2, 32], strides = [1, 1]} : vector<2x96xf32> to vector<2x32xf32>
    %108 = arith.mulf %107, %104 : vector<2x32xf32>
    %109 = arith.addf %106, %108 : vector<2x32xf32>
    %110 = vector.extract_strided_slice %102 {offsets = [0, 64], sizes = [2, 32], strides = [1, 1]} : vector<2x96xf32> to vector<2x32xf32>
    %111 = math.tanh %109 : vector<2x32xf32>
    %112 = arith.mulf %110, %111 : vector<2x32xf32>
    %113 = arith.index_cast %c1_i32 : i32 to index
    %c0_32 = arith.constant 0 : index
    %c0_33 = arith.constant 0 : index
    %114 = vector.load %arg49[%113, %c0_32, %c0_33] : memref<8x2x32xf32, #tpu.memory_space<vmem>>, vector<1x2x32xf32>
    %115 = vector.shape_cast %114 : vector<1x2x32xf32> to vector<2x32xf32>
    %116 = vector.shape_cast %96 : vector<2x32xf32> to vector<1x2x32xf32>
    tpu.vector_store %arg49[%113, %c0_32, %c0_33], %116 {strides = array<i32>} : memref<8x2x32xf32, #tpu.memory_space<vmem>>, vector<1x2x32xf32>,
    %117 = arith.index_cast %67 : i32 to index
    %c0_34 = arith.constant 0 : index
    %c0_35 = arith.constant 0 : index
    %118 = vector.load %arg50[%117, %c0_34, %c0_35] : memref<8x2x32xf32, #tpu.memory_space<vmem>>, vector<1x2x32xf32>
    %119 = vector.shape_cast %118 : vector<1x2x32xf32> to vector<2x32xf32>
    %120 = vector.shape_cast %112 : vector<2x32xf32> to vector<1x2x32xf32>
    tpu.vector_store %arg50[%117, %c0_34, %c0_35], %120 {strides = array<i32>} : memref<8x2x32xf32, #tpu.memory_space<vmem>>, vector<1x2x32xf32>,
    %121 = tpu.concatenate %96, %112 in 1 : vector<2x32xf32>, vector<2x32xf32> -> vector<2x64xf32>
    %c2_i32 = arith.constant 2 : i32
    %c7_i32_36 = arith.constant 7 : i32
    %122 = arith.subi %c7_i32_36, %c2_i32 : i32
    %cst_37 = arith.constant dense<0.000000e+00> : vector<2x256xf32>
    %123 = tpu.matmul %121, %8, %cst_37 {dimension_numbers = #tpu.dot_dimension_numbers<[1], [0], [0], [1], [0, 0, 1, 1], [], []>} : vector<2x64xf32>, vector<64x256xf32>, vector<2x256xf32> -> vector<2x256xf32>
    %124 = vector.extract_strided_slice %123 {offsets = [0, 0], sizes = [2, 128], strides = [1, 1]} : vector<2x256xf32> to vector<2x128xf32>
    %125 = arith.index_cast %c2_i32 : i32 to index
    %c0_38 = arith.constant 0 : index
    %c0_39 = arith.constant 0 : index
    %126 = vector.load %arg48[%125, %c0_38, %c0_39] : memref<8x2x256xf32, #tpu.memory_space<vmem>>, vector<1x2x256xf32>
    %127 = vector.shape_cast %126 : vector<1x2x256xf32> to vector<2x256xf32>
    %128 = vector.extract_strided_slice %127 {offsets = [0, 0], sizes = [2, 128], strides = [1, 1]} : vector<2x256xf32> to vector<2x128xf32>
    %129 = arith.addf %124, %128 : vector<2x128xf32>
    %130 = vector.extract_strided_slice %123 {offsets = [0, 128], sizes = [2, 128], strides = [1, 1]} : vector<2x256xf32> to vector<2x128xf32>
    %131 = arith.index_cast %122 : i32 to index
    %c0_40 = arith.constant 0 : index
    %c0_41 = arith.constant 0 : index
    %132 = vector.load %arg48[%131, %c0_40, %c0_41] : memref<8x2x256xf32, #tpu.memory_space<vmem>>, vector<1x2x256xf32>
    %133 = vector.shape_cast %132 : vector<1x2x256xf32> to vector<2x256xf32>
    %134 = vector.extract_strided_slice %133 {offsets = [0, 128], sizes = [2, 128], strides = [1, 1]} : vector<2x256xf32> to vector<2x128xf32>
    %135 = arith.addf %130, %134 : vector<2x128xf32>
    %136 = vector.extract_strided_slice %129 {offsets = [0, 0], sizes = [2, 96], strides = [1, 1]} : vector<2x128xf32> to vector<2x96xf32>
    %137 = arith.negf %136 : vector<2x96xf32>
    %138 = math.exp %137 : vector<2x96xf32>
    %cst_42 = arith.constant 1.000000e+00 : f32
    %139 = vector.broadcast %cst_42 : f32 to vector<2x96xf32>
    %140 = arith.addf %139, %138 : vector<2x96xf32>
    %141 = arith.divf %139, %140 : vector<2x96xf32>
    %142 = vector.extract_strided_slice %129 {offsets = [0, 96], sizes = [2, 32], strides = [1, 1]} : vector<2x128xf32> to vector<2x32xf32>
    %143 = math.tanh %142 : vector<2x32xf32>
    %144 = vector.extract_strided_slice %141 {offsets = [0, 32], sizes = [2, 32], strides = [1, 1]} : vector<2x96xf32> to vector<2x32xf32>
    %145 = arith.mulf %144, %93 : vector<2x32xf32>
    %146 = vector.extract_strided_slice %141 {offsets = [0, 0], sizes = [2, 32], strides = [1, 1]} : vector<2x96xf32> to vector<2x32xf32>
    %147 = arith.mulf %146, %143 : vector<2x32xf32>
    %148 = arith.addf %145, %147 : vector<2x32xf32>
    %149 = vector.extract_strided_slice %141 {offsets = [0, 64], sizes = [2, 32], strides = [1, 1]} : vector<2x96xf32> to vector<2x32xf32>
    %150 = math.tanh %148 : vector<2x32xf32>
    %151 = arith.mulf %149, %150 : vector<2x32xf32>
    %152 = vector.extract_strided_slice %135 {offsets = [0, 0], sizes = [2, 96], strides = [1, 1]} : vector<2x128xf32> to vector<2x96xf32>
    %153 = arith.negf %152 : vector<2x96xf32>
    %154 = math.exp %153 : vector<2x96xf32>
    %cst_43 = arith.constant 1.000000e+00 : f32
    %155 = vector.broadcast %cst_43 : f32 to vector<2x96xf32>
    %156 = arith.addf %155, %154 : vector<2x96xf32>
    %157 = arith.divf %155, %156 : vector<2x96xf32>
    %158 = vector.extract_strided_slice %135 {offsets = [0, 96], sizes = [2, 32], strides = [1, 1]} : vector<2x128xf32> to vector<2x32xf32>
    %159 = math.tanh %158 : vector<2x32xf32>
    %160 = vector.extract_strided_slice %157 {offsets = [0, 32], sizes = [2, 32], strides = [1, 1]} : vector<2x96xf32> to vector<2x32xf32>
    %161 = arith.mulf %160, %109 : vector<2x32xf32>
    %162 = vector.extract_strided_slice %157 {offsets = [0, 0], sizes = [2, 32], strides = [1, 1]} : vector<2x96xf32> to vector<2x32xf32>
    %163 = arith.mulf %162, %159 : vector<2x32xf32>
    %164 = arith.addf %161, %163 : vector<2x32xf32>
    %165 = vector.extract_strided_slice %157 {offsets = [0, 64], sizes = [2, 32], strides = [1, 1]} : vector<2x96xf32> to vector<2x32xf32>
    %166 = math.tanh %164 : vector<2x32xf32>
    %167 = arith.mulf %165, %166 : vector<2x32xf32>
    %168 = arith.index_cast %c2_i32 : i32 to index
    %c0_44 = arith.constant 0 : index
    %c0_45 = arith.constant 0 : index
    %169 = vector.load %arg49[%168, %c0_44, %c0_45] : memref<8x2x32xf32, #tpu.memory_space<vmem>>, vector<1x2x32xf32>
    %170 = vector.shape_cast %169 : vector<1x2x32xf32> to vector<2x32xf32>
    %171 = vector.shape_cast %151 : vector<2x32xf32> to vector<1x2x32xf32>
    tpu.vector_store %arg49[%168, %c0_44, %c0_45], %171 {strides = array<i32>} : memref<8x2x32xf32, #tpu.memory_space<vmem>>, vector<1x2x32xf32>,
    %172 = arith.index_cast %122 : i32 to index
    %c0_46 = arith.constant 0 : index
    %c0_47 = arith.constant 0 : index
    %173 = vector.load %arg50[%172, %c0_46, %c0_47] : memref<8x2x32xf32, #tpu.memory_space<vmem>>, vector<1x2x32xf32>
    %174 = vector.shape_cast %173 : vector<1x2x32xf32> to vector<2x32xf32>
    %175 = vector.shape_cast %167 : vector<2x32xf32> to vector<1x2x32xf32>
    tpu.vector_store %arg50[%172, %c0_46, %c0_47], %175 {strides = array<i32>} : memref<8x2x32xf32, #tpu.memory_space<vmem>>, vector<1x2x32xf32>,
    %176 = tpu.concatenate %151, %167 in 1 : vector<2x32xf32>, vector<2x32xf32> -> vector<2x64xf32>
    %c3_i32 = arith.constant 3 : i32
    %c7_i32_48 = arith.constant 7 : i32
    %177 = arith.subi %c7_i32_48, %c3_i32 : i32
    %cst_49 = arith.constant dense<0.000000e+00> : vector<2x256xf32>
    %178 = tpu.matmul %176, %8, %cst_49 {dimension_numbers = #tpu.dot_dimension_numbers<[1], [0], [0], [1], [0, 0, 1, 1], [], []>} : vector<2x64xf32>, vector<64x256xf32>, vector<2x256xf32> -> vector<2x256xf32>
    %179 = vector.extract_strided_slice %178 {offsets = [0, 0], sizes = [2, 128], strides = [1, 1]} : vector<2x256xf32> to vector<2x128xf32>
    %180 = arith.index_cast %c3_i32 : i32 to index
    %c0_50 = arith.constant 0 : index
    %c0_51 = arith.constant 0 : index
    %181 = vector.load %arg48[%180, %c0_50, %c0_51] : memref<8x2x256xf32, #tpu.memory_space<vmem>>, vector<1x2x256xf32>
    %182 = vector.shape_cast %181 : vector<1x2x256xf32> to vector<2x256xf32>
    %183 = vector.extract_strided_slice %182 {offsets = [0, 0], sizes = [2, 128], strides = [1, 1]} : vector<2x256xf32> to vector<2x128xf32>
    %184 = arith.addf %179, %183 : vector<2x128xf32>
    %185 = vector.extract_strided_slice %178 {offsets = [0, 128], sizes = [2, 128], strides = [1, 1]} : vector<2x256xf32> to vector<2x128xf32>
    %186 = arith.index_cast %177 : i32 to index
    %c0_52 = arith.constant 0 : index
    %c0_53 = arith.constant 0 : index
    %187 = vector.load %arg48[%186, %c0_52, %c0_53] : memref<8x2x256xf32, #tpu.memory_space<vmem>>, vector<1x2x256xf32>
    %188 = vector.shape_cast %187 : vector<1x2x256xf32> to vector<2x256xf32>
    %189 = vector.extract_strided_slice %188 {offsets = [0, 128], sizes = [2, 128], strides = [1, 1]} : vector<2x256xf32> to vector<2x128xf32>
    %190 = arith.addf %185, %189 : vector<2x128xf32>
    %191 = vector.extract_strided_slice %184 {offsets = [0, 0], sizes = [2, 96], strides = [1, 1]} : vector<2x128xf32> to vector<2x96xf32>
    %192 = arith.negf %191 : vector<2x96xf32>
    %193 = math.exp %192 : vector<2x96xf32>
    %cst_54 = arith.constant 1.000000e+00 : f32
    %194 = vector.broadcast %cst_54 : f32 to vector<2x96xf32>
    %195 = arith.addf %194, %193 : vector<2x96xf32>
    %196 = arith.divf %194, %195 : vector<2x96xf32>
    %197 = vector.extract_strided_slice %184 {offsets = [0, 96], sizes = [2, 32], strides = [1, 1]} : vector<2x128xf32> to vector<2x32xf32>
    %198 = math.tanh %197 : vector<2x32xf32>
    %199 = vector.extract_strided_slice %196 {offsets = [0, 32], sizes = [2, 32], strides = [1, 1]} : vector<2x96xf32> to vector<2x32xf32>
    %200 = arith.mulf %199, %148 : vector<2x32xf32>
    %201 = vector.extract_strided_slice %196 {offsets = [0, 0], sizes = [2, 32], strides = [1, 1]} : vector<2x96xf32> to vector<2x32xf32>
    %202 = arith.mulf %201, %198 : vector<2x32xf32>
    %203 = arith.addf %200, %202 : vector<2x32xf32>
    %204 = vector.extract_strided_slice %196 {offsets = [0, 64], sizes = [2, 32], strides = [1, 1]} : vector<2x96xf32> to vector<2x32xf32>
    %205 = math.tanh %203 : vector<2x32xf32>
    %206 = arith.mulf %204, %205 : vector<2x32xf32>
    %207 = vector.extract_strided_slice %190 {offsets = [0, 0], sizes = [2, 96], strides = [1, 1]} : vector<2x128xf32> to vector<2x96xf32>
    %208 = arith.negf %207 : vector<2x96xf32>
    %209 = math.exp %208 : vector<2x96xf32>
    %cst_55 = arith.constant 1.000000e+00 : f32
    %210 = vector.broadcast %cst_55 : f32 to vector<2x96xf32>
    %211 = arith.addf %210, %209 : vector<2x96xf32>
    %212 = arith.divf %210, %211 : vector<2x96xf32>
    %213 = vector.extract_strided_slice %190 {offsets = [0, 96], sizes = [2, 32], strides = [1, 1]} : vector<2x128xf32> to vector<2x32xf32>
    %214 = math.tanh %213 : vector<2x32xf32>
    %215 = vector.extract_strided_slice %212 {offsets = [0, 32], sizes = [2, 32], strides = [1, 1]} : vector<2x96xf32> to vector<2x32xf32>
    %216 = arith.mulf %215, %164 : vector<2x32xf32>
    %217 = vector.extract_strided_slice %212 {offsets = [0, 0], sizes = [2, 32], strides = [1, 1]} : vector<2x96xf32> to vector<2x32xf32>
    %218 = arith.mulf %217, %214 : vector<2x32xf32>
    %219 = arith.addf %216, %218 : vector<2x32xf32>
    %220 = vector.extract_strided_slice %212 {offsets = [0, 64], sizes = [2, 32], strides = [1, 1]} : vector<2x96xf32> to vector<2x32xf32>
    %221 = math.tanh %219 : vector<2x32xf32>
    %222 = arith.mulf %220, %221 : vector<2x32xf32>
    %223 = arith.index_cast %c3_i32 : i32 to index
    %c0_56 = arith.constant 0 : index
    %c0_57 = arith.constant 0 : index
    %224 = vector.load %arg49[%223, %c0_56, %c0_57] : memref<8x2x32xf32, #tpu.memory_space<vmem>>, vector<1x2x32xf32>
    %225 = vector.shape_cast %224 : vector<1x2x32xf32> to vector<2x32xf32>
    %226 = vector.shape_cast %206 : vector<2x32xf32> to vector<1x2x32xf32>
    tpu.vector_store %arg49[%223, %c0_56, %c0_57], %226 {strides = array<i32>} : memref<8x2x32xf32, #tpu.memory_space<vmem>>, vector<1x2x32xf32>,
    %227 = arith.index_cast %177 : i32 to index
    %c0_58 = arith.constant 0 : index
    %c0_59 = arith.constant 0 : index
    %228 = vector.load %arg50[%227, %c0_58, %c0_59] : memref<8x2x32xf32, #tpu.memory_space<vmem>>, vector<1x2x32xf32>
    %229 = vector.shape_cast %228 : vector<1x2x32xf32> to vector<2x32xf32>
    %230 = vector.shape_cast %222 : vector<2x32xf32> to vector<1x2x32xf32>
    tpu.vector_store %arg50[%227, %c0_58, %c0_59], %230 {strides = array<i32>} : memref<8x2x32xf32, #tpu.memory_space<vmem>>, vector<1x2x32xf32>,
    %231 = tpu.concatenate %206, %222 in 1 : vector<2x32xf32>, vector<2x32xf32> -> vector<2x64xf32>
    %c4_i32 = arith.constant 4 : i32
    %c7_i32_60 = arith.constant 7 : i32
    %232 = arith.subi %c7_i32_60, %c4_i32 : i32
    %cst_61 = arith.constant dense<0.000000e+00> : vector<2x256xf32>
    %233 = tpu.matmul %231, %8, %cst_61 {dimension_numbers = #tpu.dot_dimension_numbers<[1], [0], [0], [1], [0, 0, 1, 1], [], []>} : vector<2x64xf32>, vector<64x256xf32>, vector<2x256xf32> -> vector<2x256xf32>
    %234 = vector.extract_strided_slice %233 {offsets = [0, 0], sizes = [2, 128], strides = [1, 1]} : vector<2x256xf32> to vector<2x128xf32>
    %235 = arith.index_cast %c4_i32 : i32 to index
    %c0_62 = arith.constant 0 : index
    %c0_63 = arith.constant 0 : index
    %236 = vector.load %arg48[%235, %c0_62, %c0_63] : memref<8x2x256xf32, #tpu.memory_space<vmem>>, vector<1x2x256xf32>
    %237 = vector.shape_cast %236 : vector<1x2x256xf32> to vector<2x256xf32>
    %238 = vector.extract_strided_slice %237 {offsets = [0, 0], sizes = [2, 128], strides = [1, 1]} : vector<2x256xf32> to vector<2x128xf32>
    %239 = arith.addf %234, %238 : vector<2x128xf32>
    %240 = vector.extract_strided_slice %233 {offsets = [0, 128], sizes = [2, 128], strides = [1, 1]} : vector<2x256xf32> to vector<2x128xf32>
    %241 = arith.index_cast %232 : i32 to index
    %c0_64 = arith.constant 0 : index
    %c0_65 = arith.constant 0 : index
    %242 = vector.load %arg48[%241, %c0_64, %c0_65] : memref<8x2x256xf32, #tpu.memory_space<vmem>>, vector<1x2x256xf32>
    %243 = vector.shape_cast %242 : vector<1x2x256xf32> to vector<2x256xf32>
    %244 = vector.extract_strided_slice %243 {offsets = [0, 128], sizes = [2, 128], strides = [1, 1]} : vector<2x256xf32> to vector<2x128xf32>
    %245 = arith.addf %240, %244 : vector<2x128xf32>
    %246 = vector.extract_strided_slice %239 {offsets = [0, 0], sizes = [2, 96], strides = [1, 1]} : vector<2x128xf32> to vector<2x96xf32>
    %247 = arith.negf %246 : vector<2x96xf32>
    %248 = math.exp %247 : vector<2x96xf32>
    %cst_66 = arith.constant 1.000000e+00 : f32
    %249 = vector.broadcast %cst_66 : f32 to vector<2x96xf32>
    %250 = arith.addf %249, %248 : vector<2x96xf32>
    %251 = arith.divf %249, %250 : vector<2x96xf32>
    %252 = vector.extract_strided_slice %239 {offsets = [0, 96], sizes = [2, 32], strides = [1, 1]} : vector<2x128xf32> to vector<2x32xf32>
    %253 = math.tanh %252 : vector<2x32xf32>
    %254 = vector.extract_strided_slice %251 {offsets = [0, 32], sizes = [2, 32], strides = [1, 1]} : vector<2x96xf32> to vector<2x32xf32>
    %255 = arith.mulf %254, %203 : vector<2x32xf32>
    %256 = vector.extract_strided_slice %251 {offsets = [0, 0], sizes = [2, 32], strides = [1, 1]} : vector<2x96xf32> to vector<2x32xf32>
    %257 = arith.mulf %256, %253 : vector<2x32xf32>
    %258 = arith.addf %255, %257 : vector<2x32xf32>
    %259 = vector.extract_strided_slice %251 {offsets = [0, 64], sizes = [2, 32], strides = [1, 1]} : vector<2x96xf32> to vector<2x32xf32>
    %260 = math.tanh %258 : vector<2x32xf32>
    %261 = arith.mulf %259, %260 : vector<2x32xf32>
    %262 = vector.extract_strided_slice %245 {offsets = [0, 0], sizes = [2, 96], strides = [1, 1]} : vector<2x128xf32> to vector<2x96xf32>
    %263 = arith.negf %262 : vector<2x96xf32>
    %264 = math.exp %263 : vector<2x96xf32>
    %cst_67 = arith.constant 1.000000e+00 : f32
    %265 = vector.broadcast %cst_67 : f32 to vector<2x96xf32>
    %266 = arith.addf %265, %264 : vector<2x96xf32>
    %267 = arith.divf %265, %266 : vector<2x96xf32>
    %268 = vector.extract_strided_slice %245 {offsets = [0, 96], sizes = [2, 32], strides = [1, 1]} : vector<2x128xf32> to vector<2x32xf32>
    %269 = math.tanh %268 : vector<2x32xf32>
    %270 = vector.extract_strided_slice %267 {offsets = [0, 32], sizes = [2, 32], strides = [1, 1]} : vector<2x96xf32> to vector<2x32xf32>
    %271 = arith.mulf %270, %219 : vector<2x32xf32>
    %272 = vector.extract_strided_slice %267 {offsets = [0, 0], sizes = [2, 32], strides = [1, 1]} : vector<2x96xf32> to vector<2x32xf32>
    %273 = arith.mulf %272, %269 : vector<2x32xf32>
    %274 = arith.addf %271, %273 : vector<2x32xf32>
    %275 = vector.extract_strided_slice %267 {offsets = [0, 64], sizes = [2, 32], strides = [1, 1]} : vector<2x96xf32> to vector<2x32xf32>
    %276 = math.tanh %274 : vector<2x32xf32>
    %277 = arith.mulf %275, %276 : vector<2x32xf32>
    %278 = arith.index_cast %c4_i32 : i32 to index
    %c0_68 = arith.constant 0 : index
    %c0_69 = arith.constant 0 : index
    %279 = vector.load %arg49[%278, %c0_68, %c0_69] : memref<8x2x32xf32, #tpu.memory_space<vmem>>, vector<1x2x32xf32>
    %280 = vector.shape_cast %279 : vector<1x2x32xf32> to vector<2x32xf32>
    %281 = vector.shape_cast %261 : vector<2x32xf32> to vector<1x2x32xf32>
    tpu.vector_store %arg49[%278, %c0_68, %c0_69], %281 {strides = array<i32>} : memref<8x2x32xf32, #tpu.memory_space<vmem>>, vector<1x2x32xf32>,
    %282 = arith.index_cast %232 : i32 to index
    %c0_70 = arith.constant 0 : index
    %c0_71 = arith.constant 0 : index
    %283 = vector.load %arg50[%282, %c0_70, %c0_71] : memref<8x2x32xf32, #tpu.memory_space<vmem>>, vector<1x2x32xf32>
    %284 = vector.shape_cast %283 : vector<1x2x32xf32> to vector<2x32xf32>
    %285 = vector.shape_cast %277 : vector<2x32xf32> to vector<1x2x32xf32>
    tpu.vector_store %arg50[%282, %c0_70, %c0_71], %285 {strides = array<i32>} : memref<8x2x32xf32, #tpu.memory_space<vmem>>, vector<1x2x32xf32>,
    %286 = tpu.concatenate %261, %277 in 1 : vector<2x32xf32>, vector<2x32xf32> -> vector<2x64xf32>
    %c5_i32 = arith.constant 5 : i32
    %c7_i32_72 = arith.constant 7 : i32
    %287 = arith.subi %c7_i32_72, %c5_i32 : i32
    %cst_73 = arith.constant dense<0.000000e+00> : vector<2x256xf32>
    %288 = tpu.matmul %286, %8, %cst_73 {dimension_numbers = #tpu.dot_dimension_numbers<[1], [0], [0], [1], [0, 0, 1, 1], [], []>} : vector<2x64xf32>, vector<64x256xf32>, vector<2x256xf32> -> vector<2x256xf32>
    %289 = vector.extract_strided_slice %288 {offsets = [0, 0], sizes = [2, 128], strides = [1, 1]} : vector<2x256xf32> to vector<2x128xf32>
    %290 = arith.index_cast %c5_i32 : i32 to index
    %c0_74 = arith.constant 0 : index
    %c0_75 = arith.constant 0 : index
    %291 = vector.load %arg48[%290, %c0_74, %c0_75] : memref<8x2x256xf32, #tpu.memory_space<vmem>>, vector<1x2x256xf32>
    %292 = vector.shape_cast %291 : vector<1x2x256xf32> to vector<2x256xf32>
    %293 = vector.extract_strided_slice %292 {offsets = [0, 0], sizes = [2, 128], strides = [1, 1]} : vector<2x256xf32> to vector<2x128xf32>
    %294 = arith.addf %289, %293 : vector<2x128xf32>
    %295 = vector.extract_strided_slice %288 {offsets = [0, 128], sizes = [2, 128], strides = [1, 1]} : vector<2x256xf32> to vector<2x128xf32>
    %296 = arith.index_cast %287 : i32 to index
    %c0_76 = arith.constant 0 : index
    %c0_77 = arith.constant 0 : index
    %297 = vector.load %arg48[%296, %c0_76, %c0_77] : memref<8x2x256xf32, #tpu.memory_space<vmem>>, vector<1x2x256xf32>
    %298 = vector.shape_cast %297 : vector<1x2x256xf32> to vector<2x256xf32>
    %299 = vector.extract_strided_slice %298 {offsets = [0, 128], sizes = [2, 128], strides = [1, 1]} : vector<2x256xf32> to vector<2x128xf32>
    %300 = arith.addf %295, %299 : vector<2x128xf32>
    %301 = vector.extract_strided_slice %294 {offsets = [0, 0], sizes = [2, 96], strides = [1, 1]} : vector<2x128xf32> to vector<2x96xf32>
    %302 = arith.negf %301 : vector<2x96xf32>
    %303 = math.exp %302 : vector<2x96xf32>
    %cst_78 = arith.constant 1.000000e+00 : f32
    %304 = vector.broadcast %cst_78 : f32 to vector<2x96xf32>
    %305 = arith.addf %304, %303 : vector<2x96xf32>
    %306 = arith.divf %304, %305 : vector<2x96xf32>
    %307 = vector.extract_strided_slice %294 {offsets = [0, 96], sizes = [2, 32], strides = [1, 1]} : vector<2x128xf32> to vector<2x32xf32>
    %308 = math.tanh %307 : vector<2x32xf32>
    %309 = vector.extract_strided_slice %306 {offsets = [0, 32], sizes = [2, 32], strides = [1, 1]} : vector<2x96xf32> to vector<2x32xf32>
    %310 = arith.mulf %309, %258 : vector<2x32xf32>
    %311 = vector.extract_strided_slice %306 {offsets = [0, 0], sizes = [2, 32], strides = [1, 1]} : vector<2x96xf32> to vector<2x32xf32>
    %312 = arith.mulf %311, %308 : vector<2x32xf32>
    %313 = arith.addf %310, %312 : vector<2x32xf32>
    %314 = vector.extract_strided_slice %306 {offsets = [0, 64], sizes = [2, 32], strides = [1, 1]} : vector<2x96xf32> to vector<2x32xf32>
    %315 = math.tanh %313 : vector<2x32xf32>
    %316 = arith.mulf %314, %315 : vector<2x32xf32>
    %317 = vector.extract_strided_slice %300 {offsets = [0, 0], sizes = [2, 96], strides = [1, 1]} : vector<2x128xf32> to vector<2x96xf32>
    %318 = arith.negf %317 : vector<2x96xf32>
    %319 = math.exp %318 : vector<2x96xf32>
    %cst_79 = arith.constant 1.000000e+00 : f32
    %320 = vector.broadcast %cst_79 : f32 to vector<2x96xf32>
    %321 = arith.addf %320, %319 : vector<2x96xf32>
    %322 = arith.divf %320, %321 : vector<2x96xf32>
    %323 = vector.extract_strided_slice %300 {offsets = [0, 96], sizes = [2, 32], strides = [1, 1]} : vector<2x128xf32> to vector<2x32xf32>
    %324 = math.tanh %323 : vector<2x32xf32>
    %325 = vector.extract_strided_slice %322 {offsets = [0, 32], sizes = [2, 32], strides = [1, 1]} : vector<2x96xf32> to vector<2x32xf32>
    %326 = arith.mulf %325, %274 : vector<2x32xf32>
    %327 = vector.extract_strided_slice %322 {offsets = [0, 0], sizes = [2, 32], strides = [1, 1]} : vector<2x96xf32> to vector<2x32xf32>
    %328 = arith.mulf %327, %324 : vector<2x32xf32>
    %329 = arith.addf %326, %328 : vector<2x32xf32>
    %330 = vector.extract_strided_slice %322 {offsets = [0, 64], sizes = [2, 32], strides = [1, 1]} : vector<2x96xf32> to vector<2x32xf32>
    %331 = math.tanh %329 : vector<2x32xf32>
    %332 = arith.mulf %330, %331 : vector<2x32xf32>
    %333 = arith.index_cast %c5_i32 : i32 to index
    %c0_80 = arith.constant 0 : index
    %c0_81 = arith.constant 0 : index
    %334 = vector.load %arg49[%333, %c0_80, %c0_81] : memref<8x2x32xf32, #tpu.memory_space<vmem>>, vector<1x2x32xf32>
    %335 = vector.shape_cast %334 : vector<1x2x32xf32> to vector<2x32xf32>
    %336 = vector.shape_cast %316 : vector<2x32xf32> to vector<1x2x32xf32>
    tpu.vector_store %arg49[%333, %c0_80, %c0_81], %336 {strides = array<i32>} : memref<8x2x32xf32, #tpu.memory_space<vmem>>, vector<1x2x32xf32>,
    %337 = arith.index_cast %287 : i32 to index
    %c0_82 = arith.constant 0 : index
    %c0_83 = arith.constant 0 : index
    %338 = vector.load %arg50[%337, %c0_82, %c0_83] : memref<8x2x32xf32, #tpu.memory_space<vmem>>, vector<1x2x32xf32>
    %339 = vector.shape_cast %338 : vector<1x2x32xf32> to vector<2x32xf32>
    %340 = vector.shape_cast %332 : vector<2x32xf32> to vector<1x2x32xf32>
    tpu.vector_store %arg50[%337, %c0_82, %c0_83], %340 {strides = array<i32>} : memref<8x2x32xf32, #tpu.memory_space<vmem>>, vector<1x2x32xf32>,
    %341 = tpu.concatenate %316, %332 in 1 : vector<2x32xf32>, vector<2x32xf32> -> vector<2x64xf32>
    %c6_i32 = arith.constant 6 : i32
    %c7_i32_84 = arith.constant 7 : i32
    %342 = arith.subi %c7_i32_84, %c6_i32 : i32
    %cst_85 = arith.constant dense<0.000000e+00> : vector<2x256xf32>
    %343 = tpu.matmul %341, %8, %cst_85 {dimension_numbers = #tpu.dot_dimension_numbers<[1], [0], [0], [1], [0, 0, 1, 1], [], []>} : vector<2x64xf32>, vector<64x256xf32>, vector<2x256xf32> -> vector<2x256xf32>
    %344 = vector.extract_strided_slice %343 {offsets = [0, 0], sizes = [2, 128], strides = [1, 1]} : vector<2x256xf32> to vector<2x128xf32>
    %345 = arith.index_cast %c6_i32 : i32 to index
    %c0_86 = arith.constant 0 : index
    %c0_87 = arith.constant 0 : index
    %346 = vector.load %arg48[%345, %c0_86, %c0_87] : memref<8x2x256xf32, #tpu.memory_space<vmem>>, vector<1x2x256xf32>
    %347 = vector.shape_cast %346 : vector<1x2x256xf32> to vector<2x256xf32>
    %348 = vector.extract_strided_slice %347 {offsets = [0, 0], sizes = [2, 128], strides = [1, 1]} : vector<2x256xf32> to vector<2x128xf32>
    %349 = arith.addf %344, %348 : vector<2x128xf32>
    %350 = vector.extract_strided_slice %343 {offsets = [0, 128], sizes = [2, 128], strides = [1, 1]} : vector<2x256xf32> to vector<2x128xf32>
    %351 = arith.index_cast %342 : i32 to index
    %c0_88 = arith.constant 0 : index
    %c0_89 = arith.constant 0 : index
    %352 = vector.load %arg48[%351, %c0_88, %c0_89] : memref<8x2x256xf32, #tpu.memory_space<vmem>>, vector<1x2x256xf32>
    %353 = vector.shape_cast %352 : vector<1x2x256xf32> to vector<2x256xf32>
    %354 = vector.extract_strided_slice %353 {offsets = [0, 128], sizes = [2, 128], strides = [1, 1]} : vector<2x256xf32> to vector<2x128xf32>
    %355 = arith.addf %350, %354 : vector<2x128xf32>
    %356 = vector.extract_strided_slice %349 {offsets = [0, 0], sizes = [2, 96], strides = [1, 1]} : vector<2x128xf32> to vector<2x96xf32>
    %357 = arith.negf %356 : vector<2x96xf32>
    %358 = math.exp %357 : vector<2x96xf32>
    %cst_90 = arith.constant 1.000000e+00 : f32
    %359 = vector.broadcast %cst_90 : f32 to vector<2x96xf32>
    %360 = arith.addf %359, %358 : vector<2x96xf32>
    %361 = arith.divf %359, %360 : vector<2x96xf32>
    %362 = vector.extract_strided_slice %349 {offsets = [0, 96], sizes = [2, 32], strides = [1, 1]} : vector<2x128xf32> to vector<2x32xf32>
    %363 = math.tanh %362 : vector<2x32xf32>
    %364 = vector.extract_strided_slice %361 {offsets = [0, 32], sizes = [2, 32], strides = [1, 1]} : vector<2x96xf32> to vector<2x32xf32>
    %365 = arith.mulf %364, %313 : vector<2x32xf32>
    %366 = vector.extract_strided_slice %361 {offsets = [0, 0], sizes = [2, 32], strides = [1, 1]} : vector<2x96xf32> to vector<2x32xf32>
    %367 = arith.mulf %366, %363 : vector<2x32xf32>
    %368 = arith.addf %365, %367 : vector<2x32xf32>
    %369 = vector.extract_strided_slice %361 {offsets = [0, 64], sizes = [2, 32], strides = [1, 1]} : vector<2x96xf32> to vector<2x32xf32>
    %370 = math.tanh %368 : vector<2x32xf32>
    %371 = arith.mulf %369, %370 : vector<2x32xf32>
    %372 = vector.extract_strided_slice %355 {offsets = [0, 0], sizes = [2, 96], strides = [1, 1]} : vector<2x128xf32> to vector<2x96xf32>
    %373 = arith.negf %372 : vector<2x96xf32>
    %374 = math.exp %373 : vector<2x96xf32>
    %cst_91 = arith.constant 1.000000e+00 : f32
    %375 = vector.broadcast %cst_91 : f32 to vector<2x96xf32>
    %376 = arith.addf %375, %374 : vector<2x96xf32>
    %377 = arith.divf %375, %376 : vector<2x96xf32>
    %378 = vector.extract_strided_slice %355 {offsets = [0, 96], sizes = [2, 32], strides = [1, 1]} : vector<2x128xf32> to vector<2x32xf32>
    %379 = math.tanh %378 : vector<2x32xf32>
    %380 = vector.extract_strided_slice %377 {offsets = [0, 32], sizes = [2, 32], strides = [1, 1]} : vector<2x96xf32> to vector<2x32xf32>
    %381 = arith.mulf %380, %329 : vector<2x32xf32>
    %382 = vector.extract_strided_slice %377 {offsets = [0, 0], sizes = [2, 32], strides = [1, 1]} : vector<2x96xf32> to vector<2x32xf32>
    %383 = arith.mulf %382, %379 : vector<2x32xf32>
    %384 = arith.addf %381, %383 : vector<2x32xf32>
    %385 = vector.extract_strided_slice %377 {offsets = [0, 64], sizes = [2, 32], strides = [1, 1]} : vector<2x96xf32> to vector<2x32xf32>
    %386 = math.tanh %384 : vector<2x32xf32>
    %387 = arith.mulf %385, %386 : vector<2x32xf32>
    %388 = arith.index_cast %c6_i32 : i32 to index
    %c0_92 = arith.constant 0 : index
    %c0_93 = arith.constant 0 : index
    %389 = vector.load %arg49[%388, %c0_92, %c0_93] : memref<8x2x32xf32, #tpu.memory_space<vmem>>, vector<1x2x32xf32>
    %390 = vector.shape_cast %389 : vector<1x2x32xf32> to vector<2x32xf32>
    %391 = vector.shape_cast %371 : vector<2x32xf32> to vector<1x2x32xf32>
    tpu.vector_store %arg49[%388, %c0_92, %c0_93], %391 {strides = array<i32>} : memref<8x2x32xf32, #tpu.memory_space<vmem>>, vector<1x2x32xf32>,
    %392 = arith.index_cast %342 : i32 to index
    %c0_94 = arith.constant 0 : index
    %c0_95 = arith.constant 0 : index
    %393 = vector.load %arg50[%392, %c0_94, %c0_95] : memref<8x2x32xf32, #tpu.memory_space<vmem>>, vector<1x2x32xf32>
    %394 = vector.shape_cast %393 : vector<1x2x32xf32> to vector<2x32xf32>
    %395 = vector.shape_cast %387 : vector<2x32xf32> to vector<1x2x32xf32>
    tpu.vector_store %arg50[%392, %c0_94, %c0_95], %395 {strides = array<i32>} : memref<8x2x32xf32, #tpu.memory_space<vmem>>, vector<1x2x32xf32>,
    %396 = tpu.concatenate %371, %387 in 1 : vector<2x32xf32>, vector<2x32xf32> -> vector<2x64xf32>
    %c7_i32_96 = arith.constant 7 : i32
    %c7_i32_97 = arith.constant 7 : i32
    %397 = arith.subi %c7_i32_97, %c7_i32_96 : i32
    %cst_98 = arith.constant dense<0.000000e+00> : vector<2x256xf32>
    %398 = tpu.matmul %396, %8, %cst_98 {dimension_numbers = #tpu.dot_dimension_numbers<[1], [0], [0], [1], [0, 0, 1, 1], [], []>} : vector<2x64xf32>, vector<64x256xf32>, vector<2x256xf32> -> vector<2x256xf32>
    %399 = vector.extract_strided_slice %398 {offsets = [0, 0], sizes = [2, 128], strides = [1, 1]} : vector<2x256xf32> to vector<2x128xf32>
    %400 = arith.index_cast %c7_i32_96 : i32 to index
    %c0_99 = arith.constant 0 : index
    %c0_100 = arith.constant 0 : index
    %401 = vector.load %arg48[%400, %c0_99, %c0_100] : memref<8x2x256xf32, #tpu.memory_space<vmem>>, vector<1x2x256xf32>
    %402 = vector.shape_cast %401 : vector<1x2x256xf32> to vector<2x256xf32>
    %403 = vector.extract_strided_slice %402 {offsets = [0, 0], sizes = [2, 128], strides = [1, 1]} : vector<2x256xf32> to vector<2x128xf32>
    %404 = arith.addf %399, %403 : vector<2x128xf32>
    %405 = vector.extract_strided_slice %398 {offsets = [0, 128], sizes = [2, 128], strides = [1, 1]} : vector<2x256xf32> to vector<2x128xf32>
    %406 = arith.index_cast %397 : i32 to index
    %c0_101 = arith.constant 0 : index
    %c0_102 = arith.constant 0 : index
    %407 = vector.load %arg48[%406, %c0_101, %c0_102] : memref<8x2x256xf32, #tpu.memory_space<vmem>>, vector<1x2x256xf32>
    %408 = vector.shape_cast %407 : vector<1x2x256xf32> to vector<2x256xf32>
    %409 = vector.extract_strided_slice %408 {offsets = [0, 128], sizes = [2, 128], strides = [1, 1]} : vector<2x256xf32> to vector<2x128xf32>
    %410 = arith.addf %405, %409 : vector<2x128xf32>
    %411 = vector.extract_strided_slice %404 {offsets = [0, 0], sizes = [2, 96], strides = [1, 1]} : vector<2x128xf32> to vector<2x96xf32>
    %412 = arith.negf %411 : vector<2x96xf32>
    %413 = math.exp %412 : vector<2x96xf32>
    %cst_103 = arith.constant 1.000000e+00 : f32
    %414 = vector.broadcast %cst_103 : f32 to vector<2x96xf32>
    %415 = arith.addf %414, %413 : vector<2x96xf32>
    %416 = arith.divf %414, %415 : vector<2x96xf32>
    %417 = vector.extract_strided_slice %404 {offsets = [0, 96], sizes = [2, 32], strides = [1, 1]} : vector<2x128xf32> to vector<2x32xf32>
    %418 = math.tanh %417 : vector<2x32xf32>
    %419 = vector.extract_strided_slice %416 {offsets = [0, 32], sizes = [2, 32], strides = [1, 1]} : vector<2x96xf32> to vector<2x32xf32>
    %420 = arith.mulf %419, %368 : vector<2x32xf32>
    %421 = vector.extract_strided_slice %416 {offsets = [0, 0], sizes = [2, 32], strides = [1, 1]} : vector<2x96xf32> to vector<2x32xf32>
    %422 = arith.mulf %421, %418 : vector<2x32xf32>
    %423 = arith.addf %420, %422 : vector<2x32xf32>
    %424 = vector.extract_strided_slice %416 {offsets = [0, 64], sizes = [2, 32], strides = [1, 1]} : vector<2x96xf32> to vector<2x32xf32>
    %425 = math.tanh %423 : vector<2x32xf32>
    %426 = arith.mulf %424, %425 : vector<2x32xf32>
    %427 = vector.extract_strided_slice %410 {offsets = [0, 0], sizes = [2, 96], strides = [1, 1]} : vector<2x128xf32> to vector<2x96xf32>
    %428 = arith.negf %427 : vector<2x96xf32>
    %429 = math.exp %428 : vector<2x96xf32>
    %cst_104 = arith.constant 1.000000e+00 : f32
    %430 = vector.broadcast %cst_104 : f32 to vector<2x96xf32>
    %431 = arith.addf %430, %429 : vector<2x96xf32>
    %432 = arith.divf %430, %431 : vector<2x96xf32>
    %433 = vector.extract_strided_slice %410 {offsets = [0, 96], sizes = [2, 32], strides = [1, 1]} : vector<2x128xf32> to vector<2x32xf32>
    %434 = math.tanh %433 : vector<2x32xf32>
    %435 = vector.extract_strided_slice %432 {offsets = [0, 32], sizes = [2, 32], strides = [1, 1]} : vector<2x96xf32> to vector<2x32xf32>
    %436 = arith.mulf %435, %384 : vector<2x32xf32>
    %437 = vector.extract_strided_slice %432 {offsets = [0, 0], sizes = [2, 32], strides = [1, 1]} : vector<2x96xf32> to vector<2x32xf32>
    %438 = arith.mulf %437, %434 : vector<2x32xf32>
    %439 = arith.addf %436, %438 : vector<2x32xf32>
    %440 = vector.extract_strided_slice %432 {offsets = [0, 64], sizes = [2, 32], strides = [1, 1]} : vector<2x96xf32> to vector<2x32xf32>
    %441 = math.tanh %439 : vector<2x32xf32>
    %442 = arith.mulf %440, %441 : vector<2x32xf32>
    %443 = arith.index_cast %c7_i32_96 : i32 to index
    %c0_105 = arith.constant 0 : index
    %c0_106 = arith.constant 0 : index
    %444 = vector.load %arg49[%443, %c0_105, %c0_106] : memref<8x2x32xf32, #tpu.memory_space<vmem>>, vector<1x2x32xf32>
    %445 = vector.shape_cast %444 : vector<1x2x32xf32> to vector<2x32xf32>
    %446 = vector.shape_cast %426 : vector<2x32xf32> to vector<1x2x32xf32>
    tpu.vector_store %arg49[%443, %c0_105, %c0_106], %446 {strides = array<i32>} : memref<8x2x32xf32, #tpu.memory_space<vmem>>, vector<1x2x32xf32>,
    %447 = arith.index_cast %397 : i32 to index
    %c0_107 = arith.constant 0 : index
    %c0_108 = arith.constant 0 : index
    %448 = vector.load %arg50[%447, %c0_107, %c0_108] : memref<8x2x32xf32, #tpu.memory_space<vmem>>, vector<1x2x32xf32>
    %449 = vector.shape_cast %448 : vector<1x2x32xf32> to vector<2x32xf32>
    %450 = vector.shape_cast %442 : vector<2x32xf32> to vector<1x2x32xf32>
    tpu.vector_store %arg50[%447, %c0_107, %c0_108], %450 {strides = array<i32>} : memref<8x2x32xf32, #tpu.memory_space<vmem>>, vector<1x2x32xf32>,
    %451 = tpu.concatenate %426, %442 in 1 : vector<2x32xf32>, vector<2x32xf32> -> vector<2x64xf32>
    %c8_i32 = arith.constant 8 : i32
    %c0_109 = arith.constant 0 : index
    %c0_110 = arith.constant 0 : index
    %c0_111 = arith.constant 0 : index
    %452 = vector.load %arg49[%c0_109, %c0_110, %c0_111] : memref<8x2x32xf32, #tpu.memory_space<vmem>>, vector<8x2x32xf32>
    %c0_112 = arith.constant 0 : index
    %c0_113 = arith.constant 0 : index
    %c0_114 = arith.constant 0 : index
    %453 = vector.load %arg50[%c0_112, %c0_113, %c0_114] : memref<8x2x32xf32, #tpu.memory_space<vmem>>, vector<8x2x32xf32>
    %454 = tpu.concatenate %452, %453 in 2 : vector<8x2x32xf32>, vector<8x2x32xf32> -> vector<8x2x64xf32>
    %455 = vector.shape_cast %454 : vector<8x2x64xf32> to vector<16x64xf32>
    %c0_115 = arith.constant 0 : index
    %c0_116 = arith.constant 0 : index
    %456 = vector.load %arg5[%c0_115, %c0_116] : memref<64x256xf32, #tpu.memory_space<vmem>>, vector<64x256xf32>
    %cst_117 = arith.constant dense<0.000000e+00> : vector<16x256xf32>
    %457 = tpu.matmul %455, %456, %cst_117 {dimension_numbers = #tpu.dot_dimension_numbers<[1], [0], [0], [1], [0, 0, 1, 1], [], []>} : vector<16x64xf32>, vector<64x256xf32>, vector<16x256xf32> -> vector<16x256xf32>
    %c0_118 = arith.constant 0 : index
    %c0_119 = arith.constant 0 : index
    %458 = vector.load %arg7[%c0_118, %c0_119] : memref<1x256xf32, #tpu.memory_space<vmem>>, vector<1x256xf32>
    %459 = vector.broadcast %458 : vector<1x256xf32> to vector<16x256xf32>
    %460 = arith.addf %457, %459 : vector<16x256xf32>
    %461 = vector.shape_cast %460 : vector<16x256xf32> to vector<8x2x256xf32>
    %c0_120 = arith.constant 0 : index
    %c0_121 = arith.constant 0 : index
    %c0_122 = arith.constant 0 : index
    %462 = vector.load %arg48[%c0_120, %c0_121, %c0_122] : memref<8x2x256xf32, #tpu.memory_space<vmem>>, vector<8x2x256xf32>
    tpu.vector_store %arg48[%c0_120, %c0_121, %c0_122], %461 {strides = array<i32>} : memref<8x2x256xf32, #tpu.memory_space<vmem>>, vector<8x2x256xf32>,
    %c0_123 = arith.constant 0 : index
    %c0_124 = arith.constant 0 : index
    %463 = vector.load %arg6[%c0_123, %c0_124] : memref<64x256xf32, #tpu.memory_space<vmem>>, vector<64x256xf32>
    %cst_125 = arith.constant 0.000000e+00 : f32
    %464 = vector.broadcast %cst_125 : f32 to vector<2x64xf32>
    %cst_126 = arith.constant 0.000000e+00 : f32
    %465 = vector.broadcast %cst_126 : f32 to vector<2x32xf32>
    %cst_127 = arith.constant 0.000000e+00 : f32
    %466 = vector.broadcast %cst_127 : f32 to vector<2x32xf32>
    %c0_i32_128 = arith.constant 0 : i32
    %c7_i32_129 = arith.constant 7 : i32
    %467 = arith.subi %c7_i32_129, %c0_i32_128 : i32
    %cst_130 = arith.constant dense<0.000000e+00> : vector<2x256xf32>
    %468 = tpu.matmul %464, %463, %cst_130 {dimension_numbers = #tpu.dot_dimension_numbers<[1], [0], [0], [1], [0, 0, 1, 1], [], []>} : vector<2x64xf32>, vector<64x256xf32>, vector<2x256xf32> -> vector<2x256xf32>
    %469 = vector.extract_strided_slice %468 {offsets = [0, 0], sizes = [2, 128], strides = [1, 1]} : vector<2x256xf32> to vector<2x128xf32>
    %470 = arith.index_cast %c0_i32_128 : i32 to index
    %c0_131 = arith.constant 0 : index
    %c0_132 = arith.constant 0 : index
    %471 = vector.load %arg48[%470, %c0_131, %c0_132] : memref<8x2x256xf32, #tpu.memory_space<vmem>>, vector<1x2x256xf32>
    %472 = vector.shape_cast %471 : vector<1x2x256xf32> to vector<2x256xf32>
    %473 = vector.extract_strided_slice %472 {offsets = [0, 0], sizes = [2, 128], strides = [1, 1]} : vector<2x256xf32> to vector<2x128xf32>
    %474 = arith.addf %469, %473 : vector<2x128xf32>
    %475 = vector.extract_strided_slice %468 {offsets = [0, 128], sizes = [2, 128], strides = [1, 1]} : vector<2x256xf32> to vector<2x128xf32>
    %476 = arith.index_cast %467 : i32 to index
    %c0_133 = arith.constant 0 : index
    %c0_134 = arith.constant 0 : index
    %477 = vector.load %arg48[%476, %c0_133, %c0_134] : memref<8x2x256xf32, #tpu.memory_space<vmem>>, vector<1x2x256xf32>
    %478 = vector.shape_cast %477 : vector<1x2x256xf32> to vector<2x256xf32>
    %479 = vector.extract_strided_slice %478 {offsets = [0, 128], sizes = [2, 128], strides = [1, 1]} : vector<2x256xf32> to vector<2x128xf32>
    %480 = arith.addf %475, %479 : vector<2x128xf32>
    %481 = vector.extract_strided_slice %474 {offsets = [0, 0], sizes = [2, 96], strides = [1, 1]} : vector<2x128xf32> to vector<2x96xf32>
    %482 = arith.negf %481 : vector<2x96xf32>
    %483 = math.exp %482 : vector<2x96xf32>
    %cst_135 = arith.constant 1.000000e+00 : f32
    %484 = vector.broadcast %cst_135 : f32 to vector<2x96xf32>
    %485 = arith.addf %484, %483 : vector<2x96xf32>
    %486 = arith.divf %484, %485 : vector<2x96xf32>
    %487 = vector.extract_strided_slice %474 {offsets = [0, 96], sizes = [2, 32], strides = [1, 1]} : vector<2x128xf32> to vector<2x32xf32>
    %488 = math.tanh %487 : vector<2x32xf32>
    %489 = vector.extract_strided_slice %486 {offsets = [0, 32], sizes = [2, 32], strides = [1, 1]} : vector<2x96xf32> to vector<2x32xf32>
    %490 = arith.mulf %489, %465 : vector<2x32xf32>
    %491 = vector.extract_strided_slice %486 {offsets = [0, 0], sizes = [2, 32], strides = [1, 1]} : vector<2x96xf32> to vector<2x32xf32>
    %492 = arith.mulf %491, %488 : vector<2x32xf32>
    %493 = arith.addf %490, %492 : vector<2x32xf32>
    %494 = vector.extract_strided_slice %486 {offsets = [0, 64], sizes = [2, 32], strides = [1, 1]} : vector<2x96xf32> to vector<2x32xf32>
    %495 = math.tanh %493 : vector<2x32xf32>
    %496 = arith.mulf %494, %495 : vector<2x32xf32>
    %497 = vector.extract_strided_slice %480 {offsets = [0, 0], sizes = [2, 96], strides = [1, 1]} : vector<2x128xf32> to vector<2x96xf32>
    %498 = arith.negf %497 : vector<2x96xf32>
    %499 = math.exp %498 : vector<2x96xf32>
    %cst_136 = arith.constant 1.000000e+00 : f32
    %500 = vector.broadcast %cst_136 : f32 to vector<2x96xf32>
    %501 = arith.addf %500, %499 : vector<2x96xf32>
    %502 = arith.divf %500, %501 : vector<2x96xf32>
    %503 = vector.extract_strided_slice %480 {offsets = [0, 96], sizes = [2, 32], strides = [1, 1]} : vector<2x128xf32> to vector<2x32xf32>
    %504 = math.tanh %503 : vector<2x32xf32>
    %505 = vector.extract_strided_slice %502 {offsets = [0, 32], sizes = [2, 32], strides = [1, 1]} : vector<2x96xf32> to vector<2x32xf32>
    %506 = arith.mulf %505, %466 : vector<2x32xf32>
    %507 = vector.extract_strided_slice %502 {offsets = [0, 0], sizes = [2, 32], strides = [1, 1]} : vector<2x96xf32> to vector<2x32xf32>
    %508 = arith.mulf %507, %504 : vector<2x32xf32>
    %509 = arith.addf %506, %508 : vector<2x32xf32>
    %510 = vector.extract_strided_slice %502 {offsets = [0, 64], sizes = [2, 32], strides = [1, 1]} : vector<2x96xf32> to vector<2x32xf32>
    %511 = math.tanh %509 : vector<2x32xf32>
    %512 = arith.mulf %510, %511 : vector<2x32xf32>
    %513 = arith.index_cast %c0_i32_128 : i32 to index
    %c0_137 = arith.constant 0 : index
    %c0_138 = arith.constant 0 : index
    %514 = vector.load %arg49[%513, %c0_137, %c0_138] : memref<8x2x32xf32, #tpu.memory_space<vmem>>, vector<1x2x32xf32>
    %515 = vector.shape_cast %514 : vector<1x2x32xf32> to vector<2x32xf32>
    %516 = vector.shape_cast %496 : vector<2x32xf32> to vector<1x2x32xf32>
    tpu.vector_store %arg49[%513, %c0_137, %c0_138], %516 {strides = array<i32>} : memref<8x2x32xf32, #tpu.memory_space<vmem>>, vector<1x2x32xf32>,
    %517 = arith.index_cast %467 : i32 to index
    %c0_139 = arith.constant 0 : index
    %c0_140 = arith.constant 0 : index
    %518 = vector.load %arg50[%517, %c0_139, %c0_140] : memref<8x2x32xf32, #tpu.memory_space<vmem>>, vector<1x2x32xf32>
    %519 = vector.shape_cast %518 : vector<1x2x32xf32> to vector<2x32xf32>
    %520 = vector.shape_cast %512 : vector<2x32xf32> to vector<1x2x32xf32>
    tpu.vector_store %arg50[%517, %c0_139, %c0_140], %520 {strides = array<i32>} : memref<8x2x32xf32, #tpu.memory_space<vmem>>, vector<1x2x32xf32>,
    %521 = tpu.concatenate %496, %512 in 1 : vector<2x32xf32>, vector<2x32xf32> -> vector<2x64xf32>
    %c1_i32_141 = arith.constant 1 : i32
    %c7_i32_142 = arith.constant 7 : i32
    %522 = arith.subi %c7_i32_142, %c1_i32_141 : i32
    %cst_143 = arith.constant dense<0.000000e+00> : vector<2x256xf32>
    %523 = tpu.matmul %521, %463, %cst_143 {dimension_numbers = #tpu.dot_dimension_numbers<[1], [0], [0], [1], [0, 0, 1, 1], [], []>} : vector<2x64xf32>, vector<64x256xf32>, vector<2x256xf32> -> vector<2x256xf32>
    %524 = vector.extract_strided_slice %523 {offsets = [0, 0], sizes = [2, 128], strides = [1, 1]} : vector<2x256xf32> to vector<2x128xf32>
    %525 = arith.index_cast %c1_i32_141 : i32 to index
    %c0_144 = arith.constant 0 : index
    %c0_145 = arith.constant 0 : index
    %526 = vector.load %arg48[%525, %c0_144, %c0_145] : memref<8x2x256xf32, #tpu.memory_space<vmem>>, vector<1x2x256xf32>
    %527 = vector.shape_cast %526 : vector<1x2x256xf32> to vector<2x256xf32>
    %528 = vector.extract_strided_slice %527 {offsets = [0, 0], sizes = [2, 128], strides = [1, 1]} : vector<2x256xf32> to vector<2x128xf32>
    %529 = arith.addf %524, %528 : vector<2x128xf32>
    %530 = vector.extract_strided_slice %523 {offsets = [0, 128], sizes = [2, 128], strides = [1, 1]} : vector<2x256xf32> to vector<2x128xf32>
    %531 = arith.index_cast %522 : i32 to index
    %c0_146 = arith.constant 0 : index
    %c0_147 = arith.constant 0 : index
    %532 = vector.load %arg48[%531, %c0_146, %c0_147] : memref<8x2x256xf32, #tpu.memory_space<vmem>>, vector<1x2x256xf32>
    %533 = vector.shape_cast %532 : vector<1x2x256xf32> to vector<2x256xf32>
    %534 = vector.extract_strided_slice %533 {offsets = [0, 128], sizes = [2, 128], strides = [1, 1]} : vector<2x256xf32> to vector<2x128xf32>
    %535 = arith.addf %530, %534 : vector<2x128xf32>
    %536 = vector.extract_strided_slice %529 {offsets = [0, 0], sizes = [2, 96], strides = [1, 1]} : vector<2x128xf32> to vector<2x96xf32>
    %537 = arith.negf %536 : vector<2x96xf32>
    %538 = math.exp %537 : vector<2x96xf32>
    %cst_148 = arith.constant 1.000000e+00 : f32
    %539 = vector.broadcast %cst_148 : f32 to vector<2x96xf32>
    %540 = arith.addf %539, %538 : vector<2x96xf32>
    %541 = arith.divf %539, %540 : vector<2x96xf32>
    %542 = vector.extract_strided_slice %529 {offsets = [0, 96], sizes = [2, 32], strides = [1, 1]} : vector<2x128xf32> to vector<2x32xf32>
    %543 = math.tanh %542 : vector<2x32xf32>
    %544 = vector.extract_strided_slice %541 {offsets = [0, 32], sizes = [2, 32], strides = [1, 1]} : vector<2x96xf32> to vector<2x32xf32>
    %545 = arith.mulf %544, %493 : vector<2x32xf32>
    %546 = vector.extract_strided_slice %541 {offsets = [0, 0], sizes = [2, 32], strides = [1, 1]} : vector<2x96xf32> to vector<2x32xf32>
    %547 = arith.mulf %546, %543 : vector<2x32xf32>
    %548 = arith.addf %545, %547 : vector<2x32xf32>
    %549 = vector.extract_strided_slice %541 {offsets = [0, 64], sizes = [2, 32], strides = [1, 1]} : vector<2x96xf32> to vector<2x32xf32>
    %550 = math.tanh %548 : vector<2x32xf32>
    %551 = arith.mulf %549, %550 : vector<2x32xf32>
    %552 = vector.extract_strided_slice %535 {offsets = [0, 0], sizes = [2, 96], strides = [1, 1]} : vector<2x128xf32> to vector<2x96xf32>
    %553 = arith.negf %552 : vector<2x96xf32>
    %554 = math.exp %553 : vector<2x96xf32>
    %cst_149 = arith.constant 1.000000e+00 : f32
    %555 = vector.broadcast %cst_149 : f32 to vector<2x96xf32>
    %556 = arith.addf %555, %554 : vector<2x96xf32>
    %557 = arith.divf %555, %556 : vector<2x96xf32>
    %558 = vector.extract_strided_slice %535 {offsets = [0, 96], sizes = [2, 32], strides = [1, 1]} : vector<2x128xf32> to vector<2x32xf32>
    %559 = math.tanh %558 : vector<2x32xf32>
    %560 = vector.extract_strided_slice %557 {offsets = [0, 32], sizes = [2, 32], strides = [1, 1]} : vector<2x96xf32> to vector<2x32xf32>
    %561 = arith.mulf %560, %509 : vector<2x32xf32>
    %562 = vector.extract_strided_slice %557 {offsets = [0, 0], sizes = [2, 32], strides = [1, 1]} : vector<2x96xf32> to vector<2x32xf32>
    %563 = arith.mulf %562, %559 : vector<2x32xf32>
    %564 = arith.addf %561, %563 : vector<2x32xf32>
    %565 = vector.extract_strided_slice %557 {offsets = [0, 64], sizes = [2, 32], strides = [1, 1]} : vector<2x96xf32> to vector<2x32xf32>
    %566 = math.tanh %564 : vector<2x32xf32>
    %567 = arith.mulf %565, %566 : vector<2x32xf32>
    %568 = arith.index_cast %c1_i32_141 : i32 to index
    %c0_150 = arith.constant 0 : index
    %c0_151 = arith.constant 0 : index
    %569 = vector.load %arg49[%568, %c0_150, %c0_151] : memref<8x2x32xf32, #tpu.memory_space<vmem>>, vector<1x2x32xf32>
    %570 = vector.shape_cast %569 : vector<1x2x32xf32> to vector<2x32xf32>
    %571 = vector.shape_cast %551 : vector<2x32xf32> to vector<1x2x32xf32>
    tpu.vector_store %arg49[%568, %c0_150, %c0_151], %571 {strides = array<i32>} : memref<8x2x32xf32, #tpu.memory_space<vmem>>, vector<1x2x32xf32>,
    %572 = arith.index_cast %522 : i32 to index
    %c0_152 = arith.constant 0 : index
    %c0_153 = arith.constant 0 : index
    %573 = vector.load %arg50[%572, %c0_152, %c0_153] : memref<8x2x32xf32, #tpu.memory_space<vmem>>, vector<1x2x32xf32>
    %574 = vector.shape_cast %573 : vector<1x2x32xf32> to vector<2x32xf32>
    %575 = vector.shape_cast %567 : vector<2x32xf32> to vector<1x2x32xf32>
    tpu.vector_store %arg50[%572, %c0_152, %c0_153], %575 {strides = array<i32>} : memref<8x2x32xf32, #tpu.memory_space<vmem>>, vector<1x2x32xf32>,
    %576 = tpu.concatenate %551, %567 in 1 : vector<2x32xf32>, vector<2x32xf32> -> vector<2x64xf32>
    %c2_i32_154 = arith.constant 2 : i32
    %c7_i32_155 = arith.constant 7 : i32
    %577 = arith.subi %c7_i32_155, %c2_i32_154 : i32
    %cst_156 = arith.constant dense<0.000000e+00> : vector<2x256xf32>
    %578 = tpu.matmul %576, %463, %cst_156 {dimension_numbers = #tpu.dot_dimension_numbers<[1], [0], [0], [1], [0, 0, 1, 1], [], []>} : vector<2x64xf32>, vector<64x256xf32>, vector<2x256xf32> -> vector<2x256xf32>
    %579 = vector.extract_strided_slice %578 {offsets = [0, 0], sizes = [2, 128], strides = [1, 1]} : vector<2x256xf32> to vector<2x128xf32>
    %580 = arith.index_cast %c2_i32_154 : i32 to index
    %c0_157 = arith.constant 0 : index
    %c0_158 = arith.constant 0 : index
    %581 = vector.load %arg48[%580, %c0_157, %c0_158] : memref<8x2x256xf32, #tpu.memory_space<vmem>>, vector<1x2x256xf32>
    %582 = vector.shape_cast %581 : vector<1x2x256xf32> to vector<2x256xf32>
    %583 = vector.extract_strided_slice %582 {offsets = [0, 0], sizes = [2, 128], strides = [1, 1]} : vector<2x256xf32> to vector<2x128xf32>
    %584 = arith.addf %579, %583 : vector<2x128xf32>
    %585 = vector.extract_strided_slice %578 {offsets = [0, 128], sizes = [2, 128], strides = [1, 1]} : vector<2x256xf32> to vector<2x128xf32>
    %586 = arith.index_cast %577 : i32 to index
    %c0_159 = arith.constant 0 : index
    %c0_160 = arith.constant 0 : index
    %587 = vector.load %arg48[%586, %c0_159, %c0_160] : memref<8x2x256xf32, #tpu.memory_space<vmem>>, vector<1x2x256xf32>
    %588 = vector.shape_cast %587 : vector<1x2x256xf32> to vector<2x256xf32>
    %589 = vector.extract_strided_slice %588 {offsets = [0, 128], sizes = [2, 128], strides = [1, 1]} : vector<2x256xf32> to vector<2x128xf32>
    %590 = arith.addf %585, %589 : vector<2x128xf32>
    %591 = vector.extract_strided_slice %584 {offsets = [0, 0], sizes = [2, 96], strides = [1, 1]} : vector<2x128xf32> to vector<2x96xf32>
    %592 = arith.negf %591 : vector<2x96xf32>
    %593 = math.exp %592 : vector<2x96xf32>
    %cst_161 = arith.constant 1.000000e+00 : f32
    %594 = vector.broadcast %cst_161 : f32 to vector<2x96xf32>
    %595 = arith.addf %594, %593 : vector<2x96xf32>
    %596 = arith.divf %594, %595 : vector<2x96xf32>
    %597 = vector.extract_strided_slice %584 {offsets = [0, 96], sizes = [2, 32], strides = [1, 1]} : vector<2x128xf32> to vector<2x32xf32>
    %598 = math.tanh %597 : vector<2x32xf32>
    %599 = vector.extract_strided_slice %596 {offsets = [0, 32], sizes = [2, 32], strides = [1, 1]} : vector<2x96xf32> to vector<2x32xf32>
    %600 = arith.mulf %599, %548 : vector<2x32xf32>
    %601 = vector.extract_strided_slice %596 {offsets = [0, 0], sizes = [2, 32], strides = [1, 1]} : vector<2x96xf32> to vector<2x32xf32>
    %602 = arith.mulf %601, %598 : vector<2x32xf32>
    %603 = arith.addf %600, %602 : vector<2x32xf32>
    %604 = vector.extract_strided_slice %596 {offsets = [0, 64], sizes = [2, 32], strides = [1, 1]} : vector<2x96xf32> to vector<2x32xf32>
    %605 = math.tanh %603 : vector<2x32xf32>
    %606 = arith.mulf %604, %605 : vector<2x32xf32>
    %607 = vector.extract_strided_slice %590 {offsets = [0, 0], sizes = [2, 96], strides = [1, 1]} : vector<2x128xf32> to vector<2x96xf32>
    %608 = arith.negf %607 : vector<2x96xf32>
    %609 = math.exp %608 : vector<2x96xf32>
    %cst_162 = arith.constant 1.000000e+00 : f32
    %610 = vector.broadcast %cst_162 : f32 to vector<2x96xf32>
    %611 = arith.addf %610, %609 : vector<2x96xf32>
    %612 = arith.divf %610, %611 : vector<2x96xf32>
    %613 = vector.extract_strided_slice %590 {offsets = [0, 96], sizes = [2, 32], strides = [1, 1]} : vector<2x128xf32> to vector<2x32xf32>
    %614 = math.tanh %613 : vector<2x32xf32>
    %615 = vector.extract_strided_slice %612 {offsets = [0, 32], sizes = [2, 32], strides = [1, 1]} : vector<2x96xf32> to vector<2x32xf32>
    %616 = arith.mulf %615, %564 : vector<2x32xf32>
    %617 = vector.extract_strided_slice %612 {offsets = [0, 0], sizes = [2, 32], strides = [1, 1]} : vector<2x96xf32> to vector<2x32xf32>
    %618 = arith.mulf %617, %614 : vector<2x32xf32>
    %619 = arith.addf %616, %618 : vector<2x32xf32>
    %620 = vector.extract_strided_slice %612 {offsets = [0, 64], sizes = [2, 32], strides = [1, 1]} : vector<2x96xf32> to vector<2x32xf32>
    %621 = math.tanh %619 : vector<2x32xf32>
    %622 = arith.mulf %620, %621 : vector<2x32xf32>
    %623 = arith.index_cast %c2_i32_154 : i32 to index
    %c0_163 = arith.constant 0 : index
    %c0_164 = arith.constant 0 : index
    %624 = vector.load %arg49[%623, %c0_163, %c0_164] : memref<8x2x32xf32, #tpu.memory_space<vmem>>, vector<1x2x32xf32>
    %625 = vector.shape_cast %624 : vector<1x2x32xf32> to vector<2x32xf32>
    %626 = vector.shape_cast %606 : vector<2x32xf32> to vector<1x2x32xf32>
    tpu.vector_store %arg49[%623, %c0_163, %c0_164], %626 {strides = array<i32>} : memref<8x2x32xf32, #tpu.memory_space<vmem>>, vector<1x2x32xf32>,
    %627 = arith.index_cast %577 : i32 to index
    %c0_165 = arith.constant 0 : index
    %c0_166 = arith.constant 0 : index
    %628 = vector.load %arg50[%627, %c0_165, %c0_166] : memref<8x2x32xf32, #tpu.memory_space<vmem>>, vector<1x2x32xf32>
    %629 = vector.shape_cast %628 : vector<1x2x32xf32> to vector<2x32xf32>
    %630 = vector.shape_cast %622 : vector<2x32xf32> to vector<1x2x32xf32>
    tpu.vector_store %arg50[%627, %c0_165, %c0_166], %630 {strides = array<i32>} : memref<8x2x32xf32, #tpu.memory_space<vmem>>, vector<1x2x32xf32>,
    %631 = tpu.concatenate %606, %622 in 1 : vector<2x32xf32>, vector<2x32xf32> -> vector<2x64xf32>
    %c3_i32_167 = arith.constant 3 : i32
    %c7_i32_168 = arith.constant 7 : i32
    %632 = arith.subi %c7_i32_168, %c3_i32_167 : i32
    %cst_169 = arith.constant dense<0.000000e+00> : vector<2x256xf32>
    %633 = tpu.matmul %631, %463, %cst_169 {dimension_numbers = #tpu.dot_dimension_numbers<[1], [0], [0], [1], [0, 0, 1, 1], [], []>} : vector<2x64xf32>, vector<64x256xf32>, vector<2x256xf32> -> vector<2x256xf32>
    %634 = vector.extract_strided_slice %633 {offsets = [0, 0], sizes = [2, 128], strides = [1, 1]} : vector<2x256xf32> to vector<2x128xf32>
    %635 = arith.index_cast %c3_i32_167 : i32 to index
    %c0_170 = arith.constant 0 : index
    %c0_171 = arith.constant 0 : index
    %636 = vector.load %arg48[%635, %c0_170, %c0_171] : memref<8x2x256xf32, #tpu.memory_space<vmem>>, vector<1x2x256xf32>
    %637 = vector.shape_cast %636 : vector<1x2x256xf32> to vector<2x256xf32>
    %638 = vector.extract_strided_slice %637 {offsets = [0, 0], sizes = [2, 128], strides = [1, 1]} : vector<2x256xf32> to vector<2x128xf32>
    %639 = arith.addf %634, %638 : vector<2x128xf32>
    %640 = vector.extract_strided_slice %633 {offsets = [0, 128], sizes = [2, 128], strides = [1, 1]} : vector<2x256xf32> to vector<2x128xf32>
    %641 = arith.index_cast %632 : i32 to index
    %c0_172 = arith.constant 0 : index
    %c0_173 = arith.constant 0 : index
    %642 = vector.load %arg48[%641, %c0_172, %c0_173] : memref<8x2x256xf32, #tpu.memory_space<vmem>>, vector<1x2x256xf32>
    %643 = vector.shape_cast %642 : vector<1x2x256xf32> to vector<2x256xf32>
    %644 = vector.extract_strided_slice %643 {offsets = [0, 128], sizes = [2, 128], strides = [1, 1]} : vector<2x256xf32> to vector<2x128xf32>
    %645 = arith.addf %640, %644 : vector<2x128xf32>
    %646 = vector.extract_strided_slice %639 {offsets = [0, 0], sizes = [2, 96], strides = [1, 1]} : vector<2x128xf32> to vector<2x96xf32>
    %647 = arith.negf %646 : vector<2x96xf32>
    %648 = math.exp %647 : vector<2x96xf32>
    %cst_174 = arith.constant 1.000000e+00 : f32
    %649 = vector.broadcast %cst_174 : f32 to vector<2x96xf32>
    %650 = arith.addf %649, %648 : vector<2x96xf32>
    %651 = arith.divf %649, %650 : vector<2x96xf32>
    %652 = vector.extract_strided_slice %639 {offsets = [0, 96], sizes = [2, 32], strides = [1, 1]} : vector<2x128xf32> to vector<2x32xf32>
    %653 = math.tanh %652 : vector<2x32xf32>
    %654 = vector.extract_strided_slice %651 {offsets = [0, 32], sizes = [2, 32], strides = [1, 1]} : vector<2x96xf32> to vector<2x32xf32>
    %655 = arith.mulf %654, %603 : vector<2x32xf32>
    %656 = vector.extract_strided_slice %651 {offsets = [0, 0], sizes = [2, 32], strides = [1, 1]} : vector<2x96xf32> to vector<2x32xf32>
    %657 = arith.mulf %656, %653 : vector<2x32xf32>
    %658 = arith.addf %655, %657 : vector<2x32xf32>
    %659 = vector.extract_strided_slice %651 {offsets = [0, 64], sizes = [2, 32], strides = [1, 1]} : vector<2x96xf32> to vector<2x32xf32>
    %660 = math.tanh %658 : vector<2x32xf32>
    %661 = arith.mulf %659, %660 : vector<2x32xf32>
    %662 = vector.extract_strided_slice %645 {offsets = [0, 0], sizes = [2, 96], strides = [1, 1]} : vector<2x128xf32> to vector<2x96xf32>
    %663 = arith.negf %662 : vector<2x96xf32>
    %664 = math.exp %663 : vector<2x96xf32>
    %cst_175 = arith.constant 1.000000e+00 : f32
    %665 = vector.broadcast %cst_175 : f32 to vector<2x96xf32>
    %666 = arith.addf %665, %664 : vector<2x96xf32>
    %667 = arith.divf %665, %666 : vector<2x96xf32>
    %668 = vector.extract_strided_slice %645 {offsets = [0, 96], sizes = [2, 32], strides = [1, 1]} : vector<2x128xf32> to vector<2x32xf32>
    %669 = math.tanh %668 : vector<2x32xf32>
    %670 = vector.extract_strided_slice %667 {offsets = [0, 32], sizes = [2, 32], strides = [1, 1]} : vector<2x96xf32> to vector<2x32xf32>
    %671 = arith.mulf %670, %619 : vector<2x32xf32>
    %672 = vector.extract_strided_slice %667 {offsets = [0, 0], sizes = [2, 32], strides = [1, 1]} : vector<2x96xf32> to vector<2x32xf32>
    %673 = arith.mulf %672, %669 : vector<2x32xf32>
    %674 = arith.addf %671, %673 : vector<2x32xf32>
    %675 = vector.extract_strided_slice %667 {offsets = [0, 64], sizes = [2, 32], strides = [1, 1]} : vector<2x96xf32> to vector<2x32xf32>
    %676 = math.tanh %674 : vector<2x32xf32>
    %677 = arith.mulf %675, %676 : vector<2x32xf32>
    %678 = arith.index_cast %c3_i32_167 : i32 to index
    %c0_176 = arith.constant 0 : index
    %c0_177 = arith.constant 0 : index
    %679 = vector.load %arg49[%678, %c0_176, %c0_177] : memref<8x2x32xf32, #tpu.memory_space<vmem>>, vector<1x2x32xf32>
    %680 = vector.shape_cast %679 : vector<1x2x32xf32> to vector<2x32xf32>
    %681 = vector.shape_cast %661 : vector<2x32xf32> to vector<1x2x32xf32>
    tpu.vector_store %arg49[%678, %c0_176, %c0_177], %681 {strides = array<i32>} : memref<8x2x32xf32, #tpu.memory_space<vmem>>, vector<1x2x32xf32>,
    %682 = arith.index_cast %632 : i32 to index
    %c0_178 = arith.constant 0 : index
    %c0_179 = arith.constant 0 : index
    %683 = vector.load %arg50[%682, %c0_178, %c0_179] : memref<8x2x32xf32, #tpu.memory_space<vmem>>, vector<1x2x32xf32>
    %684 = vector.shape_cast %683 : vector<1x2x32xf32> to vector<2x32xf32>
    %685 = vector.shape_cast %677 : vector<2x32xf32> to vector<1x2x32xf32>
    tpu.vector_store %arg50[%682, %c0_178, %c0_179], %685 {strides = array<i32>} : memref<8x2x32xf32, #tpu.memory_space<vmem>>, vector<1x2x32xf32>,
    %686 = tpu.concatenate %661, %677 in 1 : vector<2x32xf32>, vector<2x32xf32> -> vector<2x64xf32>
    %c4_i32_180 = arith.constant 4 : i32
    %c7_i32_181 = arith.constant 7 : i32
    %687 = arith.subi %c7_i32_181, %c4_i32_180 : i32
    %cst_182 = arith.constant dense<0.000000e+00> : vector<2x256xf32>
    %688 = tpu.matmul %686, %463, %cst_182 {dimension_numbers = #tpu.dot_dimension_numbers<[1], [0], [0], [1], [0, 0, 1, 1], [], []>} : vector<2x64xf32>, vector<64x256xf32>, vector<2x256xf32> -> vector<2x256xf32>
    %689 = vector.extract_strided_slice %688 {offsets = [0, 0], sizes = [2, 128], strides = [1, 1]} : vector<2x256xf32> to vector<2x128xf32>
    %690 = arith.index_cast %c4_i32_180 : i32 to index
    %c0_183 = arith.constant 0 : index
    %c0_184 = arith.constant 0 : index
    %691 = vector.load %arg48[%690, %c0_183, %c0_184] : memref<8x2x256xf32, #tpu.memory_space<vmem>>, vector<1x2x256xf32>
    %692 = vector.shape_cast %691 : vector<1x2x256xf32> to vector<2x256xf32>
    %693 = vector.extract_strided_slice %692 {offsets = [0, 0], sizes = [2, 128], strides = [1, 1]} : vector<2x256xf32> to vector<2x128xf32>
    %694 = arith.addf %689, %693 : vector<2x128xf32>
    %695 = vector.extract_strided_slice %688 {offsets = [0, 128], sizes = [2, 128], strides = [1, 1]} : vector<2x256xf32> to vector<2x128xf32>
    %696 = arith.index_cast %687 : i32 to index
    %c0_185 = arith.constant 0 : index
    %c0_186 = arith.constant 0 : index
    %697 = vector.load %arg48[%696, %c0_185, %c0_186] : memref<8x2x256xf32, #tpu.memory_space<vmem>>, vector<1x2x256xf32>
    %698 = vector.shape_cast %697 : vector<1x2x256xf32> to vector<2x256xf32>
    %699 = vector.extract_strided_slice %698 {offsets = [0, 128], sizes = [2, 128], strides = [1, 1]} : vector<2x256xf32> to vector<2x128xf32>
    %700 = arith.addf %695, %699 : vector<2x128xf32>
    %701 = vector.extract_strided_slice %694 {offsets = [0, 0], sizes = [2, 96], strides = [1, 1]} : vector<2x128xf32> to vector<2x96xf32>
    %702 = arith.negf %701 : vector<2x96xf32>
    %703 = math.exp %702 : vector<2x96xf32>
    %cst_187 = arith.constant 1.000000e+00 : f32
    %704 = vector.broadcast %cst_187 : f32 to vector<2x96xf32>
    %705 = arith.addf %704, %703 : vector<2x96xf32>
    %706 = arith.divf %704, %705 : vector<2x96xf32>
    %707 = vector.extract_strided_slice %694 {offsets = [0, 96], sizes = [2, 32], strides = [1, 1]} : vector<2x128xf32> to vector<2x32xf32>
    %708 = math.tanh %707 : vector<2x32xf32>
    %709 = vector.extract_strided_slice %706 {offsets = [0, 32], sizes = [2, 32], strides = [1, 1]} : vector<2x96xf32> to vector<2x32xf32>
    %710 = arith.mulf %709, %658 : vector<2x32xf32>
    %711 = vector.extract_strided_slice %706 {offsets = [0, 0], sizes = [2, 32], strides = [1, 1]} : vector<2x96xf32> to vector<2x32xf32>
    %712 = arith.mulf %711, %708 : vector<2x32xf32>
    %713 = arith.addf %710, %712 : vector<2x32xf32>
    %714 = vector.extract_strided_slice %706 {offsets = [0, 64], sizes = [2, 32], strides = [1, 1]} : vector<2x96xf32> to vector<2x32xf32>
    %715 = math.tanh %713 : vector<2x32xf32>
    %716 = arith.mulf %714, %715 : vector<2x32xf32>
    %717 = vector.extract_strided_slice %700 {offsets = [0, 0], sizes = [2, 96], strides = [1, 1]} : vector<2x128xf32> to vector<2x96xf32>
    %718 = arith.negf %717 : vector<2x96xf32>
    %719 = math.exp %718 : vector<2x96xf32>
    %cst_188 = arith.constant 1.000000e+00 : f32
    %720 = vector.broadcast %cst_188 : f32 to vector<2x96xf32>
    %721 = arith.addf %720, %719 : vector<2x96xf32>
    %722 = arith.divf %720, %721 : vector<2x96xf32>
    %723 = vector.extract_strided_slice %700 {offsets = [0, 96], sizes = [2, 32], strides = [1, 1]} : vector<2x128xf32> to vector<2x32xf32>
    %724 = math.tanh %723 : vector<2x32xf32>
    %725 = vector.extract_strided_slice %722 {offsets = [0, 32], sizes = [2, 32], strides = [1, 1]} : vector<2x96xf32> to vector<2x32xf32>
    %726 = arith.mulf %725, %674 : vector<2x32xf32>
    %727 = vector.extract_strided_slice %722 {offsets = [0, 0], sizes = [2, 32], strides = [1, 1]} : vector<2x96xf32> to vector<2x32xf32>
    %728 = arith.mulf %727, %724 : vector<2x32xf32>
    %729 = arith.addf %726, %728 : vector<2x32xf32>
    %730 = vector.extract_strided_slice %722 {offsets = [0, 64], sizes = [2, 32], strides = [1, 1]} : vector<2x96xf32> to vector<2x32xf32>
    %731 = math.tanh %729 : vector<2x32xf32>
    %732 = arith.mulf %730, %731 : vector<2x32xf32>
    %733 = arith.index_cast %c4_i32_180 : i32 to index
    %c0_189 = arith.constant 0 : index
    %c0_190 = arith.constant 0 : index
    %734 = vector.load %arg49[%733, %c0_189, %c0_190] : memref<8x2x32xf32, #tpu.memory_space<vmem>>, vector<1x2x32xf32>
    %735 = vector.shape_cast %734 : vector<1x2x32xf32> to vector<2x32xf32>
    %736 = vector.shape_cast %716 : vector<2x32xf32> to vector<1x2x32xf32>
    tpu.vector_store %arg49[%733, %c0_189, %c0_190], %736 {strides = array<i32>} : memref<8x2x32xf32, #tpu.memory_space<vmem>>, vector<1x2x32xf32>,
    %737 = arith.index_cast %687 : i32 to index
    %c0_191 = arith.constant 0 : index
    %c0_192 = arith.constant 0 : index
    %738 = vector.load %arg50[%737, %c0_191, %c0_192] : memref<8x2x32xf32, #tpu.memory_space<vmem>>, vector<1x2x32xf32>
    %739 = vector.shape_cast %738 : vector<1x2x32xf32> to vector<2x32xf32>
    %740 = vector.shape_cast %732 : vector<2x32xf32> to vector<1x2x32xf32>
    tpu.vector_store %arg50[%737, %c0_191, %c0_192], %740 {strides = array<i32>} : memref<8x2x32xf32, #tpu.memory_space<vmem>>, vector<1x2x32xf32>,
    %741 = tpu.concatenate %716, %732 in 1 : vector<2x32xf32>, vector<2x32xf32> -> vector<2x64xf32>
    %c5_i32_193 = arith.constant 5 : i32
    %c7_i32_194 = arith.constant 7 : i32
    %742 = arith.subi %c7_i32_194, %c5_i32_193 : i32
    %cst_195 = arith.constant dense<0.000000e+00> : vector<2x256xf32>
    %743 = tpu.matmul %741, %463, %cst_195 {dimension_numbers = #tpu.dot_dimension_numbers<[1], [0], [0], [1], [0, 0, 1, 1], [], []>} : vector<2x64xf32>, vector<64x256xf32>, vector<2x256xf32> -> vector<2x256xf32>
    %744 = vector.extract_strided_slice %743 {offsets = [0, 0], sizes = [2, 128], strides = [1, 1]} : vector<2x256xf32> to vector<2x128xf32>
    %745 = arith.index_cast %c5_i32_193 : i32 to index
    %c0_196 = arith.constant 0 : index
    %c0_197 = arith.constant 0 : index
    %746 = vector.load %arg48[%745, %c0_196, %c0_197] : memref<8x2x256xf32, #tpu.memory_space<vmem>>, vector<1x2x256xf32>
    %747 = vector.shape_cast %746 : vector<1x2x256xf32> to vector<2x256xf32>
    %748 = vector.extract_strided_slice %747 {offsets = [0, 0], sizes = [2, 128], strides = [1, 1]} : vector<2x256xf32> to vector<2x128xf32>
    %749 = arith.addf %744, %748 : vector<2x128xf32>
    %750 = vector.extract_strided_slice %743 {offsets = [0, 128], sizes = [2, 128], strides = [1, 1]} : vector<2x256xf32> to vector<2x128xf32>
    %751 = arith.index_cast %742 : i32 to index
    %c0_198 = arith.constant 0 : index
    %c0_199 = arith.constant 0 : index
    %752 = vector.load %arg48[%751, %c0_198, %c0_199] : memref<8x2x256xf32, #tpu.memory_space<vmem>>, vector<1x2x256xf32>
    %753 = vector.shape_cast %752 : vector<1x2x256xf32> to vector<2x256xf32>
    %754 = vector.extract_strided_slice %753 {offsets = [0, 128], sizes = [2, 128], strides = [1, 1]} : vector<2x256xf32> to vector<2x128xf32>
    %755 = arith.addf %750, %754 : vector<2x128xf32>
    %756 = vector.extract_strided_slice %749 {offsets = [0, 0], sizes = [2, 96], strides = [1, 1]} : vector<2x128xf32> to vector<2x96xf32>
    %757 = arith.negf %756 : vector<2x96xf32>
    %758 = math.exp %757 : vector<2x96xf32>
    %cst_200 = arith.constant 1.000000e+00 : f32
    %759 = vector.broadcast %cst_200 : f32 to vector<2x96xf32>
    %760 = arith.addf %759, %758 : vector<2x96xf32>
    %761 = arith.divf %759, %760 : vector<2x96xf32>
    %762 = vector.extract_strided_slice %749 {offsets = [0, 96], sizes = [2, 32], strides = [1, 1]} : vector<2x128xf32> to vector<2x32xf32>
    %763 = math.tanh %762 : vector<2x32xf32>
    %764 = vector.extract_strided_slice %761 {offsets = [0, 32], sizes = [2, 32], strides = [1, 1]} : vector<2x96xf32> to vector<2x32xf32>
    %765 = arith.mulf %764, %713 : vector<2x32xf32>
    %766 = vector.extract_strided_slice %761 {offsets = [0, 0], sizes = [2, 32], strides = [1, 1]} : vector<2x96xf32> to vector<2x32xf32>
    %767 = arith.mulf %766, %763 : vector<2x32xf32>
    %768 = arith.addf %765, %767 : vector<2x32xf32>
    %769 = vector.extract_strided_slice %761 {offsets = [0, 64], sizes = [2, 32], strides = [1, 1]} : vector<2x96xf32> to vector<2x32xf32>
    %770 = math.tanh %768 : vector<2x32xf32>
    %771 = arith.mulf %769, %770 : vector<2x32xf32>
    %772 = vector.extract_strided_slice %755 {offsets = [0, 0], sizes = [2, 96], strides = [1, 1]} : vector<2x128xf32> to vector<2x96xf32>
    %773 = arith.negf %772 : vector<2x96xf32>
    %774 = math.exp %773 : vector<2x96xf32>
    %cst_201 = arith.constant 1.000000e+00 : f32
    %775 = vector.broadcast %cst_201 : f32 to vector<2x96xf32>
    %776 = arith.addf %775, %774 : vector<2x96xf32>
    %777 = arith.divf %775, %776 : vector<2x96xf32>
    %778 = vector.extract_strided_slice %755 {offsets = [0, 96], sizes = [2, 32], strides = [1, 1]} : vector<2x128xf32> to vector<2x32xf32>
    %779 = math.tanh %778 : vector<2x32xf32>
    %780 = vector.extract_strided_slice %777 {offsets = [0, 32], sizes = [2, 32], strides = [1, 1]} : vector<2x96xf32> to vector<2x32xf32>
    %781 = arith.mulf %780, %729 : vector<2x32xf32>
    %782 = vector.extract_strided_slice %777 {offsets = [0, 0], sizes = [2, 32], strides = [1, 1]} : vector<2x96xf32> to vector<2x32xf32>
    %783 = arith.mulf %782, %779 : vector<2x32xf32>
    %784 = arith.addf %781, %783 : vector<2x32xf32>
    %785 = vector.extract_strided_slice %777 {offsets = [0, 64], sizes = [2, 32], strides = [1, 1]} : vector<2x96xf32> to vector<2x32xf32>
    %786 = math.tanh %784 : vector<2x32xf32>
    %787 = arith.mulf %785, %786 : vector<2x32xf32>
    %788 = arith.index_cast %c5_i32_193 : i32 to index
    %c0_202 = arith.constant 0 : index
    %c0_203 = arith.constant 0 : index
    %789 = vector.load %arg49[%788, %c0_202, %c0_203] : memref<8x2x32xf32, #tpu.memory_space<vmem>>, vector<1x2x32xf32>
    %790 = vector.shape_cast %789 : vector<1x2x32xf32> to vector<2x32xf32>
    %791 = vector.shape_cast %771 : vector<2x32xf32> to vector<1x2x32xf32>
    tpu.vector_store %arg49[%788, %c0_202, %c0_203], %791 {strides = array<i32>} : memref<8x2x32xf32, #tpu.memory_space<vmem>>, vector<1x2x32xf32>,
    %792 = arith.index_cast %742 : i32 to index
    %c0_204 = arith.constant 0 : index
    %c0_205 = arith.constant 0 : index
    %793 = vector.load %arg50[%792, %c0_204, %c0_205] : memref<8x2x32xf32, #tpu.memory_space<vmem>>, vector<1x2x32xf32>
    %794 = vector.shape_cast %793 : vector<1x2x32xf32> to vector<2x32xf32>
    %795 = vector.shape_cast %787 : vector<2x32xf32> to vector<1x2x32xf32>
    tpu.vector_store %arg50[%792, %c0_204, %c0_205], %795 {strides = array<i32>} : memref<8x2x32xf32, #tpu.memory_space<vmem>>, vector<1x2x32xf32>,
    %796 = tpu.concatenate %771, %787 in 1 : vector<2x32xf32>, vector<2x32xf32> -> vector<2x64xf32>
    %c6_i32_206 = arith.constant 6 : i32
    %c7_i32_207 = arith.constant 7 : i32
    %797 = arith.subi %c7_i32_207, %c6_i32_206 : i32
    %cst_208 = arith.constant dense<0.000000e+00> : vector<2x256xf32>
    %798 = tpu.matmul %796, %463, %cst_208 {dimension_numbers = #tpu.dot_dimension_numbers<[1], [0], [0], [1], [0, 0, 1, 1], [], []>} : vector<2x64xf32>, vector<64x256xf32>, vector<2x256xf32> -> vector<2x256xf32>
    %799 = vector.extract_strided_slice %798 {offsets = [0, 0], sizes = [2, 128], strides = [1, 1]} : vector<2x256xf32> to vector<2x128xf32>
    %800 = arith.index_cast %c6_i32_206 : i32 to index
    %c0_209 = arith.constant 0 : index
    %c0_210 = arith.constant 0 : index
    %801 = vector.load %arg48[%800, %c0_209, %c0_210] : memref<8x2x256xf32, #tpu.memory_space<vmem>>, vector<1x2x256xf32>
    %802 = vector.shape_cast %801 : vector<1x2x256xf32> to vector<2x256xf32>
    %803 = vector.extract_strided_slice %802 {offsets = [0, 0], sizes = [2, 128], strides = [1, 1]} : vector<2x256xf32> to vector<2x128xf32>
    %804 = arith.addf %799, %803 : vector<2x128xf32>
    %805 = vector.extract_strided_slice %798 {offsets = [0, 128], sizes = [2, 128], strides = [1, 1]} : vector<2x256xf32> to vector<2x128xf32>
    %806 = arith.index_cast %797 : i32 to index
    %c0_211 = arith.constant 0 : index
    %c0_212 = arith.constant 0 : index
    %807 = vector.load %arg48[%806, %c0_211, %c0_212] : memref<8x2x256xf32, #tpu.memory_space<vmem>>, vector<1x2x256xf32>
    %808 = vector.shape_cast %807 : vector<1x2x256xf32> to vector<2x256xf32>
    %809 = vector.extract_strided_slice %808 {offsets = [0, 128], sizes = [2, 128], strides = [1, 1]} : vector<2x256xf32> to vector<2x128xf32>
    %810 = arith.addf %805, %809 : vector<2x128xf32>
    %811 = vector.extract_strided_slice %804 {offsets = [0, 0], sizes = [2, 96], strides = [1, 1]} : vector<2x128xf32> to vector<2x96xf32>
    %812 = arith.negf %811 : vector<2x96xf32>
    %813 = math.exp %812 : vector<2x96xf32>
    %cst_213 = arith.constant 1.000000e+00 : f32
    %814 = vector.broadcast %cst_213 : f32 to vector<2x96xf32>
    %815 = arith.addf %814, %813 : vector<2x96xf32>
    %816 = arith.divf %814, %815 : vector<2x96xf32>
    %817 = vector.extract_strided_slice %804 {offsets = [0, 96], sizes = [2, 32], strides = [1, 1]} : vector<2x128xf32> to vector<2x32xf32>
    %818 = math.tanh %817 : vector<2x32xf32>
    %819 = vector.extract_strided_slice %816 {offsets = [0, 32], sizes = [2, 32], strides = [1, 1]} : vector<2x96xf32> to vector<2x32xf32>
    %820 = arith.mulf %819, %768 : vector<2x32xf32>
    %821 = vector.extract_strided_slice %816 {offsets = [0, 0], sizes = [2, 32], strides = [1, 1]} : vector<2x96xf32> to vector<2x32xf32>
    %822 = arith.mulf %821, %818 : vector<2x32xf32>
    %823 = arith.addf %820, %822 : vector<2x32xf32>
    %824 = vector.extract_strided_slice %816 {offsets = [0, 64], sizes = [2, 32], strides = [1, 1]} : vector<2x96xf32> to vector<2x32xf32>
    %825 = math.tanh %823 : vector<2x32xf32>
    %826 = arith.mulf %824, %825 : vector<2x32xf32>
    %827 = vector.extract_strided_slice %810 {offsets = [0, 0], sizes = [2, 96], strides = [1, 1]} : vector<2x128xf32> to vector<2x96xf32>
    %828 = arith.negf %827 : vector<2x96xf32>
    %829 = math.exp %828 : vector<2x96xf32>
    %cst_214 = arith.constant 1.000000e+00 : f32
    %830 = vector.broadcast %cst_214 : f32 to vector<2x96xf32>
    %831 = arith.addf %830, %829 : vector<2x96xf32>
    %832 = arith.divf %830, %831 : vector<2x96xf32>
    %833 = vector.extract_strided_slice %810 {offsets = [0, 96], sizes = [2, 32], strides = [1, 1]} : vector<2x128xf32> to vector<2x32xf32>
    %834 = math.tanh %833 : vector<2x32xf32>
    %835 = vector.extract_strided_slice %832 {offsets = [0, 32], sizes = [2, 32], strides = [1, 1]} : vector<2x96xf32> to vector<2x32xf32>
    %836 = arith.mulf %835, %784 : vector<2x32xf32>
    %837 = vector.extract_strided_slice %832 {offsets = [0, 0], sizes = [2, 32], strides = [1, 1]} : vector<2x96xf32> to vector<2x32xf32>
    %838 = arith.mulf %837, %834 : vector<2x32xf32>
    %839 = arith.addf %836, %838 : vector<2x32xf32>
    %840 = vector.extract_strided_slice %832 {offsets = [0, 64], sizes = [2, 32], strides = [1, 1]} : vector<2x96xf32> to vector<2x32xf32>
    %841 = math.tanh %839 : vector<2x32xf32>
    %842 = arith.mulf %840, %841 : vector<2x32xf32>
    %843 = arith.index_cast %c6_i32_206 : i32 to index
    %c0_215 = arith.constant 0 : index
    %c0_216 = arith.constant 0 : index
    %844 = vector.load %arg49[%843, %c0_215, %c0_216] : memref<8x2x32xf32, #tpu.memory_space<vmem>>, vector<1x2x32xf32>
    %845 = vector.shape_cast %844 : vector<1x2x32xf32> to vector<2x32xf32>
    %846 = vector.shape_cast %826 : vector<2x32xf32> to vector<1x2x32xf32>
    tpu.vector_store %arg49[%843, %c0_215, %c0_216], %846 {strides = array<i32>} : memref<8x2x32xf32, #tpu.memory_space<vmem>>, vector<1x2x32xf32>,
    %847 = arith.index_cast %797 : i32 to index
    %c0_217 = arith.constant 0 : index
    %c0_218 = arith.constant 0 : index
    %848 = vector.load %arg50[%847, %c0_217, %c0_218] : memref<8x2x32xf32, #tpu.memory_space<vmem>>, vector<1x2x32xf32>
    %849 = vector.shape_cast %848 : vector<1x2x32xf32> to vector<2x32xf32>
    %850 = vector.shape_cast %842 : vector<2x32xf32> to vector<1x2x32xf32>
    tpu.vector_store %arg50[%847, %c0_217, %c0_218], %850 {strides = array<i32>} : memref<8x2x32xf32, #tpu.memory_space<vmem>>, vector<1x2x32xf32>,
    %851 = tpu.concatenate %826, %842 in 1 : vector<2x32xf32>, vector<2x32xf32> -> vector<2x64xf32>
    %c7_i32_219 = arith.constant 7 : i32
    %c7_i32_220 = arith.constant 7 : i32
    %852 = arith.subi %c7_i32_220, %c7_i32_219 : i32
    %cst_221 = arith.constant dense<0.000000e+00> : vector<2x256xf32>
    %853 = tpu.matmul %851, %463, %cst_221 {dimension_numbers = #tpu.dot_dimension_numbers<[1], [0], [0], [1], [0, 0, 1, 1], [], []>} : vector<2x64xf32>, vector<64x256xf32>, vector<2x256xf32> -> vector<2x256xf32>
    %854 = vector.extract_strided_slice %853 {offsets = [0, 0], sizes = [2, 128], strides = [1, 1]} : vector<2x256xf32> to vector<2x128xf32>
    %855 = arith.index_cast %c7_i32_219 : i32 to index
    %c0_222 = arith.constant 0 : index
    %c0_223 = arith.constant 0 : index
    %856 = vector.load %arg48[%855, %c0_222, %c0_223] : memref<8x2x256xf32, #tpu.memory_space<vmem>>, vector<1x2x256xf32>
    %857 = vector.shape_cast %856 : vector<1x2x256xf32> to vector<2x256xf32>
    %858 = vector.extract_strided_slice %857 {offsets = [0, 0], sizes = [2, 128], strides = [1, 1]} : vector<2x256xf32> to vector<2x128xf32>
    %859 = arith.addf %854, %858 : vector<2x128xf32>
    %860 = vector.extract_strided_slice %853 {offsets = [0, 128], sizes = [2, 128], strides = [1, 1]} : vector<2x256xf32> to vector<2x128xf32>
    %861 = arith.index_cast %852 : i32 to index
    %c0_224 = arith.constant 0 : index
    %c0_225 = arith.constant 0 : index
    %862 = vector.load %arg48[%861, %c0_224, %c0_225] : memref<8x2x256xf32, #tpu.memory_space<vmem>>, vector<1x2x256xf32>
    %863 = vector.shape_cast %862 : vector<1x2x256xf32> to vector<2x256xf32>
    %864 = vector.extract_strided_slice %863 {offsets = [0, 128], sizes = [2, 128], strides = [1, 1]} : vector<2x256xf32> to vector<2x128xf32>
    %865 = arith.addf %860, %864 : vector<2x128xf32>
    %866 = vector.extract_strided_slice %859 {offsets = [0, 0], sizes = [2, 96], strides = [1, 1]} : vector<2x128xf32> to vector<2x96xf32>
    %867 = arith.negf %866 : vector<2x96xf32>
    %868 = math.exp %867 : vector<2x96xf32>
    %cst_226 = arith.constant 1.000000e+00 : f32
    %869 = vector.broadcast %cst_226 : f32 to vector<2x96xf32>
    %870 = arith.addf %869, %868 : vector<2x96xf32>
    %871 = arith.divf %869, %870 : vector<2x96xf32>
    %872 = vector.extract_strided_slice %859 {offsets = [0, 96], sizes = [2, 32], strides = [1, 1]} : vector<2x128xf32> to vector<2x32xf32>
    %873 = math.tanh %872 : vector<2x32xf32>
    %874 = vector.extract_strided_slice %871 {offsets = [0, 32], sizes = [2, 32], strides = [1, 1]} : vector<2x96xf32> to vector<2x32xf32>
    %875 = arith.mulf %874, %823 : vector<2x32xf32>
    %876 = vector.extract_strided_slice %871 {offsets = [0, 0], sizes = [2, 32], strides = [1, 1]} : vector<2x96xf32> to vector<2x32xf32>
    %877 = arith.mulf %876, %873 : vector<2x32xf32>
    %878 = arith.addf %875, %877 : vector<2x32xf32>
    %879 = vector.extract_strided_slice %871 {offsets = [0, 64], sizes = [2, 32], strides = [1, 1]} : vector<2x96xf32> to vector<2x32xf32>
    %880 = math.tanh %878 : vector<2x32xf32>
    %881 = arith.mulf %879, %880 : vector<2x32xf32>
    %882 = vector.extract_strided_slice %865 {offsets = [0, 0], sizes = [2, 96], strides = [1, 1]} : vector<2x128xf32> to vector<2x96xf32>
    %883 = arith.negf %882 : vector<2x96xf32>
    %884 = math.exp %883 : vector<2x96xf32>
    %cst_227 = arith.constant 1.000000e+00 : f32
    %885 = vector.broadcast %cst_227 : f32 to vector<2x96xf32>
    %886 = arith.addf %885, %884 : vector<2x96xf32>
    %887 = arith.divf %885, %886 : vector<2x96xf32>
    %888 = vector.extract_strided_slice %865 {offsets = [0, 96], sizes = [2, 32], strides = [1, 1]} : vector<2x128xf32> to vector<2x32xf32>
    %889 = math.tanh %888 : vector<2x32xf32>
    %890 = vector.extract_strided_slice %887 {offsets = [0, 32], sizes = [2, 32], strides = [1, 1]} : vector<2x96xf32> to vector<2x32xf32>
    %891 = arith.mulf %890, %839 : vector<2x32xf32>
    %892 = vector.extract_strided_slice %887 {offsets = [0, 0], sizes = [2, 32], strides = [1, 1]} : vector<2x96xf32> to vector<2x32xf32>
    %893 = arith.mulf %892, %889 : vector<2x32xf32>
    %894 = arith.addf %891, %893 : vector<2x32xf32>
    %895 = vector.extract_strided_slice %887 {offsets = [0, 64], sizes = [2, 32], strides = [1, 1]} : vector<2x96xf32> to vector<2x32xf32>
    %896 = math.tanh %894 : vector<2x32xf32>
    %897 = arith.mulf %895, %896 : vector<2x32xf32>
    %898 = arith.index_cast %c7_i32_219 : i32 to index
    %c0_228 = arith.constant 0 : index
    %c0_229 = arith.constant 0 : index
    %899 = vector.load %arg49[%898, %c0_228, %c0_229] : memref<8x2x32xf32, #tpu.memory_space<vmem>>, vector<1x2x32xf32>
    %900 = vector.shape_cast %899 : vector<1x2x32xf32> to vector<2x32xf32>
    %901 = vector.shape_cast %881 : vector<2x32xf32> to vector<1x2x32xf32>
    tpu.vector_store %arg49[%898, %c0_228, %c0_229], %901 {strides = array<i32>} : memref<8x2x32xf32, #tpu.memory_space<vmem>>, vector<1x2x32xf32>,
    %902 = arith.index_cast %852 : i32 to index
    %c0_230 = arith.constant 0 : index
    %c0_231 = arith.constant 0 : index
    %903 = vector.load %arg50[%902, %c0_230, %c0_231] : memref<8x2x32xf32, #tpu.memory_space<vmem>>, vector<1x2x32xf32>
    %904 = vector.shape_cast %903 : vector<1x2x32xf32> to vector<2x32xf32>
    %905 = vector.shape_cast %897 : vector<2x32xf32> to vector<1x2x32xf32>
    tpu.vector_store %arg50[%902, %c0_230, %c0_231], %905 {strides = array<i32>} : memref<8x2x32xf32, #tpu.memory_space<vmem>>, vector<1x2x32xf32>,
    %906 = tpu.concatenate %881, %897 in 1 : vector<2x32xf32>, vector<2x32xf32> -> vector<2x64xf32>
    %c8_i32_232 = arith.constant 8 : i32
    %c0_233 = arith.constant 0 : index
    %c0_234 = arith.constant 0 : index
    %c0_235 = arith.constant 0 : index
    %907 = vector.load %arg49[%c0_233, %c0_234, %c0_235] : memref<8x2x32xf32, #tpu.memory_space<vmem>>, vector<8x2x32xf32>
    %c0_236 = arith.constant 0 : index
    %c0_237 = arith.constant 0 : index
    %c0_238 = arith.constant 0 : index
    %908 = vector.load %arg50[%c0_236, %c0_237, %c0_238] : memref<8x2x32xf32, #tpu.memory_space<vmem>>, vector<8x2x32xf32>
    %909 = tpu.concatenate %907, %908 in 2 : vector<8x2x32xf32>, vector<8x2x32xf32> -> vector<8x2x64xf32>
    %910 = vector.extract_strided_slice %909 {offsets = [0, 0, 0], sizes = [8, 1, 64], strides = [1, 1, 1]} : vector<8x2x64xf32> to vector<8x1x64xf32>
    %911 = vector.shape_cast %910 : vector<8x1x64xf32> to vector<8x64xf32>
    %912 = vector.extract_strided_slice %909 {offsets = [0, 1, 0], sizes = [8, 1, 64], strides = [1, 1, 1]} : vector<8x2x64xf32> to vector<8x1x64xf32>
    %913 = vector.shape_cast %912 : vector<8x1x64xf32> to vector<8x64xf32>
    %914 = tpu.concatenate %911, %913 in 0 : vector<8x64xf32>, vector<8x64xf32> -> vector<16x64xf32>
    %c0_239 = arith.constant 0 : index
    %c0_240 = arith.constant 0 : index
    %915 = vector.load %arg10[%c0_239, %c0_240] : memref<64x192xf32, #tpu.memory_space<vmem>>, vector<64x192xf32>
    %cst_241 = arith.constant dense<0.000000e+00> : vector<16x192xf32>
    %916 = tpu.matmul %914, %915, %cst_241 {dimension_numbers = #tpu.dot_dimension_numbers<[1], [0], [0], [1], [0, 0, 1, 1], [], []>} : vector<16x64xf32>, vector<64x192xf32>, vector<16x192xf32> -> vector<16x192xf32>
    %c0_242 = arith.constant 0 : index
    %c0_243 = arith.constant 0 : index
    %917 = vector.load %arg11[%c0_242, %c0_243] : memref<1x192xf32, #tpu.memory_space<vmem>>, vector<1x192xf32>
    %918 = vector.broadcast %917 : vector<1x192xf32> to vector<16x192xf32>
    %919 = arith.addf %916, %918 : vector<16x192xf32>
    %920 = vector.shape_cast %919 : vector<16x192xf32> to vector<2x8x192xf32>
    %c0_244 = arith.constant 0 : index
    %c0_245 = arith.constant 0 : index
    %921 = vector.load %arg12[%c0_244, %c0_245] : memref<64x64xf32, #tpu.memory_space<vmem>>, vector<64x64xf32>
    %cst_246 = arith.constant 0.000000e+00 : f32
    %922 = vector.broadcast %cst_246 : f32 to vector<2x64xf32>
    %923 = vector.extract_strided_slice %920 {offsets = [0, 0, 0], sizes = [2, 8, 16], strides = [1, 1, 1]} : vector<2x8x192xf32> to vector<2x8x16xf32>
    %924 = vector.extract_strided_slice %920 {offsets = [0, 0, 64], sizes = [2, 8, 16], strides = [1, 1, 1]} : vector<2x8x192xf32> to vector<2x8x16xf32>
    %925 = vector.extract_strided_slice %920 {offsets = [0, 0, 128], sizes = [2, 8, 16], strides = [1, 1, 1]} : vector<2x8x192xf32> to vector<2x8x16xf32>
    "tpu.trace_start"() <{level = 10 : i32, message = "bqd,bkd->bqk"}> : () -> ()
    %cst_247 = arith.constant dense<0.000000e+00> : vector<2x8x8xf32>
    %926 = tpu.matmul %923, %924, %cst_247 {dimension_numbers = #tpu.dot_dimension_numbers<[2], [2], [1], [1], [0, 0, 0, 1, 1, 1], [0], [0]>} : vector<2x8x16xf32>, vector<2x8x16xf32>, vector<2x8x8xf32> -> vector<2x8x8xf32>
    "tpu.trace_stop"() : () -> ()
    %cst_248 = arith.constant dense<0xFF800000> : vector<2x8xf32>
    %927 = vector.multi_reduction <maximumf>, %926, %cst_248 [2] : vector<2x8x8xf32> to vector<2x8xf32>
    %928 = vector.shape_cast %927 : vector<2x8xf32> to vector<2x8x1xf32>
    %929 = vector.broadcast %928 : vector<2x8x1xf32> to vector<2x8x8xf32>
    %930 = arith.subf %926, %929 : vector<2x8x8xf32>
    %931 = math.exp %930 : vector<2x8x8xf32>
    %cst_249 = arith.constant dense<0.000000e+00> : vector<2x8xf32>
    %932 = vector.multi_reduction <add>, %931, %cst_249 [2] : vector<2x8x8xf32> to vector<2x8xf32>
    %933 = vector.shape_cast %932 : vector<2x8xf32> to vector<2x8x1xf32>
    %934 = tpu.reciprocal %933 {approx = true} : vector<2x8x1xf32> -> vector<2x8x1xf32>
    %935 = vector.broadcast %934 : vector<2x8x1xf32> to vector<2x8x8xf32>
    %936 = arith.mulf %931, %935 : vector<2x8x8xf32>
    "tpu.trace_start"() <{level = 10 : i32, message = "bqk,bkd->bqd"}> : () -> ()
    %cst_250 = arith.constant dense<0.000000e+00> : vector<2x8x16xf32>
    %937 = tpu.matmul %936, %925, %cst_250 {dimension_numbers = #tpu.dot_dimension_numbers<[2], [1], [1], [2], [0, 0, 0, 1, 1, 2], [0], [0]>} : vector<2x8x8xf32>, vector<2x8x16xf32>, vector<2x8x16xf32> -> vector<2x8x16xf32>
    "tpu.trace_stop"() : () -> ()
    %cst_251 = arith.constant dense<0.000000e+00> : vector<2x16xf32>
    %938 = vector.multi_reduction <add>, %937, %cst_251 [1] : vector<2x8x16xf32> to vector<2x16xf32>
    %cst_252 = arith.constant 8.000000e+00 : f32
    %939 = vector.broadcast %cst_252 : f32 to vector<2x16xf32>
    %940 = arith.divf %938, %939 : vector<2x16xf32>
    %941 = vector.extract_strided_slice %921 {offsets = [0, 0], sizes = [16, 64], strides = [1, 1]} : vector<64x64xf32> to vector<16x64xf32>
    %cst_253 = arith.constant dense<0.000000e+00> : vector<2x64xf32>
    %942 = tpu.matmul %940, %941, %cst_253 {dimension_numbers = #tpu.dot_dimension_numbers<[1], [0], [0], [1], [0, 0, 1, 1], [], []>} : vector<2x16xf32>, vector<16x64xf32>, vector<2x64xf32> -> vector<2x64xf32>
    %943 = arith.addf %922, %942 : vector<2x64xf32>
    %944 = vector.extract_strided_slice %920 {offsets = [0, 0, 16], sizes = [2, 8, 16], strides = [1, 1, 1]} : vector<2x8x192xf32> to vector<2x8x16xf32>
    %945 = vector.extract_strided_slice %920 {offsets = [0, 0, 80], sizes = [2, 8, 16], strides = [1, 1, 1]} : vector<2x8x192xf32> to vector<2x8x16xf32>
    %946 = vector.extract_strided_slice %920 {offsets = [0, 0, 144], sizes = [2, 8, 16], strides = [1, 1, 1]} : vector<2x8x192xf32> to vector<2x8x16xf32>
    "tpu.trace_start"() <{level = 10 : i32, message = "bqd,bkd->bqk"}> : () -> ()
    %cst_254 = arith.constant dense<0.000000e+00> : vector<2x8x8xf32>
    %947 = tpu.matmul %944, %945, %cst_254 {dimension_numbers = #tpu.dot_dimension_numbers<[2], [2], [1], [1], [0, 0, 0, 1, 1, 1], [0], [0]>} : vector<2x8x16xf32>, vector<2x8x16xf32>, vector<2x8x8xf32> -> vector<2x8x8xf32>
    "tpu.trace_stop"() : () -> ()
    %cst_255 = arith.constant dense<0xFF800000> : vector<2x8xf32>
    %948 = vector.multi_reduction <maximumf>, %947, %cst_255 [2] : vector<2x8x8xf32> to vector<2x8xf32>
    %949 = vector.shape_cast %948 : vector<2x8xf32> to vector<2x8x1xf32>
    %950 = vector.broadcast %949 : vector<2x8x1xf32> to vector<2x8x8xf32>
    %951 = arith.subf %947, %950 : vector<2x8x8xf32>
    %952 = math.exp %951 : vector<2x8x8xf32>
    %cst_256 = arith.constant dense<0.000000e+00> : vector<2x8xf32>
    %953 = vector.multi_reduction <add>, %952, %cst_256 [2] : vector<2x8x8xf32> to vector<2x8xf32>
    %954 = vector.shape_cast %953 : vector<2x8xf32> to vector<2x8x1xf32>
    %955 = tpu.reciprocal %954 {approx = true} : vector<2x8x1xf32> -> vector<2x8x1xf32>
    %956 = vector.broadcast %955 : vector<2x8x1xf32> to vector<2x8x8xf32>
    %957 = arith.mulf %952, %956 : vector<2x8x8xf32>
    "tpu.trace_start"() <{level = 10 : i32, message = "bqk,bkd->bqd"}> : () -> ()
    %cst_257 = arith.constant dense<0.000000e+00> : vector<2x8x16xf32>
    %958 = tpu.matmul %957, %946, %cst_257 {dimension_numbers = #tpu.dot_dimension_numbers<[2], [1], [1], [2], [0, 0, 0, 1, 1, 2], [0], [0]>} : vector<2x8x8xf32>, vector<2x8x16xf32>, vector<2x8x16xf32> -> vector<2x8x16xf32>
    "tpu.trace_stop"() : () -> ()
    %cst_258 = arith.constant dense<0.000000e+00> : vector<2x16xf32>
    %959 = vector.multi_reduction <add>, %958, %cst_258 [1] : vector<2x8x16xf32> to vector<2x16xf32>
    %cst_259 = arith.constant 8.000000e+00 : f32
    %960 = vector.broadcast %cst_259 : f32 to vector<2x16xf32>
    %961 = arith.divf %959, %960 : vector<2x16xf32>
    %962 = vector.extract_strided_slice %921 {offsets = [16, 0], sizes = [16, 64], strides = [1, 1]} : vector<64x64xf32> to vector<16x64xf32>
    %cst_260 = arith.constant dense<0.000000e+00> : vector<2x64xf32>
    %963 = tpu.matmul %961, %962, %cst_260 {dimension_numbers = #tpu.dot_dimension_numbers<[1], [0], [0], [1], [0, 0, 1, 1], [], []>} : vector<2x16xf32>, vector<16x64xf32>, vector<2x64xf32> -> vector<2x64xf32>
    %964 = arith.addf %943, %963 : vector<2x64xf32>
    %965 = vector.extract_strided_slice %920 {offsets = [0, 0, 32], sizes = [2, 8, 16], strides = [1, 1, 1]} : vector<2x8x192xf32> to vector<2x8x16xf32>
    %966 = vector.extract_strided_slice %920 {offsets = [0, 0, 96], sizes = [2, 8, 16], strides = [1, 1, 1]} : vector<2x8x192xf32> to vector<2x8x16xf32>
    %967 = vector.extract_strided_slice %920 {offsets = [0, 0, 160], sizes = [2, 8, 16], strides = [1, 1, 1]} : vector<2x8x192xf32> to vector<2x8x16xf32>
    "tpu.trace_start"() <{level = 10 : i32, message = "bqd,bkd->bqk"}> : () -> ()
    %cst_261 = arith.constant dense<0.000000e+00> : vector<2x8x8xf32>
    %968 = tpu.matmul %965, %966, %cst_261 {dimension_numbers = #tpu.dot_dimension_numbers<[2], [2], [1], [1], [0, 0, 0, 1, 1, 1], [0], [0]>} : vector<2x8x16xf32>, vector<2x8x16xf32>, vector<2x8x8xf32> -> vector<2x8x8xf32>
    "tpu.trace_stop"() : () -> ()
    %cst_262 = arith.constant dense<0xFF800000> : vector<2x8xf32>
    %969 = vector.multi_reduction <maximumf>, %968, %cst_262 [2] : vector<2x8x8xf32> to vector<2x8xf32>
    %970 = vector.shape_cast %969 : vector<2x8xf32> to vector<2x8x1xf32>
    %971 = vector.broadcast %970 : vector<2x8x1xf32> to vector<2x8x8xf32>
    %972 = arith.subf %968, %971 : vector<2x8x8xf32>
    %973 = math.exp %972 : vector<2x8x8xf32>
    %cst_263 = arith.constant dense<0.000000e+00> : vector<2x8xf32>
    %974 = vector.multi_reduction <add>, %973, %cst_263 [2] : vector<2x8x8xf32> to vector<2x8xf32>
    %975 = vector.shape_cast %974 : vector<2x8xf32> to vector<2x8x1xf32>
    %976 = tpu.reciprocal %975 {approx = true} : vector<2x8x1xf32> -> vector<2x8x1xf32>
    %977 = vector.broadcast %976 : vector<2x8x1xf32> to vector<2x8x8xf32>
    %978 = arith.mulf %973, %977 : vector<2x8x8xf32>
    "tpu.trace_start"() <{level = 10 : i32, message = "bqk,bkd->bqd"}> : () -> ()
    %cst_264 = arith.constant dense<0.000000e+00> : vector<2x8x16xf32>
    %979 = tpu.matmul %978, %967, %cst_264 {dimension_numbers = #tpu.dot_dimension_numbers<[2], [1], [1], [2], [0, 0, 0, 1, 1, 2], [0], [0]>} : vector<2x8x8xf32>, vector<2x8x16xf32>, vector<2x8x16xf32> -> vector<2x8x16xf32>
    "tpu.trace_stop"() : () -> ()
    %cst_265 = arith.constant dense<0.000000e+00> : vector<2x16xf32>
    %980 = vector.multi_reduction <add>, %979, %cst_265 [1] : vector<2x8x16xf32> to vector<2x16xf32>
    %cst_266 = arith.constant 8.000000e+00 : f32
    %981 = vector.broadcast %cst_266 : f32 to vector<2x16xf32>
    %982 = arith.divf %980, %981 : vector<2x16xf32>
    %983 = vector.extract_strided_slice %921 {offsets = [32, 0], sizes = [16, 64], strides = [1, 1]} : vector<64x64xf32> to vector<16x64xf32>
    %cst_267 = arith.constant dense<0.000000e+00> : vector<2x64xf32>
    %984 = tpu.matmul %982, %983, %cst_267 {dimension_numbers = #tpu.dot_dimension_numbers<[1], [0], [0], [1], [0, 0, 1, 1], [], []>} : vector<2x16xf32>, vector<16x64xf32>, vector<2x64xf32> -> vector<2x64xf32>
    %985 = arith.addf %964, %984 : vector<2x64xf32>
    %986 = vector.extract_strided_slice %920 {offsets = [0, 0, 48], sizes = [2, 8, 16], strides = [1, 1, 1]} : vector<2x8x192xf32> to vector<2x8x16xf32>
    %987 = vector.extract_strided_slice %920 {offsets = [0, 0, 112], sizes = [2, 8, 16], strides = [1, 1, 1]} : vector<2x8x192xf32> to vector<2x8x16xf32>
    %988 = vector.extract_strided_slice %920 {offsets = [0, 0, 176], sizes = [2, 8, 16], strides = [1, 1, 1]} : vector<2x8x192xf32> to vector<2x8x16xf32>
    "tpu.trace_start"() <{level = 10 : i32, message = "bqd,bkd->bqk"}> : () -> ()
    %cst_268 = arith.constant dense<0.000000e+00> : vector<2x8x8xf32>
    %989 = tpu.matmul %986, %987, %cst_268 {dimension_numbers = #tpu.dot_dimension_numbers<[2], [2], [1], [1], [0, 0, 0, 1, 1, 1], [0], [0]>} : vector<2x8x16xf32>, vector<2x8x16xf32>, vector<2x8x8xf32> -> vector<2x8x8xf32>
    "tpu.trace_stop"() : () -> ()
    %cst_269 = arith.constant dense<0xFF800000> : vector<2x8xf32>
    %990 = vector.multi_reduction <maximumf>, %989, %cst_269 [2] : vector<2x8x8xf32> to vector<2x8xf32>
    %991 = vector.shape_cast %990 : vector<2x8xf32> to vector<2x8x1xf32>
    %992 = vector.broadcast %991 : vector<2x8x1xf32> to vector<2x8x8xf32>
    %993 = arith.subf %989, %992 : vector<2x8x8xf32>
    %994 = math.exp %993 : vector<2x8x8xf32>
    %cst_270 = arith.constant dense<0.000000e+00> : vector<2x8xf32>
    %995 = vector.multi_reduction <add>, %994, %cst_270 [2] : vector<2x8x8xf32> to vector<2x8xf32>
    %996 = vector.shape_cast %995 : vector<2x8xf32> to vector<2x8x1xf32>
    %997 = tpu.reciprocal %996 {approx = true} : vector<2x8x1xf32> -> vector<2x8x1xf32>
    %998 = vector.broadcast %997 : vector<2x8x1xf32> to vector<2x8x8xf32>
    %999 = arith.mulf %994, %998 : vector<2x8x8xf32>
    "tpu.trace_start"() <{level = 10 : i32, message = "bqk,bkd->bqd"}> : () -> ()
    %cst_271 = arith.constant dense<0.000000e+00> : vector<2x8x16xf32>
    %1000 = tpu.matmul %999, %988, %cst_271 {dimension_numbers = #tpu.dot_dimension_numbers<[2], [1], [1], [2], [0, 0, 0, 1, 1, 2], [0], [0]>} : vector<2x8x8xf32>, vector<2x8x16xf32>, vector<2x8x16xf32> -> vector<2x8x16xf32>
    "tpu.trace_stop"() : () -> ()
    %cst_272 = arith.constant dense<0.000000e+00> : vector<2x16xf32>
    %1001 = vector.multi_reduction <add>, %1000, %cst_272 [1] : vector<2x8x16xf32> to vector<2x16xf32>
    %cst_273 = arith.constant 8.000000e+00 : f32
    %1002 = vector.broadcast %cst_273 : f32 to vector<2x16xf32>
    %1003 = arith.divf %1001, %1002 : vector<2x16xf32>
    %1004 = vector.extract_strided_slice %921 {offsets = [48, 0], sizes = [16, 64], strides = [1, 1]} : vector<64x64xf32> to vector<16x64xf32>
    %cst_274 = arith.constant dense<0.000000e+00> : vector<2x64xf32>
    %1005 = tpu.matmul %1003, %1004, %cst_274 {dimension_numbers = #tpu.dot_dimension_numbers<[1], [0], [0], [1], [0, 0, 1, 1], [], []>} : vector<2x16xf32>, vector<16x64xf32>, vector<2x64xf32> -> vector<2x64xf32>
    %1006 = arith.addf %985, %1005 : vector<2x64xf32>
    %c0_275 = arith.constant 0 : index
    %c0_276 = arith.constant 0 : index
    %1007 = vector.load %arg13[%c0_275, %c0_276] : memref<1x64xf32, #tpu.memory_space<vmem>>, vector<1x64xf32>
    %1008 = vector.broadcast %1007 : vector<1x64xf32> to vector<2x64xf32>
    %1009 = arith.addf %1006, %1008 : vector<2x64xf32>
    %c0_277 = arith.constant 0 : index
    %c0_278 = arith.constant 0 : index
    %1010 = vector.load %arg1[%c0_277, %c0_278] : memref<2x8xf32, #tpu.memory_space<vmem>>, vector<2x8xf32>
    %c0_279 = arith.constant 0 : index
    %c0_280 = arith.constant 0 : index
    %1011 = vector.load %arg8[%c0_279, %c0_280] : memref<8x64xf32, #tpu.memory_space<vmem>>, vector<8x64xf32>
    %cst_281 = arith.constant dense<0.000000e+00> : vector<2x64xf32>
    %1012 = tpu.matmul %1010, %1011, %cst_281 {dimension_numbers = #tpu.dot_dimension_numbers<[1], [0], [0], [1], [0, 0, 1, 1], [], []>} : vector<2x8xf32>, vector<8x64xf32>, vector<2x64xf32> -> vector<2x64xf32>
    %c0_282 = arith.constant 0 : index
    %c0_283 = arith.constant 0 : index
    %1013 = vector.load %arg9[%c0_282, %c0_283] : memref<1x64xf32, #tpu.memory_space<vmem>>, vector<1x64xf32>
    %1014 = vector.broadcast %1013 : vector<1x64xf32> to vector<2x64xf32>
    %1015 = arith.addf %1012, %1014 : vector<2x64xf32>
    %1016 = arith.addf %1009, %1015 : vector<2x64xf32>
    %c0_284 = arith.constant 0 : index
    %c0_285 = arith.constant 0 : index
    %1017 = vector.load %arg14[%c0_284, %c0_285] : memref<1x64xf32, #tpu.memory_space<vmem>>, vector<1x64xf32>
    %c0_286 = arith.constant 0 : index
    %c0_287 = arith.constant 0 : index
    %1018 = vector.load %arg15[%c0_286, %c0_287] : memref<1x64xf32, #tpu.memory_space<vmem>>, vector<1x64xf32>
    %cst_288 = arith.constant dense<0.000000e+00> : vector<2xf32>
    %1019 = vector.multi_reduction <add>, %1016, %cst_288 [1] : vector<2x64xf32> to vector<2xf32>
    %1020 = vector.shape_cast %1019 : vector<2xf32> to vector<2x1xf32>
    %cst_289 = arith.constant 6.400000e+01 : f32
    %1021 = vector.broadcast %cst_289 : f32 to vector<2x1xf32>
    %1022 = arith.divf %1020, %1021 : vector<2x1xf32>
    %1023 = vector.broadcast %1022 : vector<2x1xf32> to vector<2x64xf32>
    %1024 = arith.subf %1016, %1023 : vector<2x64xf32>
    %1025 = arith.mulf %1024, %1024 : vector<2x64xf32>
    %cst_290 = arith.constant dense<0.000000e+00> : vector<2xf32>
    %1026 = vector.multi_reduction <add>, %1025, %cst_290 [1] : vector<2x64xf32> to vector<2xf32>
    %1027 = vector.shape_cast %1026 : vector<2xf32> to vector<2x1xf32>
    %cst_291 = arith.constant 6.400000e+01 : f32
    %1028 = vector.broadcast %cst_291 : f32 to vector<2x1xf32>
    %1029 = arith.divf %1027, %1028 : vector<2x1xf32>
    %1030 = vector.broadcast %1022 : vector<2x1xf32> to vector<2x64xf32>
    %1031 = arith.subf %1016, %1030 : vector<2x64xf32>
    %cst_292 = arith.constant 9.99999974E-6 : f32
    %1032 = vector.broadcast %cst_292 : f32 to vector<2x1xf32>
    %1033 = arith.addf %1029, %1032 : vector<2x1xf32>
    %1034 = math.rsqrt %1033 : vector<2x1xf32>
    %1035 = vector.broadcast %1034 : vector<2x1xf32> to vector<2x64xf32>
    %1036 = arith.mulf %1031, %1035 : vector<2x64xf32>
    %1037 = vector.broadcast %1017 : vector<1x64xf32> to vector<2x64xf32>
    %1038 = arith.mulf %1036, %1037 : vector<2x64xf32>
    %1039 = vector.broadcast %1018 : vector<1x64xf32> to vector<2x64xf32>
    %1040 = arith.addf %1038, %1039 : vector<2x64xf32>
    %c0_293 = arith.constant 0 : index
    %c0_294 = arith.constant 0 : index
    %1041 = vector.load %arg16[%c0_293, %c0_294] : memref<64x32xf32, #tpu.memory_space<vmem>>, vector<64x32xf32>
    %cst_295 = arith.constant dense<0.000000e+00> : vector<2x32xf32>
    %1042 = tpu.matmul %1040, %1041, %cst_295 {dimension_numbers = #tpu.dot_dimension_numbers<[1], [0], [0], [1], [0, 0, 1, 1], [], []>} : vector<2x64xf32>, vector<64x32xf32>, vector<2x32xf32> -> vector<2x32xf32>
    %c0_296 = arith.constant 0 : index
    %c0_297 = arith.constant 0 : index
    %1043 = vector.load %arg17[%c0_296, %c0_297] : memref<1x32xf32, #tpu.memory_space<vmem>>, vector<1x32xf32>
    %1044 = vector.broadcast %1043 : vector<1x32xf32> to vector<2x32xf32>
    %1045 = arith.addf %1042, %1044 : vector<2x32xf32>
    %c0_298 = arith.constant 0 : index
    %c0_299 = arith.constant 0 : index
    %1046 = vector.load %arg18[%c0_298, %c0_299] : memref<10x10xf32, #tpu.memory_space<vmem>>, vector<10x10xf32>
    %c0_300 = arith.constant 0 : index
    %c0_301 = arith.constant 0 : index
    %1047 = vector.load %arg19[%c0_300, %c0_301] : memref<10x16xf32, #tpu.memory_space<vmem>>, vector<10x16xf32>
    %c0_302 = arith.constant 0 : index
    %c0_303 = arith.constant 0 : index
    %1048 = vector.load %arg20[%c0_302, %c0_303] : memref<16x24xf32, #tpu.memory_space<vmem>>, vector<16x24xf32>
    %cst_304 = arith.constant dense<0.000000e+00> : vector<10x24xf32>
    %1049 = tpu.matmul %1047, %1048, %cst_304 {dimension_numbers = #tpu.dot_dimension_numbers<[1], [0], [0], [1], [0, 0, 1, 1], [], []>} : vector<10x16xf32>, vector<16x24xf32>, vector<10x24xf32> -> vector<10x24xf32>
    %c0_305 = arith.constant 0 : index
    %c0_306 = arith.constant 0 : index
    %1050 = vector.load %arg21[%c0_305, %c0_306] : memref<1x24xf32, #tpu.memory_space<vmem>>, vector<1x24xf32>
    %1051 = vector.broadcast %1050 : vector<1x24xf32> to vector<10x24xf32>
    %1052 = arith.addf %1049, %1051 : vector<10x24xf32>
    %c0_307 = arith.constant 0 : index
    %c0_308 = arith.constant 0 : index
    %1053 = vector.load %arg22[%c0_307, %c0_308] : memref<16x32xf32, #tpu.memory_space<vmem>>, vector<16x32xf32>
    %cst_309 = arith.constant dense<0.000000e+00> : vector<10x32xf32>
    %1054 = tpu.matmul %1047, %1053, %cst_309 {dimension_numbers = #tpu.dot_dimension_numbers<[1], [0], [0], [1], [0, 0, 1, 1], [], []>} : vector<10x16xf32>, vector<16x32xf32>, vector<10x32xf32> -> vector<10x32xf32>
    %cst_310 = arith.constant dense<0.000000e+00> : vector<10x32xf32>
    %1055 = tpu.matmul %1046, %1054, %cst_310 {dimension_numbers = #tpu.dot_dimension_numbers<[1], [0], [0], [1], [0, 0, 1, 1], [], []>} : vector<10x10xf32>, vector<10x32xf32>, vector<10x32xf32> -> vector<10x32xf32>
    %c0_311 = arith.constant 0 : index
    %c0_312 = arith.constant 0 : index
    %1056 = vector.load %arg23[%c0_311, %c0_312] : memref<1x32xf32, #tpu.memory_space<vmem>>, vector<1x32xf32>
    %1057 = vector.broadcast %1056 : vector<1x32xf32> to vector<10x32xf32>
    %1058 = arith.addf %1055, %1057 : vector<10x32xf32>
    %cst_313 = arith.constant 0.000000e+00 : f32
    %1059 = vector.broadcast %cst_313 : f32 to vector<10x32xf32>
    %1060 = arith.cmpf oge, %1058, %1059 : vector<10x32xf32>
    %cst_314 = arith.constant 0.00999999977 : f32
    %1061 = vector.broadcast %cst_314 : f32 to vector<10x32xf32>
    %1062 = arith.mulf %1061, %1058 : vector<10x32xf32>
    %1063 = arith.select %1060, %1058, %1062 : vector<10x32xi1>, vector<10x32xf32>
    %c0_315 = arith.constant 0 : index
    %c0_316 = arith.constant 0 : index
    %1064 = vector.load %arg24[%c0_315, %c0_316] : memref<32x32xf32, #tpu.memory_space<vmem>>, vector<32x32xf32>
    %cst_317 = arith.constant dense<0.000000e+00> : vector<10x32xf32>
    %1065 = tpu.matmul %1063, %1064, %cst_317 {dimension_numbers = #tpu.dot_dimension_numbers<[1], [0], [0], [1], [0, 0, 1, 1], [], []>} : vector<10x32xf32>, vector<32x32xf32>, vector<10x32xf32> -> vector<10x32xf32>
    %cst_318 = arith.constant dense<0.000000e+00> : vector<10x32xf32>
    %1066 = tpu.matmul %1046, %1065, %cst_318 {dimension_numbers = #tpu.dot_dimension_numbers<[1], [0], [0], [1], [0, 0, 1, 1], [], []>} : vector<10x10xf32>, vector<10x32xf32>, vector<10x32xf32> -> vector<10x32xf32>
    %c0_319 = arith.constant 0 : index
    %c0_320 = arith.constant 0 : index
    %1067 = vector.load %arg25[%c0_319, %c0_320] : memref<1x32xf32, #tpu.memory_space<vmem>>, vector<1x32xf32>
    %1068 = vector.broadcast %1067 : vector<1x32xf32> to vector<10x32xf32>
    %1069 = arith.addf %1066, %1068 : vector<10x32xf32>
    %cst_321 = arith.constant 0.000000e+00 : f32
    %1070 = vector.broadcast %cst_321 : f32 to vector<10x32xf32>
    %1071 = arith.cmpf oge, %1069, %1070 : vector<10x32xf32>
    %cst_322 = arith.constant 0.00999999977 : f32
    %1072 = vector.broadcast %cst_322 : f32 to vector<10x32xf32>
    %1073 = arith.mulf %1072, %1069 : vector<10x32xf32>
    %1074 = arith.select %1071, %1069, %1073 : vector<10x32xi1>, vector<10x32xf32>
    %c0_323 = arith.constant 0 : index
    %c0_324 = arith.constant 0 : index
    %1075 = vector.load %arg26[%c0_323, %c0_324] : memref<32x32xf32, #tpu.memory_space<vmem>>, vector<32x32xf32>
    %cst_325 = arith.constant dense<0.000000e+00> : vector<10x32xf32>
    %1076 = tpu.matmul %1074, %1075, %cst_325 {dimension_numbers = #tpu.dot_dimension_numbers<[1], [0], [0], [1], [0, 0, 1, 1], [], []>} : vector<10x32xf32>, vector<32x32xf32>, vector<10x32xf32> -> vector<10x32xf32>
    %cst_326 = arith.constant dense<0.000000e+00> : vector<10x32xf32>
    %1077 = tpu.matmul %1046, %1076, %cst_326 {dimension_numbers = #tpu.dot_dimension_numbers<[1], [0], [0], [1], [0, 0, 1, 1], [], []>} : vector<10x10xf32>, vector<10x32xf32>, vector<10x32xf32> -> vector<10x32xf32>
    %c0_327 = arith.constant 0 : index
    %c0_328 = arith.constant 0 : index
    %1078 = vector.load %arg27[%c0_327, %c0_328] : memref<1x32xf32, #tpu.memory_space<vmem>>, vector<1x32xf32>
    %1079 = vector.broadcast %1078 : vector<1x32xf32> to vector<10x32xf32>
    %1080 = arith.addf %1077, %1079 : vector<10x32xf32>
    %cst_329 = arith.constant 0.000000e+00 : f32
    %1081 = vector.broadcast %cst_329 : f32 to vector<10x32xf32>
    %1082 = arith.cmpf oge, %1080, %1081 : vector<10x32xf32>
    %cst_330 = arith.constant 0.00999999977 : f32
    %1083 = vector.broadcast %cst_330 : f32 to vector<10x32xf32>
    %1084 = arith.mulf %1083, %1080 : vector<10x32xf32>
    %1085 = arith.select %1082, %1080, %1084 : vector<10x32xi1>, vector<10x32xf32>
    %c0_331 = arith.constant 0 : index
    %c0_332 = arith.constant 0 : index
    %1086 = vector.load %arg28[%c0_331, %c0_332] : memref<32x24xf32, #tpu.memory_space<vmem>>, vector<32x24xf32>
    %cst_333 = arith.constant dense<0.000000e+00> : vector<10x24xf32>
    %1087 = tpu.matmul %1085, %1086, %cst_333 {dimension_numbers = #tpu.dot_dimension_numbers<[1], [0], [0], [1], [0, 0, 1, 1], [], []>} : vector<10x32xf32>, vector<32x24xf32>, vector<10x24xf32> -> vector<10x24xf32>
    %cst_334 = arith.constant dense<0.000000e+00> : vector<10x24xf32>
    %1088 = tpu.matmul %1046, %1087, %cst_334 {dimension_numbers = #tpu.dot_dimension_numbers<[1], [0], [0], [1], [0, 0, 1, 1], [], []>} : vector<10x10xf32>, vector<10x24xf32>, vector<10x24xf32> -> vector<10x24xf32>
    %c0_335 = arith.constant 0 : index
    %c0_336 = arith.constant 0 : index
    %1089 = vector.load %arg29[%c0_335, %c0_336] : memref<1x24xf32, #tpu.memory_space<vmem>>, vector<1x24xf32>
    %1090 = vector.broadcast %1089 : vector<1x24xf32> to vector<10x24xf32>
    %1091 = arith.addf %1088, %1090 : vector<10x24xf32>
    %1092 = arith.addf %1091, %1052 : vector<10x24xf32>
    %c0_337 = arith.constant 0 : index
    %c0_338 = arith.constant 0 : index
    %1093 = vector.load %arg30[%c0_337, %c0_338] : memref<1x24xf32, #tpu.memory_space<vmem>>, vector<1x24xf32>
    %1094 = vector.broadcast %1093 : vector<1x24xf32> to vector<10x24xf32>
    %1095 = arith.mulf %1092, %1094 : vector<10x24xf32>
    %c0_339 = arith.constant 0 : index
    %c0_340 = arith.constant 0 : index
    %1096 = vector.load %arg31[%c0_339, %c0_340] : memref<1x24xf32, #tpu.memory_space<vmem>>, vector<1x24xf32>
    %1097 = vector.broadcast %1096 : vector<1x24xf32> to vector<10x24xf32>
    %1098 = arith.addf %1095, %1097 : vector<10x24xf32>
    %c0_341 = arith.constant 0 : index
    %c0_342 = arith.constant 0 : index
    %1099 = vector.load %arg32[%c0_341, %c0_342] : memref<1x24xf32, #tpu.memory_space<vmem>>, vector<1x24xf32>
    %c0_343 = arith.constant 0 : index
    %c0_344 = arith.constant 0 : index
    %1100 = vector.load %arg33[%c0_343, %c0_344] : memref<1x24xf32, #tpu.memory_space<vmem>>, vector<1x24xf32>
    %cst_345 = arith.constant dense<0.000000e+00> : vector<10xf32>
    %1101 = vector.multi_reduction <add>, %1098, %cst_345 [1] : vector<10x24xf32> to vector<10xf32>
    %1102 = vector.shape_cast %1101 : vector<10xf32> to vector<10x1xf32>
    %cst_346 = arith.constant 2.400000e+01 : f32
    %1103 = vector.broadcast %cst_346 : f32 to vector<10x1xf32>
    %1104 = arith.divf %1102, %1103 : vector<10x1xf32>
    %1105 = vector.broadcast %1104 : vector<10x1xf32> to vector<10x24xf32>
    %1106 = arith.subf %1098, %1105 : vector<10x24xf32>
    %1107 = arith.mulf %1106, %1106 : vector<10x24xf32>
    %cst_347 = arith.constant dense<0.000000e+00> : vector<10xf32>
    %1108 = vector.multi_reduction <add>, %1107, %cst_347 [1] : vector<10x24xf32> to vector<10xf32>
    %1109 = vector.shape_cast %1108 : vector<10xf32> to vector<10x1xf32>
    %cst_348 = arith.constant 2.400000e+01 : f32
    %1110 = vector.broadcast %cst_348 : f32 to vector<10x1xf32>
    %1111 = arith.divf %1109, %1110 : vector<10x1xf32>
    %1112 = vector.broadcast %1104 : vector<10x1xf32> to vector<10x24xf32>
    %1113 = arith.subf %1098, %1112 : vector<10x24xf32>
    %cst_349 = arith.constant 9.99999974E-6 : f32
    %1114 = vector.broadcast %cst_349 : f32 to vector<10x1xf32>
    %1115 = arith.addf %1111, %1114 : vector<10x1xf32>
    %1116 = math.rsqrt %1115 : vector<10x1xf32>
    %1117 = vector.broadcast %1116 : vector<10x1xf32> to vector<10x24xf32>
    %1118 = arith.mulf %1113, %1117 : vector<10x24xf32>
    %1119 = vector.broadcast %1099 : vector<1x24xf32> to vector<10x24xf32>
    %1120 = arith.mulf %1118, %1119 : vector<10x24xf32>
    %1121 = vector.broadcast %1100 : vector<1x24xf32> to vector<10x24xf32>
    %1122 = arith.addf %1120, %1121 : vector<10x24xf32>
    %c0_350 = arith.constant 0 : index
    %c0_351 = arith.constant 0 : index
    %1123 = vector.load %arg34[%c0_350, %c0_351] : memref<24x32xf32, #tpu.memory_space<vmem>>, vector<24x32xf32>
    %cst_352 = arith.constant dense<0.000000e+00> : vector<10x32xf32>
    %1124 = tpu.matmul %1122, %1123, %cst_352 {dimension_numbers = #tpu.dot_dimension_numbers<[1], [0], [0], [1], [0, 0, 1, 1], [], []>} : vector<10x24xf32>, vector<24x32xf32>, vector<10x32xf32> -> vector<10x32xf32>
    %c0_353 = arith.constant 0 : index
    %c0_354 = arith.constant 0 : index
    %1125 = vector.load %arg35[%c0_353, %c0_354] : memref<1x32xf32, #tpu.memory_space<vmem>>, vector<1x32xf32>
    %1126 = vector.broadcast %1125 : vector<1x32xf32> to vector<10x32xf32>
    %1127 = arith.addf %1124, %1126 : vector<10x32xf32>
    %cst_355 = arith.constant dense<0.000000e+00> : vector<32xf32>
    %1128 = vector.multi_reduction <add>, %1127, %cst_355 [0] : vector<10x32xf32> to vector<32xf32>
    %1129 = vector.shape_cast %1128 : vector<32xf32> to vector<1x32xf32>
    %cst_356 = arith.constant 1.000000e+01 : f32
    %1130 = vector.broadcast %cst_356 : f32 to vector<1x32xf32>
    %1131 = arith.divf %1129, %1130 : vector<1x32xf32>
    %c0_357 = arith.constant 0 : index
    %c0_358 = arith.constant 0 : index
    %1132 = vector.load %arg37[%c0_357, %c0_358] : memref<32x64xf32, #tpu.memory_space<vmem>>, vector<32x64xf32>
    %cst_359 = arith.constant dense<0.000000e+00> : vector<1x64xf32>
    %1133 = tpu.matmul %1131, %1132, %cst_359 {dimension_numbers = #tpu.dot_dimension_numbers<[1], [0], [0], [1], [0, 0, 1, 1], [], []>} : vector<1x32xf32>, vector<32x64xf32>, vector<1x64xf32> -> vector<1x64xf32>
    %c0_360 = arith.constant 0 : index
    %c0_361 = arith.constant 0 : index
    %1134 = vector.load %arg38[%c0_360, %c0_361] : memref<1x64xf32, #tpu.memory_space<vmem>>, vector<1x64xf32>
    %1135 = arith.addf %1133, %1134 : vector<1x64xf32>
    %c0_362 = arith.constant 0 : index
    %c0_363 = arith.constant 0 : index
    %1136 = vector.load %arg36[%c0_362, %c0_363] : memref<32x64xf32, #tpu.memory_space<vmem>>, vector<32x64xf32>
    %cst_364 = arith.constant dense<0.000000e+00> : vector<2x64xf32>
    %1137 = tpu.matmul %1045, %1136, %cst_364 {dimension_numbers = #tpu.dot_dimension_numbers<[1], [0], [0], [1], [0, 0, 1, 1], [], []>} : vector<2x32xf32>, vector<32x64xf32>, vector<2x64xf32> -> vector<2x64xf32>
    %1138 = vector.broadcast %1135 : vector<1x64xf32> to vector<2x64xf32>
    %1139 = arith.addf %1137, %1138 : vector<2x64xf32>
    %c0_365 = arith.constant 0 : index
    %c0_366 = arith.constant 0 : index
    %1140 = vector.load %arg39[%c0_365, %c0_366] : memref<64x64xf32, #tpu.memory_space<vmem>>, vector<64x64xf32>
    %cst_367 = arith.constant dense<0.000000e+00> : vector<2x64xf32>
    %1141 = tpu.matmul %1139, %1140, %cst_367 {dimension_numbers = #tpu.dot_dimension_numbers<[1], [0], [0], [1], [0, 0, 1, 1], [], []>} : vector<2x64xf32>, vector<64x64xf32>, vector<2x64xf32> -> vector<2x64xf32>
    %c0_368 = arith.constant 0 : index
    %c0_369 = arith.constant 0 : index
    %1142 = vector.load %arg40[%c0_368, %c0_369] : memref<1x64xf32, #tpu.memory_space<vmem>>, vector<1x64xf32>
    %1143 = vector.broadcast %1142 : vector<1x64xf32> to vector<2x64xf32>
    %1144 = arith.addf %1141, %1143 : vector<2x64xf32>
    %c0_370 = arith.constant 0 : index
    %c0_371 = arith.constant 0 : index
    %1145 = vector.load %arg41[%c0_370, %c0_371] : memref<64x64xf32, #tpu.memory_space<vmem>>, vector<64x64xf32>
    %cst_372 = arith.constant dense<0.000000e+00> : vector<2x64xf32>
    %1146 = tpu.matmul %1144, %1145, %cst_372 {dimension_numbers = #tpu.dot_dimension_numbers<[1], [0], [0], [1], [0, 0, 1, 1], [], []>} : vector<2x64xf32>, vector<64x64xf32>, vector<2x64xf32> -> vector<2x64xf32>
    %c0_373 = arith.constant 0 : index
    %c0_374 = arith.constant 0 : index
    %1147 = vector.load %arg42[%c0_373, %c0_374] : memref<1x64xf32, #tpu.memory_space<vmem>>, vector<1x64xf32>
    %1148 = vector.broadcast %1147 : vector<1x64xf32> to vector<2x64xf32>
    %1149 = arith.addf %1146, %1148 : vector<2x64xf32>
    %c0_375 = arith.constant 0 : index
    %c0_376 = arith.constant 0 : index
    %1150 = vector.load %arg43[%c0_375, %c0_376] : memref<1x64xf32, #tpu.memory_space<vmem>>, vector<1x64xf32>
    %c0_377 = arith.constant 0 : index
    %c0_378 = arith.constant 0 : index
    %1151 = vector.load %arg44[%c0_377, %c0_378] : memref<1x64xf32, #tpu.memory_space<vmem>>, vector<1x64xf32>
    %cst_379 = arith.constant dense<0.000000e+00> : vector<2xf32>
    %1152 = vector.multi_reduction <add>, %1149, %cst_379 [1] : vector<2x64xf32> to vector<2xf32>
    %1153 = vector.shape_cast %1152 : vector<2xf32> to vector<2x1xf32>
    %cst_380 = arith.constant 6.400000e+01 : f32
    %1154 = vector.broadcast %cst_380 : f32 to vector<2x1xf32>
    %1155 = arith.divf %1153, %1154 : vector<2x1xf32>
    %1156 = vector.broadcast %1155 : vector<2x1xf32> to vector<2x64xf32>
    %1157 = arith.subf %1149, %1156 : vector<2x64xf32>
    %1158 = arith.mulf %1157, %1157 : vector<2x64xf32>
    %cst_381 = arith.constant dense<0.000000e+00> : vector<2xf32>
    %1159 = vector.multi_reduction <add>, %1158, %cst_381 [1] : vector<2x64xf32> to vector<2xf32>
    %1160 = vector.shape_cast %1159 : vector<2xf32> to vector<2x1xf32>
    %cst_382 = arith.constant 6.400000e+01 : f32
    %1161 = vector.broadcast %cst_382 : f32 to vector<2x1xf32>
    %1162 = arith.divf %1160, %1161 : vector<2x1xf32>
    %1163 = vector.broadcast %1155 : vector<2x1xf32> to vector<2x64xf32>
    %1164 = arith.subf %1149, %1163 : vector<2x64xf32>
    %cst_383 = arith.constant 9.99999974E-6 : f32
    %1165 = vector.broadcast %cst_383 : f32 to vector<2x1xf32>
    %1166 = arith.addf %1162, %1165 : vector<2x1xf32>
    %1167 = math.rsqrt %1166 : vector<2x1xf32>
    %1168 = vector.broadcast %1167 : vector<2x1xf32> to vector<2x64xf32>
    %1169 = arith.mulf %1164, %1168 : vector<2x64xf32>
    %1170 = vector.broadcast %1150 : vector<1x64xf32> to vector<2x64xf32>
    %1171 = arith.mulf %1169, %1170 : vector<2x64xf32>
    %1172 = vector.broadcast %1151 : vector<1x64xf32> to vector<2x64xf32>
    %1173 = arith.addf %1171, %1172 : vector<2x64xf32>
    %c0_384 = arith.constant 0 : index
    %c0_385 = arith.constant 0 : index
    %1174 = vector.load %arg45[%c0_384, %c0_385] : memref<64x1xf32, #tpu.memory_space<vmem>>, vector<64x1xf32>
    %cst_386 = arith.constant dense<0.000000e+00> : vector<2x1xf32>
    %1175 = tpu.matmul %1173, %1174, %cst_386 {dimension_numbers = #tpu.dot_dimension_numbers<[1], [0], [0], [1], [0, 0, 1, 1], [], []>} : vector<2x64xf32>, vector<64x1xf32>, vector<2x1xf32> -> vector<2x1xf32>
    %c0_387 = arith.constant 0 : index
    %c0_388 = arith.constant 0 : index
    %1176 = vector.load %arg46[%c0_387, %c0_388] : memref<1x1xf32, #tpu.memory_space<vmem>>, vector<1x1xf32>
    %1177 = vector.broadcast %1176 : vector<1x1xf32> to vector<2x1xf32>
    %1178 = arith.addf %1175, %1177 : vector<2x1xf32>
    %c0_389 = arith.constant 0 : index
    %c0_390 = arith.constant 0 : index
    %1179 = vector.load %arg47[%c0_389, %c0_390] : memref<2x1xf32, #tpu.memory_space<vmem>>, vector<2x1xf32>
    tpu.vector_store %arg47[%c0_389, %c0_390], %1178 {strides = array<i32>} : memref<2x1xf32, #tpu.memory_space<vmem>>, vector<2x1xf32>,
    return
  }
}

</mosaic_0001>

<llo_original>
// kernel: lstm_gcn_forward.1
$region0: #{lstm_gcn_forward.1}
  #allocation0 [shape = 'u32[]', space=smem, size = 0x4, offset = 0x4, fixed_abs, tag = 'smem constant byte address 0x4 - core index']
  #allocation1 [shape = 'u32[144,128]{1,0:T(1,128)}', space=vmem, size = 0x12000, scoped, tag = 'internal scratch']
  #allocation2 [shape = 'f32[8,2,256]{2,1,0:T(2,128)}', space=vmem, size = 0x4000, scoped, tag = 'scratch operand']
  #allocation3 [shape = 'f32[8,2,32]{2,1,0:T(2,128)}', space=vmem, size = 0x2000, scoped, tag = 'scratch operand']
  #allocation4 [shape = 'f32[8,2,32]{2,1,0:T(2,128)}', space=vmem, size = 0x2000, scoped, tag = 'scratch operand']
  #allocation5 [shape = 'f32[1,1]{1,0:T(1,128)S(1)}', space=vmem, size = 0x200, scoped, tag = 'scoped memory for lstm_gcn_forward.1']
  %s0 = inlined_call_operand.smem [shape: u32[48], index: -1, kind: input, shape index: {}]
  %s1 = sld [smem:[%s0]]
  %s2 = scalar_lea.smem %s0, 1
  %s3 = sld [smem:[%s2]]
  %s4 = scalar_lea.smem %s0, 2
  %s5 = sld [smem:[%s4]]
  %s6 = scalar_lea.smem %s0, 3
  %s7 = sld [smem:[%s6]]
  %s8 = scalar_lea.smem %s0, 4
  %s9 = sld [smem:[%s8]]
  %s10 = scalar_lea.smem %s0, 5
  %s11 = sld [smem:[%s10]]
  %s12 = scalar_lea.smem %s0, 6
  %s13 = sld [smem:[%s12]]
  %s14 = scalar_lea.smem %s0, 7
  %s15 = sld [smem:[%s14]]
  %s16 = scalar_lea.smem %s0, 8
  %s17 = sld [smem:[%s16]]
  %s18 = scalar_lea.smem %s0, 9
  %s19 = sld [smem:[%s18]]
  %s20 = scalar_lea.smem %s0, 10
  %s21 = sld [smem:[%s20]]
  %s22 = scalar_lea.smem %s0, 11
  %s23 = sld [smem:[%s22]]
  %s24 = scalar_lea.smem %s0, 12
  %s25 = sld [smem:[%s24]]
  %s26 = scalar_lea.smem %s0, 13
  %s27 = sld [smem:[%s26]]
  %s28 = scalar_lea.smem %s0, 14
  %s29 = sld [smem:[%s28]]
  %s30 = scalar_lea.smem %s0, 15
  %s31 = sld [smem:[%s30]]
  %s32 = scalar_lea.smem %s0, 16
  %s33 = sld [smem:[%s32]]
  %s34 = scalar_lea.smem %s0, 17
  %s35 = sld [smem:[%s34]]
  %s36 = scalar_lea.smem %s0, 18
  %s37 = sld [smem:[%s36]]
  %s38 = scalar_lea.smem %s0, 19
  %s39 = sld [smem:[%s38]]
  %s40 = scalar_lea.smem %s0, 20
  %s41 = sld [smem:[%s40]]
  %s42 = scalar_lea.smem %s0, 21
  %s43 = sld [smem:[%s42]]
  %s44 = scalar_lea.smem %s0, 22
  %s45 = sld [smem:[%s44]]
  %s46 = scalar_lea.smem %s0, 23
  %s47 = sld [smem:[%s46]]
  %s48 = scalar_lea.smem %s0, 24
  %s49 = sld [smem:[%s48]]
  %s50 = scalar_lea.smem %s0, 25
  %s51 = sld [smem:[%s50]]
  %s52 = scalar_lea.smem %s0, 26
  %s53 = sld [smem:[%s52]]
  %s54 = scalar_lea.smem %s0, 27
  %s55 = sld [smem:[%s54]]
  %s56 = scalar_lea.smem %s0, 28
  %s57 = sld [smem:[%s56]]
  %s58 = scalar_lea.smem %s0, 29
  %s59 = sld [smem:[%s58]]
  %s60 = scalar_lea.smem %s0, 30
  %s61 = sld [smem:[%s60]]
  %s62 = scalar_lea.smem %s0, 31
  %s63 = sld [smem:[%s62]]
  %s64 = scalar_lea.smem %s0, 32
  %s65 = sld [smem:[%s64]]
  %s66 = scalar_lea.smem %s0, 33
  %s67 = sld [smem:[%s66]]
  %s68 = scalar_lea.smem %s0, 34
  %s69 = sld [smem:[%s68]]
  %s70 = scalar_lea.smem %s0, 35
  %s71 = sld [smem:[%s70]]
  %s72 = scalar_lea.smem %s0, 36
  %s73 = sld [smem:[%s72]]
  %s74 = scalar_lea.smem %s0, 37
  %s75 = sld [smem:[%s74]]
  %s76 = scalar_lea.smem %s0, 38
  %s77 = sld [smem:[%s76]]
  %s78 = scalar_lea.smem %s0, 39
  %s79 = sld [smem:[%s78]]
  %s80 = scalar_lea.smem %s0, 40
  %s81 = sld [smem:[%s80]]
  %s82 = scalar_lea.smem %s0, 41
  %s83 = sld [smem:[%s82]]
  %s84 = scalar_lea.smem %s0, 42
  %s85 = sld [smem:[%s84]]
  %s86 = scalar_lea.smem %s0, 43
  %s87 = sld [smem:[%s86]]
  %s88 = scalar_lea.smem %s0, 44
  %s89 = sld [smem:[%s88]]
  %s90 = scalar_lea.smem %s0, 45
  %s91 = sld [smem:[%s90]]
  %s92 = scalar_lea.smem %s0, 46
  %s93 = sld [smem:[%s92]]
  %s94 = scalar_lea.smem %s0, 47
  %s95 = sld [smem:[%s94]]
  %s96 = sld [smem:[#allocation0]]
  $region342: #{lstm_gcn_forward.1} parent=0
    _
  %s98 = ssub.s32 1, %s96
  %s99 = scalar_select 0, %s98, %s96
  %v100 = vstv %s93
  %101 = vst [vmem:[#allocation5] sm:$0x1] %v100
  $region1: #{lstm_gcn_forward.1} parent=0
    #allocation6 [shape = 'u8[65536]{0}', space=vmem, size = 0x10000, scoped, tag = 'input window, operand 6, single buffered']
    #allocation7 [shape = 's32[1]{0}', space=sflag, size = 0x4, scoped, tag = 'scoped memory for lstm_gcn_forward.1']
    #allocation8 [shape = 'u8[1024]{0}', space=vmem, size = 0x400, scoped, tag = 'input window, operand 7, single buffered']
    #allocation9 [shape = 's32[1]{0}', space=sflag, size = 0x4, scoped, tag = 'scoped memory for lstm_gcn_forward.1']
    #allocation10 [shape = 'u8[4096]{0}', space=vmem, size = 0x1000, scoped, tag = 'input window, operand 8, single buffered']
    #allocation11 [shape = 'u8[512]{0}', space=vmem, size = 0x400, scoped, tag = 'input window, operand 9, single buffered']
    #allocation12 [shape = 's32[1]{0}', space=sflag, size = 0x4, scoped, tag = 'scoped memory for lstm_gcn_forward.1']
    #allocation13 [shape = 'u8[65536]{0}', space=vmem, size = 0x10000, scoped, tag = 'input window, operand 10, single buffered']
    #allocation14 [shape = 'u8[1024]{0}', space=vmem, size = 0x400, scoped, tag = 'input window, operand 11, single buffered']
    #allocation15 [shape = 's32[1]{0}', space=sflag, size = 0x4, scoped, tag = 'scoped memory for lstm_gcn_forward.1']
    #allocation16 [shape = 'u8[512]{0}', space=vmem, size = 0x400, scoped, tag = 'input window, operand 13, single buffered']
    #allocation17 [shape = 'u8[512]{0}', space=vmem, size = 0x400, scoped, tag = 'input window, operand 14, single buffered']
    #allocation18 [shape = 's32[1]{0}', space=sflag, size = 0x4, scoped, tag = 'scoped memory for lstm_gcn_forward.1']
    #allocation19 [shape = 'u8[512]{0}', space=vmem, size = 0x400, scoped, tag = 'input window, operand 15, single buffered']
    #allocation20 [shape = 'u8[512]{0}', space=vmem, size = 0x400, scoped, tag = 'input window, operand 17, single buffered']
    #allocation21 [shape = 's32[1]{0}', space=sflag, size = 0x4, scoped, tag = 'scoped memory for lstm_gcn_forward.1']
    #allocation22 [shape = 'u8[8192]{0}', space=vmem, size = 0x2000, scoped, tag = 'input window, operand 18, single buffered']
    #allocation23 [shape = 'u8[8192]{0}', space=vmem, size = 0x2000, scoped, tag = 'input window, operand 19, single buffered']
    #allocation24 [shape = 's32[1]{0}', space=sflag, size = 0x4, scoped, tag = 'scoped memory for lstm_gcn_forward.1']
    #allocation25 [shape = 'u8[8192]{0}', space=vmem, size = 0x2000, scoped, tag = 'input window, operand 20, single buffered']
    #allocation26 [shape = 'u8[512]{0}', space=vmem, size = 0x400, scoped, tag = 'input window, operand 21, single buffered']
    #allocation27 [shape = 's32[1]{0}', space=sflag, size = 0x4, scoped, tag = 'scoped memory for lstm_gcn_forward.1']
    #allocation28 [shape = 'u8[8192]{0}', space=vmem, size = 0x2000, scoped, tag = 'input window, operand 22, single buffered']
    #allocation29 [shape = 'u8[512]{0}', space=vmem, size = 0x400, scoped, tag = 'input window, operand 23, single buffered']
    #allocation30 [shape = 's32[1]{0}', space=sflag, size = 0x4, scoped, tag = 'scoped memory for lstm_gcn_forward.1']
    #allocation31 [shape = 'u8[16384]{0}', space=vmem, size = 0x4000, scoped, tag = 'input window, operand 24, single buffered']
    #allocation32 [shape = 'u8[512]{0}', space=vmem, size = 0x400, scoped, tag = 'input window, operand 25, single buffered']
    #allocation33 [shape = 's32[1]{0}', space=sflag, size = 0x4, scoped, tag = 'scoped memory for lstm_gcn_forward.1']
    #allocation34 [shape = 'u8[16384]{0}', space=vmem, size = 0x4000, scoped, tag = 'input window, operand 26, single buffered']
    #allocation35 [shape = 'u8[512]{0}', space=vmem, size = 0x400, scoped, tag = 'input window, operand 27, single buffered']
    #allocation36 [shape = 's32[1]{0}', space=sflag, size = 0x4, scoped, tag = 'scoped memory for lstm_gcn_forward.1']
    #allocation37 [shape = 'u8[512]{0}', space=vmem, size = 0x400, scoped, tag = 'input window, operand 29, single buffered']
    #allocation38 [shape = 'u8[512]{0}', space=vmem, size = 0x400, scoped, tag = 'input window, operand 30, single buffered']
    #allocation39 [shape = 's32[1]{0}', space=sflag, size = 0x4, scoped, tag = 'scoped memory for lstm_gcn_forward.1']
    #allocation40 [shape = 'u8[512]{0}', space=vmem, size = 0x400, scoped, tag = 'input window, operand 31, single buffered']
    #allocation41 [shape = 'u8[512]{0}', space=vmem, size = 0x400, scoped, tag = 'input window, operand 32, single buffered']
    #allocation42 [shape = 's32[1]{0}', space=sflag, size = 0x4, scoped, tag = 'scoped memory for lstm_gcn_forward.1']
    #allocation43 [shape = 'u8[512]{0}', space=vmem, size = 0x400, scoped, tag = 'input window, operand 33, single buffered']
    #allocation44 [shape = 'u8[12288]{0}', space=vmem, size = 0x3000, scoped, tag = 'input window, operand 34, single buffered']
    #allocation45 [shape = 's32[1]{0}', space=sflag, size = 0x4, scoped, tag = 'scoped memory for lstm_gcn_forward.1']
    #allocation46 [shape = 'u8[512]{0}', space=vmem, size = 0x400, scoped, tag = 'input window, operand 35, single buffered']
    #allocation47 [shape = 'u8[16384]{0}', space=vmem, size = 0x4000, scoped, tag = 'input window, operand 36, single buffered']
    #allocation48 [shape = 's32[1]{0}', space=sflag, size = 0x4, scoped, tag = 'scoped memory for lstm_gcn_forward.1']
    #allocation49 [shape = 'u8[16384]{0}', space=vmem, size = 0x4000, scoped, tag = 'input window, operand 37, single buffered']
    #allocation50 [shape = 'u8[512]{0}', space=vmem, size = 0x400, scoped, tag = 'input window, operand 38, single buffered']
    #allocation51 [shape = 's32[1]{0}', space=sflag, size = 0x4, scoped, tag = 'scoped memory for lstm_gcn_forward.1']
    #allocation52 [shape = 'u8[32768]{0}', space=vmem, size = 0x8000, scoped, tag = 'input window, operand 39, single buffered']
    #allocation53 [shape = 'u8[512]{0}', space=vmem, size = 0x400, scoped, tag = 'input window, operand 40, single buffered']
    #allocation54 [shape = 's32[1]{0}', space=sflag, size = 0x4, scoped, tag = 'scoped memory for lstm_gcn_forward.1']
    #allocation55 [shape = 'u8[32768]{0}', space=vmem, size = 0x8000, scoped, tag = 'input window, operand 41, single buffered']
    #allocation56 [shape = 'u8[512]{0}', space=vmem, size = 0x400, scoped, tag = 'input window, operand 42, single buffered']
    #allocation57 [shape = 's32[1]{0}', space=sflag, size = 0x4, scoped, tag = 'scoped memory for lstm_gcn_forward.1']
    #allocation58 [shape = 'u8[512]{0}', space=vmem, size = 0x400, scoped, tag = 'input window, operand 43, single buffered']
    #allocation59 [shape = 'u8[512]{0}', space=vmem, size = 0x400, scoped, tag = 'input window, operand 44, single buffered']
    #allocation60 [shape = 's32[1]{0}', space=sflag, size = 0x4, scoped, tag = 'scoped memory for lstm_gcn_forward.1']
    %102 = vsyncpa [#allocation7], 0
    %103 = vsyncpa [#allocation9], 0
    %104 = vsyncpa [#allocation12], 0
    %105 = vsyncpa [#allocation15], 0
    %106 = vsyncpa [#allocation18], 0
    %107 = vsyncpa [#allocation21], 0
    %108 = vsyncpa [#allocation24], 0
    %109 = vsyncpa [#allocation27], 0
    %110 = vsyncpa [#allocation30], 0
    %111 = vsyncpa [#allocation33], 0
    %112 = vsyncpa [#allocation36], 0
    %113 = vsyncpa [#allocation39], 0
    %114 = vsyncpa [#allocation42], 0
    %115 = vsyncpa [#allocation45], 0
    %116 = vsyncpa [#allocation48], 0
    %117 = vsyncpa [#allocation51], 0
    %118 = vsyncpa [#allocation54], 0
    %119 = vsyncpa [#allocation57], 0
    %120 = vsyncpa [#allocation60], 0
    // Predicated region
    $region2: #{lstm_gcn_forward.1} parent=1 // pred_check
      _
    $region3: #{lstm_gcn_forward.1} parent=1 // pred_check_branch
      %122 = sbr.rel (0) target = $region5
    $region4: #{lstm_gcn_forward.1} parent=1 // pred_region
      _
    $region5: #{lstm_gcn_forward.1} parent=1 // pred_fallthru
      _
    // Predicated region
    $region6: #{lstm_gcn_forward.1} parent=1 // pred_check
      _
    $region7: #{lstm_gcn_forward.1} parent=1 // pred_check_branch
      %124 = sbr.rel (0) target = $region9
    $region8: #{lstm_gcn_forward.1} parent=1 // pred_region
      _
    $region9: #{lstm_gcn_forward.1} parent=1 // pred_fallthru
      _
    // Predicated region
    $region10: #{lstm_gcn_forward.1} parent=1 // pred_check
      _
    $region11: #{lstm_gcn_forward.1} parent=1 // pred_check_branch
      %126 = sbr.rel (0) target = $region13
    $region12: #{lstm_gcn_forward.1} parent=1 // pred_region
      _
    $region13: #{lstm_gcn_forward.1} parent=1 // pred_fallthru
      _
    // Predicated region
    $region14: #{lstm_gcn_forward.1} parent=1 // pred_check
      _
    $region15: #{lstm_gcn_forward.1} parent=1 // pred_check_branch
      %128 = sbr.rel (0) target = $region17
    $region16: #{lstm_gcn_forward.1} parent=1 // pred_region
      _
    $region17: #{lstm_gcn_forward.1} parent=1 // pred_fallthru
      _
    // Predicated region
    $region18: #{lstm_gcn_forward.1} parent=1 // pred_check
      _
    $region19: #{lstm_gcn_forward.1} parent=1 // pred_check_branch
      %130 = sbr.rel (0) target = $region21
    $region20: #{lstm_gcn_forward.1} parent=1 // pred_region
      _
    $region21: #{lstm_gcn_forward.1} parent=1 // pred_fallthru
      _
    // Predicated region
    $region22: #{lstm_gcn_forward.1} parent=1 // pred_check
      _
    $region23: #{lstm_gcn_forward.1} parent=1 // pred_check_branch
      %132 = sbr.rel (0) target = $region25
    $region24: #{lstm_gcn_forward.1} parent=1 // pred_region
      _
    $region25: #{lstm_gcn_forward.1} parent=1 // pred_fallthru
      _
    // Predicated region
    $region26: #{lstm_gcn_forward.1} parent=1 // pred_check
      _
    $region27: #{lstm_gcn_forward.1} parent=1 // pred_check_branch
      %134 = sbr.rel (0) target = $region29
    $region28: #{lstm_gcn_forward.1} parent=1 // pred_region
      %s136 = ssub.s32 2048, 2048
      %137 = vsyncadd [#allocation7], %s136
      %s138 = sshll.u32 [#allocation6], 4
      %s139 = int_to_ptr.vmem [resolvable:$true] %s138
      %144 = dma.hbm_to_vmem [thread:$0]  %s13, 2048, %s139, [#allocation7], 256, 256, 16
    $region29: #{lstm_gcn_forward.1} parent=1 // pred_fallthru
      _
    // Predicated region
    $region30: #{lstm_gcn_forward.1} parent=1 // pred_check
      _
    $region31: #{lstm_gcn_forward.1} parent=1 // pred_check_branch
      %146 = sbr.rel (0) target = $region33
    $region32: #{lstm_gcn_forward.1} parent=1 // pred_region
      %s148 = ssub.s32 32, 32
      %149 = vsyncadd [#allocation9], %s148
      %s151 = sshll.u32 [#allocation8], 4
      %s152 = int_to_ptr.vmem [resolvable:$true] %s151
      %154 = dma.hbm_to_vmem [thread:$0]  %s15, 32, %s152, [#allocation9]
    $region33: #{lstm_gcn_forward.1} parent=1 // pred_fallthru
      _
    // Predicated region
    $region34: #{lstm_gcn_forward.1} parent=1 // pred_check
      _
    $region35: #{lstm_gcn_forward.1} parent=1 // pred_check_branch
      %156 = sbr.rel (0) target = $region37
    $region36: #{lstm_gcn_forward.1} parent=1 // pred_region
      %s158 = ssub.s32 128, 128
      %159 = vsyncadd [#allocation9], %s158
      %s161 = sshll.u32 [#allocation10], 4
      %s162 = int_to_ptr.vmem [resolvable:$true] %s161
      %164 = dma.hbm_to_vmem [thread:$0]  %s17, 128, %s162, [#allocation9]
    $region37: #{lstm_gcn_forward.1} parent=1 // pred_fallthru
      _
    // Predicated region
    $region38: #{lstm_gcn_forward.1} parent=1 // pred_check
      _
    $region39: #{lstm_gcn_forward.1} parent=1 // pred_check_branch
      %166 = sbr.rel (0) target = $region41
    $region40: #{lstm_gcn_forward.1} parent=1 // pred_region
      %s168 = ssub.s32 16, 16
      %169 = vsyncadd [#allocation12], %s168
      %s171 = sshll.u32 [#allocation11], 4
      %s172 = int_to_ptr.vmem [resolvable:$true] %s171
      %174 = dma.hbm_to_vmem [thread:$0]  %s19, 16, %s172, [#allocation12]
    $region41: #{lstm_gcn_forward.1} parent=1 // pred_fallthru
      _
    // Predicated region
    $region42: #{lstm_gcn_forward.1} parent=1 // pred_check
      _
    $region43: #{lstm_gcn_forward.1} parent=1 // pred_check_branch
      %176 = sbr.rel (0) target = $region45
    $region44: #{lstm_gcn_forward.1} parent=1 // pred_region
      %s178 = ssub.s32 2048, 2048
      %179 = vsyncadd [#allocation12], %s178
      %s180 = sshll.u32 [#allocation13], 4
      %s181 = int_to_ptr.vmem [resolvable:$true] %s180
      %186 = dma.hbm_to_vmem [thread:$0]  %s21, 2048, %s181, [#allocation12], 256, 256, 16
    $region45: #{lstm_gcn_forward.1} parent=1 // pred_fallthru
      _
    // Predicated region
    $region46: #{lstm_gcn_forward.1} parent=1 // pred_check
      _
    $region47: #{lstm_gcn_forward.1} parent=1 // pred_check_branch
      %188 = sbr.rel (0) target = $region49
    $region48: #{lstm_gcn_forward.1} parent=1 // pred_region
      %s190 = ssub.s32 32, 32
      %191 = vsyncadd [#allocation15], %s190
      %s193 = sshll.u32 [#allocation14], 4
      %s194 = int_to_ptr.vmem [resolvable:$true] %s193
      %196 = dma.hbm_to_vmem [thread:$0]  %s23, 32, %s194, [#allocation15]
    $region49: #{lstm_gcn_forward.1} parent=1 // pred_fallthru
      _
    // Predicated region
    $region50: #{lstm_gcn_forward.1} parent=1 // pred_check
      _
    $region51: #{lstm_gcn_forward.1} parent=1 // pred_check_branch
      %198 = sbr.rel (0) target = $region53
    $region52: #{lstm_gcn_forward.1} parent=1 // pred_region
      _
    $region53: #{lstm_gcn_forward.1} parent=1 // pred_fallthru
      _
    // Predicated region
    $region54: #{lstm_gcn_forward.1} parent=1 // pred_check
      _
    $region55: #{lstm_gcn_forward.1} parent=1 // pred_check_branch
      %200 = sbr.rel (0) target = $region57
    $region56: #{lstm_gcn_forward.1} parent=1 // pred_region
      %s202 = ssub.s32 16, 16
      %203 = vsyncadd [#allocation15], %s202
      %s205 = sshll.u32 [#allocation16], 4
      %s206 = int_to_ptr.vmem [resolvable:$true] %s205
      %208 = dma.hbm_to_vmem [thread:$0]  %s27, 16, %s206, [#allocation15]
    $region57: #{lstm_gcn_forward.1} parent=1 // pred_fallthru
      _
    // Predicated region
    $region58: #{lstm_gcn_forward.1} parent=1 // pred_check
      _
    $region59: #{lstm_gcn_forward.1} parent=1 // pred_check_branch
      %210 = sbr.rel (0) target = $region61
    $region60: #{lstm_gcn_forward.1} parent=1 // pred_region
      %s212 = ssub.s32 16, 16
      %213 = vsyncadd [#allocation18], %s212
      %s215 = sshll.u32 [#allocation17], 4
      %s216 = int_to_ptr.vmem [resolvable:$true] %s215
      %218 = dma.hbm_to_vmem [thread:$0]  %s29, 16, %s216, [#allocation18]
    $region61: #{lstm_gcn_forward.1} parent=1 // pred_fallthru
      _
    // Predicated region
    $region62: #{lstm_gcn_forward.1} parent=1 // pred_check
      _
    $region63: #{lstm_gcn_forward.1} parent=1 // pred_check_branch
      %220 = sbr.rel (0) target = $region65
    $region64: #{lstm_gcn_forward.1} parent=1 // pred_region
      %s222 = ssub.s32 16, 16
      %223 = vsyncadd [#allocation18], %s222
      %s225 = sshll.u32 [#allocation19], 4
      %s226 = int_to_ptr.vmem [resolvable:$true] %s225
      %228 = dma.hbm_to_vmem [thread:$0]  %s31, 16, %s226, [#allocation18]
    $region65: #{lstm_gcn_forward.1} parent=1 // pred_fallthru
      _
    // Predicated region
    $region66: #{lstm_gcn_forward.1} parent=1 // pred_check
      _
    $region67: #{lstm_gcn_forward.1} parent=1 // pred_check_branch
      %230 = sbr.rel (0) target = $region69
    $region68: #{lstm_gcn_forward.1} parent=1 // pred_region
      _
    $region69: #{lstm_gcn_forward.1} parent=1 // pred_fallthru
      _
    // Predicated region
    $region70: #{lstm_gcn_forward.1} parent=1 // pred_check
      _
    $region71: #{lstm_gcn_forward.1} parent=1 // pred_check_branch
      %232 = sbr.rel (0) target = $region73
    $region72: #{lstm_gcn_forward.1} parent=1 // pred_region
      %s234 = ssub.s32 16, 16
      %235 = vsyncadd [#allocation21], %s234
      %s237 = sshll.u32 [#allocation20], 4
      %s238 = int_to_ptr.vmem [resolvable:$true] %s237
      %240 = dma.hbm_to_vmem [thread:$0]  %s35, 16, %s238, [#allocation21]
    $region73: #{lstm_gcn_forward.1} parent=1 // pred_fallthru
      _
    // Predicated region
    $region74: #{lstm_gcn_forward.1} parent=1 // pred_check
      _
    $region75: #{lstm_gcn_forward.1} parent=1 // pred_check_branch
      %242 = sbr.rel (0) target = $region77
    $region76: #{lstm_gcn_forward.1} parent=1 // pred_region
      %s244 = ssub.s32 256, 256
      %245 = vsyncadd [#allocation21], %s244
      %s246 = sshll.u32 [#allocation22], 4
      %s247 = int_to_ptr.vmem [resolvable:$true] %s246
      %252 = dma.hbm_to_vmem [thread:$0]  %s37, 256, %s247, [#allocation21], 128, 128, 8
    $region77: #{lstm_gcn_forward.1} parent=1 // pred_fallthru
      _
    // Predicated region
    $region78: #{lstm_gcn_forward.1} parent=1 // pred_check
      _
    $region79: #{lstm_gcn_forward.1} parent=1 // pred_check_branch
      %254 = sbr.rel (0) target = $region81
    $region80: #{lstm_gcn_forward.1} parent=1 // pred_region
      %s256 = ssub.s32 256, 256
      %257 = vsyncadd [#allocation24], %s256
      %s258 = sshll.u32 [#allocation23], 4
      %s259 = int_to_ptr.vmem [resolvable:$true] %s258
      %264 = dma.hbm_to_vmem [thread:$0]  %s39, 256, %s259, [#allocation24], 128, 128, 8
    $region81: #{lstm_gcn_forward.1} parent=1 // pred_fallthru
      _
    // Predicated region
    $region82: #{lstm_gcn_forward.1} parent=1 // pred_check
      _
    $region83: #{lstm_gcn_forward.1} parent=1 // pred_check_branch
      %266 = sbr.rel (0) target = $region85
    $region84: #{lstm_gcn_forward.1} parent=1 // pred_region
      %s268 = ssub.s32 256, 256
      %269 = vsyncadd [#allocation24], %s268
      %s270 = sshll.u32 [#allocation25], 4
      %s271 = int_to_ptr.vmem [resolvable:$true] %s270
      %276 = dma.hbm_to_vmem [thread:$0]  %s41, 256, %s271, [#allocation24], 128, 128, 8
    $region85: #{lstm_gcn_forward.1} parent=1 // pred_fallthru
      _
    // Predicated region
    $region86: #{lstm_gcn_forward.1} parent=1 // pred_check
      _
    $region87: #{lstm_gcn_forward.1} parent=1 // pred_check_branch
      %278 = sbr.rel (0) target = $region89
    $region88: #{lstm_gcn_forward.1} parent=1 // pred_region
      %s280 = ssub.s32 16, 16
      %281 = vsyncadd [#allocation27], %s280
      %s283 = sshll.u32 [#allocation26], 4
      %s284 = int_to_ptr.vmem [resolvable:$true] %s283
      %286 = dma.hbm_to_vmem [thread:$0]  %s43, 16, %s284, [#allocation27]
    $region89: #{lstm_gcn_forward.1} parent=1 // pred_fallthru
      _
    // Predicated region
    $region90: #{lstm_gcn_forward.1} parent=1 // pred_check
      _
    $region91: #{lstm_gcn_forward.1} parent=1 // pred_check_branch
      %288 = sbr.rel (0) target = $region93
    $region92: #{lstm_gcn_forward.1} parent=1 // pred_region
      %s290 = ssub.s32 256, 256
      %291 = vsyncadd [#allocation27], %s290
      %s292 = sshll.u32 [#allocation28], 4
      %s293 = int_to_ptr.vmem [resolvable:$true] %s292
      %298 = dma.hbm_to_vmem [thread:$0]  %s45, 256, %s293, [#allocation27], 128, 128, 8
    $region93: #{lstm_gcn_forward.1} parent=1 // pred_fallthru
      _
    // Predicated region
    $region94: #{lstm_gcn_forward.1} parent=1 // pred_check
      _
    $region95: #{lstm_gcn_forward.1} parent=1 // pred_check_branch
      %300 = sbr.rel (0) target = $region97
    $region96: #{lstm_gcn_forward.1} parent=1 // pred_region
      %s302 = ssub.s32 16, 16
      %303 = vsyncadd [#allocation30], %s302
      %s305 = sshll.u32 [#allocation29], 4
      %s306 = int_to_ptr.vmem [resolvable:$true] %s305
      %308 = dma.hbm_to_vmem [thread:$0]  %s47, 16, %s306, [#allocation30]
    $region97: #{lstm_gcn_forward.1} parent=1 // pred_fallthru
      _
    // Predicated region
    $region98: #{lstm_gcn_forward.1} parent=1 // pred_check
      _
    $region99: #{lstm_gcn_forward.1} parent=1 // pred_check_branch
      %310 = sbr.rel (0) target = $region101
    $region100: #{lstm_gcn_forward.1} parent=1 // pred_region
      %s312 = ssub.s32 512, 512
      %313 = vsyncadd [#allocation30], %s312
      %s314 = sshll.u32 [#allocation31], 4
      %s315 = int_to_ptr.vmem [resolvable:$true] %s314
      %320 = dma.hbm_to_vmem [thread:$0]  %s49, 512, %s315, [#allocation30], 128, 128, 8
    $region101: #{lstm_gcn_forward.1} parent=1 // pred_fallthru
      _
    // Predicated region
    $region102: #{lstm_gcn_forward.1} parent=1 // pred_check
      _
    $region103: #{lstm_gcn_forward.1} parent=1 // pred_check_branch
      %322 = sbr.rel (0) target = $region105
    $region104: #{lstm_gcn_forward.1} parent=1 // pred_region
      %s324 = ssub.s32 16, 16
      %325 = vsyncadd [#allocation33], %s324
      %s327 = sshll.u32 [#allocation32], 4
      %s328 = int_to_ptr.vmem [resolvable:$true] %s327
      %330 = dma.hbm_to_vmem [thread:$0]  %s51, 16, %s328, [#allocation33]
    $region105: #{lstm_gcn_forward.1} parent=1 // pred_fallthru
      _
    // Predicated region
    $region106: #{lstm_gcn_forward.1} parent=1 // pred_check
      _
    $region107: #{lstm_gcn_forward.1} parent=1 // pred_check_branch
      %332 = sbr.rel (0) target = $region109
    $region108: #{lstm_gcn_forward.1} parent=1 // pred_region
      %s334 = ssub.s32 512, 512
      %335 = vsyncadd [#allocation33], %s334
      %s336 = sshll.u32 [#allocation34], 4
      %s337 = int_to_ptr.vmem [resolvable:$true] %s336
      %342 = dma.hbm_to_vmem [thread:$0]  %s53, 512, %s337, [#allocation33], 128, 128, 8
    $region109: #{lstm_gcn_forward.1} parent=1 // pred_fallthru
      _
    // Predicated region
    $region110: #{lstm_gcn_forward.1} parent=1 // pred_check
      _
    $region111: #{lstm_gcn_forward.1} parent=1 // pred_check_branch
      %344 = sbr.rel (0) target = $region113
    $region112: #{lstm_gcn_forward.1} parent=1 // pred_region
      %s346 = ssub.s32 16, 16
      %347 = vsyncadd [#allocation36], %s346
      %s349 = sshll.u32 [#allocation35], 4
      %s350 = int_to_ptr.vmem [resolvable:$true] %s349
      %352 = dma.hbm_to_vmem [thread:$0]  %s55, 16, %s350, [#allocation36]
    $region113: #{lstm_gcn_forward.1} parent=1 // pred_fallthru
      _
    // Predicated region
    $region114: #{lstm_gcn_forward.1} parent=1 // pred_check
      _
    $region115: #{lstm_gcn_forward.1} parent=1 // pred_check_branch
      %354 = sbr.rel (0) target = $region117
    $region116: #{lstm_gcn_forward.1} parent=1 // pred_region
      _
    $region117: #{lstm_gcn_forward.1} parent=1 // pred_fallthru
      _
    // Predicated region
    $region118: #{lstm_gcn_forward.1} parent=1 // pred_check
      _
    $region119: #{lstm_gcn_forward.1} parent=1 // pred_check_branch
      %356 = sbr.rel (0) target = $region121
    $region120: #{lstm_gcn_forward.1} parent=1 // pred_region
      %s358 = ssub.s32 16, 16
      %359 = vsyncadd [#allocation36], %s358
      %s361 = sshll.u32 [#allocation37], 4
      %s362 = int_to_ptr.vmem [resolvable:$true] %s361
      %364 = dma.hbm_to_vmem [thread:$0]  %s59, 16, %s362, [#allocation36]
    $region121: #{lstm_gcn_forward.1} parent=1 // pred_fallthru
      _
    // Predicated region
    $region122: #{lstm_gcn_forward.1} parent=1 // pred_check
      _
    $region123: #{lstm_gcn_forward.1} parent=1 // pred_check_branch
      %366 = sbr.rel (0) target = $region125
    $region124: #{lstm_gcn_forward.1} parent=1 // pred_region
      %s368 = ssub.s32 16, 16
      %369 = vsyncadd [#allocation39], %s368
      %s371 = sshll.u32 [#allocation38], 4
      %s372 = int_to_ptr.vmem [resolvable:$true] %s371
      %374 = dma.hbm_to_vmem [thread:$0]  %s61, 16, %s372, [#allocation39]
    $region125: #{lstm_gcn_forward.1} parent=1 // pred_fallthru
      _
    // Predicated region
    $region126: #{lstm_gcn_forward.1} parent=1 // pred_check
      _
    $region127: #{lstm_gcn_forward.1} parent=1 // pred_check_branch
      %376 = sbr.rel (0) target = $region129
    $region128: #{lstm_gcn_forward.1} parent=1 // pred_region
      %s378 = ssub.s32 16, 16
      %379 = vsyncadd [#allocation39], %s378
      %s381 = sshll.u32 [#allocation40], 4
      %s382 = int_to_ptr.vmem [resolvable:$true] %s381
      %384 = dma.hbm_to_vmem [thread:$0]  %s63, 16, %s382, [#allocation39]
    $region129: #{lstm_gcn_forward.1} parent=1 // pred_fallthru
      _
    // Predicated region
    $region130: #{lstm_gcn_forward.1} parent=1 // pred_check
      _
    $region131: #{lstm_gcn_forward.1} parent=1 // pred_check_branch
      %386 = sbr.rel (0) target = $region133
    $region132: #{lstm_gcn_forward.1} parent=1 // pred_region
      %s388 = ssub.s32 16, 16
      %389 = vsyncadd [#allocation42], %s388
      %s391 = sshll.u32 [#allocation41], 4
      %s392 = int_to_ptr.vmem [resolvable:$true] %s391
      %394 = dma.hbm_to_vmem [thread:$0]  %s65, 16, %s392, [#allocation42]
    $region133: #{lstm_gcn_forward.1} parent=1 // pred_fallthru
      _
    // Predicated region
    $region134: #{lstm_gcn_forward.1} parent=1 // pred_check
      _
    $region135: #{lstm_gcn_forward.1} parent=1 // pred_check_branch
      %396 = sbr.rel (0) target = $region137
    $region136: #{lstm_gcn_forward.1} parent=1 // pred_region
      %s398 = ssub.s32 16, 16
      %399 = vsyncadd [#allocation42], %s398
      %s401 = sshll.u32 [#allocation43], 4
      %s402 = int_to_ptr.vmem [resolvable:$true] %s401
      %404 = dma.hbm_to_vmem [thread:$0]  %s67, 16, %s402, [#allocation42]
    $region137: #{lstm_gcn_forward.1} parent=1 // pred_fallthru
      _
    // Predicated region
    $region138: #{lstm_gcn_forward.1} parent=1 // pred_check
      _
    $region139: #{lstm_gcn_forward.1} parent=1 // pred_check_branch
      %406 = sbr.rel (0) target = $region141
    $region140: #{lstm_gcn_forward.1} parent=1 // pred_region
      %s408 = ssub.s32 384, 384
      %409 = vsyncadd [#allocation45], %s408
      %s410 = sshll.u32 [#allocation44], 4
      %s411 = int_to_ptr.vmem [resolvable:$true] %s410
      %416 = dma.hbm_to_vmem [thread:$0]  %s69, 384, %s411, [#allocation45], 128, 128, 8
    $region141: #{lstm_gcn_forward.1} parent=1 // pred_fallthru
      _
    // Predicated region
    $region142: #{lstm_gcn_forward.1} parent=1 // pred_check
      _
    $region143: #{lstm_gcn_forward.1} parent=1 // pred_check_branch
      %418 = sbr.rel (0) target = $region145
    $region144: #{lstm_gcn_forward.1} parent=1 // pred_region
      %s420 = ssub.s32 16, 16
      %421 = vsyncadd [#allocation45], %s420
      %s423 = sshll.u32 [#allocation46], 4
      %s424 = int_to_ptr.vmem [resolvable:$true] %s423
      %426 = dma.hbm_to_vmem [thread:$0]  %s71, 16, %s424, [#allocation45]
    $region145: #{lstm_gcn_forward.1} parent=1 // pred_fallthru
      _
    // Predicated region
    $region146: #{lstm_gcn_forward.1} parent=1 // pred_check
      _
    $region147: #{lstm_gcn_forward.1} parent=1 // pred_check_branch
      %428 = sbr.rel (0) target = $region149
    $region148: #{lstm_gcn_forward.1} parent=1 // pred_region
      %s430 = ssub.s32 512, 512
      %431 = vsyncadd [#allocation48], %s430
      %s432 = sshll.u32 [#allocation47], 4
      %s433 = int_to_ptr.vmem [resolvable:$true] %s432
      %438 = dma.hbm_to_vmem [thread:$0]  %s73, 512, %s433, [#allocation48], 128, 128, 8
    $region149: #{lstm_gcn_forward.1} parent=1 // pred_fallthru
      _
    // Predicated region
    $region150: #{lstm_gcn_forward.1} parent=1 // pred_check
      _
    $region151: #{lstm_gcn_forward.1} parent=1 // pred_check_branch
      %440 = sbr.rel (0) target = $region153
    $region152: #{lstm_gcn_forward.1} parent=1 // pred_region
      %s442 = ssub.s32 512, 512
      %443 = vsyncadd [#allocation48], %s442
      %s444 = sshll.u32 [#allocation49], 4
      %s445 = int_to_ptr.vmem [resolvable:$true] %s444
      %450 = dma.hbm_to_vmem [thread:$0]  %s75, 512, %s445, [#allocation48], 128, 128, 8
    $region153: #{lstm_gcn_forward.1} parent=1 // pred_fallthru
      _
    // Predicated region
    $region154: #{lstm_gcn_forward.1} parent=1 // pred_check
      _
    $region155: #{lstm_gcn_forward.1} parent=1 // pred_check_branch
      %452 = sbr.rel (0) target = $region157
    $region156: #{lstm_gcn_forward.1} parent=1 // pred_region
      %s454 = ssub.s32 16, 16
      %455 = vsyncadd [#allocation51], %s454
      %s457 = sshll.u32 [#allocation50], 4
      %s458 = int_to_ptr.vmem [resolvable:$true] %s457
      %460 = dma.hbm_to_vmem [thread:$0]  %s77, 16, %s458, [#allocation51]
    $region157: #{lstm_gcn_forward.1} parent=1 // pred_fallthru
      _
    // Predicated region
    $region158: #{lstm_gcn_forward.1} parent=1 // pred_check
      _
    $region159: #{lstm_gcn_forward.1} parent=1 // pred_check_branch
      %462 = sbr.rel (0) target = $region161
    $region160: #{lstm_gcn_forward.1} parent=1 // pred_region
      %s464 = ssub.s32 1024, 1024
      %465 = vsyncadd [#allocation51], %s464
      %s466 = sshll.u32 [#allocation52], 4
      %s467 = int_to_ptr.vmem [resolvable:$true] %s466
      %472 = dma.hbm_to_vmem [thread:$0]  %s79, 1024, %s467, [#allocation51], 128, 128, 8
    $region161: #{lstm_gcn_forward.1} parent=1 // pred_fallthru
      _
    // Predicated region
    $region162: #{lstm_gcn_forward.1} parent=1 // pred_check
      _
    $region163: #{lstm_gcn_forward.1} parent=1 // pred_check_branch
      %474 = sbr.rel (0) target = $region165
    $region164: #{lstm_gcn_forward.1} parent=1 // pred_region
      %s476 = ssub.s32 16, 16
      %477 = vsyncadd [#allocation54], %s476
      %s479 = sshll.u32 [#allocation53], 4
      %s480 = int_to_ptr.vmem [resolvable:$true] %s479
      %482 = dma.hbm_to_vmem [thread:$0]  %s81, 16, %s480, [#allocation54]
    $region165: #{lstm_gcn_forward.1} parent=1 // pred_fallthru
      _
    // Predicated region
    $region166: #{lstm_gcn_forward.1} parent=1 // pred_check
      _
    $region167: #{lstm_gcn_forward.1} parent=1 // pred_check_branch
      %484 = sbr.rel (0) target = $region169
    $region168: #{lstm_gcn_forward.1} parent=1 // pred_region
      %s486 = ssub.s32 1024, 1024
      %487 = vsyncadd [#allocation54], %s486
      %s488 = sshll.u32 [#allocation55], 4
      %s489 = int_to_ptr.vmem [resolvable:$true] %s488
      %494 = dma.hbm_to_vmem [thread:$0]  %s83, 1024, %s489, [#allocation54], 128, 128, 8
    $region169: #{lstm_gcn_forward.1} parent=1 // pred_fallthru
      _
    // Predicated region
    $region170: #{lstm_gcn_forward.1} parent=1 // pred_check
      _
    $region171: #{lstm_gcn_forward.1} parent=1 // pred_check_branch
      %496 = sbr.rel (0) target = $region173
    $region172: #{lstm_gcn_forward.1} parent=1 // pred_region
      %s498 = ssub.s32 16, 16
      %499 = vsyncadd [#allocation57], %s498
      %s501 = sshll.u32 [#allocation56], 4
      %s502 = int_to_ptr.vmem [resolvable:$true] %s501
      %504 = dma.hbm_to_vmem [thread:$0]  %s85, 16, %s502, [#allocation57]
    $region173: #{lstm_gcn_forward.1} parent=1 // pred_fallthru
      _
    // Predicated region
    $region174: #{lstm_gcn_forward.1} parent=1 // pred_check
      _
    $region175: #{lstm_gcn_forward.1} parent=1 // pred_check_branch
      %506 = sbr.rel (0) target = $region177
    $region176: #{lstm_gcn_forward.1} parent=1 // pred_region
      %s508 = ssub.s32 16, 16
      %509 = vsyncadd [#allocation57], %s508
      %s511 = sshll.u32 [#allocation58], 4
      %s512 = int_to_ptr.vmem [resolvable:$true] %s511
      %514 = dma.hbm_to_vmem [thread:$0]  %s87, 16, %s512, [#allocation57]
    $region177: #{lstm_gcn_forward.1} parent=1 // pred_fallthru
      _
    // Predicated region
    $region178: #{lstm_gcn_forward.1} parent=1 // pred_check
      _
    $region179: #{lstm_gcn_forward.1} parent=1 // pred_check_branch
      %516 = sbr.rel (0) target = $region181
    $region180: #{lstm_gcn_forward.1} parent=1 // pred_region
      %s518 = ssub.s32 16, 16
      %519 = vsyncadd [#allocation60], %s518
      %s521 = sshll.u32 [#allocation59], 4
      %s522 = int_to_ptr.vmem [resolvable:$true] %s521
      %524 = dma.hbm_to_vmem [thread:$0]  %s89, 16, %s522, [#allocation60]
    $region181: #{lstm_gcn_forward.1} parent=1 // pred_fallthru
      _
    // Predicated region
    $region182: #{lstm_gcn_forward.1} parent=1 // pred_check
      _
    $region183: #{lstm_gcn_forward.1} parent=1 // pred_check_branch
      %526 = sbr.rel (0) target = $region185
    $region184: #{lstm_gcn_forward.1} parent=1 // pred_region
      _
    $region185: #{lstm_gcn_forward.1} parent=1 // pred_fallthru
      _
    // Predicated region
    $region186: #{lstm_gcn_forward.1} parent=1 // pred_check
      _
    $region187: #{lstm_gcn_forward.1} parent=1 // pred_check_branch
      %528 = sbr.rel (0) target = $region189
    $region188: #{lstm_gcn_forward.1} parent=1 // pred_region
      _
    $region189: #{lstm_gcn_forward.1} parent=1 // pred_fallthru
      _
    // Predicated region
    $region190: #{lstm_gcn_forward.1} parent=1 // pred_check
      _
    $region191: #{lstm_gcn_forward.1} parent=1 // pred_check_branch
      %530 = sbr.rel (0) target = $region193
    $region192: #{lstm_gcn_forward.1} parent=1 // pred_region
      %531 = dma.done [#allocation7], 2048
    $region193: #{lstm_gcn_forward.1} parent=1 // pred_fallthru
      _
    // Predicated region
    $region194: #{lstm_gcn_forward.1} parent=1 // pred_check
      _
    $region195: #{lstm_gcn_forward.1} parent=1 // pred_check_branch
      %533 = sbr.rel (0) target = $region197
    $region196: #{lstm_gcn_forward.1} parent=1 // pred_region
      %534 = dma.done [#allocation9], 32
    $region197: #{lstm_gcn_forward.1} parent=1 // pred_fallthru
      _
    // Predicated region
    $region198: #{lstm_gcn_forward.1} parent=1 // pred_check
      _
    $region199: #{lstm_gcn_forward.1} parent=1 // pred_check_branch
      %536 = sbr.rel (0) target = $region201
    $region200: #{lstm_gcn_forward.1} parent=1 // pred_region
      %537 = dma.done [#allocation9], 128
    $region201: #{lstm_gcn_forward.1} parent=1 // pred_fallthru
      _
    // Predicated region
    $region202: #{lstm_gcn_forward.1} parent=1 // pred_check
      _
    $region203: #{lstm_gcn_forward.1} parent=1 // pred_check_branch
      %539 = sbr.rel (0) target = $region205
    $region204: #{lstm_gcn_forward.1} parent=1 // pred_region
      %540 = dma.done [#allocation12], 16
    $region205: #{lstm_gcn_forward.1} parent=1 // pred_fallthru
      _
    // Predicated region
    $region206: #{lstm_gcn_forward.1} parent=1 // pred_check
      _
    $region207: #{lstm_gcn_forward.1} parent=1 // pred_check_branch
      %542 = sbr.rel (0) target = $region209
    $region208: #{lstm_gcn_forward.1} parent=1 // pred_region
      %543 = dma.done [#allocation12], 2048
    $region209: #{lstm_gcn_forward.1} parent=1 // pred_fallthru
      _
    // Predicated region
    $region210: #{lstm_gcn_forward.1} parent=1 // pred_check
      _
    $region211: #{lstm_gcn_forward.1} parent=1 // pred_check_branch
      %545 = sbr.rel (0) target = $region213
    $region212: #{lstm_gcn_forward.1} parent=1 // pred_region
      %546 = dma.done [#allocation15], 32
    $region213: #{lstm_gcn_forward.1} parent=1 // pred_fallthru
      _
    // Predicated region
    $region214: #{lstm_gcn_forward.1} parent=1 // pred_check
      _
    $region215: #{lstm_gcn_forward.1} parent=1 // pred_check_branch
      %548 = sbr.rel (0) target = $region217
    $region216: #{lstm_gcn_forward.1} parent=1 // pred_region
      %549 = dma.done [#allocation15], 16
    $region217: #{lstm_gcn_forward.1} parent=1 // pred_fallthru
      _
    // Predicated region
    $region218: #{lstm_gcn_forward.1} parent=1 // pred_check
      _
    $region219: #{lstm_gcn_forward.1} parent=1 // pred_check_branch
      %551 = sbr.rel (0) target = $region221
    $region220: #{lstm_gcn_forward.1} parent=1 // pred_region
      %552 = dma.done [#allocation18], 16
    $region221: #{lstm_gcn_forward.1} parent=1 // pred_fallthru
      _
    // Predicated region
    $region222: #{lstm_gcn_forward.1} parent=1 // pred_check
      _
    $region223: #{lstm_gcn_forward.1} parent=1 // pred_check_branch
      %554 = sbr.rel (0) target = $region225
    $region224: #{lstm_gcn_forward.1} parent=1 // pred_region
      %555 = dma.done [#allocation18], 16
    $region225: #{lstm_gcn_forward.1} parent=1 // pred_fallthru
      _
    // Predicated region
    $region226: #{lstm_gcn_forward.1} parent=1 // pred_check
      _
    $region227: #{lstm_gcn_forward.1} parent=1 // pred_check_branch
      %557 = sbr.rel (0) target = $region229
    $region228: #{lstm_gcn_forward.1} parent=1 // pred_region
      %558 = dma.done [#allocation21], 16
    $region229: #{lstm_gcn_forward.1} parent=1 // pred_fallthru
      _
    // Predicated region
    $region230: #{lstm_gcn_forward.1} parent=1 // pred_check
      _
    $region231: #{lstm_gcn_forward.1} parent=1 // pred_check_branch
      %560 = sbr.rel (0) target = $region233
    $region232: #{lstm_gcn_forward.1} parent=1 // pred_region
      %561 = dma.done [#allocation21], 256
    $region233: #{lstm_gcn_forward.1} parent=1 // pred_fallthru
      _
    // Predicated region
    $region234: #{lstm_gcn_forward.1} parent=1 // pred_check
      _
    $region235: #{lstm_gcn_forward.1} parent=1 // pred_check_branch
      %563 = sbr.rel (0) target = $region237
    $region236: #{lstm_gcn_forward.1} parent=1 // pred_region
      %564 = dma.done [#allocation24], 256
    $region237: #{lstm_gcn_forward.1} parent=1 // pred_fallthru
      _
    // Predicated region
    $region238: #{lstm_gcn_forward.1} parent=1 // pred_check
      _
    $region239: #{lstm_gcn_forward.1} parent=1 // pred_check_branch
      %566 = sbr.rel (0) target = $region241
    $region240: #{lstm_gcn_forward.1} parent=1 // pred_region
      %567 = dma.done [#allocation24], 256
    $region241: #{lstm_gcn_forward.1} parent=1 // pred_fallthru
      _
    // Predicated region
    $region242: #{lstm_gcn_forward.1} parent=1 // pred_check
      _
    $region243: #{lstm_gcn_forward.1} parent=1 // pred_check_branch
      %569 = sbr.rel (0) target = $region245
    $region244: #{lstm_gcn_forward.1} parent=1 // pred_region
      %570 = dma.done [#allocation27], 16
    $region245: #{lstm_gcn_forward.1} parent=1 // pred_fallthru
      _
    // Predicated region
    $region246: #{lstm_gcn_forward.1} parent=1 // pred_check
      _
    $region247: #{lstm_gcn_forward.1} parent=1 // pred_check_branch
      %572 = sbr.rel (0) target = $region249
    $region248: #{lstm_gcn_forward.1} parent=1 // pred_region
      %573 = dma.done [#allocation27], 256
    $region249: #{lstm_gcn_forward.1} parent=1 // pred_fallthru
      _
    // Predicated region
    $region250: #{lstm_gcn_forward.1} parent=1 // pred_check
      _
    $region251: #{lstm_gcn_forward.1} parent=1 // pred_check_branch
      %575 = sbr.rel (0) target = $region253
    $region252: #{lstm_gcn_forward.1} parent=1 // pred_region
      %576 = dma.done [#allocation30], 16
    $region253: #{lstm_gcn_forward.1} parent=1 // pred_fallthru
      _
    // Predicated region
    $region254: #{lstm_gcn_forward.1} parent=1 // pred_check
      _
    $region255: #{lstm_gcn_forward.1} parent=1 // pred_check_branch
      %578 = sbr.rel (0) target = $region257
    $region256: #{lstm_gcn_forward.1} parent=1 // pred_region
      %579 = dma.done [#allocation30], 512
    $region257: #{lstm_gcn_forward.1} parent=1 // pred_fallthru
      _
    // Predicated region
    $region258: #{lstm_gcn_forward.1} parent=1 // pred_check
      _
    $region259: #{lstm_gcn_forward.1} parent=1 // pred_check_branch
      %581 = sbr.rel (0) target = $region261
    $region260: #{lstm_gcn_forward.1} parent=1 // pred_region
      %582 = dma.done [#allocation33], 16
    $region261: #{lstm_gcn_forward.1} parent=1 // pred_fallthru
      _
    // Predicated region
    $region262: #{lstm_gcn_forward.1} parent=1 // pred_check
      _
    $region263: #{lstm_gcn_forward.1} parent=1 // pred_check_branch
      %584 = sbr.rel (0) target = $region265
    $region264: #{lstm_gcn_forward.1} parent=1 // pred_region
      %585 = dma.done [#allocation33], 512
    $region265: #{lstm_gcn_forward.1} parent=1 // pred_fallthru
      _
    // Predicated region
    $region266: #{lstm_gcn_forward.1} parent=1 // pred_check
      _
    $region267: #{lstm_gcn_forward.1} parent=1 // pred_check_branch
      %587 = sbr.rel (0) target = $region269
    $region268: #{lstm_gcn_forward.1} parent=1 // pred_region
      %588 = dma.done [#allocation36], 16
    $region269: #{lstm_gcn_forward.1} parent=1 // pred_fallthru
      _
    // Predicated region
    $region270: #{lstm_gcn_forward.1} parent=1 // pred_check
      _
    $region271: #{lstm_gcn_forward.1} parent=1 // pred_check_branch
      %590 = sbr.rel (0) target = $region273
    $region272: #{lstm_gcn_forward.1} parent=1 // pred_region
      %591 = dma.done [#allocation36], 16
    $region273: #{lstm_gcn_forward.1} parent=1 // pred_fallthru
      _
    // Predicated region
    $region274: #{lstm_gcn_forward.1} parent=1 // pred_check
      _
    $region275: #{lstm_gcn_forward.1} parent=1 // pred_check_branch
      %593 = sbr.rel (0) target = $region277
    $region276: #{lstm_gcn_forward.1} parent=1 // pred_region
      %594 = dma.done [#allocation39], 16
    $region277: #{lstm_gcn_forward.1} parent=1 // pred_fallthru
      _
    // Predicated region
    $region278: #{lstm_gcn_forward.1} parent=1 // pred_check
      _
    $region279: #{lstm_gcn_forward.1} parent=1 // pred_check_branch
      %596 = sbr.rel (0) target = $region281
    $region280: #{lstm_gcn_forward.1} parent=1 // pred_region
      %597 = dma.done [#allocation39], 16
    $region281: #{lstm_gcn_forward.1} parent=1 // pred_fallthru
      _
    // Predicated region
    $region282: #{lstm_gcn_forward.1} parent=1 // pred_check
      _
    $region283: #{lstm_gcn_forward.1} parent=1 // pred_check_branch
      %599 = sbr.rel (0) target = $region285
    $region284: #{lstm_gcn_forward.1} parent=1 // pred_region
      %600 = dma.done [#allocation42], 16
    $region285: #{lstm_gcn_forward.1} parent=1 // pred_fallthru
      _
    // Predicated region
    $region286: #{lstm_gcn_forward.1} parent=1 // pred_check
      _
    $region287: #{lstm_gcn_forward.1} parent=1 // pred_check_branch
      %602 = sbr.rel (0) target = $region289
    $region288: #{lstm_gcn_forward.1} parent=1 // pred_region
      %603 = dma.done [#allocation42], 16
    $region289: #{lstm_gcn_forward.1} parent=1 // pred_fallthru
      _
    // Predicated region
    $region290: #{lstm_gcn_forward.1} parent=1 // pred_check
      _
    $region291: #{lstm_gcn_forward.1} parent=1 // pred_check_branch
      %605 = sbr.rel (0) target = $region293
    $region292: #{lstm_gcn_forward.1} parent=1 // pred_region
      %606 = dma.done [#allocation45], 384
    $region293: #{lstm_gcn_forward.1} parent=1 // pred_fallthru
      _
    // Predicated region
    $region294: #{lstm_gcn_forward.1} parent=1 // pred_check
      _
    $region295: #{lstm_gcn_forward.1} parent=1 // pred_check_branch
      %608 = sbr.rel (0) target = $region297
    $region296: #{lstm_gcn_forward.1} parent=1 // pred_region
      %609 = dma.done [#allocation45], 16
    $region297: #{lstm_gcn_forward.1} parent=1 // pred_fallthru
      _
    // Predicated region
    $region298: #{lstm_gcn_forward.1} parent=1 // pred_check
      _
    $region299: #{lstm_gcn_forward.1} parent=1 // pred_check_branch
      %611 = sbr.rel (0) target = $region301
    $region300: #{lstm_gcn_forward.1} parent=1 // pred_region
      %612 = dma.done [#allocation48], 512
    $region301: #{lstm_gcn_forward.1} parent=1 // pred_fallthru
      _
    // Predicated region
    $region302: #{lstm_gcn_forward.1} parent=1 // pred_check
      _
    $region303: #{lstm_gcn_forward.1} parent=1 // pred_check_branch
      %614 = sbr.rel (0) target = $region305
    $region304: #{lstm_gcn_forward.1} parent=1 // pred_region
      %615 = dma.done [#allocation48], 512
    $region305: #{lstm_gcn_forward.1} parent=1 // pred_fallthru
      _
    // Predicated region
    $region306: #{lstm_gcn_forward.1} parent=1 // pred_check
      _
    $region307: #{lstm_gcn_forward.1} parent=1 // pred_check_branch
      %617 = sbr.rel (0) target = $region309
    $region308: #{lstm_gcn_forward.1} parent=1 // pred_region
      %618 = dma.done [#allocation51], 16
    $region309: #{lstm_gcn_forward.1} parent=1 // pred_fallthru
      _
    // Predicated region
    $region310: #{lstm_gcn_forward.1} parent=1 // pred_check
      _
    $region311: #{lstm_gcn_forward.1} parent=1 // pred_check_branch
      %620 = sbr.rel (0) target = $region313
    $region312: #{lstm_gcn_forward.1} parent=1 // pred_region
      %621 = dma.done [#allocation51], 1024
    $region313: #{lstm_gcn_forward.1} parent=1 // pred_fallthru
      _
    // Predicated region
    $region314: #{lstm_gcn_forward.1} parent=1 // pred_check
      _
    $region315: #{lstm_gcn_forward.1} parent=1 // pred_check_branch
      %623 = sbr.rel (0) target = $region317
    $region316: #{lstm_gcn_forward.1} parent=1 // pred_region
      %624 = dma.done [#allocation54], 16
    $region317: #{lstm_gcn_forward.1} parent=1 // pred_fallthru
      _
    // Predicated region
    $region318: #{lstm_gcn_forward.1} parent=1 // pred_check
      _
    $region319: #{lstm_gcn_forward.1} parent=1 // pred_check_branch
      %626 = sbr.rel (0) target = $region321
    $region320: #{lstm_gcn_forward.1} parent=1 // pred_region
      %627 = dma.done [#allocation54], 1024
    $region321: #{lstm_gcn_forward.1} parent=1 // pred_fallthru
      _
    // Predicated region
    $region322: #{lstm_gcn_forward.1} parent=1 // pred_check
      _
    $region323: #{lstm_gcn_forward.1} parent=1 // pred_check_branch
      %629 = sbr.rel (0) target = $region325
    $region324: #{lstm_gcn_forward.1} parent=1 // pred_region
      %630 = dma.done [#allocation57], 16
    $region325: #{lstm_gcn_forward.1} parent=1 // pred_fallthru
      _
    // Predicated region
    $region326: #{lstm_gcn_forward.1} parent=1 // pred_check
      _
    $region327: #{lstm_gcn_forward.1} parent=1 // pred_check_branch
      %632 = sbr.rel (0) target = $region329
    $region328: #{lstm_gcn_forward.1} parent=1 // pred_region
      %633 = dma.done [#allocation57], 16
    $region329: #{lstm_gcn_forward.1} parent=1 // pred_fallthru
      _
    // Predicated region
    $region330: #{lstm_gcn_forward.1} parent=1 // pred_check
      _
    $region331: #{lstm_gcn_forward.1} parent=1 // pred_check_branch
      %635 = sbr.rel (0) target = $region333
    $region332: #{lstm_gcn_forward.1} parent=1 // pred_region
      %636 = dma.done [#allocation60], 16
    $region333: #{lstm_gcn_forward.1} parent=1 // pred_fallthru
      _
    %v637 = vld [vmem:[%s1] sm:$0xff]
    %v638 = vld [vmem:[%s1 + $0x8] sm:$0xff]
    %v639 = vld [vmem:[%s5] sm:$0xff]
    %v640 = vld [vmem:[%s5 + $0x8] sm:$0xff]
    %v641 = vld [vmem:[%s9] sm:$0x3]
    %v643 = vlaneseq
    %v644 = vshrl.u32 %v643, 7
    %v645 = vsub.s32 0, %v644
    %v646 = vrot.slane %v641, %v645
    %v647 = vlaneseq
    %v648 = vshrl.u32 %v647, 7
    %v649 = vsub.s32 1, %v648
    %v650 = vrot.slane %v641, %v649
    %vm653 = vcmask 64512
    %v655 = vsel %vm653, %v637, 0
    %v658 = vsel %vm653, %v638, 0
    %660 = vmatprep.subr.mxu0 0.0
    %661 = vmatpush1.msra.mxu0 0.0
    %662 = vmatprep.subr.mxu0 0.0
    %663 = vmatpush1.msra.mxu0 0.0
    %664 = vmatprep.subr.mxu0 0.0
    %665 = vmatpush1.msra.mxu0 0.0
    %666 = vmatprep.subr.mxu0 0.0
    %667 = vmatpush1.msra.mxu0 0.0
    %668 = vmatprep.subr.mxu0 0.0
    %669 = vmatpush1.msra.mxu0 0.0
    %670 = vmatprep.subr.mxu0 0.0
    %671 = vmatpush1.msra.mxu0 0.0
    %672 = vmatprep.subr.mxu0 0.0
    %673 = vmatpush1.msra.mxu0 0.0
    %674 = vmatprep.subr.mxu0 0.0
    %675 = vmatpush1.msra.mxu0 0.0
    %676 = vmatprep.subr.mxu0 0.0
    %677 = vmatpush1.msra.mxu0 0.0
    %678 = vmatprep.subr.mxu0 0.0
    %679 = vmatpush1.msra.mxu0 0.0
    %680 = vmatprep.subr.mxu0 0.0
    %681 = vmatpush1.msra.mxu0 0.0
    %682 = vmatprep.subr.mxu0 0.0
    %683 = vmatpush1.msra.mxu0 0.0
    %684 = vmatprep.subr.mxu0 0.0
    %685 = vmatpush1.msra.mxu0 0.0
    %686 = vmatprep.subr.mxu0 0.0
    %687 = vmatpush1.msra.mxu0 0.0
    %688 = vmatprep.subr.mxu0 0.0
    %689 = vmatpush1.msra.mxu0 0.0
    %690 = vmatprep.subr.mxu0 %v640
    %691 = vmatpush1.msra.mxu0 %v639
    %692 = vmatprep.subr.mxu0 0.0
    %693 = vmatpush2.msra.mxu0 0.0
    %694 = vmatprep.subr.mxu0 0.0
    %695 = vmatpush2.msra.mxu0 0.0
    %696 = vmatprep.subr.mxu0 0.0
    %697 = vmatpush2.msra.mxu0 0.0
    %698 = vmatprep.subr.mxu0 0.0
    %699 = vmatpush2.msra.mxu0 0.0
    %700 = vmatprep.subr.mxu0 0.0
    %701 = vmatpush2.msra.mxu0 0.0
    %702 = vmatprep.subr.mxu0 0.0
    %703 = vmatpush2.msra.mxu0 0.0
    %704 = vmatprep.subr.mxu0 0.0
    %705 = vmatpush2.msra.mxu0 0.0
    %706 = vmatprep.subr.mxu0 0.0
    %707 = vmatpush2.msra.mxu0 0.0
    %708 = vmatprep.subr.mxu0 0.0
    %709 = vmatpush2.msra.mxu0 0.0
    %710 = vmatprep.subr.mxu0 0.0
    %711 = vmatpush2.msra.mxu0 0.0
    %712 = vmatprep.subr.mxu0 0.0
    %713 = vmatpush2.msra.mxu0 0.0
    %714 = vmatprep.subr.mxu0 0.0
    %715 = vmatpush2.msra.mxu0 0.0
    %716 = vmatprep.subr.mxu0 0.0
    %717 = vmatpush2.msra.mxu0 0.0
    %718 = vmatprep.subr.mxu0 0.0
    %719 = vmatpush2.msra.mxu0 0.0
    %720 = vmatprep.subr.mxu0 0.0
    %721 = vmatpush2.msra.mxu0 0.0
    %722 = vmatprep.subr.mxu0 0.0
    %723 = vmatpush2.msra.mxu0 0.0
    %724 = vmatprep.mubr.f32.mxu0 0.0
    %725 = vmatmul.mubr.f32.gmra.mxu0 %v655
    %v726 = vpop.f32.mrf.mxu0
    %v727 = vadd.f32 %v646, %v726
    %v728 = vpop.f32.mrf.mxu0
    %v729 = vadd.f32 %v650, %v728
    %730 = vmatprep.mubr.f32.mxu0 0.0
    %731 = vmatmul.mubr.f32.gmra.mxu0 %v658
    %v732 = vpop.f32.mrf.mxu0
    %v733 = vadd.f32 %v646, %v732
    %v734 = vpop.f32.mrf.mxu0
    %v735 = vadd.f32 %v650, %v734
    %736 = vdwg.mxu0
    %v741 = vcombine.low %v727, %v729
    %v742 = vcombine.high %v727, %v729
    %v744 = vunpack.c.l.s4 1983009808
    %v745 = vunpack.c.0.s8 %v744
    %v746 = vlaneseq
    %v747 = vshrl.u32 %v746, 7
    %v748 = vsub.s32 %v745, %v747
    %v749 = vrot.slane %v741, %v748
    %v751 = vunpack.c.l.s4 1983009808
    %v752 = vunpack.c.0.s8 %v751
    %v753 = vlaneseq
    %v754 = vshrl.u32 %v753, 7
    %v755 = vsub.s32 %v752, %v754
    %v756 = vrot.slane %v742, %v755
    %v757 = vcombine.high %v749, %v749
    %v758 = vcombine.high %v756, %v756
    %v759 = vcombine.low %v733, %v735
    %v760 = vcombine.high %v733, %v735
    %v762 = vunpack.c.l.s4 1983009808
    %v763 = vunpack.c.0.s8 %v762
    %v764 = vlaneseq
    %v765 = vshrl.u32 %v764, 7
    %v766 = vsub.s32 %v763, %v765
    %v767 = vrot.slane %v759, %v766
    %v769 = vunpack.c.l.s4 1983009808
    %v770 = vunpack.c.0.s8 %v769
    %v771 = vlaneseq
    %v772 = vshrl.u32 %v771, 7
    %v773 = vsub.s32 %v770, %v772
    %v774 = vrot.slane %v760, %v773
    %v775 = vcombine.high %v767, %v767
    %v776 = vcombine.high %v774, %v774
    %785 = vst [vmem:[#allocation2] sm:$0xf] %v749
    %786 = vst [vmem:[#allocation2 + $0x4] sm:$0xf] %v757
    %787 = vst [vmem:[#allocation2 + $0x8] sm:$0xf] %v756
    %788 = vst [vmem:[#allocation2 + $0xc] sm:$0xf] %v758
    %789 = vst [vmem:[#allocation2 + $0x10] sm:$0xf] %v767
    %790 = vst [vmem:[#allocation2 + $0x14] sm:$0xf] %v775
    %791 = vst [vmem:[#allocation2 + $0x18] sm:$0xf] %v774
    %792 = vst [vmem:[#allocation2 + $0x1c] sm:$0xf] %v776
    %v793 = vld [vmem:[%s7] sm:$0xff]
    %v794 = vld [vmem:[%s7 + $0x8] sm:$0xff]
    %v795 = vld [vmem:[%s7 + $0x10] sm:$0xff]
    %v796 = vld [vmem:[%s7 + $0x18] sm:$0xff]
    %v797 = vld [vmem:[%s7 + $0x20] sm:$0xff]
    %v798 = vld [vmem:[%s7 + $0x28] sm:$0xff]
    %v799 = vld [vmem:[%s7 + $0x30] sm:$0xff]
    %v800 = vld [vmem:[%s7 + $0x38] sm:$0xff]
    %v801 = vld [vmem:[%s7 + $0x40] sm:$0xff]
    %v802 = vld [vmem:[%s7 + $0x48] sm:$0xff]
    %v803 = vld [vmem:[%s7 + $0x50] sm:$0xff]
    %v804 = vld [vmem:[%s7 + $0x58] sm:$0xff]
    %v805 = vld [vmem:[%s7 + $0x60] sm:$0xff]
    %v806 = vld [vmem:[%s7 + $0x68] sm:$0xff]
    %v807 = vld [vmem:[%s7 + $0x70] sm:$0xff]
    %v808 = vld [vmem:[%s7 + $0x78] sm:$0xff]
    %vm809 = vcmask 523264
    %v811 = vsel %vm809, 0.0, 0
    %813 = vmatprep.subr.mxu0 0.0
    %814 = vmatpush1.msra.mxu0 0.0
    %815 = vmatprep.subr.mxu0 0.0
    %816 = vmatpush1.msra.mxu0 0.0
    %817 = vmatprep.subr.mxu0 0.0
    %818 = vmatpush1.msra.mxu0 0.0
    %819 = vmatprep.subr.mxu0 0.0
    %820 = vmatpush1.msra.mxu0 0.0
    %821 = vmatprep.subr.mxu0 0.0
    %822 = vmatpush1.msra.mxu0 0.0
    %823 = vmatprep.subr.mxu0 0.0
    %824 = vmatpush1.msra.mxu0 0.0
    %825 = vmatprep.subr.mxu0 0.0
    %826 = vmatpush1.msra.mxu0 0.0
    %827 = vmatprep.subr.mxu0 0.0
    %828 = vmatpush1.msra.mxu0 0.0
    %829 = vmatprep.subr.mxu0 %v808
    %830 = vmatpush1.msra.mxu0 %v807
    %831 = vmatprep.subr.mxu0 %v806
    %832 = vmatpush1.msra.mxu0 %v805
    %833 = vmatprep.subr.mxu0 %v804
    %834 = vmatpush1.msra.mxu0 %v803
    %835 = vmatprep.subr.mxu0 %v802
    %836 = vmatpush1.msra.mxu0 %v801
    %837 = vmatprep.subr.mxu0 %v800
    %838 = vmatpush1.msra.mxu0 %v799
    %839 = vmatprep.subr.mxu0 %v798
    %840 = vmatpush1.msra.mxu0 %v797
    %841 = vmatprep.subr.mxu0 %v796
    %842 = vmatpush1.msra.mxu0 %v795
    %843 = vmatprep.subr.mxu0 %v794
    %844 = vmatpush1.msra.mxu0 %v793
    %845 = vmatprep.subr.mxu0 0.0
    %846 = vmatpush2.msra.mxu0 0.0
    %847 = vmatprep.subr.mxu0 0.0
    %848 = vmatpush2.msra.mxu0 0.0
    %849 = vmatprep.subr.mxu0 0.0
    %850 = vmatpush2.msra.mxu0 0.0
    %851 = vmatprep.subr.mxu0 0.0
    %852 = vmatpush2.msra.mxu0 0.0
    %853 = vmatprep.subr.mxu0 0.0
    %854 = vmatpush2.msra.mxu0 0.0
    %855 = vmatprep.subr.mxu0 0.0
    %856 = vmatpush2.msra.mxu0 0.0
    %857 = vmatprep.subr.mxu0 0.0
    %858 = vmatpush2.msra.mxu0 0.0
    %859 = vmatprep.subr.mxu0 0.0
    %860 = vmatpush2.msra.mxu0 0.0
    %861 = vmatprep.subr.mxu0 0.0
    %862 = vmatpush2.msra.mxu0 0.0
    %863 = vmatprep.subr.mxu0 0.0
    %864 = vmatpush2.msra.mxu0 0.0
    %865 = vmatprep.subr.mxu0 0.0
    %866 = vmatpush2.msra.mxu0 0.0
    %867 = vmatprep.subr.mxu0 0.0
    %868 = vmatpush2.msra.mxu0 0.0
    %869 = vmatprep.subr.mxu0 0.0
    %870 = vmatpush2.msra.mxu0 0.0
    %871 = vmatprep.subr.mxu0 0.0
    %872 = vmatpush2.msra.mxu0 0.0
    %873 = vmatprep.subr.mxu0 0.0
    %874 = vmatpush2.msra.mxu0 0.0
    %875 = vmatprep.subr.mxu0 0.0
    %876 = vmatpush2.msra.mxu0 0.0
    %877 = vmatprep.mubr.f32.mxu0 0.0
    %878 = vmatmul.mubr.f32.gmra.mxu0 %v811
    %v879 = vpop.f32.mrf.mxu0
    %v880 = vadd.f32 0.0, %v879
    %v881 = vpop.f32.mrf.mxu0
    %v882 = vadd.f32 0.0, %v881
    %883 = vdwg.mxu0
    %v884 = vld [vmem:[#allocation2] sm:$0xf]
    %v885 = vadd.f32 %v880, %v884
    %s886 = scalar_lea.vmem [#allocation2], 28
    %v887 = vld [vmem:[%s886] sm:$0xf]
    %v890 = vunpack.c.l.s4 1983009808
    %v891 = vunpack.c.0.s8 %v890
    %v892 = vlaneseq
    %v893 = vshrl.u32 %v892, 7
    %v894 = vsub.s32 %v891, %v893
    %v895 = vrot.slane %v887, %v894
    %v896 = vcombine.high %v895, %v895
    %v898 = vadd.f32 %v882, %v896
    %v899 = vxor.u32 %v885, 2147483648
    %v900 = vmul.f32 %v899, 1.442695
    %v901 = vpow.pop %v900
    %v902 = vadd.f32 %v901, 1.0
    %v903 = vrcp.pop %v902
    %v904 = vmul.f32 1.0, %v903
    %v905 = vtanh.pop %v885
    %v906 = vmul.f32 %v904, 0.0
    %908 = vrot.lane.b32.xlu0 %v905, 32
    %v909 = vpop.permute.xlu0 %908
    %v911 = vmul.f32 %v904, %v909
    %913 = vrot.lane.b32.xlu0 %v911, 32
    %v914 = vpop.permute.xlu0 %913
    %v916 = vadd.f32 %v906, %v914
    %v917 = vtanh.pop %v916
    %919 = vrot.lane.b32.xlu0 %v917, 32
    %v920 = vpop.permute.xlu0 %919
    %v922 = vmul.f32 %v904, %v920
    %v923 = vxor.u32 %v898, 2147483648
    %v924 = vmul.f32 %v923, 1.442695
    %v925 = vpow.pop %v924
    %v926 = vadd.f32 %v925, 1.0
    %v927 = vrcp.pop %v926
    %v928 = vmul.f32 1.0, %v927
    %v929 = vtanh.pop %v898
    %v930 = vmul.f32 %v928, 0.0
    %932 = vrot.lane.b32.xlu0 %v929, 32
    %v933 = vpop.permute.xlu0 %932
    %v935 = vmul.f32 %v928, %v933
    %937 = vrot.lane.b32.xlu0 %v935, 32
    %v938 = vpop.permute.xlu0 %937
    %v940 = vadd.f32 %v930, %v938
    %v941 = vtanh.pop %v940
    %943 = vrot.lane.b32.xlu0 %v941, 32
    %v944 = vpop.permute.xlu0 %943
    %v946 = vmul.f32 %v928, %v944
    %948 = vrot.lane.b32.xlu0 %v922, 64
    %v949 = vpop.permute.xlu0 %948
    %vm951 = vcmask 254976
    %952 = vst.msk [vmem:[#allocation3] sm:$0x3] %vm951, %v949
    %954 = vrot.lane.b32.xlu0 %v946, 64
    %v955 = vpop.permute.xlu0 %954
    %s957 = scalar_lea.vmem [#allocation4], 14
    %958 = vst.msk [vmem:[%s957] sm:$0x3] %vm951, %v955
    %959 = vrot.lane.b32.xlu0 %v946, 96
    %v960 = vpop.permute.xlu0 %959
    %vm962 = vcmask 261120
    %v963 = vsel %vm962, %v949, %v960
    %v965 = vsel %vm809, %v963, 0
    %967 = vmatprep.subr.mxu0 0.0
    %968 = vmatpush1.msra.mxu0 0.0
    %969 = vmatprep.subr.mxu0 0.0
    %970 = vmatpush1.msra.mxu0 0.0
    %971 = vmatprep.subr.mxu0 0.0
    %972 = vmatpush1.msra.mxu0 0.0
    %973 = vmatprep.subr.mxu0 0.0
    %974 = vmatpush1.msra.mxu0 0.0
    %975 = vmatprep.subr.mxu0 0.0
    %976 = vmatpush1.msra.mxu0 0.0
    %977 = vmatprep.subr.mxu0 0.0
    %978 = vmatpush1.msra.mxu0 0.0
    %979 = vmatprep.subr.mxu0 0.0
    %980 = vmatpush1.msra.mxu0 0.0
    %981 = vmatprep.subr.mxu0 0.0
    %982 = vmatpush1.msra.mxu0 0.0
    %983 = vmatprep.subr.mxu0 %v808
    %984 = vmatpush1.msra.mxu0 %v807
    %985 = vmatprep.subr.mxu0 %v806
    %986 = vmatpush1.msra.mxu0 %v805
    %987 = vmatprep.subr.mxu0 %v804
    %988 = vmatpush1.msra.mxu0 %v803
    %989 = vmatprep.subr.mxu0 %v802
    %990 = vmatpush1.msra.mxu0 %v801
    %991 = vmatprep.subr.mxu0 %v800
    %992 = vmatpush1.msra.mxu0 %v799
    %993 = vmatprep.subr.mxu0 %v798
    %994 = vmatpush1.msra.mxu0 %v797
    %995 = vmatprep.subr.mxu0 %v796
    %996 = vmatpush1.msra.mxu0 %v795
    %997 = vmatprep.subr.mxu0 %v794
    %998 = vmatpush1.msra.mxu0 %v793
    %999 = vmatprep.subr.mxu0 0.0
    %1000 = vmatpush2.msra.mxu0 0.0
    %1001 = vmatprep.subr.mxu0 0.0
    %1002 = vmatpush2.msra.mxu0 0.0
    %1003 = vmatprep.subr.mxu0 0.0
    %1004 = vmatpush2.msra.mxu0 0.0
    %1005 = vmatprep.subr.mxu0 0.0
    %1006 = vmatpush2.msra.mxu0 0.0
    %1007 = vmatprep.subr.mxu0 0.0
    %1008 = vmatpush2.msra.mxu0 0.0
    %1009 = vmatprep.subr.mxu0 0.0
    %1010 = vmatpush2.msra.mxu0 0.0
    %1011 = vmatprep.subr.mxu0 0.0
    %1012 = vmatpush2.msra.mxu0 0.0
    %1013 = vmatprep.subr.mxu0 0.0
    %1014 = vmatpush2.msra.mxu0 0.0
    %1015 = vmatprep.subr.mxu0 0.0
    %1016 = vmatpush2.msra.mxu0 0.0
    %1017 = vmatprep.subr.mxu0 0.0
    %1018 = vmatpush2.msra.mxu0 0.0
    %1019 = vmatprep.subr.mxu0 0.0
    %1020 = vmatpush2.msra.mxu0 0.0
    %1021 = vmatprep.subr.mxu0 0.0
    %1022 = vmatpush2.msra.mxu0 0.0
    %1023 = vmatprep.subr.mxu0 0.0
    %1024 = vmatpush2.msra.mxu0 0.0
    %1025 = vmatprep.subr.mxu0 0.0
    %1026 = vmatpush2.msra.mxu0 0.0
    %1027 = vmatprep.subr.mxu0 0.0
    %1028 = vmatpush2.msra.mxu0 0.0
    %1029 = vmatprep.subr.mxu0 0.0
    %1030 = vmatpush2.msra.mxu0 0.0
    %1031 = vmatprep.mubr.f32.mxu0 0.0
    %1032 = vmatmul.mubr.f32.gmra.mxu0 %v965
    %v1033 = vpop.f32.mrf.mxu0
    %v1034 = vadd.f32 0.0, %v1033
    %v1035 = vpop.f32.mrf.mxu0
    %v1036 = vadd.f32 0.0, %v1035
    %1037 = vdwg.mxu0
    %s1038 = scalar_lea.vmem [#allocation2], 4
    %v1039 = vld [vmem:[%s1038] sm:$0xf]
    %v1040 = vadd.f32 %v1034, %v1039
    %s1041 = scalar_lea.vmem [#allocation2], 24
    %v1042 = vld [vmem:[%s1041] sm:$0xf]
    %v1045 = vunpack.c.l.s4 1983009808
    %v1046 = vunpack.c.0.s8 %v1045
    %v1047 = vlaneseq
    %v1048 = vshrl.u32 %v1047, 7
    %v1049 = vsub.s32 %v1046, %v1048
    %v1050 = vrot.slane %v1042, %v1049
    %v1051 = vcombine.high %v1050, %v1050
    %v1053 = vadd.f32 %v1036, %v1051
    %v1054 = vxor.u32 %v1040, 2147483648
    %v1055 = vmul.f32 %v1054, 1.442695
    %v1056 = vpow.pop %v1055
    %v1057 = vadd.f32 %v1056, 1.0
    %v1058 = vrcp.pop %v1057
    %v1059 = vmul.f32 1.0, %v1058
    %v1060 = vtanh.pop %v1040
    %v1061 = vmul.f32 %v1059, %v916
    %1063 = vrot.lane.b32.xlu0 %v1060, 32
    %v1064 = vpop.permute.xlu0 %1063
    %v1066 = vmul.f32 %v1059, %v1064
    %1068 = vrot.lane.b32.xlu0 %v1066, 32
    %v1069 = vpop.permute.xlu0 %1068
    %v1071 = vadd.f32 %v1061, %v1069
    %v1072 = vtanh.pop %v1071
    %1074 = vrot.lane.b32.xlu0 %v1072, 32
    %v1075 = vpop.permute.xlu0 %1074
    %v1077 = vmul.f32 %v1059, %v1075
    %v1078 = vxor.u32 %v1053, 2147483648
    %v1079 = vmul.f32 %v1078, 1.442695
    %v1080 = vpow.pop %v1079
    %v1081 = vadd.f32 %v1080, 1.0
    %v1082 = vrcp.pop %v1081
    %v1083 = vmul.f32 1.0, %v1082
    %v1084 = vtanh.pop %v1053
    %v1085 = vmul.f32 %v1083, %v940
    %1087 = vrot.lane.b32.xlu0 %v1084, 32
    %v1088 = vpop.permute.xlu0 %1087
    %v1090 = vmul.f32 %v1083, %v1088
    %1092 = vrot.lane.b32.xlu0 %v1090, 32
    %v1093 = vpop.permute.xlu0 %1092
    %v1095 = vadd.f32 %v1085, %v1093
    %v1096 = vtanh.pop %v1095
    %1098 = vrot.lane.b32.xlu0 %v1096, 32
    %v1099 = vpop.permute.xlu0 %1098
    %v1101 = vmul.f32 %v1083, %v1099
    %1103 = vrot.lane.b32.xlu0 %v1077, 64
    %v1104 = vpop.permute.xlu0 %1103
    %s1106 = scalar_lea.vmem [#allocation3], 2
    %1107 = vst.msk [vmem:[%s1106] sm:$0x3] %vm951, %v1104
    %1109 = vrot.lane.b32.xlu0 %v1101, 64
    %v1110 = vpop.permute.xlu0 %1109
    %s1112 = scalar_lea.vmem [#allocation4], 12
    %1113 = vst.msk [vmem:[%s1112] sm:$0x3] %vm951, %v1110
    %1114 = vrot.lane.b32.xlu0 %v1101, 96
    %v1115 = vpop.permute.xlu0 %1114
    %v1117 = vsel %vm962, %v1104, %v1115
    %v1119 = vsel %vm809, %v1117, 0
    %1121 = vmatprep.subr.mxu0 0.0
    %1122 = vmatpush1.msra.mxu0 0.0
    %1123 = vmatprep.subr.mxu0 0.0
    %1124 = vmatpush1.msra.mxu0 0.0
    %1125 = vmatprep.subr.mxu0 0.0
    %1126 = vmatpush1.msra.mxu0 0.0
    %1127 = vmatprep.subr.mxu0 0.0
    %1128 = vmatpush1.msra.mxu0 0.0
    %1129 = vmatprep.subr.mxu0 0.0
    %1130 = vmatpush1.msra.mxu0 0.0
    %1131 = vmatprep.subr.mxu0 0.0
    %1132 = vmatpush1.msra.mxu0 0.0
    %1133 = vmatprep.subr.mxu0 0.0
    %1134 = vmatpush1.msra.mxu0 0.0
    %1135 = vmatprep.subr.mxu0 0.0
    %1136 = vmatpush1.msra.mxu0 0.0
    %1137 = vmatprep.subr.mxu0 %v808
    %1138 = vmatpush1.msra.mxu0 %v807
    %1139 = vmatprep.subr.mxu0 %v806
    %1140 = vmatpush1.msra.mxu0 %v805
    %1141 = vmatprep.subr.mxu0 %v804
    %1142 = vmatpush1.msra.mxu0 %v803
    %1143 = vmatprep.subr.mxu0 %v802
    %1144 = vmatpush1.msra.mxu0 %v801
    %1145 = vmatprep.subr.mxu0 %v800
    %1146 = vmatpush1.msra.mxu0 %v799
    %1147 = vmatprep.subr.mxu0 %v798
    %1148 = vmatpush1.msra.mxu0 %v797
    %1149 = vmatprep.subr.mxu0 %v796
    %1150 = vmatpush1.msra.mxu0 %v795
    %1151 = vmatprep.subr.mxu0 %v794
    %1152 = vmatpush1.msra.mxu0 %v793
    %1153 = vmatprep.subr.mxu0 0.0
    %1154 = vmatpush2.msra.mxu0 0.0
    %1155 = vmatprep.subr.mxu0 0.0
    %1156 = vmatpush2.msra.mxu0 0.0
    %1157 = vmatprep.subr.mxu0 0.0
    %1158 = vmatpush2.msra.mxu0 0.0
    %1159 = vmatprep.subr.mxu0 0.0
    %1160 = vmatpush2.msra.mxu0 0.0
    %1161 = vmatprep.subr.mxu0 0.0
    %1162 = vmatpush2.msra.mxu0 0.0
    %1163 = vmatprep.subr.mxu0 0.0
    %1164 = vmatpush2.msra.mxu0 0.0
    %1165 = vmatprep.subr.mxu0 0.0
    %1166 = vmatpush2.msra.mxu0 0.0
    %1167 = vmatprep.subr.mxu0 0.0
    %1168 = vmatpush2.msra.mxu0 0.0
    %1169 = vmatprep.subr.mxu0 0.0
    %1170 = vmatpush2.msra.mxu0 0.0
    %1171 = vmatprep.subr.mxu0 0.0
    %1172 = vmatpush2.msra.mxu0 0.0
    %1173 = vmatprep.subr.mxu0 0.0
    %1174 = vmatpush2.msra.mxu0 0.0
    %1175 = vmatprep.subr.mxu0 0.0
    %1176 = vmatpush2.msra.mxu0 0.0
    %1177 = vmatprep.subr.mxu0 0.0
    %1178 = vmatpush2.msra.mxu0 0.0
    %1179 = vmatprep.subr.mxu0 0.0
    %1180 = vmatpush2.msra.mxu0 0.0
    %1181 = vmatprep.subr.mxu0 0.0
    %1182 = vmatpush2.msra.mxu0 0.0
    %1183 = vmatprep.subr.mxu0 0.0
    %1184 = vmatpush2.msra.mxu0 0.0
    %1185 = vmatprep.mubr.f32.mxu0 0.0
    %1186 = vmatmul.mubr.f32.gmra.mxu0 %v1119
    %v1187 = vpop.f32.mrf.mxu0
    %v1188 = vadd.f32 0.0, %v1187
    %v1189 = vpop.f32.mrf.mxu0
    %v1190 = vadd.f32 0.0, %v1189
    %1191 = vdwg.mxu0
    %s1192 = scalar_lea.vmem [#allocation2], 8
    %v1193 = vld [vmem:[%s1192] sm:$0xf]
    %v1194 = vadd.f32 %v1188, %v1193
    %s1195 = scalar_lea.vmem [#allocation2], 20
    %v1196 = vld [vmem:[%s1195] sm:$0xf]
    %v1199 = vunpack.c.l.s4 1983009808
    %v1200 = vunpack.c.0.s8 %v1199
    %v1201 = vlaneseq
    %v1202 = vshrl.u32 %v1201, 7
    %v1203 = vsub.s32 %v1200, %v1202
    %v1204 = vrot.slane %v1196, %v1203
    %v1205 = vcombine.high %v1204, %v1204
    %v1207 = vadd.f32 %v1190, %v1205
    %v1208 = vxor.u32 %v1194, 2147483648
    %v1209 = vmul.f32 %v1208, 1.442695
    %v1210 = vpow.pop %v1209
    %v1211 = vadd.f32 %v1210, 1.0
    %v1212 = vrcp.pop %v1211
    %v1213 = vmul.f32 1.0, %v1212
    %v1214 = vtanh.pop %v1194
    %v1215 = vmul.f32 %v1213, %v1071
    %1217 = vrot.lane.b32.xlu0 %v1214, 32
    %v1218 = vpop.permute.xlu0 %1217
    %v1220 = vmul.f32 %v1213, %v1218
    %1222 = vrot.lane.b32.xlu0 %v1220, 32
    %v1223 = vpop.permute.xlu0 %1222
    %v1225 = vadd.f32 %v1215, %v1223
    %v1226 = vtanh.pop %v1225
    %1228 = vrot.lane.b32.xlu0 %v1226, 32
    %v1229 = vpop.permute.xlu0 %1228
    %v1231 = vmul.f32 %v1213, %v1229
    %v1232 = vxor.u32 %v1207, 2147483648
    %v1233 = vmul.f32 %v1232, 1.442695
    %v1234 = vpow.pop %v1233
    %v1235 = vadd.f32 %v1234, 1.0
    %v1236 = vrcp.pop %v1235
    %v1237 = vmul.f32 1.0, %v1236
    %v1238 = vtanh.pop %v1207
    %v1239 = vmul.f32 %v1237, %v1095
    %1241 = vrot.lane.b32.xlu0 %v1238, 32
    %v1242 = vpop.permute.xlu0 %1241
    %v1244 = vmul.f32 %v1237, %v1242
    %1246 = vrot.lane.b32.xlu0 %v1244, 32
    %v1247 = vpop.permute.xlu0 %1246
    %v1249 = vadd.f32 %v1239, %v1247
    %v1250 = vtanh.pop %v1249
    %1252 = vrot.lane.b32.xlu0 %v1250, 32
    %v1253 = vpop.permute.xlu0 %1252
    %v1255 = vmul.f32 %v1237, %v1253
    %1257 = vrot.lane.b32.xlu0 %v1231, 64
    %v1258 = vpop.permute.xlu0 %1257
    %s1260 = scalar_lea.vmem [#allocation3], 4
    %1261 = vst.msk [vmem:[%s1260] sm:$0x3] %vm951, %v1258
    %1263 = vrot.lane.b32.xlu0 %v1255, 64
    %v1264 = vpop.permute.xlu0 %1263
    %s1266 = scalar_lea.vmem [#allocation4], 10
    %1267 = vst.msk [vmem:[%s1266] sm:$0x3] %vm951, %v1264
    %1268 = vrot.lane.b32.xlu0 %v1255, 96
    %v1269 = vpop.permute.xlu0 %1268
    %v1271 = vsel %vm962, %v1258, %v1269
    %v1273 = vsel %vm809, %v1271, 0
    %1275 = vmatprep.subr.mxu0 0.0
    %1276 = vmatpush1.msra.mxu0 0.0
    %1277 = vmatprep.subr.mxu0 0.0
    %1278 = vmatpush1.msra.mxu0 0.0
    %1279 = vmatprep.subr.mxu0 0.0
    %1280 = vmatpush1.msra.mxu0 0.0
    %1281 = vmatprep.subr.mxu0 0.0
    %1282 = vmatpush1.msra.mxu0 0.0
    %1283 = vmatprep.subr.mxu0 0.0
    %1284 = vmatpush1.msra.mxu0 0.0
    %1285 = vmatprep.subr.mxu0 0.0
    %1286 = vmatpush1.msra.mxu0 0.0
    %1287 = vmatprep.subr.mxu0 0.0
    %1288 = vmatpush1.msra.mxu0 0.0
    %1289 = vmatprep.subr.mxu0 0.0
    %1290 = vmatpush1.msra.mxu0 0.0
    %1291 = vmatprep.subr.mxu0 %v808
    %1292 = vmatpush1.msra.mxu0 %v807
    %1293 = vmatprep.subr.mxu0 %v806
    %1294 = vmatpush1.msra.mxu0 %v805
    %1295 = vmatprep.subr.mxu0 %v804
    %1296 = vmatpush1.msra.mxu0 %v803
    %1297 = vmatprep.subr.mxu0 %v802
    %1298 = vmatpush1.msra.mxu0 %v801
    %1299 = vmatprep.subr.mxu0 %v800
    %1300 = vmatpush1.msra.mxu0 %v799
    %1301 = vmatprep.subr.mxu0 %v798
    %1302 = vmatpush1.msra.mxu0 %v797
    %1303 = vmatprep.subr.mxu0 %v796
    %1304 = vmatpush1.msra.mxu0 %v795
    %1305 = vmatprep.subr.mxu0 %v794
    %1306 = vmatpush1.msra.mxu0 %v793
    %1307 = vmatprep.subr.mxu0 0.0
    %1308 = vmatpush2.msra.mxu0 0.0
    %1309 = vmatprep.subr.mxu0 0.0
    %1310 = vmatpush2.msra.mxu0 0.0
    %1311 = vmatprep.subr.mxu0 0.0
    %1312 = vmatpush2.msra.mxu0 0.0
    %1313 = vmatprep.subr.mxu0 0.0
    %1314 = vmatpush2.msra.mxu0 0.0
    %1315 = vmatprep.subr.mxu0 0.0
    %1316 = vmatpush2.msra.mxu0 0.0
    %1317 = vmatprep.subr.mxu0 0.0
    %1318 = vmatpush2.msra.mxu0 0.0
    %1319 = vmatprep.subr.mxu0 0.0
    %1320 = vmatpush2.msra.mxu0 0.0
    %1321 = vmatprep.subr.mxu0 0.0
    %1322 = vmatpush2.msra.mxu0 0.0
    %1323 = vmatprep.subr.mxu0 0.0
    %1324 = vmatpush2.msra.mxu0 0.0
    %1325 = vmatprep.subr.mxu0 0.0
    %1326 = vmatpush2.msra.mxu0 0.0
    %1327 = vmatprep.subr.mxu0 0.0
    %1328 = vmatpush2.msra.mxu0 0.0
    %1329 = vmatprep.subr.mxu0 0.0
    %1330 = vmatpush2.msra.mxu0 0.0
    %1331 = vmatprep.subr.mxu0 0.0
    %1332 = vmatpush2.msra.mxu0 0.0
    %1333 = vmatprep.subr.mxu0 0.0
    %1334 = vmatpush2.msra.mxu0 0.0
    %1335 = vmatprep.subr.mxu0 0.0
    %1336 = vmatpush2.msra.mxu0 0.0
    %1337 = vmatprep.subr.mxu0 0.0
    %1338 = vmatpush2.msra.mxu0 0.0
    %1339 = vmatprep.mubr.f32.mxu0 0.0
    %1340 = vmatmul.mubr.f32.gmra.mxu0 %v1273
    %v1341 = vpop.f32.mrf.mxu0
    %v1342 = vadd.f32 0.0, %v1341
    %v1343 = vpop.f32.mrf.mxu0
    %v1344 = vadd.f32 0.0, %v1343
    %1345 = vdwg.mxu0
    %s1346 = scalar_lea.vmem [#allocation2], 12
    %v1347 = vld [vmem:[%s1346] sm:$0xf]
    %v1348 = vadd.f32 %v1342, %v1347
    %s1349 = scalar_lea.vmem [#allocation2], 16
    %v1350 = vld [vmem:[%s1349] sm:$0xf]
    %v1353 = vunpack.c.l.s4 1983009808
    %v1354 = vunpack.c.0.s8 %v1353
    %v1355 = vlaneseq
    %v1356 = vshrl.u32 %v1355, 7
    %v1357 = vsub.s32 %v1354, %v1356
    %v1358 = vrot.slane %v1350, %v1357
    %v1359 = vcombine.high %v1358, %v1358
    %v1361 = vadd.f32 %v1344, %v1359
    %v1362 = vxor.u32 %v1348, 2147483648
    %v1363 = vmul.f32 %v1362, 1.442695
    %v1364 = vpow.pop %v1363
    %v1365 = vadd.f32 %v1364, 1.0
    %v1366 = vrcp.pop %v1365
    %v1367 = vmul.f32 1.0, %v1366
    %v1368 = vtanh.pop %v1348
    %v1369 = vmul.f32 %v1367, %v1225
    %1371 = vrot.lane.b32.xlu0 %v1368, 32
    %v1372 = vpop.permute.xlu0 %1371
    %v1374 = vmul.f32 %v1367, %v1372
    %1376 = vrot.lane.b32.xlu0 %v1374, 32
    %v1377 = vpop.permute.xlu0 %1376
    %v1379 = vadd.f32 %v1369, %v1377
    %v1380 = vtanh.pop %v1379
    %1382 = vrot.lane.b32.xlu0 %v1380, 32
    %v1383 = vpop.permute.xlu0 %1382
    %v1385 = vmul.f32 %v1367, %v1383
    %v1386 = vxor.u32 %v1361, 2147483648
    %v1387 = vmul.f32 %v1386, 1.442695
    %v1388 = vpow.pop %v1387
    %v1389 = vadd.f32 %v1388, 1.0
    %v1390 = vrcp.pop %v1389
    %v1391 = vmul.f32 1.0, %v1390
    %v1392 = vtanh.pop %v1361
    %v1393 = vmul.f32 %v1391, %v1249
    %1395 = vrot.lane.b32.xlu0 %v1392, 32
    %v1396 = vpop.permute.xlu0 %1395
    %v1398 = vmul.f32 %v1391, %v1396
    %1400 = vrot.lane.b32.xlu0 %v1398, 32
    %v1401 = vpop.permute.xlu0 %1400
    %v1403 = vadd.f32 %v1393, %v1401
    %v1404 = vtanh.pop %v1403
    %1406 = vrot.lane.b32.xlu0 %v1404, 32
    %v1407 = vpop.permute.xlu0 %1406
    %v1409 = vmul.f32 %v1391, %v1407
    %1411 = vrot.lane.b32.xlu0 %v1385, 64
    %v1412 = vpop.permute.xlu0 %1411
    %s1414 = scalar_lea.vmem [#allocation3], 6
    %1415 = vst.msk [vmem:[%s1414] sm:$0x3] %vm951, %v1412
    %1417 = vrot.lane.b32.xlu0 %v1409, 64
    %v1418 = vpop.permute.xlu0 %1417
    %s1420 = scalar_lea.vmem [#allocation4], 8
    %1421 = vst.msk [vmem:[%s1420] sm:$0x3] %vm951, %v1418
    %1422 = vrot.lane.b32.xlu0 %v1409, 96
    %v1423 = vpop.permute.xlu0 %1422
    %v1425 = vsel %vm962, %v1412, %v1423
    %v1427 = vsel %vm809, %v1425, 0
    %1429 = vmatprep.subr.mxu0 0.0
    %1430 = vmatpush1.msra.mxu0 0.0
    %1431 = vmatprep.subr.mxu0 0.0
    %1432 = vmatpush1.msra.mxu0 0.0
    %1433 = vmatprep.subr.mxu0 0.0
    %1434 = vmatpush1.msra.mxu0 0.0
    %1435 = vmatprep.subr.mxu0 0.0
    %1436 = vmatpush1.msra.mxu0 0.0
    %1437 = vmatprep.subr.mxu0 0.0
    %1438 = vmatpush1.msra.mxu0 0.0
    %1439 = vmatprep.subr.mxu0 0.0
    %1440 = vmatpush1.msra.mxu0 0.0
    %1441 = vmatprep.subr.mxu0 0.0
    %1442 = vmatpush1.msra.mxu0 0.0
    %1443 = vmatprep.subr.mxu0 0.0
    %1444 = vmatpush1.msra.mxu0 0.0
    %1445 = vmatprep.subr.mxu0 %v808
    %1446 = vmatpush1.msra.mxu0 %v807
    %1447 = vmatprep.subr.mxu0 %v806
    %1448 = vmatpush1.msra.mxu0 %v805
    %1449 = vmatprep.subr.mxu0 %v804
    %1450 = vmatpush1.msra.mxu0 %v803
    %1451 = vmatprep.subr.mxu0 %v802
    %1452 = vmatpush1.msra.mxu0 %v801
    %1453 = vmatprep.subr.mxu0 %v800
    %1454 = vmatpush1.msra.mxu0 %v799
    %1455 = vmatprep.subr.mxu0 %v798
    %1456 = vmatpush1.msra.mxu0 %v797
    %1457 = vmatprep.subr.mxu0 %v796
    %1458 = vmatpush1.msra.mxu0 %v795
    %1459 = vmatprep.subr.mxu0 %v794
    %1460 = vmatpush1.msra.mxu0 %v793
    %1461 = vmatprep.subr.mxu0 0.0
    %1462 = vmatpush2.msra.mxu0 0.0
    %1463 = vmatprep.subr.mxu0 0.0
    %1464 = vmatpush2.msra.mxu0 0.0
    %1465 = vmatprep.subr.mxu0 0.0
    %1466 = vmatpush2.msra.mxu0 0.0
    %1467 = vmatprep.subr.mxu0 0.0
    %1468 = vmatpush2.msra.mxu0 0.0
    %1469 = vmatprep.subr.mxu0 0.0
    %1470 = vmatpush2.msra.mxu0 0.0
    %1471 = vmatprep.subr.mxu0 0.0
    %1472 = vmatpush2.msra.mxu0 0.0
    %1473 = vmatprep.subr.mxu0 0.0
    %1474 = vmatpush2.msra.mxu0 0.0
    %1475 = vmatprep.subr.mxu0 0.0
    %1476 = vmatpush2.msra.mxu0 0.0
    %1477 = vmatprep.subr.mxu0 0.0
    %1478 = vmatpush2.msra.mxu0 0.0
    %1479 = vmatprep.subr.mxu0 0.0
    %1480 = vmatpush2.msra.mxu0 0.0
    %1481 = vmatprep.subr.mxu0 0.0
    %1482 = vmatpush2.msra.mxu0 0.0
    %1483 = vmatprep.subr.mxu0 0.0
    %1484 = vmatpush2.msra.mxu0 0.0
    %1485 = vmatprep.subr.mxu0 0.0
    %1486 = vmatpush2.msra.mxu0 0.0
    %1487 = vmatprep.subr.mxu0 0.0
    %1488 = vmatpush2.msra.mxu0 0.0
    %1489 = vmatprep.subr.mxu0 0.0
    %1490 = vmatpush2.msra.mxu0 0.0
    %1491 = vmatprep.subr.mxu0 0.0
    %1492 = vmatpush2.msra.mxu0 0.0
    %1493 = vmatprep.mubr.f32.mxu0 0.0
    %1494 = vmatmul.mubr.f32.gmra.mxu0 %v1427
    %v1495 = vpop.f32.mrf.mxu0
    %v1496 = vadd.f32 0.0, %v1495
    %v1497 = vpop.f32.mrf.mxu0
    %v1498 = vadd.f32 0.0, %v1497
    %1499 = vdwg.mxu0
    %v1500 = vld [vmem:[%s1349] sm:$0xf]
    %v1501 = vadd.f32 %v1496, %v1500
    %v1502 = vld [vmem:[%s1346] sm:$0xf]
    %v1505 = vunpack.c.l.s4 1983009808
    %v1506 = vunpack.c.0.s8 %v1505
    %v1507 = vlaneseq
    %v1508 = vshrl.u32 %v1507, 7
    %v1509 = vsub.s32 %v1506, %v1508
    %v1510 = vrot.slane %v1502, %v1509
    %v1511 = vcombine.high %v1510, %v1510
    %v1513 = vadd.f32 %v1498, %v1511
    %v1514 = vxor.u32 %v1501, 2147483648
    %v1515 = vmul.f32 %v1514, 1.442695
    %v1516 = vpow.pop %v1515
    %v1517 = vadd.f32 %v1516, 1.0
    %v1518 = vrcp.pop %v1517
    %v1519 = vmul.f32 1.0, %v1518
    %v1520 = vtanh.pop %v1501
    %v1521 = vmul.f32 %v1519, %v1379
    %1523 = vrot.lane.b32.xlu0 %v1520, 32
    %v1524 = vpop.permute.xlu0 %1523
    %v1526 = vmul.f32 %v1519, %v1524
    %1528 = vrot.lane.b32.xlu0 %v1526, 32
    %v1529 = vpop.permute.xlu0 %1528
    %v1531 = vadd.f32 %v1521, %v1529
    %v1532 = vtanh.pop %v1531
    %1534 = vrot.lane.b32.xlu0 %v1532, 32
    %v1535 = vpop.permute.xlu0 %1534
    %v1537 = vmul.f32 %v1519, %v1535
    %v1538 = vxor.u32 %v1513, 2147483648
    %v1539 = vmul.f32 %v1538, 1.442695
    %v1540 = vpow.pop %v1539
    %v1541 = vadd.f32 %v1540, 1.0
    %v1542 = vrcp.pop %v1541
    %v1543 = vmul.f32 1.0, %v1542
    %v1544 = vtanh.pop %v1513
    %v1545 = vmul.f32 %v1543, %v1403
    %1547 = vrot.lane.b32.xlu0 %v1544, 32
    %v1548 = vpop.permute.xlu0 %1547
    %v1550 = vmul.f32 %v1543, %v1548
    %1552 = vrot.lane.b32.xlu0 %v1550, 32
    %v1553 = vpop.permute.xlu0 %1552
    %v1555 = vadd.f32 %v1545, %v1553
    %v1556 = vtanh.pop %v1555
    %1558 = vrot.lane.b32.xlu0 %v1556, 32
    %v1559 = vpop.permute.xlu0 %1558
    %v1561 = vmul.f32 %v1543, %v1559
    %1563 = vrot.lane.b32.xlu0 %v1537, 64
    %v1564 = vpop.permute.xlu0 %1563
    %s1566 = scalar_lea.vmem [#allocation3], 8
    %1567 = vst.msk [vmem:[%s1566] sm:$0x3] %vm951, %v1564
    %1569 = vrot.lane.b32.xlu0 %v1561, 64
    %v1570 = vpop.permute.xlu0 %1569
    %s1572 = scalar_lea.vmem [#allocation4], 6
    %1573 = vst.msk [vmem:[%s1572] sm:$0x3] %vm951, %v1570
    %1574 = vrot.lane.b32.xlu0 %v1561, 96
    %v1575 = vpop.permute.xlu0 %1574
    %v1577 = vsel %vm962, %v1564, %v1575
    %v1579 = vsel %vm809, %v1577, 0
    %1581 = vmatprep.subr.mxu0 0.0
    %1582 = vmatpush1.msra.mxu0 0.0
    %1583 = vmatprep.subr.mxu0 0.0
    %1584 = vmatpush1.msra.mxu0 0.0
    %1585 = vmatprep.subr.mxu0 0.0
    %1586 = vmatpush1.msra.mxu0 0.0
    %1587 = vmatprep.subr.mxu0 0.0
    %1588 = vmatpush1.msra.mxu0 0.0
    %1589 = vmatprep.subr.mxu0 0.0
    %1590 = vmatpush1.msra.mxu0 0.0
    %1591 = vmatprep.subr.mxu0 0.0
    %1592 = vmatpush1.msra.mxu0 0.0
    %1593 = vmatprep.subr.mxu0 0.0
    %1594 = vmatpush1.msra.mxu0 0.0
    %1595 = vmatprep.subr.mxu0 0.0
    %1596 = vmatpush1.msra.mxu0 0.0
    %1597 = vmatprep.subr.mxu0 %v808
    %1598 = vmatpush1.msra.mxu0 %v807
    %1599 = vmatprep.subr.mxu0 %v806
    %1600 = vmatpush1.msra.mxu0 %v805
    %1601 = vmatprep.subr.mxu0 %v804
    %1602 = vmatpush1.msra.mxu0 %v803
    %1603 = vmatprep.subr.mxu0 %v802
    %1604 = vmatpush1.msra.mxu0 %v801
    %1605 = vmatprep.subr.mxu0 %v800
    %1606 = vmatpush1.msra.mxu0 %v799
    %1607 = vmatprep.subr.mxu0 %v798
    %1608 = vmatpush1.msra.mxu0 %v797
    %1609 = vmatprep.subr.mxu0 %v796
    %1610 = vmatpush1.msra.mxu0 %v795
    %1611 = vmatprep.subr.mxu0 %v794
    %1612 = vmatpush1.msra.mxu0 %v793
    %1613 = vmatprep.subr.mxu0 0.0
    %1614 = vmatpush2.msra.mxu0 0.0
    %1615 = vmatprep.subr.mxu0 0.0
    %1616 = vmatpush2.msra.mxu0 0.0
    %1617 = vmatprep.subr.mxu0 0.0
    %1618 = vmatpush2.msra.mxu0 0.0
    %1619 = vmatprep.subr.mxu0 0.0
    %1620 = vmatpush2.msra.mxu0 0.0
    %1621 = vmatprep.subr.mxu0 0.0
    %1622 = vmatpush2.msra.mxu0 0.0
    %1623 = vmatprep.subr.mxu0 0.0
    %1624 = vmatpush2.msra.mxu0 0.0
    %1625 = vmatprep.subr.mxu0 0.0
    %1626 = vmatpush2.msra.mxu0 0.0
    %1627 = vmatprep.subr.mxu0 0.0
    %1628 = vmatpush2.msra.mxu0 0.0
    %1629 = vmatprep.subr.mxu0 0.0
    %1630 = vmatpush2.msra.mxu0 0.0
    %1631 = vmatprep.subr.mxu0 0.0
    %1632 = vmatpush2.msra.mxu0 0.0
    %1633 = vmatprep.subr.mxu0 0.0
    %1634 = vmatpush2.msra.mxu0 0.0
    %1635 = vmatprep.subr.mxu0 0.0
    %1636 = vmatpush2.msra.mxu0 0.0
    %1637 = vmatprep.subr.mxu0 0.0
    %1638 = vmatpush2.msra.mxu0 0.0
    %1639 = vmatprep.subr.mxu0 0.0
    %1640 = vmatpush2.msra.mxu0 0.0
    %1641 = vmatprep.subr.mxu0 0.0
    %1642 = vmatpush2.msra.mxu0 0.0
    %1643 = vmatprep.subr.mxu0 0.0
    %1644 = vmatpush2.msra.mxu0 0.0
    %1645 = vmatprep.mubr.f32.mxu0 0.0
    %1646 = vmatmul.mubr.f32.gmra.mxu0 %v1579
    %v1647 = vpop.f32.mrf.mxu0
    %v1648 = vadd.f32 0.0, %v1647
    %v1649 = vpop.f32.mrf.mxu0
    %v1650 = vadd.f32 0.0, %v1649
    %1651 = vdwg.mxu0
    %v1652 = vld [vmem:[%s1195] sm:$0xf]
    %v1653 = vadd.f32 %v1648, %v1652
    %v1654 = vld [vmem:[%s1192] sm:$0xf]
    %v1657 = vunpack.c.l.s4 1983009808
    %v1658 = vunpack.c.0.s8 %v1657
    %v1659 = vlaneseq
    %v1660 = vshrl.u32 %v1659, 7
    %v1661 = vsub.s32 %v1658, %v1660
    %v1662 = vrot.slane %v1654, %v1661
    %v1663 = vcombine.high %v1662, %v1662
    %v1665 = vadd.f32 %v1650, %v1663
    %v1666 = vxor.u32 %v1653, 2147483648
    %v1667 = vmul.f32 %v1666, 1.442695
    %v1668 = vpow.pop %v1667
    %v1669 = vadd.f32 %v1668, 1.0
    %v1670 = vrcp.pop %v1669
    %v1671 = vmul.f32 1.0, %v1670
    %v1672 = vtanh.pop %v1653
    %v1673 = vmul.f32 %v1671, %v1531
    %1675 = vrot.lane.b32.xlu0 %v1672, 32
    %v1676 = vpop.permute.xlu0 %1675
    %v1678 = vmul.f32 %v1671, %v1676
    %1680 = vrot.lane.b32.xlu0 %v1678, 32
    %v1681 = vpop.permute.xlu0 %1680
    %v1683 = vadd.f32 %v1673, %v1681
    %v1684 = vtanh.pop %v1683
    %1686 = vrot.lane.b32.xlu0 %v1684, 32
    %v1687 = vpop.permute.xlu0 %1686
    %v1689 = vmul.f32 %v1671, %v1687
    %v1690 = vxor.u32 %v1665, 2147483648
    %v1691 = vmul.f32 %v1690, 1.442695
    %v1692 = vpow.pop %v1691
    %v1693 = vadd.f32 %v1692, 1.0
    %v1694 = vrcp.pop %v1693
    %v1695 = vmul.f32 1.0, %v1694
    %v1696 = vtanh.pop %v1665
    %v1697 = vmul.f32 %v1695, %v1555
    %1699 = vrot.lane.b32.xlu0 %v1696, 32
    %v1700 = vpop.permute.xlu0 %1699
    %v1702 = vmul.f32 %v1695, %v1700
    %1704 = vrot.lane.b32.xlu0 %v1702, 32
    %v1705 = vpop.permute.xlu0 %1704
    %v1707 = vadd.f32 %v1697, %v1705
    %v1708 = vtanh.pop %v1707
    %1710 = vrot.lane.b32.xlu0 %v1708, 32
    %v1711 = vpop.permute.xlu0 %1710
    %v1713 = vmul.f32 %v1695, %v1711
    %1715 = vrot.lane.b32.xlu0 %v1689, 64
    %v1716 = vpop.permute.xlu0 %1715
    %s1718 = scalar_lea.vmem [#allocation3], 10
    %1719 = vst.msk [vmem:[%s1718] sm:$0x3] %vm951, %v1716
    %1721 = vrot.lane.b32.xlu0 %v1713, 64
    %v1722 = vpop.permute.xlu0 %1721
    %s1724 = scalar_lea.vmem [#allocation4], 4
    %1725 = vst.msk [vmem:[%s1724] sm:$0x3] %vm951, %v1722
    %1726 = vrot.lane.b32.xlu0 %v1713, 96
    %v1727 = vpop.permute.xlu0 %1726
    %v1729 = vsel %vm962, %v1716, %v1727
    %v1731 = vsel %vm809, %v1729, 0
    %1733 = vmatprep.subr.mxu0 0.0
    %1734 = vmatpush1.msra.mxu0 0.0
    %1735 = vmatprep.subr.mxu0 0.0
    %1736 = vmatpush1.msra.mxu0 0.0
    %1737 = vmatprep.subr.mxu0 0.0
    %1738 = vmatpush1.msra.mxu0 0.0
    %1739 = vmatprep.subr.mxu0 0.0
    %1740 = vmatpush1.msra.mxu0 0.0
    %1741 = vmatprep.subr.mxu0 0.0
    %1742 = vmatpush1.msra.mxu0 0.0
    %1743 = vmatprep.subr.mxu0 0.0
    %1744 = vmatpush1.msra.mxu0 0.0
    %1745 = vmatprep.subr.mxu0 0.0
    %1746 = vmatpush1.msra.mxu0 0.0
    %1747 = vmatprep.subr.mxu0 0.0
    %1748 = vmatpush1.msra.mxu0 0.0
    %1749 = vmatprep.subr.mxu0 %v808
    %1750 = vmatpush1.msra.mxu0 %v807
    %1751 = vmatprep.subr.mxu0 %v806
    %1752 = vmatpush1.msra.mxu0 %v805
    %1753 = vmatprep.subr.mxu0 %v804
    %1754 = vmatpush1.msra.mxu0 %v803
    %1755 = vmatprep.subr.mxu0 %v802
    %1756 = vmatpush1.msra.mxu0 %v801
    %1757 = vmatprep.subr.mxu0 %v800
    %1758 = vmatpush1.msra.mxu0 %v799
    %1759 = vmatprep.subr.mxu0 %v798
    %1760 = vmatpush1.msra.mxu0 %v797
    %1761 = vmatprep.subr.mxu0 %v796
    %1762 = vmatpush1.msra.mxu0 %v795
    %1763 = vmatprep.subr.mxu0 %v794
    %1764 = vmatpush1.msra.mxu0 %v793
    %1765 = vmatprep.subr.mxu0 0.0
    %1766 = vmatpush2.msra.mxu0 0.0
    %1767 = vmatprep.subr.mxu0 0.0
    %1768 = vmatpush2.msra.mxu0 0.0
    %1769 = vmatprep.subr.mxu0 0.0
    %1770 = vmatpush2.msra.mxu0 0.0
    %1771 = vmatprep.subr.mxu0 0.0
    %1772 = vmatpush2.msra.mxu0 0.0
    %1773 = vmatprep.subr.mxu0 0.0
    %1774 = vmatpush2.msra.mxu0 0.0
    %1775 = vmatprep.subr.mxu0 0.0
    %1776 = vmatpush2.msra.mxu0 0.0
    %1777 = vmatprep.subr.mxu0 0.0
    %1778 = vmatpush2.msra.mxu0 0.0
    %1779 = vmatprep.subr.mxu0 0.0
    %1780 = vmatpush2.msra.mxu0 0.0
    %1781 = vmatprep.subr.mxu0 0.0
    %1782 = vmatpush2.msra.mxu0 0.0
    %1783 = vmatprep.subr.mxu0 0.0
    %1784 = vmatpush2.msra.mxu0 0.0
    %1785 = vmatprep.subr.mxu0 0.0
    %1786 = vmatpush2.msra.mxu0 0.0
    %1787 = vmatprep.subr.mxu0 0.0
    %1788 = vmatpush2.msra.mxu0 0.0
    %1789 = vmatprep.subr.mxu0 0.0
    %1790 = vmatpush2.msra.mxu0 0.0
    %1791 = vmatprep.subr.mxu0 0.0
    %1792 = vmatpush2.msra.mxu0 0.0
    %1793 = vmatprep.subr.mxu0 0.0
    %1794 = vmatpush2.msra.mxu0 0.0
    %1795 = vmatprep.subr.mxu0 0.0
    %1796 = vmatpush2.msra.mxu0 0.0
    %1797 = vmatprep.mubr.f32.mxu0 0.0
    %1798 = vmatmul.mubr.f32.gmra.mxu0 %v1731
    %v1799 = vpop.f32.mrf.mxu0
    %v1800 = vadd.f32 0.0, %v1799
    %v1801 = vpop.f32.mrf.mxu0
    %v1802 = vadd.f32 0.0, %v1801
    %1803 = vdwg.mxu0
    %v1804 = vld [vmem:[%s1041] sm:$0xf]
    %v1805 = vadd.f32 %v1800, %v1804
    %v1806 = vld [vmem:[%s1038] sm:$0xf]
    %v1809 = vunpack.c.l.s4 1983009808
    %v1810 = vunpack.c.0.s8 %v1809
    %v1811 = vlaneseq
    %v1812 = vshrl.u32 %v1811, 7
    %v1813 = vsub.s32 %v1810, %v1812
    %v1814 = vrot.slane %v1806, %v1813
    %v1815 = vcombine.high %v1814, %v1814
    %v1817 = vadd.f32 %v1802, %v1815
    %v1818 = vxor.u32 %v1805, 2147483648
    %v1819 = vmul.f32 %v1818, 1.442695
    %v1820 = vpow.pop %v1819
    %v1821 = vadd.f32 %v1820, 1.0
    %v1822 = vrcp.pop %v1821
    %v1823 = vmul.f32 1.0, %v1822
    %v1824 = vtanh.pop %v1805
    %v1825 = vmul.f32 %v1823, %v1683
    %1827 = vrot.lane.b32.xlu0 %v1824, 32
    %v1828 = vpop.permute.xlu0 %1827
    %v1830 = vmul.f32 %v1823, %v1828
    %1832 = vrot.lane.b32.xlu0 %v1830, 32
    %v1833 = vpop.permute.xlu0 %1832
    %v1835 = vadd.f32 %v1825, %v1833
    %v1836 = vtanh.pop %v1835
    %1838 = vrot.lane.b32.xlu0 %v1836, 32
    %v1839 = vpop.permute.xlu0 %1838
    %v1841 = vmul.f32 %v1823, %v1839
    %v1842 = vxor.u32 %v1817, 2147483648
    %v1843 = vmul.f32 %v1842, 1.442695
    %v1844 = vpow.pop %v1843
    %v1845 = vadd.f32 %v1844, 1.0
    %v1846 = vrcp.pop %v1845
    %v1847 = vmul.f32 1.0, %v1846
    %v1848 = vtanh.pop %v1817
    %v1849 = vmul.f32 %v1847, %v1707
    %1851 = vrot.lane.b32.xlu0 %v1848, 32
    %v1852 = vpop.permute.xlu0 %1851
    %v1854 = vmul.f32 %v1847, %v1852
    %1856 = vrot.lane.b32.xlu0 %v1854, 32
    %v1857 = vpop.permute.xlu0 %1856
    %v1859 = vadd.f32 %v1849, %v1857
    %v1860 = vtanh.pop %v1859
    %1862 = vrot.lane.b32.xlu0 %v1860, 32
    %v1863 = vpop.permute.xlu0 %1862
    %v1865 = vmul.f32 %v1847, %v1863
    %1867 = vrot.lane.b32.xlu0 %v1841, 64
    %v1868 = vpop.permute.xlu0 %1867
    %s1870 = scalar_lea.vmem [#allocation3], 12
    %1871 = vst.msk [vmem:[%s1870] sm:$0x3] %vm951, %v1868
    %1873 = vrot.lane.b32.xlu0 %v1865, 64
    %v1874 = vpop.permute.xlu0 %1873
    %s1876 = scalar_lea.vmem [#allocation4], 2
    %1877 = vst.msk [vmem:[%s1876] sm:$0x3] %vm951, %v1874
    %1878 = vrot.lane.b32.xlu0 %v1865, 96
    %v1879 = vpop.permute.xlu0 %1878
    %v1881 = vsel %vm962, %v1868, %v1879
    %v1883 = vsel %vm809, %v1881, 0
    %1885 = vmatprep.subr.mxu0 0.0
    %1886 = vmatpush1.msra.mxu0 0.0
    %1887 = vmatprep.subr.mxu0 0.0
    %1888 = vmatpush1.msra.mxu0 0.0
    %1889 = vmatprep.subr.mxu0 0.0
    %1890 = vmatpush1.msra.mxu0 0.0
    %1891 = vmatprep.subr.mxu0 0.0
    %1892 = vmatpush1.msra.mxu0 0.0
    %1893 = vmatprep.subr.mxu0 0.0
    %1894 = vmatpush1.msra.mxu0 0.0
    %1895 = vmatprep.subr.mxu0 0.0
    %1896 = vmatpush1.msra.mxu0 0.0
    %1897 = vmatprep.subr.mxu0 0.0
    %1898 = vmatpush1.msra.mxu0 0.0
    %1899 = vmatprep.subr.mxu0 0.0
    %1900 = vmatpush1.msra.mxu0 0.0
    %1901 = vmatprep.subr.mxu0 %v808
    %1902 = vmatpush1.msra.mxu0 %v807
    %1903 = vmatprep.subr.mxu0 %v806
    %1904 = vmatpush1.msra.mxu0 %v805
    %1905 = vmatprep.subr.mxu0 %v804
    %1906 = vmatpush1.msra.mxu0 %v803
    %1907 = vmatprep.subr.mxu0 %v802
    %1908 = vmatpush1.msra.mxu0 %v801
    %1909 = vmatprep.subr.mxu0 %v800
    %1910 = vmatpush1.msra.mxu0 %v799
    %1911 = vmatprep.subr.mxu0 %v798
    %1912 = vmatpush1.msra.mxu0 %v797
    %1913 = vmatprep.subr.mxu0 %v796
    %1914 = vmatpush1.msra.mxu0 %v795
    %1915 = vmatprep.subr.mxu0 %v794
    %1916 = vmatpush1.msra.mxu0 %v793
    %1917 = vmatprep.subr.mxu0 0.0
    %1918 = vmatpush2.msra.mxu0 0.0
    %1919 = vmatprep.subr.mxu0 0.0
    %1920 = vmatpush2.msra.mxu0 0.0
    %1921 = vmatprep.subr.mxu0 0.0
    %1922 = vmatpush2.msra.mxu0 0.0
    %1923 = vmatprep.subr.mxu0 0.0
    %1924 = vmatpush2.msra.mxu0 0.0
    %1925 = vmatprep.subr.mxu0 0.0
    %1926 = vmatpush2.msra.mxu0 0.0
    %1927 = vmatprep.subr.mxu0 0.0
    %1928 = vmatpush2.msra.mxu0 0.0
    %1929 = vmatprep.subr.mxu0 0.0
    %1930 = vmatpush2.msra.mxu0 0.0
    %1931 = vmatprep.subr.mxu0 0.0
    %1932 = vmatpush2.msra.mxu0 0.0
    %1933 = vmatprep.subr.mxu0 0.0
    %1934 = vmatpush2.msra.mxu0 0.0
    %1935 = vmatprep.subr.mxu0 0.0
    %1936 = vmatpush2.msra.mxu0 0.0
    %1937 = vmatprep.subr.mxu0 0.0
    %1938 = vmatpush2.msra.mxu0 0.0
    %1939 = vmatprep.subr.mxu0 0.0
    %1940 = vmatpush2.msra.mxu0 0.0
    %1941 = vmatprep.subr.mxu0 0.0
    %1942 = vmatpush2.msra.mxu0 0.0
    %1943 = vmatprep.subr.mxu0 0.0
    %1944 = vmatpush2.msra.mxu0 0.0
    %1945 = vmatprep.subr.mxu0 0.0
    %1946 = vmatpush2.msra.mxu0 0.0
    %1947 = vmatprep.subr.mxu0 0.0
    %1948 = vmatpush2.msra.mxu0 0.0
    %1949 = vmatprep.mubr.f32.mxu0 0.0
    %1950 = vmatmul.mubr.f32.gmra.mxu0 %v1883
    %v1951 = vpop.f32.mrf.mxu0
    %v1952 = vadd.f32 0.0, %v1951
    %v1953 = vpop.f32.mrf.mxu0
    %v1954 = vadd.f32 0.0, %v1953
    %1955 = vdwg.mxu0
    %v1956 = vld [vmem:[%s886] sm:$0xf]
    %v1957 = vadd.f32 %v1952, %v1956
    %v1958 = vld [vmem:[#allocation2] sm:$0xf]
    %v1961 = vunpack.c.l.s4 1983009808
    %v1962 = vunpack.c.0.s8 %v1961
    %v1963 = vlaneseq
    %v1964 = vshrl.u32 %v1963, 7
    %v1965 = vsub.s32 %v1962, %v1964
    %v1966 = vrot.slane %v1958, %v1965
    %v1967 = vcombine.high %v1966, %v1966
    %v1969 = vadd.f32 %v1954, %v1967
    %v1970 = vxor.u32 %v1957, 2147483648
    %v1971 = vmul.f32 %v1970, 1.442695
    %v1972 = vpow.pop %v1971
    %v1973 = vadd.f32 %v1972, 1.0
    %v1974 = vrcp.pop %v1973
    %v1975 = vmul.f32 1.0, %v1974
    %v1976 = vtanh.pop %v1957
    %v1977 = vmul.f32 %v1975, %v1835
    %1979 = vrot.lane.b32.xlu0 %v1976, 32
    %v1980 = vpop.permute.xlu0 %1979
    %v1982 = vmul.f32 %v1975, %v1980
    %1984 = vrot.lane.b32.xlu0 %v1982, 32
    %v1985 = vpop.permute.xlu0 %1984
    %v1987 = vadd.f32 %v1977, %v1985
    %v1988 = vtanh.pop %v1987
    %1990 = vrot.lane.b32.xlu0 %v1988, 32
    %v1991 = vpop.permute.xlu0 %1990
    %v1993 = vmul.f32 %v1975, %v1991
    %v1994 = vxor.u32 %v1969, 2147483648
    %v1995 = vmul.f32 %v1994, 1.442695
    %v1996 = vpow.pop %v1995
    %v1997 = vadd.f32 %v1996, 1.0
    %v1998 = vrcp.pop %v1997
    %v1999 = vmul.f32 1.0, %v1998
    %v2000 = vtanh.pop %v1969
    %v2001 = vmul.f32 %v1999, %v1859
    %2003 = vrot.lane.b32.xlu0 %v2000, 32
    %v2004 = vpop.permute.xlu0 %2003
    %v2006 = vmul.f32 %v1999, %v2004
    %2008 = vrot.lane.b32.xlu0 %v2006, 32
    %v2009 = vpop.permute.xlu0 %2008
    %v2011 = vadd.f32 %v2001, %v2009
    %v2012 = vtanh.pop %v2011
    %2014 = vrot.lane.b32.xlu0 %v2012, 32
    %v2015 = vpop.permute.xlu0 %2014
    %v2017 = vmul.f32 %v1999, %v2015
    %2019 = vrot.lane.b32.xlu0 %v1993, 64
    %v2020 = vpop.permute.xlu0 %2019
    %s2022 = scalar_lea.vmem [#allocation3], 14
    %2023 = vst.msk [vmem:[%s2022] sm:$0x3] %vm951, %v2020
    %2025 = vrot.lane.b32.xlu0 %v2017, 64
    %v2026 = vpop.permute.xlu0 %2025
    %2028 = vst.msk [vmem:[#allocation4] sm:$0x3] %vm951, %v2026
    %v2029 = vld [vmem:[#allocation3] sm:$0x3]
    %v2030 = vld [vmem:[#allocation3 + $0x2] sm:$0x3]
    %v2031 = vld [vmem:[#allocation3 + $0x4] sm:$0x3]
    %v2032 = vld [vmem:[#allocation3 + $0x6] sm:$0x3]
    %v2033 = vld [vmem:[#allocation3 + $0x8] sm:$0x3]
    %v2034 = vld [vmem:[#allocation3 + $0xa] sm:$0x3]
    %v2035 = vld [vmem:[#allocation3 + $0xc] sm:$0x3]
    %v2036 = vld [vmem:[#allocation3 + $0xe] sm:$0x3]
    %v2037 = vld [vmem:[#allocation4] sm:$0x3]
    %v2038 = vld [vmem:[#allocation4 + $0x2] sm:$0x3]
    %v2039 = vld [vmem:[#allocation4 + $0x4] sm:$0x3]
    %v2040 = vld [vmem:[#allocation4 + $0x6] sm:$0x3]
    %v2041 = vld [vmem:[#allocation4 + $0x8] sm:$0x3]
    %v2042 = vld [vmem:[#allocation4 + $0xa] sm:$0x3]
    %v2043 = vld [vmem:[#allocation4 + $0xc] sm:$0x3]
    %v2044 = vld [vmem:[#allocation4 + $0xe] sm:$0x3]
    %2053 = vrot.lane.b32.xlu0 %v2037, 32
    %v2054 = vpop.permute.xlu0 %2053
    %2055 = vrot.lane.b32.xlu0 %v2038, 32
    %v2056 = vpop.permute.xlu0 %2055
    %2057 = vrot.lane.b32.xlu0 %v2039, 32
    %v2058 = vpop.permute.xlu0 %2057
    %2059 = vrot.lane.b32.xlu0 %v2040, 32
    %v2060 = vpop.permute.xlu0 %2059
    %2061 = vrot.lane.b32.xlu0 %v2041, 32
    %v2062 = vpop.permute.xlu0 %2061
    %2063 = vrot.lane.b32.xlu0 %v2042, 32
    %v2064 = vpop.permute.xlu0 %2063
    %2065 = vrot.lane.b32.xlu0 %v2043, 32
    %v2066 = vpop.permute.xlu0 %2065
    %2067 = vrot.lane.b32.xlu0 %v2044, 32
    %v2068 = vpop.permute.xlu0 %2067
    %v2077 = vsel %vm962, %v2029, %v2054
    %v2078 = vsel %vm962, %v2030, %v2056
    %v2079 = vsel %vm962, %v2031, %v2058
    %v2080 = vsel %vm962, %v2032, %v2060
    %v2081 = vsel %vm962, %v2033, %v2062
    %v2082 = vsel %vm962, %v2034, %v2064
    %v2083 = vsel %vm962, %v2035, %v2066
    %v2084 = vsel %vm962, %v2036, %v2068
    %v2085 = vld [vmem:[%s11] sm:$0xff]
    %v2086 = vld [vmem:[%s11 + $0x8] sm:$0xff]
    %v2087 = vld [vmem:[%s11 + $0x10] sm:$0xff]
    %v2088 = vld [vmem:[%s11 + $0x18] sm:$0xff]
    %v2089 = vld [vmem:[%s11 + $0x20] sm:$0xff]
    %v2090 = vld [vmem:[%s11 + $0x28] sm:$0xff]
    %v2091 = vld [vmem:[%s11 + $0x30] sm:$0xff]
    %v2092 = vld [vmem:[%s11 + $0x38] sm:$0xff]
    %v2093 = vld [vmem:[%s11 + $0x40] sm:$0xff]
    %v2094 = vld [vmem:[%s11 + $0x48] sm:$0xff]
    %v2095 = vld [vmem:[%s11 + $0x50] sm:$0xff]
    %v2096 = vld [vmem:[%s11 + $0x58] sm:$0xff]
    %v2097 = vld [vmem:[%s11 + $0x60] sm:$0xff]
    %v2098 = vld [vmem:[%s11 + $0x68] sm:$0xff]
    %v2099 = vld [vmem:[%s11 + $0x70] sm:$0xff]
    %v2100 = vld [vmem:[%s11 + $0x78] sm:$0xff]
    %v2101 = vld [vmem:[#allocation8] sm:$0x3]
    %v2103 = vlaneseq
    %v2104 = vshrl.u32 %v2103, 7
    %v2105 = vsub.s32 0, %v2104
    %v2106 = vrot.slane %v2101, %v2105
    %v2107 = vlaneseq
    %v2108 = vshrl.u32 %v2107, 7
    %v2109 = vsub.s32 1, %v2108
    %v2110 = vrot.slane %v2101, %v2109
    %v2121 = vcombine.low %v2077, %v2078
    %v2122 = vcombine.low %v2079, %v2080
    %v2124 = vunpack.c.l.s4 1983009808
    %v2125 = vunpack.c.0.s8 %v2124
    %v2126 = vlaneseq
    %v2127 = vshrl.u32 %v2126, 7
    %v2128 = vsub.s32 %v2125, %v2127
    %v2129 = vrot.slane %v2121, %v2128
    %v2131 = vunpack.c.l.s4 1983009808
    %v2132 = vunpack.c.0.s8 %v2131
    %v2133 = vlaneseq
    %v2134 = vshrl.u32 %v2133, 7
    %v2135 = vsub.s32 %v2132, %v2134
    %v2136 = vrot.slane %v2122, %v2135
    %v2137 = vcombine.low %v2129, %v2136
    %v2138 = vcombine.low %v2081, %v2082
    %v2139 = vcombine.low %v2083, %v2084
    %v2141 = vunpack.c.l.s4 1983009808
    %v2142 = vunpack.c.0.s8 %v2141
    %v2143 = vlaneseq
    %v2144 = vshrl.u32 %v2143, 7
    %v2145 = vsub.s32 %v2142, %v2144
    %v2146 = vrot.slane %v2138, %v2145
    %v2148 = vunpack.c.l.s4 1983009808
    %v2149 = vunpack.c.0.s8 %v2148
    %v2150 = vlaneseq
    %v2151 = vshrl.u32 %v2150, 7
    %v2152 = vsub.s32 %v2149, %v2151
    %v2153 = vrot.slane %v2139, %v2152
    %v2154 = vcombine.low %v2146, %v2153
    %v2155 = vsel %vm809, %v2137, 0
    %v2157 = vsel %vm809, %v2154, 0
    %2159 = vmatprep.subr.mxu0 0.0
    %2160 = vmatpush1.msra.mxu0 0.0
    %2161 = vmatprep.subr.mxu0 0.0
    %2162 = vmatpush1.msra.mxu0 0.0
    %2163 = vmatprep.subr.mxu0 0.0
    %2164 = vmatpush1.msra.mxu0 0.0
    %2165 = vmatprep.subr.mxu0 0.0
    %2166 = vmatpush1.msra.mxu0 0.0
    %2167 = vmatprep.subr.mxu0 0.0
    %2168 = vmatpush1.msra.mxu0 0.0
    %2169 = vmatprep.subr.mxu0 0.0
    %2170 = vmatpush1.msra.mxu0 0.0
    %2171 = vmatprep.subr.mxu0 0.0
    %2172 = vmatpush1.msra.mxu0 0.0
    %2173 = vmatprep.subr.mxu0 0.0
    %2174 = vmatpush1.msra.mxu0 0.0
    %2175 = vmatprep.subr.mxu0 %v2100
    %2176 = vmatpush1.msra.mxu0 %v2099
    %2177 = vmatprep.subr.mxu0 %v2098
    %2178 = vmatpush1.msra.mxu0 %v2097
    %2179 = vmatprep.subr.mxu0 %v2096
    %2180 = vmatpush1.msra.mxu0 %v2095
    %2181 = vmatprep.subr.mxu0 %v2094
    %2182 = vmatpush1.msra.mxu0 %v2093
    %2183 = vmatprep.subr.mxu0 %v2092
    %2184 = vmatpush1.msra.mxu0 %v2091
    %2185 = vmatprep.subr.mxu0 %v2090
    %2186 = vmatpush1.msra.mxu0 %v2089
    %2187 = vmatprep.subr.mxu0 %v2088
    %2188 = vmatpush1.msra.mxu0 %v2087
    %2189 = vmatprep.subr.mxu0 %v2086
    %2190 = vmatpush1.msra.mxu0 %v2085
    %2191 = vmatprep.subr.mxu0 0.0
    %2192 = vmatpush2.msra.mxu0 0.0
    %2193 = vmatprep.subr.mxu0 0.0
    %2194 = vmatpush2.msra.mxu0 0.0
    %2195 = vmatprep.subr.mxu0 0.0
    %2196 = vmatpush2.msra.mxu0 0.0
    %2197 = vmatprep.subr.mxu0 0.0
    %2198 = vmatpush2.msra.mxu0 0.0
    %2199 = vmatprep.subr.mxu0 0.0
    %2200 = vmatpush2.msra.mxu0 0.0
    %2201 = vmatprep.subr.mxu0 0.0
    %2202 = vmatpush2.msra.mxu0 0.0
    %2203 = vmatprep.subr.mxu0 0.0
    %2204 = vmatpush2.msra.mxu0 0.0
    %2205 = vmatprep.subr.mxu0 0.0
    %2206 = vmatpush2.msra.mxu0 0.0
    %2207 = vmatprep.subr.mxu0 0.0
    %2208 = vmatpush2.msra.mxu0 0.0
    %2209 = vmatprep.subr.mxu0 0.0
    %2210 = vmatpush2.msra.mxu0 0.0
    %2211 = vmatprep.subr.mxu0 0.0
    %2212 = vmatpush2.msra.mxu0 0.0
    %2213 = vmatprep.subr.mxu0 0.0
    %2214 = vmatpush2.msra.mxu0 0.0
    %2215 = vmatprep.subr.mxu0 0.0
    %2216 = vmatpush2.msra.mxu0 0.0
    %2217 = vmatprep.subr.mxu0 0.0
    %2218 = vmatpush2.msra.mxu0 0.0
    %2219 = vmatprep.subr.mxu0 0.0
    %2220 = vmatpush2.msra.mxu0 0.0
    %2221 = vmatprep.subr.mxu0 0.0
    %2222 = vmatpush2.msra.mxu0 0.0
    %2223 = vmatprep.mubr.f32.mxu0 0.0
    %2224 = vmatmul.mubr.f32.gmra.mxu0 %v2155
    %v2225 = vpop.f32.mrf.mxu0
    %v2226 = vadd.f32 %v2106, %v2225
    %v2227 = vpop.f32.mrf.mxu0
    %v2228 = vadd.f32 %v2110, %v2227
    %2229 = vmatprep.mubr.f32.mxu0 0.0
    %2230 = vmatmul.mubr.f32.gmra.mxu0 %v2157
    %v2231 = vpop.f32.mrf.mxu0
    %v2232 = vadd.f32 %v2106, %v2231
    %v2233 = vpop.f32.mrf.mxu0
    %v2234 = vadd.f32 %v2110, %v2233
    %2235 = vdwg.mxu0
    %v2240 = vcombine.low %v2226, %v2228
    %v2241 = vcombine.high %v2226, %v2228
    %v2243 = vunpack.c.l.s4 1983009808
    %v2244 = vunpack.c.0.s8 %v2243
    %v2245 = vlaneseq
    %v2246 = vshrl.u32 %v2245, 7
    %v2247 = vsub.s32 %v2244, %v2246
    %v2248 = vrot.slane %v2240, %v2247
    %v2250 = vunpack.c.l.s4 1983009808
    %v2251 = vunpack.c.0.s8 %v2250
    %v2252 = vlaneseq
    %v2253 = vshrl.u32 %v2252, 7
    %v2254 = vsub.s32 %v2251, %v2253
    %v2255 = vrot.slane %v2241, %v2254
    %v2256 = vcombine.high %v2248, %v2248
    %v2257 = vcombine.high %v2255, %v2255
    %v2258 = vcombine.low %v2232, %v2234
    %v2259 = vcombine.high %v2232, %v2234
    %v2261 = vunpack.c.l.s4 1983009808
    %v2262 = vunpack.c.0.s8 %v2261
    %v2263 = vlaneseq
    %v2264 = vshrl.u32 %v2263, 7
    %v2265 = vsub.s32 %v2262, %v2264
    %v2266 = vrot.slane %v2258, %v2265
    %v2268 = vunpack.c.l.s4 1983009808
    %v2269 = vunpack.c.0.s8 %v2268
    %v2270 = vlaneseq
    %v2271 = vshrl.u32 %v2270, 7
    %v2272 = vsub.s32 %v2269, %v2271
    %v2273 = vrot.slane %v2259, %v2272
    %v2274 = vcombine.high %v2266, %v2266
    %v2275 = vcombine.high %v2273, %v2273
    %2284 = vst [vmem:[#allocation2] sm:$0xf] %v2248
    %2285 = vst [vmem:[#allocation2 + $0x4] sm:$0xf] %v2256
    %2286 = vst [vmem:[#allocation2 + $0x8] sm:$0xf] %v2255
    %2287 = vst [vmem:[#allocation2 + $0xc] sm:$0xf] %v2257
    %2288 = vst [vmem:[#allocation2 + $0x10] sm:$0xf] %v2266
    %2289 = vst [vmem:[#allocation2 + $0x14] sm:$0xf] %v2274
    %2290 = vst [vmem:[#allocation2 + $0x18] sm:$0xf] %v2273
    %2291 = vst [vmem:[#allocation2 + $0x1c] sm:$0xf] %v2275
    %v2292 = vld [vmem:[#allocation6] sm:$0xff]
    %v2293 = vld [vmem:[#allocation6 + $0x8] sm:$0xff]
    %v2294 = vld [vmem:[#allocation6 + $0x10] sm:$0xff]
    %v2295 = vld [vmem:[#allocation6 + $0x18] sm:$0xff]
    %v2296 = vld [vmem:[#allocation6 + $0x20] sm:$0xff]
    %v2297 = vld [vmem:[#allocation6 + $0x28] sm:$0xff]
    %v2298 = vld [vmem:[#allocation6 + $0x30] sm:$0xff]
    %v2299 = vld [vmem:[#allocation6 + $0x38] sm:$0xff]
    %v2300 = vld [vmem:[#allocation6 + $0x40] sm:$0xff]
    %v2301 = vld [vmem:[#allocation6 + $0x48] sm:$0xff]
    %v2302 = vld [vmem:[#allocation6 + $0x50] sm:$0xff]
    %v2303 = vld [vmem:[#allocation6 + $0x58] sm:$0xff]
    %v2304 = vld [vmem:[#allocation6 + $0x60] sm:$0xff]
    %v2305 = vld [vmem:[#allocation6 + $0x68] sm:$0xff]
    %v2306 = vld [vmem:[#allocation6 + $0x70] sm:$0xff]
    %v2307 = vld [vmem:[#allocation6 + $0x78] sm:$0xff]
    %2308 = vmatprep.subr.mxu0 0.0
    %2309 = vmatpush1.msra.mxu0 0.0
    %2310 = vmatprep.subr.mxu0 0.0
    %2311 = vmatpush1.msra.mxu0 0.0
    %2312 = vmatprep.subr.mxu0 0.0
    %2313 = vmatpush1.msra.mxu0 0.0
    %2314 = vmatprep.subr.mxu0 0.0
    %2315 = vmatpush1.msra.mxu0 0.0
    %2316 = vmatprep.subr.mxu0 0.0
    %2317 = vmatpush1.msra.mxu0 0.0
    %2318 = vmatprep.subr.mxu0 0.0
    %2319 = vmatpush1.msra.mxu0 0.0
    %2320 = vmatprep.subr.mxu0 0.0
    %2321 = vmatpush1.msra.mxu0 0.0
    %2322 = vmatprep.subr.mxu0 0.0
    %2323 = vmatpush1.msra.mxu0 0.0
    %2324 = vmatprep.subr.mxu0 %v2307
    %2325 = vmatpush1.msra.mxu0 %v2306
    %2326 = vmatprep.subr.mxu0 %v2305
    %2327 = vmatpush1.msra.mxu0 %v2304
    %2328 = vmatprep.subr.mxu0 %v2303
    %2329 = vmatpush1.msra.mxu0 %v2302
    %2330 = vmatprep.subr.mxu0 %v2301
    %2331 = vmatpush1.msra.mxu0 %v2300
    %2332 = vmatprep.subr.mxu0 %v2299
    %2333 = vmatpush1.msra.mxu0 %v2298
    %2334 = vmatprep.subr.mxu0 %v2297
    %2335 = vmatpush1.msra.mxu0 %v2296
    %2336 = vmatprep.subr.mxu0 %v2295
    %2337 = vmatpush1.msra.mxu0 %v2294
    %2338 = vmatprep.subr.mxu0 %v2293
    %2339 = vmatpush1.msra.mxu0 %v2292
    %2340 = vmatprep.subr.mxu0 0.0
    %2341 = vmatpush2.msra.mxu0 0.0
    %2342 = vmatprep.subr.mxu0 0.0
    %2343 = vmatpush2.msra.mxu0 0.0
    %2344 = vmatprep.subr.mxu0 0.0
    %2345 = vmatpush2.msra.mxu0 0.0
    %2346 = vmatprep.subr.mxu0 0.0
    %2347 = vmatpush2.msra.mxu0 0.0
    %2348 = vmatprep.subr.mxu0 0.0
    %2349 = vmatpush2.msra.mxu0 0.0
    %2350 = vmatprep.subr.mxu0 0.0
    %2351 = vmatpush2.msra.mxu0 0.0
    %2352 = vmatprep.subr.mxu0 0.0
    %2353 = vmatpush2.msra.mxu0 0.0
    %2354 = vmatprep.subr.mxu0 0.0
    %2355 = vmatpush2.msra.mxu0 0.0
    %2356 = vmatprep.subr.mxu0 0.0
    %2357 = vmatpush2.msra.mxu0 0.0
    %2358 = vmatprep.subr.mxu0 0.0
    %2359 = vmatpush2.msra.mxu0 0.0
    %2360 = vmatprep.subr.mxu0 0.0
    %2361 = vmatpush2.msra.mxu0 0.0
    %2362 = vmatprep.subr.mxu0 0.0
    %2363 = vmatpush2.msra.mxu0 0.0
    %2364 = vmatprep.subr.mxu0 0.0
    %2365 = vmatpush2.msra.mxu0 0.0
    %2366 = vmatprep.subr.mxu0 0.0
    %2367 = vmatpush2.msra.mxu0 0.0
    %2368 = vmatprep.subr.mxu0 0.0
    %2369 = vmatpush2.msra.mxu0 0.0
    %2370 = vmatprep.subr.mxu0 0.0
    %2371 = vmatpush2.msra.mxu0 0.0
    %2372 = vmatprep.mubr.f32.mxu0 0.0
    %2373 = vmatmul.mubr.f32.gmra.mxu0 %v811
    %v2374 = vpop.f32.mrf.mxu0
    %v2375 = vadd.f32 0.0, %v2374
    %v2376 = vpop.f32.mrf.mxu0
    %v2377 = vadd.f32 0.0, %v2376
    %2378 = vdwg.mxu0
    %v2379 = vld [vmem:[#allocation2] sm:$0xf]
    %v2380 = vadd.f32 %v2375, %v2379
    %v2381 = vld [vmem:[%s886] sm:$0xf]
    %v2384 = vunpack.c.l.s4 1983009808
    %v2385 = vunpack.c.0.s8 %v2384
    %v2386 = vlaneseq
    %v2387 = vshrl.u32 %v2386, 7
    %v2388 = vsub.s32 %v2385, %v2387
    %v2389 = vrot.slane %v2381, %v2388
    %v2390 = vcombine.high %v2389, %v2389
    %v2392 = vadd.f32 %v2377, %v2390
    %v2393 = vxor.u32 %v2380, 2147483648
    %v2394 = vmul.f32 %v2393, 1.442695
    %v2395 = vpow.pop %v2394
    %v2396 = vadd.f32 %v2395, 1.0
    %v2397 = vrcp.pop %v2396
    %v2398 = vmul.f32 1.0, %v2397
    %v2399 = vtanh.pop %v2380
    %v2400 = vmul.f32 %v2398, 0.0
    %2402 = vrot.lane.b32.xlu0 %v2399, 32
    %v2403 = vpop.permute.xlu0 %2402
    %v2405 = vmul.f32 %v2398, %v2403
    %2407 = vrot.lane.b32.xlu0 %v2405, 32
    %v2408 = vpop.permute.xlu0 %2407
    %v2410 = vadd.f32 %v2400, %v2408
    %v2411 = vtanh.pop %v2410
    %2413 = vrot.lane.b32.xlu0 %v2411, 32
    %v2414 = vpop.permute.xlu0 %2413
    %v2416 = vmul.f32 %v2398, %v2414
    %v2417 = vxor.u32 %v2392, 2147483648
    %v2418 = vmul.f32 %v2417, 1.442695
    %v2419 = vpow.pop %v2418
    %v2420 = vadd.f32 %v2419, 1.0
    %v2421 = vrcp.pop %v2420
    %v2422 = vmul.f32 1.0, %v2421
    %v2423 = vtanh.pop %v2392
    %v2424 = vmul.f32 %v2422, 0.0
    %2426 = vrot.lane.b32.xlu0 %v2423, 32
    %v2427 = vpop.permute.xlu0 %2426
    %v2429 = vmul.f32 %v2422, %v2427
    %2431 = vrot.lane.b32.xlu0 %v2429, 32
    %v2432 = vpop.permute.xlu0 %2431
    %v2434 = vadd.f32 %v2424, %v2432
    %v2435 = vtanh.pop %v2434
    %2437 = vrot.lane.b32.xlu0 %v2435, 32
    %v2438 = vpop.permute.xlu0 %2437
    %v2440 = vmul.f32 %v2422, %v2438
    %2442 = vrot.lane.b32.xlu0 %v2416, 64
    %v2443 = vpop.permute.xlu0 %2442
    %2445 = vst.msk [vmem:[#allocation3] sm:$0x3] %vm951, %v2443
    %2447 = vrot.lane.b32.xlu0 %v2440, 64
    %v2448 = vpop.permute.xlu0 %2447
    %2450 = vst.msk [vmem:[%s957] sm:$0x3] %vm951, %v2448
    %2451 = vrot.lane.b32.xlu0 %v2440, 96
    %v2452 = vpop.permute.xlu0 %2451
    %v2454 = vsel %vm962, %v2443, %v2452
    %v2456 = vsel %vm809, %v2454, 0
    %2458 = vmatprep.subr.mxu0 0.0
    %2459 = vmatpush1.msra.mxu0 0.0
    %2460 = vmatprep.subr.mxu0 0.0
    %2461 = vmatpush1.msra.mxu0 0.0
    %2462 = vmatprep.subr.mxu0 0.0
    %2463 = vmatpush1.msra.mxu0 0.0
    %2464 = vmatprep.subr.mxu0 0.0
    %2465 = vmatpush1.msra.mxu0 0.0
    %2466 = vmatprep.subr.mxu0 0.0
    %2467 = vmatpush1.msra.mxu0 0.0
    %2468 = vmatprep.subr.mxu0 0.0
    %2469 = vmatpush1.msra.mxu0 0.0
    %2470 = vmatprep.subr.mxu0 0.0
    %2471 = vmatpush1.msra.mxu0 0.0
    %2472 = vmatprep.subr.mxu0 0.0
    %2473 = vmatpush1.msra.mxu0 0.0
    %2474 = vmatprep.subr.mxu0 %v2307
    %2475 = vmatpush1.msra.mxu0 %v2306
    %2476 = vmatprep.subr.mxu0 %v2305
    %2477 = vmatpush1.msra.mxu0 %v2304
    %2478 = vmatprep.subr.mxu0 %v2303
    %2479 = vmatpush1.msra.mxu0 %v2302
    %2480 = vmatprep.subr.mxu0 %v2301
    %2481 = vmatpush1.msra.mxu0 %v2300
    %2482 = vmatprep.subr.mxu0 %v2299
    %2483 = vmatpush1.msra.mxu0 %v2298
    %2484 = vmatprep.subr.mxu0 %v2297
    %2485 = vmatpush1.msra.mxu0 %v2296
    %2486 = vmatprep.subr.mxu0 %v2295
    %2487 = vmatpush1.msra.mxu0 %v2294
    %2488 = vmatprep.subr.mxu0 %v2293
    %2489 = vmatpush1.msra.mxu0 %v2292
    %2490 = vmatprep.subr.mxu0 0.0
    %2491 = vmatpush2.msra.mxu0 0.0
    %2492 = vmatprep.subr.mxu0 0.0
    %2493 = vmatpush2.msra.mxu0 0.0
    %2494 = vmatprep.subr.mxu0 0.0
    %2495 = vmatpush2.msra.mxu0 0.0
    %2496 = vmatprep.subr.mxu0 0.0
    %2497 = vmatpush2.msra.mxu0 0.0
    %2498 = vmatprep.subr.mxu0 0.0
    %2499 = vmatpush2.msra.mxu0 0.0
    %2500 = vmatprep.subr.mxu0 0.0
    %2501 = vmatpush2.msra.mxu0 0.0
    %2502 = vmatprep.subr.mxu0 0.0
    %2503 = vmatpush2.msra.mxu0 0.0
    %2504 = vmatprep.subr.mxu0 0.0
    %2505 = vmatpush2.msra.mxu0 0.0
    %2506 = vmatprep.subr.mxu0 0.0
    %2507 = vmatpush2.msra.mxu0 0.0
    %2508 = vmatprep.subr.mxu0 0.0
    %2509 = vmatpush2.msra.mxu0 0.0
    %2510 = vmatprep.subr.mxu0 0.0
    %2511 = vmatpush2.msra.mxu0 0.0
    %2512 = vmatprep.subr.mxu0 0.0
    %2513 = vmatpush2.msra.mxu0 0.0
    %2514 = vmatprep.subr.mxu0 0.0
    %2515 = vmatpush2.msra.mxu0 0.0
    %2516 = vmatprep.subr.mxu0 0.0
    %2517 = vmatpush2.msra.mxu0 0.0
    %2518 = vmatprep.subr.mxu0 0.0
    %2519 = vmatpush2.msra.mxu0 0.0
    %2520 = vmatprep.subr.mxu0 0.0
    %2521 = vmatpush2.msra.mxu0 0.0
    %2522 = vmatprep.mubr.f32.mxu0 0.0
    %2523 = vmatmul.mubr.f32.gmra.mxu0 %v2456
    %v2524 = vpop.f32.mrf.mxu0
    %v2525 = vadd.f32 0.0, %v2524
    %v2526 = vpop.f32.mrf.mxu0
    %v2527 = vadd.f32 0.0, %v2526
    %2528 = vdwg.mxu0
    %v2529 = vld [vmem:[%s1038] sm:$0xf]
    %v2530 = vadd.f32 %v2525, %v2529
    %v2531 = vld [vmem:[%s1041] sm:$0xf]
    %v2534 = vunpack.c.l.s4 1983009808
    %v2535 = vunpack.c.0.s8 %v2534
    %v2536 = vlaneseq
    %v2537 = vshrl.u32 %v2536, 7
    %v2538 = vsub.s32 %v2535, %v2537
    %v2539 = vrot.slane %v2531, %v2538
    %v2540 = vcombine.high %v2539, %v2539
    %v2542 = vadd.f32 %v2527, %v2540
    %v2543 = vxor.u32 %v2530, 2147483648
    %v2544 = vmul.f32 %v2543, 1.442695
    %v2545 = vpow.pop %v2544
    %v2546 = vadd.f32 %v2545, 1.0
    %v2547 = vrcp.pop %v2546
    %v2548 = vmul.f32 1.0, %v2547
    %v2549 = vtanh.pop %v2530
    %v2550 = vmul.f32 %v2548, %v2410
    %2552 = vrot.lane.b32.xlu0 %v2549, 32
    %v2553 = vpop.permute.xlu0 %2552
    %v2555 = vmul.f32 %v2548, %v2553
    %2557 = vrot.lane.b32.xlu0 %v2555, 32
    %v2558 = vpop.permute.xlu0 %2557
    %v2560 = vadd.f32 %v2550, %v2558
    %v2561 = vtanh.pop %v2560
    %2563 = vrot.lane.b32.xlu0 %v2561, 32
    %v2564 = vpop.permute.xlu0 %2563
    %v2566 = vmul.f32 %v2548, %v2564
    %v2567 = vxor.u32 %v2542, 2147483648
    %v2568 = vmul.f32 %v2567, 1.442695
    %v2569 = vpow.pop %v2568
    %v2570 = vadd.f32 %v2569, 1.0
    %v2571 = vrcp.pop %v2570
    %v2572 = vmul.f32 1.0, %v2571
    %v2573 = vtanh.pop %v2542
    %v2574 = vmul.f32 %v2572, %v2434
    %2576 = vrot.lane.b32.xlu0 %v2573, 32
    %v2577 = vpop.permute.xlu0 %2576
    %v2579 = vmul.f32 %v2572, %v2577
    %2581 = vrot.lane.b32.xlu0 %v2579, 32
    %v2582 = vpop.permute.xlu0 %2581
    %v2584 = vadd.f32 %v2574, %v2582
    %v2585 = vtanh.pop %v2584
    %2587 = vrot.lane.b32.xlu0 %v2585, 32
    %v2588 = vpop.permute.xlu0 %2587
    %v2590 = vmul.f32 %v2572, %v2588
    %2592 = vrot.lane.b32.xlu0 %v2566, 64
    %v2593 = vpop.permute.xlu0 %2592
    %2595 = vst.msk [vmem:[%s1106] sm:$0x3] %vm951, %v2593
    %2597 = vrot.lane.b32.xlu0 %v2590, 64
    %v2598 = vpop.permute.xlu0 %2597
    %2600 = vst.msk [vmem:[%s1112] sm:$0x3] %vm951, %v2598
    %2601 = vrot.lane.b32.xlu0 %v2590, 96
    %v2602 = vpop.permute.xlu0 %2601
    %v2604 = vsel %vm962, %v2593, %v2602
    %v2606 = vsel %vm809, %v2604, 0
    %2608 = vmatprep.subr.mxu0 0.0
    %2609 = vmatpush1.msra.mxu0 0.0
    %2610 = vmatprep.subr.mxu0 0.0
    %2611 = vmatpush1.msra.mxu0 0.0
    %2612 = vmatprep.subr.mxu0 0.0
    %2613 = vmatpush1.msra.mxu0 0.0
    %2614 = vmatprep.subr.mxu0 0.0
    %2615 = vmatpush1.msra.mxu0 0.0
    %2616 = vmatprep.subr.mxu0 0.0
    %2617 = vmatpush1.msra.mxu0 0.0
    %2618 = vmatprep.subr.mxu0 0.0
    %2619 = vmatpush1.msra.mxu0 0.0
    %2620 = vmatprep.subr.mxu0 0.0
    %2621 = vmatpush1.msra.mxu0 0.0
    %2622 = vmatprep.subr.mxu0 0.0
    %2623 = vmatpush1.msra.mxu0 0.0
    %2624 = vmatprep.subr.mxu0 %v2307
    %2625 = vmatpush1.msra.mxu0 %v2306
    %2626 = vmatprep.subr.mxu0 %v2305
    %2627 = vmatpush1.msra.mxu0 %v2304
    %2628 = vmatprep.subr.mxu0 %v2303
    %2629 = vmatpush1.msra.mxu0 %v2302
    %2630 = vmatprep.subr.mxu0 %v2301
    %2631 = vmatpush1.msra.mxu0 %v2300
    %2632 = vmatprep.subr.mxu0 %v2299
    %2633 = vmatpush1.msra.mxu0 %v2298
    %2634 = vmatprep.subr.mxu0 %v2297
    %2635 = vmatpush1.msra.mxu0 %v2296
    %2636 = vmatprep.subr.mxu0 %v2295
    %2637 = vmatpush1.msra.mxu0 %v2294
    %2638 = vmatprep.subr.mxu0 %v2293
    %2639 = vmatpush1.msra.mxu0 %v2292
    %2640 = vmatprep.subr.mxu0 0.0
    %2641 = vmatpush2.msra.mxu0 0.0
    %2642 = vmatprep.subr.mxu0 0.0
    %2643 = vmatpush2.msra.mxu0 0.0
    %2644 = vmatprep.subr.mxu0 0.0
    %2645 = vmatpush2.msra.mxu0 0.0
    %2646 = vmatprep.subr.mxu0 0.0
    %2647 = vmatpush2.msra.mxu0 0.0
    %2648 = vmatprep.subr.mxu0 0.0
    %2649 = vmatpush2.msra.mxu0 0.0
    %2650 = vmatprep.subr.mxu0 0.0
    %2651 = vmatpush2.msra.mxu0 0.0
    %2652 = vmatprep.subr.mxu0 0.0
    %2653 = vmatpush2.msra.mxu0 0.0
    %2654 = vmatprep.subr.mxu0 0.0
    %2655 = vmatpush2.msra.mxu0 0.0
    %2656 = vmatprep.subr.mxu0 0.0
    %2657 = vmatpush2.msra.mxu0 0.0
    %2658 = vmatprep.subr.mxu0 0.0
    %2659 = vmatpush2.msra.mxu0 0.0
    %2660 = vmatprep.subr.mxu0 0.0
    %2661 = vmatpush2.msra.mxu0 0.0
    %2662 = vmatprep.subr.mxu0 0.0
    %2663 = vmatpush2.msra.mxu0 0.0
    %2664 = vmatprep.subr.mxu0 0.0
    %2665 = vmatpush2.msra.mxu0 0.0
    %2666 = vmatprep.subr.mxu0 0.0
    %2667 = vmatpush2.msra.mxu0 0.0
    %2668 = vmatprep.subr.mxu0 0.0
    %2669 = vmatpush2.msra.mxu0 0.0
    %2670 = vmatprep.subr.mxu0 0.0
    %2671 = vmatpush2.msra.mxu0 0.0
    %2672 = vmatprep.mubr.f32.mxu0 0.0
    %2673 = vmatmul.mubr.f32.gmra.mxu0 %v2606
    %v2674 = vpop.f32.mrf.mxu0
    %v2675 = vadd.f32 0.0, %v2674
    %v2676 = vpop.f32.mrf.mxu0
    %v2677 = vadd.f32 0.0, %v2676
    %2678 = vdwg.mxu0
    %v2679 = vld [vmem:[%s1192] sm:$0xf]
    %v2680 = vadd.f32 %v2675, %v2679
    %v2681 = vld [vmem:[%s1195] sm:$0xf]
    %v2684 = vunpack.c.l.s4 1983009808
    %v2685 = vunpack.c.0.s8 %v2684
    %v2686 = vlaneseq
    %v2687 = vshrl.u32 %v2686, 7
    %v2688 = vsub.s32 %v2685, %v2687
    %v2689 = vrot.slane %v2681, %v2688
    %v2690 = vcombine.high %v2689, %v2689
    %v2692 = vadd.f32 %v2677, %v2690
    %v2693 = vxor.u32 %v2680, 2147483648
    %v2694 = vmul.f32 %v2693, 1.442695
    %v2695 = vpow.pop %v2694
    %v2696 = vadd.f32 %v2695, 1.0
    %v2697 = vrcp.pop %v2696
    %v2698 = vmul.f32 1.0, %v2697
    %v2699 = vtanh.pop %v2680
    %v2700 = vmul.f32 %v2698, %v2560
    %2702 = vrot.lane.b32.xlu0 %v2699, 32
    %v2703 = vpop.permute.xlu0 %2702
    %v2705 = vmul.f32 %v2698, %v2703
    %2707 = vrot.lane.b32.xlu0 %v2705, 32
    %v2708 = vpop.permute.xlu0 %2707
    %v2710 = vadd.f32 %v2700, %v2708
    %v2711 = vtanh.pop %v2710
    %2713 = vrot.lane.b32.xlu0 %v2711, 32
    %v2714 = vpop.permute.xlu0 %2713
    %v2716 = vmul.f32 %v2698, %v2714
    %v2717 = vxor.u32 %v2692, 2147483648
    %v2718 = vmul.f32 %v2717, 1.442695
    %v2719 = vpow.pop %v2718
    %v2720 = vadd.f32 %v2719, 1.0
    %v2721 = vrcp.pop %v2720
    %v2722 = vmul.f32 1.0, %v2721
    %v2723 = vtanh.pop %v2692
    %v2724 = vmul.f32 %v2722, %v2584
    %2726 = vrot.lane.b32.xlu0 %v2723, 32
    %v2727 = vpop.permute.xlu0 %2726
    %v2729 = vmul.f32 %v2722, %v2727
    %2731 = vrot.lane.b32.xlu0 %v2729, 32
    %v2732 = vpop.permute.xlu0 %2731
    %v2734 = vadd.f32 %v2724, %v2732
    %v2735 = vtanh.pop %v2734
    %2737 = vrot.lane.b32.xlu0 %v2735, 32
    %v2738 = vpop.permute.xlu0 %2737
    %v2740 = vmul.f32 %v2722, %v2738
    %2742 = vrot.lane.b32.xlu0 %v2716, 64
    %v2743 = vpop.permute.xlu0 %2742
    %2745 = vst.msk [vmem:[%s1260] sm:$0x3] %vm951, %v2743
    %2747 = vrot.lane.b32.xlu0 %v2740, 64
    %v2748 = vpop.permute.xlu0 %2747
    %2750 = vst.msk [vmem:[%s1266] sm:$0x3] %vm951, %v2748
    %2751 = vrot.lane.b32.xlu0 %v2740, 96
    %v2752 = vpop.permute.xlu0 %2751
    %v2754 = vsel %vm962, %v2743, %v2752
    %v2756 = vsel %vm809, %v2754, 0
    %2758 = vmatprep.subr.mxu0 0.0
    %2759 = vmatpush1.msra.mxu0 0.0
    %2760 = vmatprep.subr.mxu0 0.0
    %2761 = vmatpush1.msra.mxu0 0.0
    %2762 = vmatprep.subr.mxu0 0.0
    %2763 = vmatpush1.msra.mxu0 0.0
    %2764 = vmatprep.subr.mxu0 0.0
    %2765 = vmatpush1.msra.mxu0 0.0
    %2766 = vmatprep.subr.mxu0 0.0
    %2767 = vmatpush1.msra.mxu0 0.0
    %2768 = vmatprep.subr.mxu0 0.0
    %2769 = vmatpush1.msra.mxu0 0.0
    %2770 = vmatprep.subr.mxu0 0.0
    %2771 = vmatpush1.msra.mxu0 0.0
    %2772 = vmatprep.subr.mxu0 0.0
    %2773 = vmatpush1.msra.mxu0 0.0
    %2774 = vmatprep.subr.mxu0 %v2307
    %2775 = vmatpush1.msra.mxu0 %v2306
    %2776 = vmatprep.subr.mxu0 %v2305
    %2777 = vmatpush1.msra.mxu0 %v2304
    %2778 = vmatprep.subr.mxu0 %v2303
    %2779 = vmatpush1.msra.mxu0 %v2302
    %2780 = vmatprep.subr.mxu0 %v2301
    %2781 = vmatpush1.msra.mxu0 %v2300
    %2782 = vmatprep.subr.mxu0 %v2299
    %2783 = vmatpush1.msra.mxu0 %v2298
    %2784 = vmatprep.subr.mxu0 %v2297
    %2785 = vmatpush1.msra.mxu0 %v2296
    %2786 = vmatprep.subr.mxu0 %v2295
    %2787 = vmatpush1.msra.mxu0 %v2294
    %2788 = vmatprep.subr.mxu0 %v2293
    %2789 = vmatpush1.msra.mxu0 %v2292
    %2790 = vmatprep.subr.mxu0 0.0
    %2791 = vmatpush2.msra.mxu0 0.0
    %2792 = vmatprep.subr.mxu0 0.0
    %2793 = vmatpush2.msra.mxu0 0.0
    %2794 = vmatprep.subr.mxu0 0.0
    %2795 = vmatpush2.msra.mxu0 0.0
    %2796 = vmatprep.subr.mxu0 0.0
    %2797 = vmatpush2.msra.mxu0 0.0
    %2798 = vmatprep.subr.mxu0 0.0
    %2799 = vmatpush2.msra.mxu0 0.0
    %2800 = vmatprep.subr.mxu0 0.0
    %2801 = vmatpush2.msra.mxu0 0.0
    %2802 = vmatprep.subr.mxu0 0.0
    %2803 = vmatpush2.msra.mxu0 0.0
    %2804 = vmatprep.subr.mxu0 0.0
    %2805 = vmatpush2.msra.mxu0 0.0
    %2806 = vmatprep.subr.mxu0 0.0
    %2807 = vmatpush2.msra.mxu0 0.0
    %2808 = vmatprep.subr.mxu0 0.0
    %2809 = vmatpush2.msra.mxu0 0.0
    %2810 = vmatprep.subr.mxu0 0.0
    %2811 = vmatpush2.msra.mxu0 0.0
    %2812 = vmatprep.subr.mxu0 0.0
    %2813 = vmatpush2.msra.mxu0 0.0
    %2814 = vmatprep.subr.mxu0 0.0
    %2815 = vmatpush2.msra.mxu0 0.0
    %2816 = vmatprep.subr.mxu0 0.0
    %2817 = vmatpush2.msra.mxu0 0.0
    %2818 = vmatprep.subr.mxu0 0.0
    %2819 = vmatpush2.msra.mxu0 0.0
    %2820 = vmatprep.subr.mxu0 0.0
    %2821 = vmatpush2.msra.mxu0 0.0
    %2822 = vmatprep.mubr.f32.mxu0 0.0
    %2823 = vmatmul.mubr.f32.gmra.mxu0 %v2756
    %v2824 = vpop.f32.mrf.mxu0
    %v2825 = vadd.f32 0.0, %v2824
    %v2826 = vpop.f32.mrf.mxu0
    %v2827 = vadd.f32 0.0, %v2826
    %2828 = vdwg.mxu0
    %v2829 = vld [vmem:[%s1346] sm:$0xf]
    %v2830 = vadd.f32 %v2825, %v2829
    %v2831 = vld [vmem:[%s1349] sm:$0xf]
    %v2834 = vunpack.c.l.s4 1983009808
    %v2835 = vunpack.c.0.s8 %v2834
    %v2836 = vlaneseq
    %v2837 = vshrl.u32 %v2836, 7
    %v2838 = vsub.s32 %v2835, %v2837
    %v2839 = vrot.slane %v2831, %v2838
    %v2840 = vcombine.high %v2839, %v2839
    %v2842 = vadd.f32 %v2827, %v2840
    %v2843 = vxor.u32 %v2830, 2147483648
    %v2844 = vmul.f32 %v2843, 1.442695
    %v2845 = vpow.pop %v2844
    %v2846 = vadd.f32 %v2845, 1.0
    %v2847 = vrcp.pop %v2846
    %v2848 = vmul.f32 1.0, %v2847
    %v2849 = vtanh.pop %v2830
    %v2850 = vmul.f32 %v2848, %v2710
    %2852 = vrot.lane.b32.xlu0 %v2849, 32
    %v2853 = vpop.permute.xlu0 %2852
    %v2855 = vmul.f32 %v2848, %v2853
    %2857 = vrot.lane.b32.xlu0 %v2855, 32
    %v2858 = vpop.permute.xlu0 %2857
    %v2860 = vadd.f32 %v2850, %v2858
    %v2861 = vtanh.pop %v2860
    %2863 = vrot.lane.b32.xlu0 %v2861, 32
    %v2864 = vpop.permute.xlu0 %2863
    %v2866 = vmul.f32 %v2848, %v2864
    %v2867 = vxor.u32 %v2842, 2147483648
    %v2868 = vmul.f32 %v2867, 1.442695
    %v2869 = vpow.pop %v2868
    %v2870 = vadd.f32 %v2869, 1.0
    %v2871 = vrcp.pop %v2870
    %v2872 = vmul.f32 1.0, %v2871
    %v2873 = vtanh.pop %v2842
    %v2874 = vmul.f32 %v2872, %v2734
    %2876 = vrot.lane.b32.xlu0 %v2873, 32
    %v2877 = vpop.permute.xlu0 %2876
    %v2879 = vmul.f32 %v2872, %v2877
    %2881 = vrot.lane.b32.xlu0 %v2879, 32
    %v2882 = vpop.permute.xlu0 %2881
    %v2884 = vadd.f32 %v2874, %v2882
    %v2885 = vtanh.pop %v2884
    %2887 = vrot.lane.b32.xlu0 %v2885, 32
    %v2888 = vpop.permute.xlu0 %2887
    %v2890 = vmul.f32 %v2872, %v2888
    %2892 = vrot.lane.b32.xlu0 %v2866, 64
    %v2893 = vpop.permute.xlu0 %2892
    %2895 = vst.msk [vmem:[%s1414] sm:$0x3] %vm951, %v2893
    %2897 = vrot.lane.b32.xlu0 %v2890, 64
    %v2898 = vpop.permute.xlu0 %2897
    %2900 = vst.msk [vmem:[%s1420] sm:$0x3] %vm951, %v2898
    %2901 = vrot.lane.b32.xlu0 %v2890, 96
    %v2902 = vpop.permute.xlu0 %2901
    %v2904 = vsel %vm962, %v2893, %v2902
    %v2906 = vsel %vm809, %v2904, 0
    %2908 = vmatprep.subr.mxu0 0.0
    %2909 = vmatpush1.msra.mxu0 0.0
    %2910 = vmatprep.subr.mxu0 0.0
    %2911 = vmatpush1.msra.mxu0 0.0
    %2912 = vmatprep.subr.mxu0 0.0
    %2913 = vmatpush1.msra.mxu0 0.0
    %2914 = vmatprep.subr.mxu0 0.0
    %2915 = vmatpush1.msra.mxu0 0.0
    %2916 = vmatprep.subr.mxu0 0.0
    %2917 = vmatpush1.msra.mxu0 0.0
    %2918 = vmatprep.subr.mxu0 0.0
    %2919 = vmatpush1.msra.mxu0 0.0
    %2920 = vmatprep.subr.mxu0 0.0
    %2921 = vmatpush1.msra.mxu0 0.0
    %2922 = vmatprep.subr.mxu0 0.0
    %2923 = vmatpush1.msra.mxu0 0.0
    %2924 = vmatprep.subr.mxu0 %v2307
    %2925 = vmatpush1.msra.mxu0 %v2306
    %2926 = vmatprep.subr.mxu0 %v2305
    %2927 = vmatpush1.msra.mxu0 %v2304
    %2928 = vmatprep.subr.mxu0 %v2303
    %2929 = vmatpush1.msra.mxu0 %v2302
    %2930 = vmatprep.subr.mxu0 %v2301
    %2931 = vmatpush1.msra.mxu0 %v2300
    %2932 = vmatprep.subr.mxu0 %v2299
    %2933 = vmatpush1.msra.mxu0 %v2298
    %2934 = vmatprep.subr.mxu0 %v2297
    %2935 = vmatpush1.msra.mxu0 %v2296
    %2936 = vmatprep.subr.mxu0 %v2295
    %2937 = vmatpush1.msra.mxu0 %v2294
    %2938 = vmatprep.subr.mxu0 %v2293
    %2939 = vmatpush1.msra.mxu0 %v2292
    %2940 = vmatprep.subr.mxu0 0.0
    %2941 = vmatpush2.msra.mxu0 0.0
    %2942 = vmatprep.subr.mxu0 0.0
    %2943 = vmatpush2.msra.mxu0 0.0
    %2944 = vmatprep.subr.mxu0 0.0
    %2945 = vmatpush2.msra.mxu0 0.0
    %2946 = vmatprep.subr.mxu0 0.0
    %2947 = vmatpush2.msra.mxu0 0.0
    %2948 = vmatprep.subr.mxu0 0.0
    %2949 = vmatpush2.msra.mxu0 0.0
    %2950 = vmatprep.subr.mxu0 0.0
    %2951 = vmatpush2.msra.mxu0 0.0
    %2952 = vmatprep.subr.mxu0 0.0
    %2953 = vmatpush2.msra.mxu0 0.0
    %2954 = vmatprep.subr.mxu0 0.0
    %2955 = vmatpush2.msra.mxu0 0.0
    %2956 = vmatprep.subr.mxu0 0.0
    %2957 = vmatpush2.msra.mxu0 0.0
    %2958 = vmatprep.subr.mxu0 0.0
    %2959 = vmatpush2.msra.mxu0 0.0
    %2960 = vmatprep.subr.mxu0 0.0
    %2961 = vmatpush2.msra.mxu0 0.0
    %2962 = vmatprep.subr.mxu0 0.0
    %2963 = vmatpush2.msra.mxu0 0.0
    %2964 = vmatprep.subr.mxu0 0.0
    %2965 = vmatpush2.msra.mxu0 0.0
    %2966 = vmatprep.subr.mxu0 0.0
    %2967 = vmatpush2.msra.mxu0 0.0
    %2968 = vmatprep.subr.mxu0 0.0
    %2969 = vmatpush2.msra.mxu0 0.0
    %2970 = vmatprep.subr.mxu0 0.0
    %2971 = vmatpush2.msra.mxu0 0.0
    %2972 = vmatprep.mubr.f32.mxu0 0.0
    %2973 = vmatmul.mubr.f32.gmra.mxu0 %v2906
    %v2974 = vpop.f32.mrf.mxu0
    %v2975 = vadd.f32 0.0, %v2974
    %v2976 = vpop.f32.mrf.mxu0
    %v2977 = vadd.f32 0.0, %v2976
    %2978 = vdwg.mxu0
    %v2979 = vld [vmem:[%s1349] sm:$0xf]
    %v2980 = vadd.f32 %v2975, %v2979
    %v2981 = vld [vmem:[%s1346] sm:$0xf]
    %v2984 = vunpack.c.l.s4 1983009808
    %v2985 = vunpack.c.0.s8 %v2984
    %v2986 = vlaneseq
    %v2987 = vshrl.u32 %v2986, 7
    %v2988 = vsub.s32 %v2985, %v2987
    %v2989 = vrot.slane %v2981, %v2988
    %v2990 = vcombine.high %v2989, %v2989
    %v2992 = vadd.f32 %v2977, %v2990
    %v2993 = vxor.u32 %v2980, 2147483648
    %v2994 = vmul.f32 %v2993, 1.442695
    %v2995 = vpow.pop %v2994
    %v2996 = vadd.f32 %v2995, 1.0
    %v2997 = vrcp.pop %v2996
    %v2998 = vmul.f32 1.0, %v2997
    %v2999 = vtanh.pop %v2980
    %v3000 = vmul.f32 %v2998, %v2860
    %3002 = vrot.lane.b32.xlu0 %v2999, 32
    %v3003 = vpop.permute.xlu0 %3002
    %v3005 = vmul.f32 %v2998, %v3003
    %3007 = vrot.lane.b32.xlu0 %v3005, 32
    %v3008 = vpop.permute.xlu0 %3007
    %v3010 = vadd.f32 %v3000, %v3008
    %v3011 = vtanh.pop %v3010
    %3013 = vrot.lane.b32.xlu0 %v3011, 32
    %v3014 = vpop.permute.xlu0 %3013
    %v3016 = vmul.f32 %v2998, %v3014
    %v3017 = vxor.u32 %v2992, 2147483648
    %v3018 = vmul.f32 %v3017, 1.442695
    %v3019 = vpow.pop %v3018
    %v3020 = vadd.f32 %v3019, 1.0
    %v3021 = vrcp.pop %v3020
    %v3022 = vmul.f32 1.0, %v3021
    %v3023 = vtanh.pop %v2992
    %v3024 = vmul.f32 %v3022, %v2884
    %3026 = vrot.lane.b32.xlu0 %v3023, 32
    %v3027 = vpop.permute.xlu0 %3026
    %v3029 = vmul.f32 %v3022, %v3027
    %3031 = vrot.lane.b32.xlu0 %v3029, 32
    %v3032 = vpop.permute.xlu0 %3031
    %v3034 = vadd.f32 %v3024, %v3032
    %v3035 = vtanh.pop %v3034
    %3037 = vrot.lane.b32.xlu0 %v3035, 32
    %v3038 = vpop.permute.xlu0 %3037
    %v3040 = vmul.f32 %v3022, %v3038
    %3042 = vrot.lane.b32.xlu0 %v3016, 64
    %v3043 = vpop.permute.xlu0 %3042
    %3045 = vst.msk [vmem:[%s1566] sm:$0x3] %vm951, %v3043
    %3047 = vrot.lane.b32.xlu0 %v3040, 64
    %v3048 = vpop.permute.xlu0 %3047
    %3050 = vst.msk [vmem:[%s1572] sm:$0x3] %vm951, %v3048
    %3051 = vrot.lane.b32.xlu0 %v3040, 96
    %v3052 = vpop.permute.xlu0 %3051
    %v3054 = vsel %vm962, %v3043, %v3052
    %v3056 = vsel %vm809, %v3054, 0
    %3058 = vmatprep.subr.mxu0 0.0
    %3059 = vmatpush1.msra.mxu0 0.0
    %3060 = vmatprep.subr.mxu0 0.0
    %3061 = vmatpush1.msra.mxu0 0.0
    %3062 = vmatprep.subr.mxu0 0.0
    %3063 = vmatpush1.msra.mxu0 0.0
    %3064 = vmatprep.subr.mxu0 0.0
    %3065 = vmatpush1.msra.mxu0 0.0
    %3066 = vmatprep.subr.mxu0 0.0
    %3067 = vmatpush1.msra.mxu0 0.0
    %3068 = vmatprep.subr.mxu0 0.0
    %3069 = vmatpush1.msra.mxu0 0.0
    %3070 = vmatprep.subr.mxu0 0.0
    %3071 = vmatpush1.msra.mxu0 0.0
    %3072 = vmatprep.subr.mxu0 0.0
    %3073 = vmatpush1.msra.mxu0 0.0
    %3074 = vmatprep.subr.mxu0 %v2307
    %3075 = vmatpush1.msra.mxu0 %v2306
    %3076 = vmatprep.subr.mxu0 %v2305
    %3077 = vmatpush1.msra.mxu0 %v2304
    %3078 = vmatprep.subr.mxu0 %v2303
    %3079 = vmatpush1.msra.mxu0 %v2302
    %3080 = vmatprep.subr.mxu0 %v2301
    %3081 = vmatpush1.msra.mxu0 %v2300
    %3082 = vmatprep.subr.mxu0 %v2299
    %3083 = vmatpush1.msra.mxu0 %v2298
    %3084 = vmatprep.subr.mxu0 %v2297
    %3085 = vmatpush1.msra.mxu0 %v2296
    %3086 = vmatprep.subr.mxu0 %v2295
    %3087 = vmatpush1.msra.mxu0 %v2294
    %3088 = vmatprep.subr.mxu0 %v2293
    %3089 = vmatpush1.msra.mxu0 %v2292
    %3090 = vmatprep.subr.mxu0 0.0
    %3091 = vmatpush2.msra.mxu0 0.0
    %3092 = vmatprep.subr.mxu0 0.0
    %3093 = vmatpush2.msra.mxu0 0.0
    %3094 = vmatprep.subr.mxu0 0.0
    %3095 = vmatpush2.msra.mxu0 0.0
    %3096 = vmatprep.subr.mxu0 0.0
    %3097 = vmatpush2.msra.mxu0 0.0
    %3098 = vmatprep.subr.mxu0 0.0
    %3099 = vmatpush2.msra.mxu0 0.0
    %3100 = vmatprep.subr.mxu0 0.0
    %3101 = vmatpush2.msra.mxu0 0.0
    %3102 = vmatprep.subr.mxu0 0.0
    %3103 = vmatpush2.msra.mxu0 0.0
    %3104 = vmatprep.subr.mxu0 0.0
    %3105 = vmatpush2.msra.mxu0 0.0
    %3106 = vmatprep.subr.mxu0 0.0
    %3107 = vmatpush2.msra.mxu0 0.0
    %3108 = vmatprep.subr.mxu0 0.0
    %3109 = vmatpush2.msra.mxu0 0.0
    %3110 = vmatprep.subr.mxu0 0.0
    %3111 = vmatpush2.msra.mxu0 0.0
    %3112 = vmatprep.subr.mxu0 0.0
    %3113 = vmatpush2.msra.mxu0 0.0
    %3114 = vmatprep.subr.mxu0 0.0
    %3115 = vmatpush2.msra.mxu0 0.0
    %3116 = vmatprep.subr.mxu0 0.0
    %3117 = vmatpush2.msra.mxu0 0.0
    %3118 = vmatprep.subr.mxu0 0.0
    %3119 = vmatpush2.msra.mxu0 0.0
    %3120 = vmatprep.subr.mxu0 0.0
    %3121 = vmatpush2.msra.mxu0 0.0
    %3122 = vmatprep.mubr.f32.mxu0 0.0
    %3123 = vmatmul.mubr.f32.gmra.mxu0 %v3056
    %v3124 = vpop.f32.mrf.mxu0
    %v3125 = vadd.f32 0.0, %v3124
    %v3126 = vpop.f32.mrf.mxu0
    %v3127 = vadd.f32 0.0, %v3126
    %3128 = vdwg.mxu0
    %v3129 = vld [vmem:[%s1195] sm:$0xf]
    %v3130 = vadd.f32 %v3125, %v3129
    %v3131 = vld [vmem:[%s1192] sm:$0xf]
    %v3134 = vunpack.c.l.s4 1983009808
    %v3135 = vunpack.c.0.s8 %v3134
    %v3136 = vlaneseq
    %v3137 = vshrl.u32 %v3136, 7
    %v3138 = vsub.s32 %v3135, %v3137
    %v3139 = vrot.slane %v3131, %v3138
    %v3140 = vcombine.high %v3139, %v3139
    %v3142 = vadd.f32 %v3127, %v3140
    %v3143 = vxor.u32 %v3130, 2147483648
    %v3144 = vmul.f32 %v3143, 1.442695
    %v3145 = vpow.pop %v3144
    %v3146 = vadd.f32 %v3145, 1.0
    %v3147 = vrcp.pop %v3146
    %v3148 = vmul.f32 1.0, %v3147
    %v3149 = vtanh.pop %v3130
    %v3150 = vmul.f32 %v3148, %v3010
    %3152 = vrot.lane.b32.xlu0 %v3149, 32
    %v3153 = vpop.permute.xlu0 %3152
    %v3155 = vmul.f32 %v3148, %v3153
    %3157 = vrot.lane.b32.xlu0 %v3155, 32
    %v3158 = vpop.permute.xlu0 %3157
    %v3160 = vadd.f32 %v3150, %v3158
    %v3161 = vtanh.pop %v3160
    %3163 = vrot.lane.b32.xlu0 %v3161, 32
    %v3164 = vpop.permute.xlu0 %3163
    %v3166 = vmul.f32 %v3148, %v3164
    %v3167 = vxor.u32 %v3142, 2147483648
    %v3168 = vmul.f32 %v3167, 1.442695
    %v3169 = vpow.pop %v3168
    %v3170 = vadd.f32 %v3169, 1.0
    %v3171 = vrcp.pop %v3170
    %v3172 = vmul.f32 1.0, %v3171
    %v3173 = vtanh.pop %v3142
    %v3174 = vmul.f32 %v3172, %v3034
    %3176 = vrot.lane.b32.xlu0 %v3173, 32
    %v3177 = vpop.permute.xlu0 %3176
    %v3179 = vmul.f32 %v3172, %v3177
    %3181 = vrot.lane.b32.xlu0 %v3179, 32
    %v3182 = vpop.permute.xlu0 %3181
    %v3184 = vadd.f32 %v3174, %v3182
    %v3185 = vtanh.pop %v3184
    %3187 = vrot.lane.b32.xlu0 %v3185, 32
    %v3188 = vpop.permute.xlu0 %3187
    %v3190 = vmul.f32 %v3172, %v3188
    %3192 = vrot.lane.b32.xlu0 %v3166, 64
    %v3193 = vpop.permute.xlu0 %3192
    %3195 = vst.msk [vmem:[%s1718] sm:$0x3] %vm951, %v3193
    %3197 = vrot.lane.b32.xlu0 %v3190, 64
    %v3198 = vpop.permute.xlu0 %3197
    %3200 = vst.msk [vmem:[%s1724] sm:$0x3] %vm951, %v3198
    %3201 = vrot.lane.b32.xlu0 %v3190, 96
    %v3202 = vpop.permute.xlu0 %3201
    %v3204 = vsel %vm962, %v3193, %v3202
    %v3206 = vsel %vm809, %v3204, 0
    %3208 = vmatprep.subr.mxu0 0.0
    %3209 = vmatpush1.msra.mxu0 0.0
    %3210 = vmatprep.subr.mxu0 0.0
    %3211 = vmatpush1.msra.mxu0 0.0
    %3212 = vmatprep.subr.mxu0 0.0
    %3213 = vmatpush1.msra.mxu0 0.0
    %3214 = vmatprep.subr.mxu0 0.0
    %3215 = vmatpush1.msra.mxu0 0.0
    %3216 = vmatprep.subr.mxu0 0.0
    %3217 = vmatpush1.msra.mxu0 0.0
    %3218 = vmatprep.subr.mxu0 0.0
    %3219 = vmatpush1.msra.mxu0 0.0
    %3220 = vmatprep.subr.mxu0 0.0
    %3221 = vmatpush1.msra.mxu0 0.0
    %3222 = vmatprep.subr.mxu0 0.0
    %3223 = vmatpush1.msra.mxu0 0.0
    %3224 = vmatprep.subr.mxu0 %v2307
    %3225 = vmatpush1.msra.mxu0 %v2306
    %3226 = vmatprep.subr.mxu0 %v2305
    %3227 = vmatpush1.msra.mxu0 %v2304
    %3228 = vmatprep.subr.mxu0 %v2303
    %3229 = vmatpush1.msra.mxu0 %v2302
    %3230 = vmatprep.subr.mxu0 %v2301
    %3231 = vmatpush1.msra.mxu0 %v2300
    %3232 = vmatprep.subr.mxu0 %v2299
    %3233 = vmatpush1.msra.mxu0 %v2298
    %3234 = vmatprep.subr.mxu0 %v2297
    %3235 = vmatpush1.msra.mxu0 %v2296
    %3236 = vmatprep.subr.mxu0 %v2295
    %3237 = vmatpush1.msra.mxu0 %v2294
    %3238 = vmatprep.subr.mxu0 %v2293
    %3239 = vmatpush1.msra.mxu0 %v2292
    %3240 = vmatprep.subr.mxu0 0.0
    %3241 = vmatpush2.msra.mxu0 0.0
    %3242 = vmatprep.subr.mxu0 0.0
    %3243 = vmatpush2.msra.mxu0 0.0
    %3244 = vmatprep.subr.mxu0 0.0
    %3245 = vmatpush2.msra.mxu0 0.0
    %3246 = vmatprep.subr.mxu0 0.0
    %3247 = vmatpush2.msra.mxu0 0.0
    %3248 = vmatprep.subr.mxu0 0.0
    %3249 = vmatpush2.msra.mxu0 0.0
    %3250 = vmatprep.subr.mxu0 0.0
    %3251 = vmatpush2.msra.mxu0 0.0
    %3252 = vmatprep.subr.mxu0 0.0
    %3253 = vmatpush2.msra.mxu0 0.0
    %3254 = vmatprep.subr.mxu0 0.0
    %3255 = vmatpush2.msra.mxu0 0.0
    %3256 = vmatprep.subr.mxu0 0.0
    %3257 = vmatpush2.msra.mxu0 0.0
    %3258 = vmatprep.subr.mxu0 0.0
    %3259 = vmatpush2.msra.mxu0 0.0
    %3260 = vmatprep.subr.mxu0 0.0
    %3261 = vmatpush2.msra.mxu0 0.0
    %3262 = vmatprep.subr.mxu0 0.0
    %3263 = vmatpush2.msra.mxu0 0.0
    %3264 = vmatprep.subr.mxu0 0.0
    %3265 = vmatpush2.msra.mxu0 0.0
    %3266 = vmatprep.subr.mxu0 0.0
    %3267 = vmatpush2.msra.mxu0 0.0
    %3268 = vmatprep.subr.mxu0 0.0
    %3269 = vmatpush2.msra.mxu0 0.0
    %3270 = vmatprep.subr.mxu0 0.0
    %3271 = vmatpush2.msra.mxu0 0.0
    %3272 = vmatprep.mubr.f32.mxu0 0.0
    %3273 = vmatmul.mubr.f32.gmra.mxu0 %v3206
    %v3274 = vpop.f32.mrf.mxu0
    %v3275 = vadd.f32 0.0, %v3274
    %v3276 = vpop.f32.mrf.mxu0
    %v3277 = vadd.f32 0.0, %v3276
    %3278 = vdwg.mxu0
    %v3279 = vld [vmem:[%s1041] sm:$0xf]
    %v3280 = vadd.f32 %v3275, %v3279
    %v3281 = vld [vmem:[%s1038] sm:$0xf]
    %v3284 = vunpack.c.l.s4 1983009808
    %v3285 = vunpack.c.0.s8 %v3284
    %v3286 = vlaneseq
    %v3287 = vshrl.u32 %v3286, 7
    %v3288 = vsub.s32 %v3285, %v3287
    %v3289 = vrot.slane %v3281, %v3288
    %v3290 = vcombine.high %v3289, %v3289
    %v3292 = vadd.f32 %v3277, %v3290
    %v3293 = vxor.u32 %v3280, 2147483648
    %v3294 = vmul.f32 %v3293, 1.442695
    %v3295 = vpow.pop %v3294
    %v3296 = vadd.f32 %v3295, 1.0
    %v3297 = vrcp.pop %v3296
    %v3298 = vmul.f32 1.0, %v3297
    %v3299 = vtanh.pop %v3280
    %v3300 = vmul.f32 %v3298, %v3160
    %3302 = vrot.lane.b32.xlu0 %v3299, 32
    %v3303 = vpop.permute.xlu0 %3302
    %v3305 = vmul.f32 %v3298, %v3303
    %3307 = vrot.lane.b32.xlu0 %v3305, 32
    %v3308 = vpop.permute.xlu0 %3307
    %v3310 = vadd.f32 %v3300, %v3308
    %v3311 = vtanh.pop %v3310
    %3313 = vrot.lane.b32.xlu0 %v3311, 32
    %v3314 = vpop.permute.xlu0 %3313
    %v3316 = vmul.f32 %v3298, %v3314
    %v3317 = vxor.u32 %v3292, 2147483648
    %v3318 = vmul.f32 %v3317, 1.442695
    %v3319 = vpow.pop %v3318
    %v3320 = vadd.f32 %v3319, 1.0
    %v3321 = vrcp.pop %v3320
    %v3322 = vmul.f32 1.0, %v3321
    %v3323 = vtanh.pop %v3292
    %v3324 = vmul.f32 %v3322, %v3184
    %3326 = vrot.lane.b32.xlu0 %v3323, 32
    %v3327 = vpop.permute.xlu0 %3326
    %v3329 = vmul.f32 %v3322, %v3327
    %3331 = vrot.lane.b32.xlu0 %v3329, 32
    %v3332 = vpop.permute.xlu0 %3331
    %v3334 = vadd.f32 %v3324, %v3332
    %v3335 = vtanh.pop %v3334
    %3337 = vrot.lane.b32.xlu0 %v3335, 32
    %v3338 = vpop.permute.xlu0 %3337
    %v3340 = vmul.f32 %v3322, %v3338
    %3342 = vrot.lane.b32.xlu0 %v3316, 64
    %v3343 = vpop.permute.xlu0 %3342
    %3345 = vst.msk [vmem:[%s1870] sm:$0x3] %vm951, %v3343
    %3347 = vrot.lane.b32.xlu0 %v3340, 64
    %v3348 = vpop.permute.xlu0 %3347
    %3350 = vst.msk [vmem:[%s1876] sm:$0x3] %vm951, %v3348
    %3351 = vrot.lane.b32.xlu0 %v3340, 96
    %v3352 = vpop.permute.xlu0 %3351
    %v3354 = vsel %vm962, %v3343, %v3352
    %v3356 = vsel %vm809, %v3354, 0
    %3358 = vmatprep.subr.mxu0 0.0
    %3359 = vmatpush1.msra.mxu0 0.0
    %3360 = vmatprep.subr.mxu0 0.0
    %3361 = vmatpush1.msra.mxu0 0.0
    %3362 = vmatprep.subr.mxu0 0.0
    %3363 = vmatpush1.msra.mxu0 0.0
    %3364 = vmatprep.subr.mxu0 0.0
    %3365 = vmatpush1.msra.mxu0 0.0
    %3366 = vmatprep.subr.mxu0 0.0
    %3367 = vmatpush1.msra.mxu0 0.0
    %3368 = vmatprep.subr.mxu0 0.0
    %3369 = vmatpush1.msra.mxu0 0.0
    %3370 = vmatprep.subr.mxu0 0.0
    %3371 = vmatpush1.msra.mxu0 0.0
    %3372 = vmatprep.subr.mxu0 0.0
    %3373 = vmatpush1.msra.mxu0 0.0
    %3374 = vmatprep.subr.mxu0 %v2307
    %3375 = vmatpush1.msra.mxu0 %v2306
    %3376 = vmatprep.subr.mxu0 %v2305
    %3377 = vmatpush1.msra.mxu0 %v2304
    %3378 = vmatprep.subr.mxu0 %v2303
    %3379 = vmatpush1.msra.mxu0 %v2302
    %3380 = vmatprep.subr.mxu0 %v2301
    %3381 = vmatpush1.msra.mxu0 %v2300
    %3382 = vmatprep.subr.mxu0 %v2299
    %3383 = vmatpush1.msra.mxu0 %v2298
    %3384 = vmatprep.subr.mxu0 %v2297
    %3385 = vmatpush1.msra.mxu0 %v2296
    %3386 = vmatprep.subr.mxu0 %v2295
    %3387 = vmatpush1.msra.mxu0 %v2294
    %3388 = vmatprep.subr.mxu0 %v2293
    %3389 = vmatpush1.msra.mxu0 %v2292
    %3390 = vmatprep.subr.mxu0 0.0
    %3391 = vmatpush2.msra.mxu0 0.0
    %3392 = vmatprep.subr.mxu0 0.0
    %3393 = vmatpush2.msra.mxu0 0.0
    %3394 = vmatprep.subr.mxu0 0.0
    %3395 = vmatpush2.msra.mxu0 0.0
    %3396 = vmatprep.subr.mxu0 0.0
    %3397 = vmatpush2.msra.mxu0 0.0
    %3398 = vmatprep.subr.mxu0 0.0
    %3399 = vmatpush2.msra.mxu0 0.0
    %3400 = vmatprep.subr.mxu0 0.0
    %3401 = vmatpush2.msra.mxu0 0.0
    %3402 = vmatprep.subr.mxu0 0.0
    %3403 = vmatpush2.msra.mxu0 0.0
    %3404 = vmatprep.subr.mxu0 0.0
    %3405 = vmatpush2.msra.mxu0 0.0
    %3406 = vmatprep.subr.mxu0 0.0
    %3407 = vmatpush2.msra.mxu0 0.0
    %3408 = vmatprep.subr.mxu0 0.0
    %3409 = vmatpush2.msra.mxu0 0.0
    %3410 = vmatprep.subr.mxu0 0.0
    %3411 = vmatpush2.msra.mxu0 0.0
    %3412 = vmatprep.subr.mxu0 0.0
    %3413 = vmatpush2.msra.mxu0 0.0
    %3414 = vmatprep.subr.mxu0 0.0
    %3415 = vmatpush2.msra.mxu0 0.0
    %3416 = vmatprep.subr.mxu0 0.0
    %3417 = vmatpush2.msra.mxu0 0.0
    %3418 = vmatprep.subr.mxu0 0.0
    %3419 = vmatpush2.msra.mxu0 0.0
    %3420 = vmatprep.subr.mxu0 0.0
    %3421 = vmatpush2.msra.mxu0 0.0
    %3422 = vmatprep.mubr.f32.mxu0 0.0
    %3423 = vmatmul.mubr.f32.gmra.mxu0 %v3356
    %v3424 = vpop.f32.mrf.mxu0
    %v3425 = vadd.f32 0.0, %v3424
    %v3426 = vpop.f32.mrf.mxu0
    %v3427 = vadd.f32 0.0, %v3426
    %3428 = vdwg.mxu0
    %v3429 = vld [vmem:[%s886] sm:$0xf]
    %v3430 = vadd.f32 %v3425, %v3429
    %v3431 = vld [vmem:[#allocation2] sm:$0xf]
    %v3434 = vunpack.c.l.s4 1983009808
    %v3435 = vunpack.c.0.s8 %v3434
    %v3436 = vlaneseq
    %v3437 = vshrl.u32 %v3436, 7
    %v3438 = vsub.s32 %v3435, %v3437
    %v3439 = vrot.slane %v3431, %v3438
    %v3440 = vcombine.high %v3439, %v3439
    %v3442 = vadd.f32 %v3427, %v3440
    %v3443 = vxor.u32 %v3430, 2147483648
    %v3444 = vmul.f32 %v3443, 1.442695
    %v3445 = vpow.pop %v3444
    %v3446 = vadd.f32 %v3445, 1.0
    %v3447 = vrcp.pop %v3446
    %v3448 = vmul.f32 1.0, %v3447
    %v3449 = vtanh.pop %v3430
    %v3450 = vmul.f32 %v3448, %v3310
    %3452 = vrot.lane.b32.xlu0 %v3449, 32
    %v3453 = vpop.permute.xlu0 %3452
    %v3455 = vmul.f32 %v3448, %v3453
    %3457 = vrot.lane.b32.xlu0 %v3455, 32
    %v3458 = vpop.permute.xlu0 %3457
    %v3460 = vadd.f32 %v3450, %v3458
    %v3461 = vtanh.pop %v3460
    %3463 = vrot.lane.b32.xlu0 %v3461, 32
    %v3464 = vpop.permute.xlu0 %3463
    %v3466 = vmul.f32 %v3448, %v3464
    %v3467 = vxor.u32 %v3442, 2147483648
    %v3468 = vmul.f32 %v3467, 1.442695
    %v3469 = vpow.pop %v3468
    %v3470 = vadd.f32 %v3469, 1.0
    %v3471 = vrcp.pop %v3470
    %v3472 = vmul.f32 1.0, %v3471
    %v3473 = vtanh.pop %v3442
    %v3474 = vmul.f32 %v3472, %v3334
    %3476 = vrot.lane.b32.xlu0 %v3473, 32
    %v3477 = vpop.permute.xlu0 %3476
    %v3479 = vmul.f32 %v3472, %v3477
    %3481 = vrot.lane.b32.xlu0 %v3479, 32
    %v3482 = vpop.permute.xlu0 %3481
    %v3484 = vadd.f32 %v3474, %v3482
    %v3485 = vtanh.pop %v3484
    %3487 = vrot.lane.b32.xlu0 %v3485, 32
    %v3488 = vpop.permute.xlu0 %3487
    %v3490 = vmul.f32 %v3472, %v3488
    %3492 = vrot.lane.b32.xlu0 %v3466, 64
    %v3493 = vpop.permute.xlu0 %3492
    %3495 = vst.msk [vmem:[%s2022] sm:$0x3] %vm951, %v3493
    %3497 = vrot.lane.b32.xlu0 %v3490, 64
    %v3498 = vpop.permute.xlu0 %3497
    %3500 = vst.msk [vmem:[#allocation4] sm:$0x3] %vm951, %v3498
    %v3501 = vld [vmem:[#allocation3] sm:$0x3]
    %v3502 = vld [vmem:[#allocation3 + $0x2] sm:$0x3]
    %v3503 = vld [vmem:[#allocation3 + $0x4] sm:$0x3]
    %v3504 = vld [vmem:[#allocation3 + $0x6] sm:$0x3]
    %v3505 = vld [vmem:[#allocation3 + $0x8] sm:$0x3]
    %v3506 = vld [vmem:[#allocation3 + $0xa] sm:$0x3]
    %v3507 = vld [vmem:[#allocation3 + $0xc] sm:$0x3]
    %v3508 = vld [vmem:[#allocation3 + $0xe] sm:$0x3]
    %v3509 = vld [vmem:[#allocation4] sm:$0x3]
    %v3510 = vld [vmem:[#allocation4 + $0x2] sm:$0x3]
    %v3511 = vld [vmem:[#allocation4 + $0x4] sm:$0x3]
    %v3512 = vld [vmem:[#allocation4 + $0x6] sm:$0x3]
    %v3513 = vld [vmem:[#allocation4 + $0x8] sm:$0x3]
    %v3514 = vld [vmem:[#allocation4 + $0xa] sm:$0x3]
    %v3515 = vld [vmem:[#allocation4 + $0xc] sm:$0x3]
    %v3516 = vld [vmem:[#allocation4 + $0xe] sm:$0x3]
    %3525 = vrot.lane.b32.xlu0 %v3509, 32
    %v3526 = vpop.permute.xlu0 %3525
    %3527 = vrot.lane.b32.xlu0 %v3510, 32
    %v3528 = vpop.permute.xlu0 %3527
    %3529 = vrot.lane.b32.xlu0 %v3511, 32
    %v3530 = vpop.permute.xlu0 %3529
    %3531 = vrot.lane.b32.xlu0 %v3512, 32
    %v3532 = vpop.permute.xlu0 %3531
    %3533 = vrot.lane.b32.xlu0 %v3513, 32
    %v3534 = vpop.permute.xlu0 %3533
    %3535 = vrot.lane.b32.xlu0 %v3514, 32
    %v3536 = vpop.permute.xlu0 %3535
    %3537 = vrot.lane.b32.xlu0 %v3515, 32
    %v3538 = vpop.permute.xlu0 %3537
    %3539 = vrot.lane.b32.xlu0 %v3516, 32
    %v3540 = vpop.permute.xlu0 %3539
    %v3549 = vsel %vm962, %v3501, %v3526
    %v3550 = vsel %vm962, %v3502, %v3528
    %v3551 = vsel %vm962, %v3503, %v3530
    %v3552 = vsel %vm962, %v3504, %v3532
    %v3553 = vsel %vm962, %v3505, %v3534
    %v3554 = vsel %vm962, %v3506, %v3536
    %v3555 = vsel %vm962, %v3507, %v3538
    %v3556 = vsel %vm962, %v3508, %v3540
    %v3565 = vrot.slane %v3550, 7
    %vm3566 = vcmask 1041409
    %v3567 = vsel %vm3566, %v3565, %v3549
    %v3568 = vrot.slane %v3551, 6
    %vm3569 = vcmask 1042434
    %v3570 = vsel %vm3569, %v3568, %v3567
    %v3571 = vrot.slane %v3552, 5
    %vm3572 = vcmask 1043459
    %v3573 = vsel %vm3572, %v3571, %v3570
    %v3574 = vrot.slane %v3553, 4
    %vm3575 = vcmask 1044484
    %v3576 = vsel %vm3575, %v3574, %v3573
    %v3577 = vrot.slane %v3554, 3
    %vm3578 = vcmask 1045509
    %v3579 = vsel %vm3578, %v3577, %v3576
    %v3580 = vrot.slane %v3555, 2
    %vm3581 = vcmask 1046534
    %v3582 = vsel %vm3581, %v3580, %v3579
    %v3583 = vrot.slane %v3556, 1
    %vm3584 = vcmask 1047559
    %v3585 = vsel %vm3584, %v3583, %v3582
    %v3586 = vrot.slane %v3549, 1
    %v3587 = vsel %vm3566, %v3550, %v3586
    %v3588 = vrot.slane %v3551, 7
    %v3589 = vsel %vm3569, %v3588, %v3587
    %v3590 = vrot.slane %v3552, 6
    %v3591 = vsel %vm3572, %v3590, %v3589
    %v3592 = vrot.slane %v3553, 5
    %v3593 = vsel %vm3575, %v3592, %v3591
    %v3594 = vrot.slane %v3554, 4
    %v3595 = vsel %vm3578, %v3594, %v3593
    %v3596 = vrot.slane %v3555, 3
    %v3597 = vsel %vm3581, %v3596, %v3595
    %v3598 = vrot.slane %v3556, 2
    %v3599 = vsel %vm3584, %v3598, %v3597
    %v3600 = vld [vmem:[#allocation13] sm:$0xff]
    %v3601 = vld [vmem:[#allocation13 + $0x8] sm:$0xff]
    %v3602 = vld [vmem:[#allocation13 + $0x10] sm:$0xff]
    %v3603 = vld [vmem:[#allocation13 + $0x18] sm:$0xff]
    %v3604 = vld [vmem:[#allocation13 + $0x20] sm:$0xff]
    %v3605 = vld [vmem:[#allocation13 + $0x28] sm:$0xff]
    %v3606 = vld [vmem:[#allocation13 + $0x30] sm:$0xff]
    %v3607 = vld [vmem:[#allocation13 + $0x38] sm:$0xff]
    %v3608 = vld [vmem:[#allocation13 + $0x40] sm:$0xff]
    %v3609 = vld [vmem:[#allocation13 + $0x48] sm:$0xff]
    %v3610 = vld [vmem:[#allocation13 + $0x50] sm:$0xff]
    %v3611 = vld [vmem:[#allocation13 + $0x58] sm:$0xff]
    %v3612 = vld [vmem:[#allocation13 + $0x60] sm:$0xff]
    %v3613 = vld [vmem:[#allocation13 + $0x68] sm:$0xff]
    %v3614 = vld [vmem:[#allocation13 + $0x70] sm:$0xff]
    %v3615 = vld [vmem:[#allocation13 + $0x78] sm:$0xff]
    %v3616 = vld [vmem:[#allocation14] sm:$0x3]
    %v3618 = vlaneseq
    %v3619 = vshrl.u32 %v3618, 7
    %v3620 = vsub.s32 0, %v3619
    %v3621 = vrot.slane %v3616, %v3620
    %v3622 = vlaneseq
    %v3623 = vshrl.u32 %v3622, 7
    %v3624 = vsub.s32 1, %v3623
    %v3625 = vrot.slane %v3616, %v3624
    %v3628 = vsel %vm809, %v3585, 0
    %v3630 = vsel %vm809, %v3599, 0
    %3632 = vmatprep.subr.mxu0 0.0
    %3633 = vmatpush1.msra.mxu0 0.0
    %3634 = vmatprep.subr.mxu0 0.0
    %3635 = vmatpush1.msra.mxu0 0.0
    %3636 = vmatprep.subr.mxu0 0.0
    %3637 = vmatpush1.msra.mxu0 0.0
    %3638 = vmatprep.subr.mxu0 0.0
    %3639 = vmatpush1.msra.mxu0 0.0
    %3640 = vmatprep.subr.mxu0 0.0
    %3641 = vmatpush1.msra.mxu0 0.0
    %3642 = vmatprep.subr.mxu0 0.0
    %3643 = vmatpush1.msra.mxu0 0.0
    %3644 = vmatprep.subr.mxu0 0.0
    %3645 = vmatpush1.msra.mxu0 0.0
    %3646 = vmatprep.subr.mxu0 0.0
    %3647 = vmatpush1.msra.mxu0 0.0
    %3648 = vmatprep.subr.mxu0 %v3615
    %3649 = vmatpush1.msra.mxu0 %v3614
    %3650 = vmatprep.subr.mxu0 %v3613
    %3651 = vmatpush1.msra.mxu0 %v3612
    %3652 = vmatprep.subr.mxu0 %v3611
    %3653 = vmatpush1.msra.mxu0 %v3610
    %3654 = vmatprep.subr.mxu0 %v3609
    %3655 = vmatpush1.msra.mxu0 %v3608
    %3656 = vmatprep.subr.mxu0 %v3607
    %3657 = vmatpush1.msra.mxu0 %v3606
    %3658 = vmatprep.subr.mxu0 %v3605
    %3659 = vmatpush1.msra.mxu0 %v3604
    %3660 = vmatprep.subr.mxu0 %v3603
    %3661 = vmatpush1.msra.mxu0 %v3602
    %3662 = vmatprep.subr.mxu0 %v3601
    %3663 = vmatpush1.msra.mxu0 %v3600
    %3664 = vmatprep.subr.mxu0 0.0
    %3665 = vmatpush2.msra.mxu0 0.0
    %3666 = vmatprep.subr.mxu0 0.0
    %3667 = vmatpush2.msra.mxu0 0.0
    %3668 = vmatprep.subr.mxu0 0.0
    %3669 = vmatpush2.msra.mxu0 0.0
    %3670 = vmatprep.subr.mxu0 0.0
    %3671 = vmatpush2.msra.mxu0 0.0
    %3672 = vmatprep.subr.mxu0 0.0
    %3673 = vmatpush2.msra.mxu0 0.0
    %3674 = vmatprep.subr.mxu0 0.0
    %3675 = vmatpush2.msra.mxu0 0.0
    %3676 = vmatprep.subr.mxu0 0.0
    %3677 = vmatpush2.msra.mxu0 0.0
    %3678 = vmatprep.subr.mxu0 0.0
    %3679 = vmatpush2.msra.mxu0 0.0
    %3680 = vmatprep.subr.mxu0 0.0
    %3681 = vmatpush2.msra.mxu0 0.0
    %3682 = vmatprep.subr.mxu0 0.0
    %3683 = vmatpush2.msra.mxu0 0.0
    %3684 = vmatprep.subr.mxu0 0.0
    %3685 = vmatpush2.msra.mxu0 0.0
    %3686 = vmatprep.subr.mxu0 0.0
    %3687 = vmatpush2.msra.mxu0 0.0
    %3688 = vmatprep.subr.mxu0 0.0
    %3689 = vmatpush2.msra.mxu0 0.0
    %3690 = vmatprep.subr.mxu0 0.0
    %3691 = vmatpush2.msra.mxu0 0.0
    %3692 = vmatprep.subr.mxu0 0.0
    %3693 = vmatpush2.msra.mxu0 0.0
    %3694 = vmatprep.subr.mxu0 0.0
    %3695 = vmatpush2.msra.mxu0 0.0
    %3696 = vmatprep.mubr.f32.mxu0 0.0
    %3697 = vmatmul.mubr.f32.gmra.mxu0 %v3628
    %v3698 = vpop.f32.mrf.mxu0
    %v3699 = vadd.f32 %v3621, %v3698
    %v3700 = vpop.f32.mrf.mxu0
    %v3701 = vadd.f32 %v3625, %v3700
    %3702 = vmatprep.mubr.f32.mxu0 0.0
    %3703 = vmatmul.mubr.f32.gmra.mxu0 %v3630
    %v3704 = vpop.f32.mrf.mxu0
    %v3705 = vadd.f32 %v3621, %v3704
    %v3706 = vpop.f32.mrf.mxu0
    %v3707 = vadd.f32 %v3625, %v3706
    %3708 = vdwg.mxu0
    %v3709 = vld [vmem:[%s25] sm:$0xff]
    %v3710 = vld [vmem:[%s25 + $0x8] sm:$0xff]
    %v3711 = vld [vmem:[%s25 + $0x10] sm:$0xff]
    %v3712 = vld [vmem:[%s25 + $0x18] sm:$0xff]
    %v3713 = vld [vmem:[%s25 + $0x20] sm:$0xff]
    %v3714 = vld [vmem:[%s25 + $0x28] sm:$0xff]
    %v3715 = vld [vmem:[%s25 + $0x30] sm:$0xff]
    %v3716 = vld [vmem:[%s25 + $0x38] sm:$0xff]
    %3718 = vrot.lane.b32.xlu0 %v3699, 64
    %v3719 = vpop.permute.xlu0 %3718
    %vm3720 = vcmask 130048
    %v3721 = vsel %vm3720, %v3699, 0
    %v3723 = vsel %vm3720, %v3719, 0
    %3725 = vmatprep.subr.mxu0 0.0
    %3726 = vmatpush1.xpose.msra.mxu0 0.0
    %3727 = vmatprep.subr.mxu0 0.0
    %3728 = vmatpush1.xpose.msra.mxu0 0.0
    %3729 = vmatprep.subr.mxu0 0.0
    %3730 = vmatpush1.xpose.msra.mxu0 0.0
    %3731 = vmatprep.subr.mxu0 0.0
    %3732 = vmatpush1.xpose.msra.mxu0 0.0
    %3733 = vmatprep.subr.mxu0 0.0
    %3734 = vmatpush1.xpose.msra.mxu0 0.0
    %3735 = vmatprep.subr.mxu0 0.0
    %3736 = vmatpush1.xpose.msra.mxu0 0.0
    %3737 = vmatprep.subr.mxu0 0.0
    %3738 = vmatpush1.xpose.msra.mxu0 0.0
    %3739 = vmatprep.subr.mxu0 0.0
    %3740 = vmatpush1.xpose.msra.mxu0 0.0
    %3741 = vmatprep.subr.mxu0 0.0
    %3742 = vmatpush1.xpose.msra.mxu0 0.0
    %3743 = vmatprep.subr.mxu0 0.0
    %3744 = vmatpush1.xpose.msra.mxu0 0.0
    %3745 = vmatprep.subr.mxu0 0.0
    %3746 = vmatpush1.xpose.msra.mxu0 0.0
    %3747 = vmatprep.subr.mxu0 0.0
    %3748 = vmatpush1.xpose.msra.mxu0 0.0
    %3749 = vmatprep.subr.mxu0 0.0
    %3750 = vmatpush1.xpose.msra.mxu0 0.0
    %3751 = vmatprep.subr.mxu0 0.0
    %3752 = vmatpush1.xpose.msra.mxu0 0.0
    %3753 = vmatprep.subr.mxu0 0.0
    %3754 = vmatpush1.xpose.msra.mxu0 0.0
    %3755 = vmatprep.subr.mxu0 0.0
    %3756 = vmatpush1.xpose.msra.mxu0 %v3723
    %3757 = vmatprep.subr.mxu0 0.0
    %3758 = vmatpush2.xpose.msra.mxu0 0.0
    %3759 = vmatprep.subr.mxu0 0.0
    %3760 = vmatpush2.xpose.msra.mxu0 0.0
    %3761 = vmatprep.subr.mxu0 0.0
    %3762 = vmatpush2.xpose.msra.mxu0 0.0
    %3763 = vmatprep.subr.mxu0 0.0
    %3764 = vmatpush2.xpose.msra.mxu0 0.0
    %3765 = vmatprep.subr.mxu0 0.0
    %3766 = vmatpush2.xpose.msra.mxu0 0.0
    %3767 = vmatprep.subr.mxu0 0.0
    %3768 = vmatpush2.xpose.msra.mxu0 0.0
    %3769 = vmatprep.subr.mxu0 0.0
    %3770 = vmatpush2.xpose.msra.mxu0 0.0
    %3771 = vmatprep.subr.mxu0 0.0
    %3772 = vmatpush2.xpose.msra.mxu0 0.0
    %3773 = vmatprep.subr.mxu0 0.0
    %3774 = vmatpush2.xpose.msra.mxu0 0.0
    %3775 = vmatprep.subr.mxu0 0.0
    %3776 = vmatpush2.xpose.msra.mxu0 0.0
    %3777 = vmatprep.subr.mxu0 0.0
    %3778 = vmatpush2.xpose.msra.mxu0 0.0
    %3779 = vmatprep.subr.mxu0 0.0
    %3780 = vmatpush2.xpose.msra.mxu0 0.0
    %3781 = vmatprep.subr.mxu0 0.0
    %3782 = vmatpush2.xpose.msra.mxu0 0.0
    %3783 = vmatprep.subr.mxu0 0.0
    %3784 = vmatpush2.xpose.msra.mxu0 0.0
    %3785 = vmatprep.subr.mxu0 0.0
    %3786 = vmatpush2.xpose.msra.mxu0 0.0
    %3787 = vmatprep.subr.mxu0 0.0
    %3788 = vmatpush2.xpose.msra.mxu0 0.0
    %3789 = vmatprep.mubr.f32.mxu0 0.0
    %3790 = vmatmul.mubr.f32.gmra.mxu0 %v3721
    %v3791 = vpop.f32.mrf.mxu0
    %v3792 = vadd.f32 0.0, %v3791
    %v3793 = vpop.f32.mrf.mxu0
    %3794 = vdwg.mxu0
    %3796 = vrot.lane.b32.xlu0 %v3705, 64
    %v3797 = vpop.permute.xlu0 %3796
    %v3798 = vsel %vm3720, %v3705, 0
    %v3800 = vsel %vm3720, %v3797, 0
    %3802 = vmatprep.subr.mxu0 0.0
    %3803 = vmatpush1.xpose.msra.mxu0 0.0
    %3804 = vmatprep.subr.mxu0 0.0
    %3805 = vmatpush1.xpose.msra.mxu0 0.0
    %3806 = vmatprep.subr.mxu0 0.0
    %3807 = vmatpush1.xpose.msra.mxu0 0.0
    %3808 = vmatprep.subr.mxu0 0.0
    %3809 = vmatpush1.xpose.msra.mxu0 0.0
    %3810 = vmatprep.subr.mxu0 0.0
    %3811 = vmatpush1.xpose.msra.mxu0 0.0
    %3812 = vmatprep.subr.mxu0 0.0
    %3813 = vmatpush1.xpose.msra.mxu0 0.0
    %3814 = vmatprep.subr.mxu0 0.0
    %3815 = vmatpush1.xpose.msra.mxu0 0.0
    %3816 = vmatprep.subr.mxu0 0.0
    %3817 = vmatpush1.xpose.msra.mxu0 0.0
    %3818 = vmatprep.subr.mxu0 0.0
    %3819 = vmatpush1.xpose.msra.mxu0 0.0
    %3820 = vmatprep.subr.mxu0 0.0
    %3821 = vmatpush1.xpose.msra.mxu0 0.0
    %3822 = vmatprep.subr.mxu0 0.0
    %3823 = vmatpush1.xpose.msra.mxu0 0.0
    %3824 = vmatprep.subr.mxu0 0.0
    %3825 = vmatpush1.xpose.msra.mxu0 0.0
    %3826 = vmatprep.subr.mxu0 0.0
    %3827 = vmatpush1.xpose.msra.mxu0 0.0
    %3828 = vmatprep.subr.mxu0 0.0
    %3829 = vmatpush1.xpose.msra.mxu0 0.0
    %3830 = vmatprep.subr.mxu0 0.0
    %3831 = vmatpush1.xpose.msra.mxu0 0.0
    %3832 = vmatprep.subr.mxu0 0.0
    %3833 = vmatpush1.xpose.msra.mxu0 %v3800
    %3834 = vmatprep.subr.mxu0 0.0
    %3835 = vmatpush2.xpose.msra.mxu0 0.0
    %3836 = vmatprep.subr.mxu0 0.0
    %3837 = vmatpush2.xpose.msra.mxu0 0.0
    %3838 = vmatprep.subr.mxu0 0.0
    %3839 = vmatpush2.xpose.msra.mxu0 0.0
    %3840 = vmatprep.subr.mxu0 0.0
    %3841 = vmatpush2.xpose.msra.mxu0 0.0
    %3842 = vmatprep.subr.mxu0 0.0
    %3843 = vmatpush2.xpose.msra.mxu0 0.0
    %3844 = vmatprep.subr.mxu0 0.0
    %3845 = vmatpush2.xpose.msra.mxu0 0.0
    %3846 = vmatprep.subr.mxu0 0.0
    %3847 = vmatpush2.xpose.msra.mxu0 0.0
    %3848 = vmatprep.subr.mxu0 0.0
    %3849 = vmatpush2.xpose.msra.mxu0 0.0
    %3850 = vmatprep.subr.mxu0 0.0
    %3851 = vmatpush2.xpose.msra.mxu0 0.0
    %3852 = vmatprep.subr.mxu0 0.0
    %3853 = vmatpush2.xpose.msra.mxu0 0.0
    %3854 = vmatprep.subr.mxu0 0.0
    %3855 = vmatpush2.xpose.msra.mxu0 0.0
    %3856 = vmatprep.subr.mxu0 0.0
    %3857 = vmatpush2.xpose.msra.mxu0 0.0
    %3858 = vmatprep.subr.mxu0 0.0
    %3859 = vmatpush2.xpose.msra.mxu0 0.0
    %3860 = vmatprep.subr.mxu0 0.0
    %3861 = vmatpush2.xpose.msra.mxu0 0.0
    %3862 = vmatprep.subr.mxu0 0.0
    %3863 = vmatpush2.xpose.msra.mxu0 0.0
    %3864 = vmatprep.subr.mxu0 0.0
    %3865 = vmatpush2.xpose.msra.mxu0 0.0
    %3866 = vmatprep.mubr.f32.mxu0 0.0
    %3867 = vmatmul.mubr.f32.gmra.mxu0 %v3798
    %v3868 = vpop.f32.mrf.mxu0
    %v3869 = vadd.f32 0.0, %v3868
    %v3870 = vpop.f32.mrf.mxu0
    %3871 = vdwg.mxu0
    %v3872 = vsel %vm653, %v3792, -inf
    %3873 = vmax.xlane.f32.xlu0 %v3872
    %v3874 = vpop.xlane.xlu0 %3873
    %v3875 = vsel %vm653, %v3869, -inf
    %3876 = vmax.xlane.f32.xlu0 %v3875
    %v3877 = vpop.xlane.xlu0 %3876
    %v3878 = vsub.f32 %v3792, %v3874
    %v3879 = vsub.f32 %v3869, %v3877
    %v3880 = vmul.f32 %v3878, 1.442695
    %v3881 = vpow.pop %v3880
    %v3882 = vmul.f32 %v3879, 1.442695
    %v3883 = vpow.pop %v3882
    %v3884 = vsel %vm653, %v3881, 0.0
    %3885 = vadd.xlane.f32.xlu0 %v3884
    %v3886 = vpop.xlane.xlu0 %3885
    %v3887 = vsel %vm653, %v3883, 0.0
    %3888 = vadd.xlane.f32.xlu0 %v3887
    %v3889 = vpop.xlane.xlu0 %3888
    %v3890 = vrcp.pop %v3886
    %v3891 = vrcp.pop %v3889
    %v3892 = vmul.f32 %v3881, %v3890
    %v3893 = vmul.f32 %v3883, %v3891
    %v3895 = vsel %vm653, %v3892, 0
    %3897 = vmatprep.subr.mxu0 0.0
    %3898 = vmatpush1.msra.mxu0 0.0
    %3899 = vmatprep.subr.mxu0 0.0
    %3900 = vmatpush1.msra.mxu0 0.0
    %3901 = vmatprep.subr.mxu0 0.0
    %3902 = vmatpush1.msra.mxu0 0.0
    %3903 = vmatprep.subr.mxu0 0.0
    %3904 = vmatpush1.msra.mxu0 0.0
    %3905 = vmatprep.subr.mxu0 0.0
    %3906 = vmatpush1.msra.mxu0 0.0
    %3907 = vmatprep.subr.mxu0 0.0
    %3908 = vmatpush1.msra.mxu0 0.0
    %3909 = vmatprep.subr.mxu0 0.0
    %3910 = vmatpush1.msra.mxu0 0.0
    %3911 = vmatprep.subr.mxu0 0.0
    %3912 = vmatpush1.msra.mxu0 0.0
    %3913 = vmatprep.subr.mxu0 0.0
    %3914 = vmatpush1.msra.mxu0 0.0
    %3915 = vmatprep.subr.mxu0 0.0
    %3916 = vmatpush1.msra.mxu0 0.0
    %3917 = vmatprep.subr.mxu0 0.0
    %3918 = vmatpush1.msra.mxu0 0.0
    %3919 = vmatprep.subr.mxu0 0.0
    %3920 = vmatpush1.msra.mxu0 0.0
    %3921 = vmatprep.subr.mxu0 0.0
    %3922 = vmatpush1.msra.mxu0 0.0
    %3923 = vmatprep.subr.mxu0 0.0
    %3924 = vmatpush1.msra.mxu0 0.0
    %3925 = vmatprep.subr.mxu0 0.0
    %3926 = vmatpush1.msra.mxu0 0.0
    %3927 = vmatprep.subr.mxu0 0.0
    %3928 = vmatpush1.msra.mxu0 %v3701
    %3929 = vmatprep.subr.mxu0 0.0
    %3930 = vmatpush2.msra.mxu0 0.0
    %3931 = vmatprep.subr.mxu0 0.0
    %3932 = vmatpush2.msra.mxu0 0.0
    %3933 = vmatprep.subr.mxu0 0.0
    %3934 = vmatpush2.msra.mxu0 0.0
    %3935 = vmatprep.subr.mxu0 0.0
    %3936 = vmatpush2.msra.mxu0 0.0
    %3937 = vmatprep.subr.mxu0 0.0
    %3938 = vmatpush2.msra.mxu0 0.0
    %3939 = vmatprep.subr.mxu0 0.0
    %3940 = vmatpush2.msra.mxu0 0.0
    %3941 = vmatprep.subr.mxu0 0.0
    %3942 = vmatpush2.msra.mxu0 0.0
    %3943 = vmatprep.subr.mxu0 0.0
    %3944 = vmatpush2.msra.mxu0 0.0
    %3945 = vmatprep.subr.mxu0 0.0
    %3946 = vmatpush2.msra.mxu0 0.0
    %3947 = vmatprep.subr.mxu0 0.0
    %3948 = vmatpush2.msra.mxu0 0.0
    %3949 = vmatprep.subr.mxu0 0.0
    %3950 = vmatpush2.msra.mxu0 0.0
    %3951 = vmatprep.subr.mxu0 0.0
    %3952 = vmatpush2.msra.mxu0 0.0
    %3953 = vmatprep.subr.mxu0 0.0
    %3954 = vmatpush2.msra.mxu0 0.0
    %3955 = vmatprep.subr.mxu0 0.0
    %3956 = vmatpush2.msra.mxu0 0.0
    %3957 = vmatprep.subr.mxu0 0.0
    %3958 = vmatpush2.msra.mxu0 0.0
    %3959 = vmatprep.subr.mxu0 0.0
    %3960 = vmatpush2.msra.mxu0 0.0
    %3961 = vmatprep.mubr.f32.mxu0 0.0
    %3962 = vmatmul.mubr.f32.gmra.mxu0 %v3895
    %v3963 = vpop.f32.mrf.mxu0
    %v3964 = vadd.f32 0.0, %v3963
    %v3965 = vpop.f32.mrf.mxu0
    %3966 = vdwg.mxu0
    %v3968 = vsel %vm653, %v3893, 0
    %3970 = vmatprep.subr.mxu0 0.0
    %3971 = vmatpush1.msra.mxu0 0.0
    %3972 = vmatprep.subr.mxu0 0.0
    %3973 = vmatpush1.msra.mxu0 0.0
    %3974 = vmatprep.subr.mxu0 0.0
    %3975 = vmatpush1.msra.mxu0 0.0
    %3976 = vmatprep.subr.mxu0 0.0
    %3977 = vmatpush1.msra.mxu0 0.0
    %3978 = vmatprep.subr.mxu0 0.0
    %3979 = vmatpush1.msra.mxu0 0.0
    %3980 = vmatprep.subr.mxu0 0.0
    %3981 = vmatpush1.msra.mxu0 0.0
    %3982 = vmatprep.subr.mxu0 0.0
    %3983 = vmatpush1.msra.mxu0 0.0
    %3984 = vmatprep.subr.mxu0 0.0
    %3985 = vmatpush1.msra.mxu0 0.0
    %3986 = vmatprep.subr.mxu0 0.0
    %3987 = vmatpush1.msra.mxu0 0.0
    %3988 = vmatprep.subr.mxu0 0.0
    %3989 = vmatpush1.msra.mxu0 0.0
    %3990 = vmatprep.subr.mxu0 0.0
    %3991 = vmatpush1.msra.mxu0 0.0
    %3992 = vmatprep.subr.mxu0 0.0
    %3993 = vmatpush1.msra.mxu0 0.0
    %3994 = vmatprep.subr.mxu0 0.0
    %3995 = vmatpush1.msra.mxu0 0.0
    %3996 = vmatprep.subr.mxu0 0.0
    %3997 = vmatpush1.msra.mxu0 0.0
    %3998 = vmatprep.subr.mxu0 0.0
    %3999 = vmatpush1.msra.mxu0 0.0
    %4000 = vmatprep.subr.mxu0 0.0
    %4001 = vmatpush1.msra.mxu0 %v3707
    %4002 = vmatprep.subr.mxu0 0.0
    %4003 = vmatpush2.msra.mxu0 0.0
    %4004 = vmatprep.subr.mxu0 0.0
    %4005 = vmatpush2.msra.mxu0 0.0
    %4006 = vmatprep.subr.mxu0 0.0
    %4007 = vmatpush2.msra.mxu0 0.0
    %4008 = vmatprep.subr.mxu0 0.0
    %4009 = vmatpush2.msra.mxu0 0.0
    %4010 = vmatprep.subr.mxu0 0.0
    %4011 = vmatpush2.msra.mxu0 0.0
    %4012 = vmatprep.subr.mxu0 0.0
    %4013 = vmatpush2.msra.mxu0 0.0
    %4014 = vmatprep.subr.mxu0 0.0
    %4015 = vmatpush2.msra.mxu0 0.0
    %4016 = vmatprep.subr.mxu0 0.0
    %4017 = vmatpush2.msra.mxu0 0.0
    %4018 = vmatprep.subr.mxu0 0.0
    %4019 = vmatpush2.msra.mxu0 0.0
    %4020 = vmatprep.subr.mxu0 0.0
    %4021 = vmatpush2.msra.mxu0 0.0
    %4022 = vmatprep.subr.mxu0 0.0
    %4023 = vmatpush2.msra.mxu0 0.0
    %4024 = vmatprep.subr.mxu0 0.0
    %4025 = vmatpush2.msra.mxu0 0.0
    %4026 = vmatprep.subr.mxu0 0.0
    %4027 = vmatpush2.msra.mxu0 0.0
    %4028 = vmatprep.subr.mxu0 0.0
    %4029 = vmatpush2.msra.mxu0 0.0
    %4030 = vmatprep.subr.mxu0 0.0
    %4031 = vmatpush2.msra.mxu0 0.0
    %4032 = vmatprep.subr.mxu0 0.0
    %4033 = vmatpush2.msra.mxu0 0.0
    %4034 = vmatprep.mubr.f32.mxu0 0.0
    %4035 = vmatmul.mubr.f32.gmra.mxu0 %v3968
    %v4036 = vpop.f32.mrf.mxu0
    %v4037 = vadd.f32 0.0, %v4036
    %v4038 = vpop.f32.mrf.mxu0
    %4039 = vdwg.mxu0
    %v4040 = vsel %vm3720, %v3964, 0.0
    %v4041 = vrot.slane %v4040, 4
    %v4042 = vadd.f32 %v4040, %v4041
    %v4043 = vrot.slane %v4042, 2
    %v4044 = vadd.f32 %v4042, %v4043
    %v4045 = vrot.slane %v4044, 1
    %v4046 = vadd.f32 %v4044, %v4045
    %v4047 = vsel %vm3720, %v4037, 0.0
    %v4048 = vrot.slane %v4047, 4
    %v4049 = vadd.f32 %v4047, %v4048
    %v4050 = vrot.slane %v4049, 2
    %v4051 = vadd.f32 %v4049, %v4050
    %v4052 = vrot.slane %v4051, 1
    %v4053 = vadd.f32 %v4051, %v4052
    %v4054 = vrcp.pop 8.0
    %v4055 = vmul.f32 %v4046, %v4054
    %v4056 = vmul.f32 %v4053, %v4054
    %4057 = vrot.lane.b32.xlu0 %v3699, 112
    %v4058 = vpop.permute.xlu0 %4057
    %4059 = vrot.lane.b32.xlu0 %v3699, 48
    %v4060 = vpop.permute.xlu0 %4059
    %v4061 = vsel %vm3720, %v4058, 0
    %v4063 = vsel %vm3720, %v4060, 0
    %4065 = vmatprep.subr.mxu0 0.0
    %4066 = vmatpush1.xpose.msra.mxu0 0.0
    %4067 = vmatprep.subr.mxu0 0.0
    %4068 = vmatpush1.xpose.msra.mxu0 0.0
    %4069 = vmatprep.subr.mxu0 0.0
    %4070 = vmatpush1.xpose.msra.mxu0 0.0
    %4071 = vmatprep.subr.mxu0 0.0
    %4072 = vmatpush1.xpose.msra.mxu0 0.0
    %4073 = vmatprep.subr.mxu0 0.0
    %4074 = vmatpush1.xpose.msra.mxu0 0.0
    %4075 = vmatprep.subr.mxu0 0.0
    %4076 = vmatpush1.xpose.msra.mxu0 0.0
    %4077 = vmatprep.subr.mxu0 0.0
    %4078 = vmatpush1.xpose.msra.mxu0 0.0
    %4079 = vmatprep.subr.mxu0 0.0
    %4080 = vmatpush1.xpose.msra.mxu0 0.0
    %4081 = vmatprep.subr.mxu0 0.0
    %4082 = vmatpush1.xpose.msra.mxu0 0.0
    %4083 = vmatprep.subr.mxu0 0.0
    %4084 = vmatpush1.xpose.msra.mxu0 0.0
    %4085 = vmatprep.subr.mxu0 0.0
    %4086 = vmatpush1.xpose.msra.mxu0 0.0
    %4087 = vmatprep.subr.mxu0 0.0
    %4088 = vmatpush1.xpose.msra.mxu0 0.0
    %4089 = vmatprep.subr.mxu0 0.0
    %4090 = vmatpush1.xpose.msra.mxu0 0.0
    %4091 = vmatprep.subr.mxu0 0.0
    %4092 = vmatpush1.xpose.msra.mxu0 0.0
    %4093 = vmatprep.subr.mxu0 0.0
    %4094 = vmatpush1.xpose.msra.mxu0 0.0
    %4095 = vmatprep.subr.mxu0 0.0
    %4096 = vmatpush1.xpose.msra.mxu0 %v4063
    %4097 = vmatprep.subr.mxu0 0.0
    %4098 = vmatpush2.xpose.msra.mxu0 0.0
    %4099 = vmatprep.subr.mxu0 0.0
    %4100 = vmatpush2.xpose.msra.mxu0 0.0
    %4101 = vmatprep.subr.mxu0 0.0
    %4102 = vmatpush2.xpose.msra.mxu0 0.0
    %4103 = vmatprep.subr.mxu0 0.0
    %4104 = vmatpush2.xpose.msra.mxu0 0.0
    %4105 = vmatprep.subr.mxu0 0.0
    %4106 = vmatpush2.xpose.msra.mxu0 0.0
    %4107 = vmatprep.subr.mxu0 0.0
    %4108 = vmatpush2.xpose.msra.mxu0 0.0
    %4109 = vmatprep.subr.mxu0 0.0
    %4110 = vmatpush2.xpose.msra.mxu0 0.0
    %4111 = vmatprep.subr.mxu0 0.0
    %4112 = vmatpush2.xpose.msra.mxu0 0.0
    %4113 = vmatprep.subr.mxu0 0.0
    %4114 = vmatpush2.xpose.msra.mxu0 0.0
    %4115 = vmatprep.subr.mxu0 0.0
    %4116 = vmatpush2.xpose.msra.mxu0 0.0
    %4117 = vmatprep.subr.mxu0 0.0
    %4118 = vmatpush2.xpose.msra.mxu0 0.0
    %4119 = vmatprep.subr.mxu0 0.0
    %4120 = vmatpush2.xpose.msra.mxu0 0.0
    %4121 = vmatprep.subr.mxu0 0.0
    %4122 = vmatpush2.xpose.msra.mxu0 0.0
    %4123 = vmatprep.subr.mxu0 0.0
    %4124 = vmatpush2.xpose.msra.mxu0 0.0
    %4125 = vmatprep.subr.mxu0 0.0
    %4126 = vmatpush2.xpose.msra.mxu0 0.0
    %4127 = vmatprep.subr.mxu0 0.0
    %4128 = vmatpush2.xpose.msra.mxu0 0.0
    %4129 = vmatprep.mubr.f32.mxu0 0.0
    %4130 = vmatmul.mubr.f32.gmra.mxu0 %v4061
    %v4131 = vpop.f32.mrf.mxu0
    %v4132 = vadd.f32 0.0, %v4131
    %v4133 = vpop.f32.mrf.mxu0
    %4134 = vdwg.mxu0
    %4135 = vrot.lane.b32.xlu0 %v3705, 112
    %v4136 = vpop.permute.xlu0 %4135
    %4137 = vrot.lane.b32.xlu0 %v3705, 48
    %v4138 = vpop.permute.xlu0 %4137
    %v4139 = vsel %vm3720, %v4136, 0
    %v4141 = vsel %vm3720, %v4138, 0
    %4143 = vmatprep.subr.mxu0 0.0
    %4144 = vmatpush1.xpose.msra.mxu0 0.0
    %4145 = vmatprep.subr.mxu0 0.0
    %4146 = vmatpush1.xpose.msra.mxu0 0.0
    %4147 = vmatprep.subr.mxu0 0.0
    %4148 = vmatpush1.xpose.msra.mxu0 0.0
    %4149 = vmatprep.subr.mxu0 0.0
    %4150 = vmatpush1.xpose.msra.mxu0 0.0
    %4151 = vmatprep.subr.mxu0 0.0
    %4152 = vmatpush1.xpose.msra.mxu0 0.0
    %4153 = vmatprep.subr.mxu0 0.0
    %4154 = vmatpush1.xpose.msra.mxu0 0.0
    %4155 = vmatprep.subr.mxu0 0.0
    %4156 = vmatpush1.xpose.msra.mxu0 0.0
    %4157 = vmatprep.subr.mxu0 0.0
    %4158 = vmatpush1.xpose.msra.mxu0 0.0
    %4159 = vmatprep.subr.mxu0 0.0
    %4160 = vmatpush1.xpose.msra.mxu0 0.0
    %4161 = vmatprep.subr.mxu0 0.0
    %4162 = vmatpush1.xpose.msra.mxu0 0.0
    %4163 = vmatprep.subr.mxu0 0.0
    %4164 = vmatpush1.xpose.msra.mxu0 0.0
    %4165 = vmatprep.subr.mxu0 0.0
    %4166 = vmatpush1.xpose.msra.mxu0 0.0
    %4167 = vmatprep.subr.mxu0 0.0
    %4168 = vmatpush1.xpose.msra.mxu0 0.0
    %4169 = vmatprep.subr.mxu0 0.0
    %4170 = vmatpush1.xpose.msra.mxu0 0.0
    %4171 = vmatprep.subr.mxu0 0.0
    %4172 = vmatpush1.xpose.msra.mxu0 0.0
    %4173 = vmatprep.subr.mxu0 0.0
    %4174 = vmatpush1.xpose.msra.mxu0 %v4141
    %4175 = vmatprep.subr.mxu0 0.0
    %4176 = vmatpush2.xpose.msra.mxu0 0.0
    %4177 = vmatprep.subr.mxu0 0.0
    %4178 = vmatpush2.xpose.msra.mxu0 0.0
    %4179 = vmatprep.subr.mxu0 0.0
    %4180 = vmatpush2.xpose.msra.mxu0 0.0
    %4181 = vmatprep.subr.mxu0 0.0
    %4182 = vmatpush2.xpose.msra.mxu0 0.0
    %4183 = vmatprep.subr.mxu0 0.0
    %4184 = vmatpush2.xpose.msra.mxu0 0.0
    %4185 = vmatprep.subr.mxu0 0.0
    %4186 = vmatpush2.xpose.msra.mxu0 0.0
    %4187 = vmatprep.subr.mxu0 0.0
    %4188 = vmatpush2.xpose.msra.mxu0 0.0
    %4189 = vmatprep.subr.mxu0 0.0
    %4190 = vmatpush2.xpose.msra.mxu0 0.0
    %4191 = vmatprep.subr.mxu0 0.0
    %4192 = vmatpush2.xpose.msra.mxu0 0.0
    %4193 = vmatprep.subr.mxu0 0.0
    %4194 = vmatpush2.xpose.msra.mxu0 0.0
    %4195 = vmatprep.subr.mxu0 0.0
    %4196 = vmatpush2.xpose.msra.mxu0 0.0
    %4197 = vmatprep.subr.mxu0 0.0
    %4198 = vmatpush2.xpose.msra.mxu0 0.0
    %4199 = vmatprep.subr.mxu0 0.0
    %4200 = vmatpush2.xpose.msra.mxu0 0.0
    %4201 = vmatprep.subr.mxu0 0.0
    %4202 = vmatpush2.xpose.msra.mxu0 0.0
    %4203 = vmatprep.subr.mxu0 0.0
    %4204 = vmatpush2.xpose.msra.mxu0 0.0
    %4205 = vmatprep.subr.mxu0 0.0
    %4206 = vmatpush2.xpose.msra.mxu0 0.0
    %4207 = vmatprep.mubr.f32.mxu0 0.0
    %4208 = vmatmul.mubr.f32.gmra.mxu0 %v4139
    %v4209 = vpop.f32.mrf.mxu0
    %v4210 = vadd.f32 0.0, %v4209
    %v4211 = vpop.f32.mrf.mxu0
    %4212 = vdwg.mxu0
    %v4213 = vsel %vm653, %v4132, -inf
    %4214 = vmax.xlane.f32.xlu0 %v4213
    %v4215 = vpop.xlane.xlu0 %4214
    %v4216 = vsel %vm653, %v4210, -inf
    %4217 = vmax.xlane.f32.xlu0 %v4216
    %v4218 = vpop.xlane.xlu0 %4217
    %v4219 = vsub.f32 %v4132, %v4215
    %v4220 = vsub.f32 %v4210, %v4218
    %v4221 = vmul.f32 %v4219, 1.442695
    %v4222 = vpow.pop %v4221
    %v4223 = vmul.f32 %v4220, 1.442695
    %v4224 = vpow.pop %v4223
    %v4225 = vsel %vm653, %v4222, 0.0
    %4226 = vadd.xlane.f32.xlu0 %v4225
    %v4227 = vpop.xlane.xlu0 %4226
    %v4228 = vsel %vm653, %v4224, 0.0
    %4229 = vadd.xlane.f32.xlu0 %v4228
    %v4230 = vpop.xlane.xlu0 %4229
    %v4231 = vrcp.pop %v4227
    %v4232 = vrcp.pop %v4230
    %v4233 = vmul.f32 %v4222, %v4231
    %v4234 = vmul.f32 %v4224, %v4232
    %4236 = vrot.lane.b32.xlu0 %v3701, 112
    %v4237 = vpop.permute.xlu0 %4236
    %v4240 = vsel %vm653, %v4233, 0
    %4242 = vmatprep.subr.mxu0 0.0
    %4243 = vmatpush1.msra.mxu0 0.0
    %4244 = vmatprep.subr.mxu0 0.0
    %4245 = vmatpush1.msra.mxu0 0.0
    %4246 = vmatprep.subr.mxu0 0.0
    %4247 = vmatpush1.msra.mxu0 0.0
    %4248 = vmatprep.subr.mxu0 0.0
    %4249 = vmatpush1.msra.mxu0 0.0
    %4250 = vmatprep.subr.mxu0 0.0
    %4251 = vmatpush1.msra.mxu0 0.0
    %4252 = vmatprep.subr.mxu0 0.0
    %4253 = vmatpush1.msra.mxu0 0.0
    %4254 = vmatprep.subr.mxu0 0.0
    %4255 = vmatpush1.msra.mxu0 0.0
    %4256 = vmatprep.subr.mxu0 0.0
    %4257 = vmatpush1.msra.mxu0 0.0
    %4258 = vmatprep.subr.mxu0 0.0
    %4259 = vmatpush1.msra.mxu0 0.0
    %4260 = vmatprep.subr.mxu0 0.0
    %4261 = vmatpush1.msra.mxu0 0.0
    %4262 = vmatprep.subr.mxu0 0.0
    %4263 = vmatpush1.msra.mxu0 0.0
    %4264 = vmatprep.subr.mxu0 0.0
    %4265 = vmatpush1.msra.mxu0 0.0
    %4266 = vmatprep.subr.mxu0 0.0
    %4267 = vmatpush1.msra.mxu0 0.0
    %4268 = vmatprep.subr.mxu0 0.0
    %4269 = vmatpush1.msra.mxu0 0.0
    %4270 = vmatprep.subr.mxu0 0.0
    %4271 = vmatpush1.msra.mxu0 0.0
    %4272 = vmatprep.subr.mxu0 0.0
    %4273 = vmatpush1.msra.mxu0 %v4237
    %4274 = vmatprep.subr.mxu0 0.0
    %4275 = vmatpush2.msra.mxu0 0.0
    %4276 = vmatprep.subr.mxu0 0.0
    %4277 = vmatpush2.msra.mxu0 0.0
    %4278 = vmatprep.subr.mxu0 0.0
    %4279 = vmatpush2.msra.mxu0 0.0
    %4280 = vmatprep.subr.mxu0 0.0
    %4281 = vmatpush2.msra.mxu0 0.0
    %4282 = vmatprep.subr.mxu0 0.0
    %4283 = vmatpush2.msra.mxu0 0.0
    %4284 = vmatprep.subr.mxu0 0.0
    %4285 = vmatpush2.msra.mxu0 0.0
    %4286 = vmatprep.subr.mxu0 0.0
    %4287 = vmatpush2.msra.mxu0 0.0
    %4288 = vmatprep.subr.mxu0 0.0
    %4289 = vmatpush2.msra.mxu0 0.0
    %4290 = vmatprep.subr.mxu0 0.0
    %4291 = vmatpush2.msra.mxu0 0.0
    %4292 = vmatprep.subr.mxu0 0.0
    %4293 = vmatpush2.msra.mxu0 0.0
    %4294 = vmatprep.subr.mxu0 0.0
    %4295 = vmatpush2.msra.mxu0 0.0
    %4296 = vmatprep.subr.mxu0 0.0
    %4297 = vmatpush2.msra.mxu0 0.0
    %4298 = vmatprep.subr.mxu0 0.0
    %4299 = vmatpush2.msra.mxu0 0.0
    %4300 = vmatprep.subr.mxu0 0.0
    %4301 = vmatpush2.msra.mxu0 0.0
    %4302 = vmatprep.subr.mxu0 0.0
    %4303 = vmatpush2.msra.mxu0 0.0
    %4304 = vmatprep.subr.mxu0 0.0
    %4305 = vmatpush2.msra.mxu0 0.0
    %4306 = vmatprep.mubr.f32.mxu0 0.0
    %4307 = vmatmul.mubr.f32.gmra.mxu0 %v4240
    %v4308 = vpop.f32.mrf.mxu0
    %v4309 = vadd.f32 0.0, %v4308
    %v4310 = vpop.f32.mrf.mxu0
    %4311 = vdwg.mxu0
    %4313 = vrot.lane.b32.xlu0 %v3707, 112
    %v4314 = vpop.permute.xlu0 %4313
    %v4317 = vsel %vm653, %v4234, 0
    %4319 = vmatprep.subr.mxu0 0.0
    %4320 = vmatpush1.msra.mxu0 0.0
    %4321 = vmatprep.subr.mxu0 0.0
    %4322 = vmatpush1.msra.mxu0 0.0
    %4323 = vmatprep.subr.mxu0 0.0
    %4324 = vmatpush1.msra.mxu0 0.0
    %4325 = vmatprep.subr.mxu0 0.0
    %4326 = vmatpush1.msra.mxu0 0.0
    %4327 = vmatprep.subr.mxu0 0.0
    %4328 = vmatpush1.msra.mxu0 0.0
    %4329 = vmatprep.subr.mxu0 0.0
    %4330 = vmatpush1.msra.mxu0 0.0
    %4331 = vmatprep.subr.mxu0 0.0
    %4332 = vmatpush1.msra.mxu0 0.0
    %4333 = vmatprep.subr.mxu0 0.0
    %4334 = vmatpush1.msra.mxu0 0.0
    %4335 = vmatprep.subr.mxu0 0.0
    %4336 = vmatpush1.msra.mxu0 0.0
    %4337 = vmatprep.subr.mxu0 0.0
    %4338 = vmatpush1.msra.mxu0 0.0
    %4339 = vmatprep.subr.mxu0 0.0
    %4340 = vmatpush1.msra.mxu0 0.0
    %4341 = vmatprep.subr.mxu0 0.0
    %4342 = vmatpush1.msra.mxu0 0.0
    %4343 = vmatprep.subr.mxu0 0.0
    %4344 = vmatpush1.msra.mxu0 0.0
    %4345 = vmatprep.subr.mxu0 0.0
    %4346 = vmatpush1.msra.mxu0 0.0
    %4347 = vmatprep.subr.mxu0 0.0
    %4348 = vmatpush1.msra.mxu0 0.0
    %4349 = vmatprep.subr.mxu0 0.0
    %4350 = vmatpush1.msra.mxu0 %v4314
    %4351 = vmatprep.subr.mxu0 0.0
    %4352 = vmatpush2.msra.mxu0 0.0
    %4353 = vmatprep.subr.mxu0 0.0
    %4354 = vmatpush2.msra.mxu0 0.0
    %4355 = vmatprep.subr.mxu0 0.0
    %4356 = vmatpush2.msra.mxu0 0.0
    %4357 = vmatprep.subr.mxu0 0.0
    %4358 = vmatpush2.msra.mxu0 0.0
    %4359 = vmatprep.subr.mxu0 0.0
    %4360 = vmatpush2.msra.mxu0 0.0
    %4361 = vmatprep.subr.mxu0 0.0
    %4362 = vmatpush2.msra.mxu0 0.0
    %4363 = vmatprep.subr.mxu0 0.0
    %4364 = vmatpush2.msra.mxu0 0.0
    %4365 = vmatprep.subr.mxu0 0.0
    %4366 = vmatpush2.msra.mxu0 0.0
    %4367 = vmatprep.subr.mxu0 0.0
    %4368 = vmatpush2.msra.mxu0 0.0
    %4369 = vmatprep.subr.mxu0 0.0
    %4370 = vmatpush2.msra.mxu0 0.0
    %4371 = vmatprep.subr.mxu0 0.0
    %4372 = vmatpush2.msra.mxu0 0.0
    %4373 = vmatprep.subr.mxu0 0.0
    %4374 = vmatpush2.msra.mxu0 0.0
    %4375 = vmatprep.subr.mxu0 0.0
    %4376 = vmatpush2.msra.mxu0 0.0
    %4377 = vmatprep.subr.mxu0 0.0
    %4378 = vmatpush2.msra.mxu0 0.0
    %4379 = vmatprep.subr.mxu0 0.0
    %4380 = vmatpush2.msra.mxu0 0.0
    %4381 = vmatprep.subr.mxu0 0.0
    %4382 = vmatpush2.msra.mxu0 0.0
    %4383 = vmatprep.mubr.f32.mxu0 0.0
    %4384 = vmatmul.mubr.f32.gmra.mxu0 %v4317
    %v4385 = vpop.f32.mrf.mxu0
    %v4386 = vadd.f32 0.0, %v4385
    %v4387 = vpop.f32.mrf.mxu0
    %4388 = vdwg.mxu0
    %v4389 = vsel %vm3720, %v4309, 0.0
    %v4390 = vrot.slane %v4389, 4
    %v4391 = vadd.f32 %v4389, %v4390
    %v4392 = vrot.slane %v4391, 2
    %v4393 = vadd.f32 %v4391, %v4392
    %v4394 = vrot.slane %v4393, 1
    %v4395 = vadd.f32 %v4393, %v4394
    %v4396 = vsel %vm3720, %v4386, 0.0
    %v4397 = vrot.slane %v4396, 4
    %v4398 = vadd.f32 %v4396, %v4397
    %v4399 = vrot.slane %v4398, 2
    %v4400 = vadd.f32 %v4398, %v4399
    %v4401 = vrot.slane %v4400, 1
    %v4402 = vadd.f32 %v4400, %v4401
    %v4403 = vmul.f32 %v4395, %v4054
    %v4404 = vmul.f32 %v4402, %v4054
    %v4407 = vsel %vm3566, %v4404, %v4403
    %v4408 = vsel %vm3720, %v4407, 0
    %4410 = vmatprep.subr.mxu0 0.0
    %4411 = vmatpush1.msra.mxu0 0.0
    %4412 = vmatprep.subr.mxu0 0.0
    %4413 = vmatpush1.msra.mxu0 0.0
    %4414 = vmatprep.subr.mxu0 0.0
    %4415 = vmatpush1.msra.mxu0 0.0
    %4416 = vmatprep.subr.mxu0 0.0
    %4417 = vmatpush1.msra.mxu0 0.0
    %4418 = vmatprep.subr.mxu0 0.0
    %4419 = vmatpush1.msra.mxu0 0.0
    %4420 = vmatprep.subr.mxu0 0.0
    %4421 = vmatpush1.msra.mxu0 0.0
    %4422 = vmatprep.subr.mxu0 0.0
    %4423 = vmatpush1.msra.mxu0 0.0
    %4424 = vmatprep.subr.mxu0 0.0
    %4425 = vmatpush1.msra.mxu0 0.0
    %4426 = vmatprep.subr.mxu0 0.0
    %4427 = vmatpush1.msra.mxu0 0.0
    %4428 = vmatprep.subr.mxu0 0.0
    %4429 = vmatpush1.msra.mxu0 0.0
    %4430 = vmatprep.subr.mxu0 0.0
    %4431 = vmatpush1.msra.mxu0 0.0
    %4432 = vmatprep.subr.mxu0 0.0
    %4433 = vmatpush1.msra.mxu0 0.0
    %4434 = vmatprep.subr.mxu0 0.0
    %4435 = vmatpush1.msra.mxu0 0.0
    %4436 = vmatprep.subr.mxu0 0.0
    %4437 = vmatpush1.msra.mxu0 0.0
    %4438 = vmatprep.subr.mxu0 0.0
    %4439 = vmatpush1.msra.mxu0 %v3712
    %4440 = vmatprep.subr.mxu0 0.0
    %4441 = vmatpush1.msra.mxu0 %v3711
    %4442 = vmatprep.subr.mxu0 0.0
    %4443 = vmatpush2.msra.mxu0 0.0
    %4444 = vmatprep.subr.mxu0 0.0
    %4445 = vmatpush2.msra.mxu0 0.0
    %4446 = vmatprep.subr.mxu0 0.0
    %4447 = vmatpush2.msra.mxu0 0.0
    %4448 = vmatprep.subr.mxu0 0.0
    %4449 = vmatpush2.msra.mxu0 0.0
    %4450 = vmatprep.subr.mxu0 0.0
    %4451 = vmatpush2.msra.mxu0 0.0
    %4452 = vmatprep.subr.mxu0 0.0
    %4453 = vmatpush2.msra.mxu0 0.0
    %4454 = vmatprep.subr.mxu0 0.0
    %4455 = vmatpush2.msra.mxu0 0.0
    %4456 = vmatprep.subr.mxu0 0.0
    %4457 = vmatpush2.msra.mxu0 0.0
    %4458 = vmatprep.subr.mxu0 0.0
    %4459 = vmatpush2.msra.mxu0 0.0
    %4460 = vmatprep.subr.mxu0 0.0
    %4461 = vmatpush2.msra.mxu0 0.0
    %4462 = vmatprep.subr.mxu0 0.0
    %4463 = vmatpush2.msra.mxu0 0.0
    %4464 = vmatprep.subr.mxu0 0.0
    %4465 = vmatpush2.msra.mxu0 0.0
    %4466 = vmatprep.subr.mxu0 0.0
    %4467 = vmatpush2.msra.mxu0 0.0
    %4468 = vmatprep.subr.mxu0 0.0
    %4469 = vmatpush2.msra.mxu0 0.0
    %4470 = vmatprep.subr.mxu0 0.0
    %4471 = vmatpush2.msra.mxu0 0.0
    %4472 = vmatprep.subr.mxu0 0.0
    %4473 = vmatpush2.msra.mxu0 0.0
    %4474 = vmatprep.mubr.f32.mxu0 0.0
    %4475 = vmatmul.mubr.f32.gmra.mxu0 %v4408
    %v4476 = vpop.f32.mrf.mxu0
    %v4477 = vadd.f32 0.0, %v4476
    %v4478 = vpop.f32.mrf.mxu0
    %4479 = vdwg.mxu0
    %v4482 = vsel %vm3566, %v4056, %v4055
    %v4483 = vsel %vm3720, %v4482, 0
    %4485 = vmatprep.subr.mxu0 0.0
    %4486 = vmatpush1.msra.mxu0 0.0
    %4487 = vmatprep.subr.mxu0 0.0
    %4488 = vmatpush1.msra.mxu0 0.0
    %4489 = vmatprep.subr.mxu0 0.0
    %4490 = vmatpush1.msra.mxu0 0.0
    %4491 = vmatprep.subr.mxu0 0.0
    %4492 = vmatpush1.msra.mxu0 0.0
    %4493 = vmatprep.subr.mxu0 0.0
    %4494 = vmatpush1.msra.mxu0 0.0
    %4495 = vmatprep.subr.mxu0 0.0
    %4496 = vmatpush1.msra.mxu0 0.0
    %4497 = vmatprep.subr.mxu0 0.0
    %4498 = vmatpush1.msra.mxu0 0.0
    %4499 = vmatprep.subr.mxu0 0.0
    %4500 = vmatpush1.msra.mxu0 0.0
    %4501 = vmatprep.subr.mxu0 0.0
    %4502 = vmatpush1.msra.mxu0 0.0
    %4503 = vmatprep.subr.mxu0 0.0
    %4504 = vmatpush1.msra.mxu0 0.0
    %4505 = vmatprep.subr.mxu0 0.0
    %4506 = vmatpush1.msra.mxu0 0.0
    %4507 = vmatprep.subr.mxu0 0.0
    %4508 = vmatpush1.msra.mxu0 0.0
    %4509 = vmatprep.subr.mxu0 0.0
    %4510 = vmatpush1.msra.mxu0 0.0
    %4511 = vmatprep.subr.mxu0 0.0
    %4512 = vmatpush1.msra.mxu0 0.0
    %4513 = vmatprep.subr.mxu0 0.0
    %4514 = vmatpush1.msra.mxu0 %v3710
    %4515 = vmatprep.subr.mxu0 0.0
    %4516 = vmatpush1.msra.mxu0 %v3709
    %4517 = vmatprep.subr.mxu0 0.0
    %4518 = vmatpush2.msra.mxu0 0.0
    %4519 = vmatprep.subr.mxu0 0.0
    %4520 = vmatpush2.msra.mxu0 0.0
    %4521 = vmatprep.subr.mxu0 0.0
    %4522 = vmatpush2.msra.mxu0 0.0
    %4523 = vmatprep.subr.mxu0 0.0
    %4524 = vmatpush2.msra.mxu0 0.0
    %4525 = vmatprep.subr.mxu0 0.0
    %4526 = vmatpush2.msra.mxu0 0.0
    %4527 = vmatprep.subr.mxu0 0.0
    %4528 = vmatpush2.msra.mxu0 0.0
    %4529 = vmatprep.subr.mxu0 0.0
    %4530 = vmatpush2.msra.mxu0 0.0
    %4531 = vmatprep.subr.mxu0 0.0
    %4532 = vmatpush2.msra.mxu0 0.0
    %4533 = vmatprep.subr.mxu0 0.0
    %4534 = vmatpush2.msra.mxu0 0.0
    %4535 = vmatprep.subr.mxu0 0.0
    %4536 = vmatpush2.msra.mxu0 0.0
    %4537 = vmatprep.subr.mxu0 0.0
    %4538 = vmatpush2.msra.mxu0 0.0
    %4539 = vmatprep.subr.mxu0 0.0
    %4540 = vmatpush2.msra.mxu0 0.0
    %4541 = vmatprep.subr.mxu0 0.0
    %4542 = vmatpush2.msra.mxu0 0.0
    %4543 = vmatprep.subr.mxu0 0.0
    %4544 = vmatpush2.msra.mxu0 0.0
    %4545 = vmatprep.subr.mxu0 0.0
    %4546 = vmatpush2.msra.mxu0 0.0
    %4547 = vmatprep.subr.mxu0 0.0
    %4548 = vmatpush2.msra.mxu0 0.0
    %4549 = vmatprep.mubr.f32.mxu0 0.0
    %4550 = vmatmul.mubr.f32.gmra.mxu0 %v4483
    %v4551 = vpop.f32.mrf.mxu0
    %v4552 = vadd.f32 %v4477, %v4551
    %v4553 = vpop.f32.mrf.mxu0
    %4554 = vdwg.mxu0
    %4555 = vrot.lane.b32.xlu0 %v3699, 96
    %v4556 = vpop.permute.xlu0 %4555
    %4557 = vrot.lane.b32.xlu0 %v3699, 32
    %v4558 = vpop.permute.xlu0 %4557
    %v4559 = vsel %vm3720, %v4556, 0
    %v4561 = vsel %vm3720, %v4558, 0
    %4563 = vmatprep.subr.mxu0 0.0
    %4564 = vmatpush1.xpose.msra.mxu0 0.0
    %4565 = vmatprep.subr.mxu0 0.0
    %4566 = vmatpush1.xpose.msra.mxu0 0.0
    %4567 = vmatprep.subr.mxu0 0.0
    %4568 = vmatpush1.xpose.msra.mxu0 0.0
    %4569 = vmatprep.subr.mxu0 0.0
    %4570 = vmatpush1.xpose.msra.mxu0 0.0
    %4571 = vmatprep.subr.mxu0 0.0
    %4572 = vmatpush1.xpose.msra.mxu0 0.0
    %4573 = vmatprep.subr.mxu0 0.0
    %4574 = vmatpush1.xpose.msra.mxu0 0.0
    %4575 = vmatprep.subr.mxu0 0.0
    %4576 = vmatpush1.xpose.msra.mxu0 0.0
    %4577 = vmatprep.subr.mxu0 0.0
    %4578 = vmatpush1.xpose.msra.mxu0 0.0
    %4579 = vmatprep.subr.mxu0 0.0
    %4580 = vmatpush1.xpose.msra.mxu0 0.0
    %4581 = vmatprep.subr.mxu0 0.0
    %4582 = vmatpush1.xpose.msra.mxu0 0.0
    %4583 = vmatprep.subr.mxu0 0.0
    %4584 = vmatpush1.xpose.msra.mxu0 0.0
    %4585 = vmatprep.subr.mxu0 0.0
    %4586 = vmatpush1.xpose.msra.mxu0 0.0
    %4587 = vmatprep.subr.mxu0 0.0
    %4588 = vmatpush1.xpose.msra.mxu0 0.0
    %4589 = vmatprep.subr.mxu0 0.0
    %4590 = vmatpush1.xpose.msra.mxu0 0.0
    %4591 = vmatprep.subr.mxu0 0.0
    %4592 = vmatpush1.xpose.msra.mxu0 0.0
    %4593 = vmatprep.subr.mxu0 0.0
    %4594 = vmatpush1.xpose.msra.mxu0 %v4561
    %4595 = vmatprep.subr.mxu0 0.0
    %4596 = vmatpush2.xpose.msra.mxu0 0.0
    %4597 = vmatprep.subr.mxu0 0.0
    %4598 = vmatpush2.xpose.msra.mxu0 0.0
    %4599 = vmatprep.subr.mxu0 0.0
    %4600 = vmatpush2.xpose.msra.mxu0 0.0
    %4601 = vmatprep.subr.mxu0 0.0
    %4602 = vmatpush2.xpose.msra.mxu0 0.0
    %4603 = vmatprep.subr.mxu0 0.0
    %4604 = vmatpush2.xpose.msra.mxu0 0.0
    %4605 = vmatprep.subr.mxu0 0.0
    %4606 = vmatpush2.xpose.msra.mxu0 0.0
    %4607 = vmatprep.subr.mxu0 0.0
    %4608 = vmatpush2.xpose.msra.mxu0 0.0
    %4609 = vmatprep.subr.mxu0 0.0
    %4610 = vmatpush2.xpose.msra.mxu0 0.0
    %4611 = vmatprep.subr.mxu0 0.0
    %4612 = vmatpush2.xpose.msra.mxu0 0.0
    %4613 = vmatprep.subr.mxu0 0.0
    %4614 = vmatpush2.xpose.msra.mxu0 0.0
    %4615 = vmatprep.subr.mxu0 0.0
    %4616 = vmatpush2.xpose.msra.mxu0 0.0
    %4617 = vmatprep.subr.mxu0 0.0
    %4618 = vmatpush2.xpose.msra.mxu0 0.0
    %4619 = vmatprep.subr.mxu0 0.0
    %4620 = vmatpush2.xpose.msra.mxu0 0.0
    %4621 = vmatprep.subr.mxu0 0.0
    %4622 = vmatpush2.xpose.msra.mxu0 0.0
    %4623 = vmatprep.subr.mxu0 0.0
    %4624 = vmatpush2.xpose.msra.mxu0 0.0
    %4625 = vmatprep.subr.mxu0 0.0
    %4626 = vmatpush2.xpose.msra.mxu0 0.0
    %4627 = vmatprep.mubr.f32.mxu0 0.0
    %4628 = vmatmul.mubr.f32.gmra.mxu0 %v4559
    %v4629 = vpop.f32.mrf.mxu0
    %v4630 = vadd.f32 0.0, %v4629
    %v4631 = vpop.f32.mrf.mxu0
    %4632 = vdwg.mxu0
    %4633 = vrot.lane.b32.xlu0 %v3705, 96
    %v4634 = vpop.permute.xlu0 %4633
    %4635 = vrot.lane.b32.xlu0 %v3705, 32
    %v4636 = vpop.permute.xlu0 %4635
    %v4637 = vsel %vm3720, %v4634, 0
    %v4639 = vsel %vm3720, %v4636, 0
    %4641 = vmatprep.subr.mxu0 0.0
    %4642 = vmatpush1.xpose.msra.mxu0 0.0
    %4643 = vmatprep.subr.mxu0 0.0
    %4644 = vmatpush1.xpose.msra.mxu0 0.0
    %4645 = vmatprep.subr.mxu0 0.0
    %4646 = vmatpush1.xpose.msra.mxu0 0.0
    %4647 = vmatprep.subr.mxu0 0.0
    %4648 = vmatpush1.xpose.msra.mxu0 0.0
    %4649 = vmatprep.subr.mxu0 0.0
    %4650 = vmatpush1.xpose.msra.mxu0 0.0
    %4651 = vmatprep.subr.mxu0 0.0
    %4652 = vmatpush1.xpose.msra.mxu0 0.0
    %4653 = vmatprep.subr.mxu0 0.0
    %4654 = vmatpush1.xpose.msra.mxu0 0.0
    %4655 = vmatprep.subr.mxu0 0.0
    %4656 = vmatpush1.xpose.msra.mxu0 0.0
    %4657 = vmatprep.subr.mxu0 0.0
    %4658 = vmatpush1.xpose.msra.mxu0 0.0
    %4659 = vmatprep.subr.mxu0 0.0
    %4660 = vmatpush1.xpose.msra.mxu0 0.0
    %4661 = vmatprep.subr.mxu0 0.0
    %4662 = vmatpush1.xpose.msra.mxu0 0.0
    %4663 = vmatprep.subr.mxu0 0.0
    %4664 = vmatpush1.xpose.msra.mxu0 0.0
    %4665 = vmatprep.subr.mxu0 0.0
    %4666 = vmatpush1.xpose.msra.mxu0 0.0
    %4667 = vmatprep.subr.mxu0 0.0
    %4668 = vmatpush1.xpose.msra.mxu0 0.0
    %4669 = vmatprep.subr.mxu0 0.0
    %4670 = vmatpush1.xpose.msra.mxu0 0.0
    %4671 = vmatprep.subr.mxu0 0.0
    %4672 = vmatpush1.xpose.msra.mxu0 %v4639
    %4673 = vmatprep.subr.mxu0 0.0
    %4674 = vmatpush2.xpose.msra.mxu0 0.0
    %4675 = vmatprep.subr.mxu0 0.0
    %4676 = vmatpush2.xpose.msra.mxu0 0.0
    %4677 = vmatprep.subr.mxu0 0.0
    %4678 = vmatpush2.xpose.msra.mxu0 0.0
    %4679 = vmatprep.subr.mxu0 0.0
    %4680 = vmatpush2.xpose.msra.mxu0 0.0
    %4681 = vmatprep.subr.mxu0 0.0
    %4682 = vmatpush2.xpose.msra.mxu0 0.0
    %4683 = vmatprep.subr.mxu0 0.0
    %4684 = vmatpush2.xpose.msra.mxu0 0.0
    %4685 = vmatprep.subr.mxu0 0.0
    %4686 = vmatpush2.xpose.msra.mxu0 0.0
    %4687 = vmatprep.subr.mxu0 0.0
    %4688 = vmatpush2.xpose.msra.mxu0 0.0
    %4689 = vmatprep.subr.mxu0 0.0
    %4690 = vmatpush2.xpose.msra.mxu0 0.0
    %4691 = vmatprep.subr.mxu0 0.0
    %4692 = vmatpush2.xpose.msra.mxu0 0.0
    %4693 = vmatprep.subr.mxu0 0.0
    %4694 = vmatpush2.xpose.msra.mxu0 0.0
    %4695 = vmatprep.subr.mxu0 0.0
    %4696 = vmatpush2.xpose.msra.mxu0 0.0
    %4697 = vmatprep.subr.mxu0 0.0
    %4698 = vmatpush2.xpose.msra.mxu0 0.0
    %4699 = vmatprep.subr.mxu0 0.0
    %4700 = vmatpush2.xpose.msra.mxu0 0.0
    %4701 = vmatprep.subr.mxu0 0.0
    %4702 = vmatpush2.xpose.msra.mxu0 0.0
    %4703 = vmatprep.subr.mxu0 0.0
    %4704 = vmatpush2.xpose.msra.mxu0 0.0
    %4705 = vmatprep.mubr.f32.mxu0 0.0
    %4706 = vmatmul.mubr.f32.gmra.mxu0 %v4637
    %v4707 = vpop.f32.mrf.mxu0
    %v4708 = vadd.f32 0.0, %v4707
    %v4709 = vpop.f32.mrf.mxu0
    %4710 = vdwg.mxu0
    %v4711 = vsel %vm653, %v4630, -inf
    %4712 = vmax.xlane.f32.xlu0 %v4711
    %v4713 = vpop.xlane.xlu0 %4712
    %v4714 = vsel %vm653, %v4708, -inf
    %4715 = vmax.xlane.f32.xlu0 %v4714
    %v4716 = vpop.xlane.xlu0 %4715
    %v4717 = vsub.f32 %v4630, %v4713
    %v4718 = vsub.f32 %v4708, %v4716
    %v4719 = vmul.f32 %v4717, 1.442695
    %v4720 = vpow.pop %v4719
    %v4721 = vmul.f32 %v4718, 1.442695
    %v4722 = vpow.pop %v4721
    %v4723 = vsel %vm653, %v4720, 0.0
    %4724 = vadd.xlane.f32.xlu0 %v4723
    %v4725 = vpop.xlane.xlu0 %4724
    %v4726 = vsel %vm653, %v4722, 0.0
    %4727 = vadd.xlane.f32.xlu0 %v4726
    %v4728 = vpop.xlane.xlu0 %4727
    %v4729 = vrcp.pop %v4725
    %v4730 = vrcp.pop %v4728
    %v4731 = vmul.f32 %v4720, %v4729
    %v4732 = vmul.f32 %v4722, %v4730
    %4733 = vrot.lane.b32.xlu0 %v3701, 96
    %v4734 = vpop.permute.xlu0 %4733
    %v4737 = vsel %vm653, %v4731, 0
    %4739 = vmatprep.subr.mxu0 0.0
    %4740 = vmatpush1.msra.mxu0 0.0
    %4741 = vmatprep.subr.mxu0 0.0
    %4742 = vmatpush1.msra.mxu0 0.0
    %4743 = vmatprep.subr.mxu0 0.0
    %4744 = vmatpush1.msra.mxu0 0.0
    %4745 = vmatprep.subr.mxu0 0.0
    %4746 = vmatpush1.msra.mxu0 0.0
    %4747 = vmatprep.subr.mxu0 0.0
    %4748 = vmatpush1.msra.mxu0 0.0
    %4749 = vmatprep.subr.mxu0 0.0
    %4750 = vmatpush1.msra.mxu0 0.0
    %4751 = vmatprep.subr.mxu0 0.0
    %4752 = vmatpush1.msra.mxu0 0.0
    %4753 = vmatprep.subr.mxu0 0.0
    %4754 = vmatpush1.msra.mxu0 0.0
    %4755 = vmatprep.subr.mxu0 0.0
    %4756 = vmatpush1.msra.mxu0 0.0
    %4757 = vmatprep.subr.mxu0 0.0
    %4758 = vmatpush1.msra.mxu0 0.0
    %4759 = vmatprep.subr.mxu0 0.0
    %4760 = vmatpush1.msra.mxu0 0.0
    %4761 = vmatprep.subr.mxu0 0.0
    %4762 = vmatpush1.msra.mxu0 0.0
    %4763 = vmatprep.subr.mxu0 0.0
    %4764 = vmatpush1.msra.mxu0 0.0
    %4765 = vmatprep.subr.mxu0 0.0
    %4766 = vmatpush1.msra.mxu0 0.0
    %4767 = vmatprep.subr.mxu0 0.0
    %4768 = vmatpush1.msra.mxu0 0.0
    %4769 = vmatprep.subr.mxu0 0.0
    %4770 = vmatpush1.msra.mxu0 %v4734
    %4771 = vmatprep.subr.mxu0 0.0
    %4772 = vmatpush2.msra.mxu0 0.0
    %4773 = vmatprep.subr.mxu0 0.0
    %4774 = vmatpush2.msra.mxu0 0.0
    %4775 = vmatprep.subr.mxu0 0.0
    %4776 = vmatpush2.msra.mxu0 0.0
    %4777 = vmatprep.subr.mxu0 0.0
    %4778 = vmatpush2.msra.mxu0 0.0
    %4779 = vmatprep.subr.mxu0 0.0
    %4780 = vmatpush2.msra.mxu0 0.0
    %4781 = vmatprep.subr.mxu0 0.0
    %4782 = vmatpush2.msra.mxu0 0.0
    %4783 = vmatprep.subr.mxu0 0.0
    %4784 = vmatpush2.msra.mxu0 0.0
    %4785 = vmatprep.subr.mxu0 0.0
    %4786 = vmatpush2.msra.mxu0 0.0
    %4787 = vmatprep.subr.mxu0 0.0
    %4788 = vmatpush2.msra.mxu0 0.0
    %4789 = vmatprep.subr.mxu0 0.0
    %4790 = vmatpush2.msra.mxu0 0.0
    %4791 = vmatprep.subr.mxu0 0.0
    %4792 = vmatpush2.msra.mxu0 0.0
    %4793 = vmatprep.subr.mxu0 0.0
    %4794 = vmatpush2.msra.mxu0 0.0
    %4795 = vmatprep.subr.mxu0 0.0
    %4796 = vmatpush2.msra.mxu0 0.0
    %4797 = vmatprep.subr.mxu0 0.0
    %4798 = vmatpush2.msra.mxu0 0.0
    %4799 = vmatprep.subr.mxu0 0.0
    %4800 = vmatpush2.msra.mxu0 0.0
    %4801 = vmatprep.subr.mxu0 0.0
    %4802 = vmatpush2.msra.mxu0 0.0
    %4803 = vmatprep.mubr.f32.mxu0 0.0
    %4804 = vmatmul.mubr.f32.gmra.mxu0 %v4737
    %v4805 = vpop.f32.mrf.mxu0
    %v4806 = vadd.f32 0.0, %v4805
    %v4807 = vpop.f32.mrf.mxu0
    %4808 = vdwg.mxu0
    %4809 = vrot.lane.b32.xlu0 %v3707, 96
    %v4810 = vpop.permute.xlu0 %4809
    %v4813 = vsel %vm653, %v4732, 0
    %4815 = vmatprep.subr.mxu0 0.0
    %4816 = vmatpush1.msra.mxu0 0.0
    %4817 = vmatprep.subr.mxu0 0.0
    %4818 = vmatpush1.msra.mxu0 0.0
    %4819 = vmatprep.subr.mxu0 0.0
    %4820 = vmatpush1.msra.mxu0 0.0
    %4821 = vmatprep.subr.mxu0 0.0
    %4822 = vmatpush1.msra.mxu0 0.0
    %4823 = vmatprep.subr.mxu0 0.0
    %4824 = vmatpush1.msra.mxu0 0.0
    %4825 = vmatprep.subr.mxu0 0.0
    %4826 = vmatpush1.msra.mxu0 0.0
    %4827 = vmatprep.subr.mxu0 0.0
    %4828 = vmatpush1.msra.mxu0 0.0
    %4829 = vmatprep.subr.mxu0 0.0
    %4830 = vmatpush1.msra.mxu0 0.0
    %4831 = vmatprep.subr.mxu0 0.0
    %4832 = vmatpush1.msra.mxu0 0.0
    %4833 = vmatprep.subr.mxu0 0.0
    %4834 = vmatpush1.msra.mxu0 0.0
    %4835 = vmatprep.subr.mxu0 0.0
    %4836 = vmatpush1.msra.mxu0 0.0
    %4837 = vmatprep.subr.mxu0 0.0
    %4838 = vmatpush1.msra.mxu0 0.0
    %4839 = vmatprep.subr.mxu0 0.0
    %4840 = vmatpush1.msra.mxu0 0.0
    %4841 = vmatprep.subr.mxu0 0.0
    %4842 = vmatpush1.msra.mxu0 0.0
    %4843 = vmatprep.subr.mxu0 0.0
    %4844 = vmatpush1.msra.mxu0 0.0
    %4845 = vmatprep.subr.mxu0 0.0
    %4846 = vmatpush1.msra.mxu0 %v4810
    %4847 = vmatprep.subr.mxu0 0.0
    %4848 = vmatpush2.msra.mxu0 0.0
    %4849 = vmatprep.subr.mxu0 0.0
    %4850 = vmatpush2.msra.mxu0 0.0
    %4851 = vmatprep.subr.mxu0 0.0
    %4852 = vmatpush2.msra.mxu0 0.0
    %4853 = vmatprep.subr.mxu0 0.0
    %4854 = vmatpush2.msra.mxu0 0.0
    %4855 = vmatprep.subr.mxu0 0.0
    %4856 = vmatpush2.msra.mxu0 0.0
    %4857 = vmatprep.subr.mxu0 0.0
    %4858 = vmatpush2.msra.mxu0 0.0
    %4859 = vmatprep.subr.mxu0 0.0
    %4860 = vmatpush2.msra.mxu0 0.0
    %4861 = vmatprep.subr.mxu0 0.0
    %4862 = vmatpush2.msra.mxu0 0.0
    %4863 = vmatprep.subr.mxu0 0.0
    %4864 = vmatpush2.msra.mxu0 0.0
    %4865 = vmatprep.subr.mxu0 0.0
    %4866 = vmatpush2.msra.mxu0 0.0
    %4867 = vmatprep.subr.mxu0 0.0
    %4868 = vmatpush2.msra.mxu0 0.0
    %4869 = vmatprep.subr.mxu0 0.0
    %4870 = vmatpush2.msra.mxu0 0.0
    %4871 = vmatprep.subr.mxu0 0.0
    %4872 = vmatpush2.msra.mxu0 0.0
    %4873 = vmatprep.subr.mxu0 0.0
    %4874 = vmatpush2.msra.mxu0 0.0
    %4875 = vmatprep.subr.mxu0 0.0
    %4876 = vmatpush2.msra.mxu0 0.0
    %4877 = vmatprep.subr.mxu0 0.0
    %4878 = vmatpush2.msra.mxu0 0.0
    %4879 = vmatprep.mubr.f32.mxu0 0.0
    %4880 = vmatmul.mubr.f32.gmra.mxu0 %v4813
    %v4881 = vpop.f32.mrf.mxu0
    %v4882 = vadd.f32 0.0, %v4881
    %v4883 = vpop.f32.mrf.mxu0
    %4884 = vdwg.mxu0
    %v4885 = vsel %vm3720, %v4806, 0.0
    %v4886 = vrot.slane %v4885, 4
    %v4887 = vadd.f32 %v4885, %v4886
    %v4888 = vrot.slane %v4887, 2
    %v4889 = vadd.f32 %v4887, %v4888
    %v4890 = vrot.slane %v4889, 1
    %v4891 = vadd.f32 %v4889, %v4890
    %v4892 = vsel %vm3720, %v4882, 0.0
    %v4893 = vrot.slane %v4892, 4
    %v4894 = vadd.f32 %v4892, %v4893
    %v4895 = vrot.slane %v4894, 2
    %v4896 = vadd.f32 %v4894, %v4895
    %v4897 = vrot.slane %v4896, 1
    %v4898 = vadd.f32 %v4896, %v4897
    %v4899 = vmul.f32 %v4891, %v4054
    %v4900 = vmul.f32 %v4898, %v4054
    %v4903 = vsel %vm3566, %v4900, %v4899
    %v4904 = vsel %vm3720, %v4903, 0
    %4906 = vmatprep.subr.mxu0 0.0
    %4907 = vmatpush1.msra.mxu0 0.0
    %4908 = vmatprep.subr.mxu0 0.0
    %4909 = vmatpush1.msra.mxu0 0.0
    %4910 = vmatprep.subr.mxu0 0.0
    %4911 = vmatpush1.msra.mxu0 0.0
    %4912 = vmatprep.subr.mxu0 0.0
    %4913 = vmatpush1.msra.mxu0 0.0
    %4914 = vmatprep.subr.mxu0 0.0
    %4915 = vmatpush1.msra.mxu0 0.0
    %4916 = vmatprep.subr.mxu0 0.0
    %4917 = vmatpush1.msra.mxu0 0.0
    %4918 = vmatprep.subr.mxu0 0.0
    %4919 = vmatpush1.msra.mxu0 0.0
    %4920 = vmatprep.subr.mxu0 0.0
    %4921 = vmatpush1.msra.mxu0 0.0
    %4922 = vmatprep.subr.mxu0 0.0
    %4923 = vmatpush1.msra.mxu0 0.0
    %4924 = vmatprep.subr.mxu0 0.0
    %4925 = vmatpush1.msra.mxu0 0.0
    %4926 = vmatprep.subr.mxu0 0.0
    %4927 = vmatpush1.msra.mxu0 0.0
    %4928 = vmatprep.subr.mxu0 0.0
    %4929 = vmatpush1.msra.mxu0 0.0
    %4930 = vmatprep.subr.mxu0 0.0
    %4931 = vmatpush1.msra.mxu0 0.0
    %4932 = vmatprep.subr.mxu0 0.0
    %4933 = vmatpush1.msra.mxu0 0.0
    %4934 = vmatprep.subr.mxu0 0.0
    %4935 = vmatpush1.msra.mxu0 %v3714
    %4936 = vmatprep.subr.mxu0 0.0
    %4937 = vmatpush1.msra.mxu0 %v3713
    %4938 = vmatprep.subr.mxu0 0.0
    %4939 = vmatpush2.msra.mxu0 0.0
    %4940 = vmatprep.subr.mxu0 0.0
    %4941 = vmatpush2.msra.mxu0 0.0
    %4942 = vmatprep.subr.mxu0 0.0
    %4943 = vmatpush2.msra.mxu0 0.0
    %4944 = vmatprep.subr.mxu0 0.0
    %4945 = vmatpush2.msra.mxu0 0.0
    %4946 = vmatprep.subr.mxu0 0.0
    %4947 = vmatpush2.msra.mxu0 0.0
    %4948 = vmatprep.subr.mxu0 0.0
    %4949 = vmatpush2.msra.mxu0 0.0
    %4950 = vmatprep.subr.mxu0 0.0
    %4951 = vmatpush2.msra.mxu0 0.0
    %4952 = vmatprep.subr.mxu0 0.0
    %4953 = vmatpush2.msra.mxu0 0.0
    %4954 = vmatprep.subr.mxu0 0.0
    %4955 = vmatpush2.msra.mxu0 0.0
    %4956 = vmatprep.subr.mxu0 0.0
    %4957 = vmatpush2.msra.mxu0 0.0
    %4958 = vmatprep.subr.mxu0 0.0
    %4959 = vmatpush2.msra.mxu0 0.0
    %4960 = vmatprep.subr.mxu0 0.0
    %4961 = vmatpush2.msra.mxu0 0.0
    %4962 = vmatprep.subr.mxu0 0.0
    %4963 = vmatpush2.msra.mxu0 0.0
    %4964 = vmatprep.subr.mxu0 0.0
    %4965 = vmatpush2.msra.mxu0 0.0
    %4966 = vmatprep.subr.mxu0 0.0
    %4967 = vmatpush2.msra.mxu0 0.0
    %4968 = vmatprep.subr.mxu0 0.0
    %4969 = vmatpush2.msra.mxu0 0.0
    %4970 = vmatprep.mubr.f32.mxu0 0.0
    %4971 = vmatmul.mubr.f32.gmra.mxu0 %v4904
    %v4972 = vpop.f32.mrf.mxu0
    %v4973 = vadd.f32 0.0, %v4972
    %v4974 = vpop.f32.mrf.mxu0
    %4975 = vdwg.mxu0
    %v4976 = vadd.f32 %v4552, %v4973
    %4977 = vrot.lane.b32.xlu0 %v3699, 80
    %v4978 = vpop.permute.xlu0 %4977
    %4979 = vrot.lane.b32.xlu0 %v3699, 16
    %v4980 = vpop.permute.xlu0 %4979
    %v4981 = vsel %vm3720, %v4978, 0
    %v4983 = vsel %vm3720, %v4980, 0
    %4985 = vmatprep.subr.mxu0 0.0
    %4986 = vmatpush1.xpose.msra.mxu0 0.0
    %4987 = vmatprep.subr.mxu0 0.0
    %4988 = vmatpush1.xpose.msra.mxu0 0.0
    %4989 = vmatprep.subr.mxu0 0.0
    %4990 = vmatpush1.xpose.msra.mxu0 0.0
    %4991 = vmatprep.subr.mxu0 0.0
    %4992 = vmatpush1.xpose.msra.mxu0 0.0
    %4993 = vmatprep.subr.mxu0 0.0
    %4994 = vmatpush1.xpose.msra.mxu0 0.0
    %4995 = vmatprep.subr.mxu0 0.0
    %4996 = vmatpush1.xpose.msra.mxu0 0.0
    %4997 = vmatprep.subr.mxu0 0.0
    %4998 = vmatpush1.xpose.msra.mxu0 0.0
    %4999 = vmatprep.subr.mxu0 0.0
    %5000 = vmatpush1.xpose.msra.mxu0 0.0
    %5001 = vmatprep.subr.mxu0 0.0
    %5002 = vmatpush1.xpose.msra.mxu0 0.0
    %5003 = vmatprep.subr.mxu0 0.0
    %5004 = vmatpush1.xpose.msra.mxu0 0.0
    %5005 = vmatprep.subr.mxu0 0.0
    %5006 = vmatpush1.xpose.msra.mxu0 0.0
    %5007 = vmatprep.subr.mxu0 0.0
    %5008 = vmatpush1.xpose.msra.mxu0 0.0
    %5009 = vmatprep.subr.mxu0 0.0
    %5010 = vmatpush1.xpose.msra.mxu0 0.0
    %5011 = vmatprep.subr.mxu0 0.0
    %5012 = vmatpush1.xpose.msra.mxu0 0.0
    %5013 = vmatprep.subr.mxu0 0.0
    %5014 = vmatpush1.xpose.msra.mxu0 0.0
    %5015 = vmatprep.subr.mxu0 0.0
    %5016 = vmatpush1.xpose.msra.mxu0 %v4983
    %5017 = vmatprep.subr.mxu0 0.0
    %5018 = vmatpush2.xpose.msra.mxu0 0.0
    %5019 = vmatprep.subr.mxu0 0.0
    %5020 = vmatpush2.xpose.msra.mxu0 0.0
    %5021 = vmatprep.subr.mxu0 0.0
    %5022 = vmatpush2.xpose.msra.mxu0 0.0
    %5023 = vmatprep.subr.mxu0 0.0
    %5024 = vmatpush2.xpose.msra.mxu0 0.0
    %5025 = vmatprep.subr.mxu0 0.0
    %5026 = vmatpush2.xpose.msra.mxu0 0.0
    %5027 = vmatprep.subr.mxu0 0.0
    %5028 = vmatpush2.xpose.msra.mxu0 0.0
    %5029 = vmatprep.subr.mxu0 0.0
    %5030 = vmatpush2.xpose.msra.mxu0 0.0
    %5031 = vmatprep.subr.mxu0 0.0
    %5032 = vmatpush2.xpose.msra.mxu0 0.0
    %5033 = vmatprep.subr.mxu0 0.0
    %5034 = vmatpush2.xpose.msra.mxu0 0.0
    %5035 = vmatprep.subr.mxu0 0.0
    %5036 = vmatpush2.xpose.msra.mxu0 0.0
    %5037 = vmatprep.subr.mxu0 0.0
    %5038 = vmatpush2.xpose.msra.mxu0 0.0
    %5039 = vmatprep.subr.mxu0 0.0
    %5040 = vmatpush2.xpose.msra.mxu0 0.0
    %5041 = vmatprep.subr.mxu0 0.0
    %5042 = vmatpush2.xpose.msra.mxu0 0.0
    %5043 = vmatprep.subr.mxu0 0.0
    %5044 = vmatpush2.xpose.msra.mxu0 0.0
    %5045 = vmatprep.subr.mxu0 0.0
    %5046 = vmatpush2.xpose.msra.mxu0 0.0
    %5047 = vmatprep.subr.mxu0 0.0
    %5048 = vmatpush2.xpose.msra.mxu0 0.0
    %5049 = vmatprep.mubr.f32.mxu0 0.0
    %5050 = vmatmul.mubr.f32.gmra.mxu0 %v4981
    %v5051 = vpop.f32.mrf.mxu0
    %v5052 = vadd.f32 0.0, %v5051
    %v5053 = vpop.f32.mrf.mxu0
    %5054 = vdwg.mxu0
    %5055 = vrot.lane.b32.xlu0 %v3705, 80
    %v5056 = vpop.permute.xlu0 %5055
    %5057 = vrot.lane.b32.xlu0 %v3705, 16
    %v5058 = vpop.permute.xlu0 %5057
    %v5059 = vsel %vm3720, %v5056, 0
    %v5061 = vsel %vm3720, %v5058, 0
    %5063 = vmatprep.subr.mxu0 0.0
    %5064 = vmatpush1.xpose.msra.mxu0 0.0
    %5065 = vmatprep.subr.mxu0 0.0
    %5066 = vmatpush1.xpose.msra.mxu0 0.0
    %5067 = vmatprep.subr.mxu0 0.0
    %5068 = vmatpush1.xpose.msra.mxu0 0.0
    %5069 = vmatprep.subr.mxu0 0.0
    %5070 = vmatpush1.xpose.msra.mxu0 0.0
    %5071 = vmatprep.subr.mxu0 0.0
    %5072 = vmatpush1.xpose.msra.mxu0 0.0
    %5073 = vmatprep.subr.mxu0 0.0
    %5074 = vmatpush1.xpose.msra.mxu0 0.0
    %5075 = vmatprep.subr.mxu0 0.0
    %5076 = vmatpush1.xpose.msra.mxu0 0.0
    %5077 = vmatprep.subr.mxu0 0.0
    %5078 = vmatpush1.xpose.msra.mxu0 0.0
    %5079 = vmatprep.subr.mxu0 0.0
    %5080 = vmatpush1.xpose.msra.mxu0 0.0
    %5081 = vmatprep.subr.mxu0 0.0
    %5082 = vmatpush1.xpose.msra.mxu0 0.0
    %5083 = vmatprep.subr.mxu0 0.0
    %5084 = vmatpush1.xpose.msra.mxu0 0.0
    %5085 = vmatprep.subr.mxu0 0.0
    %5086 = vmatpush1.xpose.msra.mxu0 0.0
    %5087 = vmatprep.subr.mxu0 0.0
    %5088 = vmatpush1.xpose.msra.mxu0 0.0
    %5089 = vmatprep.subr.mxu0 0.0
    %5090 = vmatpush1.xpose.msra.mxu0 0.0
    %5091 = vmatprep.subr.mxu0 0.0
    %5092 = vmatpush1.xpose.msra.mxu0 0.0
    %5093 = vmatprep.subr.mxu0 0.0
    %5094 = vmatpush1.xpose.msra.mxu0 %v5061
    %5095 = vmatprep.subr.mxu0 0.0
    %5096 = vmatpush2.xpose.msra.mxu0 0.0
    %5097 = vmatprep.subr.mxu0 0.0
    %5098 = vmatpush2.xpose.msra.mxu0 0.0
    %5099 = vmatprep.subr.mxu0 0.0
    %5100 = vmatpush2.xpose.msra.mxu0 0.0
    %5101 = vmatprep.subr.mxu0 0.0
    %5102 = vmatpush2.xpose.msra.mxu0 0.0
    %5103 = vmatprep.subr.mxu0 0.0
    %5104 = vmatpush2.xpose.msra.mxu0 0.0
    %5105 = vmatprep.subr.mxu0 0.0
    %5106 = vmatpush2.xpose.msra.mxu0 0.0
    %5107 = vmatprep.subr.mxu0 0.0
    %5108 = vmatpush2.xpose.msra.mxu0 0.0
    %5109 = vmatprep.subr.mxu0 0.0
    %5110 = vmatpush2.xpose.msra.mxu0 0.0
    %5111 = vmatprep.subr.mxu0 0.0
    %5112 = vmatpush2.xpose.msra.mxu0 0.0
    %5113 = vmatprep.subr.mxu0 0.0
    %5114 = vmatpush2.xpose.msra.mxu0 0.0
    %5115 = vmatprep.subr.mxu0 0.0
    %5116 = vmatpush2.xpose.msra.mxu0 0.0
    %5117 = vmatprep.subr.mxu0 0.0
    %5118 = vmatpush2.xpose.msra.mxu0 0.0
    %5119 = vmatprep.subr.mxu0 0.0
    %5120 = vmatpush2.xpose.msra.mxu0 0.0
    %5121 = vmatprep.subr.mxu0 0.0
    %5122 = vmatpush2.xpose.msra.mxu0 0.0
    %5123 = vmatprep.subr.mxu0 0.0
    %5124 = vmatpush2.xpose.msra.mxu0 0.0
    %5125 = vmatprep.subr.mxu0 0.0
    %5126 = vmatpush2.xpose.msra.mxu0 0.0
    %5127 = vmatprep.mubr.f32.mxu0 0.0
    %5128 = vmatmul.mubr.f32.gmra.mxu0 %v5059
    %v5129 = vpop.f32.mrf.mxu0
    %v5130 = vadd.f32 0.0, %v5129
    %v5131 = vpop.f32.mrf.mxu0
    %5132 = vdwg.mxu0
    %v5133 = vsel %vm653, %v5052, -inf
    %5134 = vmax.xlane.f32.xlu0 %v5133
    %v5135 = vpop.xlane.xlu0 %5134
    %v5136 = vsel %vm653, %v5130, -inf
    %5137 = vmax.xlane.f32.xlu0 %v5136
    %v5138 = vpop.xlane.xlu0 %5137
    %v5139 = vsub.f32 %v5052, %v5135
    %v5140 = vsub.f32 %v5130, %v5138
    %v5141 = vmul.f32 %v5139, 1.442695
    %v5142 = vpow.pop %v5141
    %v5143 = vmul.f32 %v5140, 1.442695
    %v5144 = vpow.pop %v5143
    %v5145 = vsel %vm653, %v5142, 0.0
    %5146 = vadd.xlane.f32.xlu0 %v5145
    %v5147 = vpop.xlane.xlu0 %5146
    %v5148 = vsel %vm653, %v5144, 0.0
    %5149 = vadd.xlane.f32.xlu0 %v5148
    %v5150 = vpop.xlane.xlu0 %5149
    %v5151 = vrcp.pop %v5147
    %v5152 = vrcp.pop %v5150
    %v5153 = vmul.f32 %v5142, %v5151
    %v5154 = vmul.f32 %v5144, %v5152
    %5155 = vrot.lane.b32.xlu0 %v3701, 80
    %v5156 = vpop.permute.xlu0 %5155
    %v5159 = vsel %vm653, %v5153, 0
    %5161 = vmatprep.subr.mxu0 0.0
    %5162 = vmatpush1.msra.mxu0 0.0
    %5163 = vmatprep.subr.mxu0 0.0
    %5164 = vmatpush1.msra.mxu0 0.0
    %5165 = vmatprep.subr.mxu0 0.0
    %5166 = vmatpush1.msra.mxu0 0.0
    %5167 = vmatprep.subr.mxu0 0.0
    %5168 = vmatpush1.msra.mxu0 0.0
    %5169 = vmatprep.subr.mxu0 0.0
    %5170 = vmatpush1.msra.mxu0 0.0
    %5171 = vmatprep.subr.mxu0 0.0
    %5172 = vmatpush1.msra.mxu0 0.0
    %5173 = vmatprep.subr.mxu0 0.0
    %5174 = vmatpush1.msra.mxu0 0.0
    %5175 = vmatprep.subr.mxu0 0.0
    %5176 = vmatpush1.msra.mxu0 0.0
    %5177 = vmatprep.subr.mxu0 0.0
    %5178 = vmatpush1.msra.mxu0 0.0
    %5179 = vmatprep.subr.mxu0 0.0
    %5180 = vmatpush1.msra.mxu0 0.0
    %5181 = vmatprep.subr.mxu0 0.0
    %5182 = vmatpush1.msra.mxu0 0.0
    %5183 = vmatprep.subr.mxu0 0.0
    %5184 = vmatpush1.msra.mxu0 0.0
    %5185 = vmatprep.subr.mxu0 0.0
    %5186 = vmatpush1.msra.mxu0 0.0
    %5187 = vmatprep.subr.mxu0 0.0
    %5188 = vmatpush1.msra.mxu0 0.0
    %5189 = vmatprep.subr.mxu0 0.0
    %5190 = vmatpush1.msra.mxu0 0.0
    %5191 = vmatprep.subr.mxu0 0.0
    %5192 = vmatpush1.msra.mxu0 %v5156
    %5193 = vmatprep.subr.mxu0 0.0
    %5194 = vmatpush2.msra.mxu0 0.0
    %5195 = vmatprep.subr.mxu0 0.0
    %5196 = vmatpush2.msra.mxu0 0.0
    %5197 = vmatprep.subr.mxu0 0.0
    %5198 = vmatpush2.msra.mxu0 0.0
    %5199 = vmatprep.subr.mxu0 0.0
    %5200 = vmatpush2.msra.mxu0 0.0
    %5201 = vmatprep.subr.mxu0 0.0
    %5202 = vmatpush2.msra.mxu0 0.0
    %5203 = vmatprep.subr.mxu0 0.0
    %5204 = vmatpush2.msra.mxu0 0.0
    %5205 = vmatprep.subr.mxu0 0.0
    %5206 = vmatpush2.msra.mxu0 0.0
    %5207 = vmatprep.subr.mxu0 0.0
    %5208 = vmatpush2.msra.mxu0 0.0
    %5209 = vmatprep.subr.mxu0 0.0
    %5210 = vmatpush2.msra.mxu0 0.0
    %5211 = vmatprep.subr.mxu0 0.0
    %5212 = vmatpush2.msra.mxu0 0.0
    %5213 = vmatprep.subr.mxu0 0.0
    %5214 = vmatpush2.msra.mxu0 0.0
    %5215 = vmatprep.subr.mxu0 0.0
    %5216 = vmatpush2.msra.mxu0 0.0
    %5217 = vmatprep.subr.mxu0 0.0
    %5218 = vmatpush2.msra.mxu0 0.0
    %5219 = vmatprep.subr.mxu0 0.0
    %5220 = vmatpush2.msra.mxu0 0.0
    %5221 = vmatprep.subr.mxu0 0.0
    %5222 = vmatpush2.msra.mxu0 0.0
    %5223 = vmatprep.subr.mxu0 0.0
    %5224 = vmatpush2.msra.mxu0 0.0
    %5225 = vmatprep.mubr.f32.mxu0 0.0
    %5226 = vmatmul.mubr.f32.gmra.mxu0 %v5159
    %v5227 = vpop.f32.mrf.mxu0
    %v5228 = vadd.f32 0.0, %v5227
    %v5229 = vpop.f32.mrf.mxu0
    %5230 = vdwg.mxu0
    %5231 = vrot.lane.b32.xlu0 %v3707, 80
    %v5232 = vpop.permute.xlu0 %5231
    %v5235 = vsel %vm653, %v5154, 0
    %5237 = vmatprep.subr.mxu0 0.0
    %5238 = vmatpush1.msra.mxu0 0.0
    %5239 = vmatprep.subr.mxu0 0.0
    %5240 = vmatpush1.msra.mxu0 0.0
    %5241 = vmatprep.subr.mxu0 0.0
    %5242 = vmatpush1.msra.mxu0 0.0
    %5243 = vmatprep.subr.mxu0 0.0
    %5244 = vmatpush1.msra.mxu0 0.0
    %5245 = vmatprep.subr.mxu0 0.0
    %5246 = vmatpush1.msra.mxu0 0.0
    %5247 = vmatprep.subr.mxu0 0.0
    %5248 = vmatpush1.msra.mxu0 0.0
    %5249 = vmatprep.subr.mxu0 0.0
    %5250 = vmatpush1.msra.mxu0 0.0
    %5251 = vmatprep.subr.mxu0 0.0
    %5252 = vmatpush1.msra.mxu0 0.0
    %5253 = vmatprep.subr.mxu0 0.0
    %5254 = vmatpush1.msra.mxu0 0.0
    %5255 = vmatprep.subr.mxu0 0.0
    %5256 = vmatpush1.msra.mxu0 0.0
    %5257 = vmatprep.subr.mxu0 0.0
    %5258 = vmatpush1.msra.mxu0 0.0
    %5259 = vmatprep.subr.mxu0 0.0
    %5260 = vmatpush1.msra.mxu0 0.0
    %5261 = vmatprep.subr.mxu0 0.0
    %5262 = vmatpush1.msra.mxu0 0.0
    %5263 = vmatprep.subr.mxu0 0.0
    %5264 = vmatpush1.msra.mxu0 0.0
    %5265 = vmatprep.subr.mxu0 0.0
    %5266 = vmatpush1.msra.mxu0 0.0
    %5267 = vmatprep.subr.mxu0 0.0
    %5268 = vmatpush1.msra.mxu0 %v5232
    %5269 = vmatprep.subr.mxu0 0.0
    %5270 = vmatpush2.msra.mxu0 0.0
    %5271 = vmatprep.subr.mxu0 0.0
    %5272 = vmatpush2.msra.mxu0 0.0
    %5273 = vmatprep.subr.mxu0 0.0
    %5274 = vmatpush2.msra.mxu0 0.0
    %5275 = vmatprep.subr.mxu0 0.0
    %5276 = vmatpush2.msra.mxu0 0.0
    %5277 = vmatprep.subr.mxu0 0.0
    %5278 = vmatpush2.msra.mxu0 0.0
    %5279 = vmatprep.subr.mxu0 0.0
    %5280 = vmatpush2.msra.mxu0 0.0
    %5281 = vmatprep.subr.mxu0 0.0
    %5282 = vmatpush2.msra.mxu0 0.0
    %5283 = vmatprep.subr.mxu0 0.0
    %5284 = vmatpush2.msra.mxu0 0.0
    %5285 = vmatprep.subr.mxu0 0.0
    %5286 = vmatpush2.msra.mxu0 0.0
    %5287 = vmatprep.subr.mxu0 0.0
    %5288 = vmatpush2.msra.mxu0 0.0
    %5289 = vmatprep.subr.mxu0 0.0
    %5290 = vmatpush2.msra.mxu0 0.0
    %5291 = vmatprep.subr.mxu0 0.0
    %5292 = vmatpush2.msra.mxu0 0.0
    %5293 = vmatprep.subr.mxu0 0.0
    %5294 = vmatpush2.msra.mxu0 0.0
    %5295 = vmatprep.subr.mxu0 0.0
    %5296 = vmatpush2.msra.mxu0 0.0
    %5297 = vmatprep.subr.mxu0 0.0
    %5298 = vmatpush2.msra.mxu0 0.0
    %5299 = vmatprep.subr.mxu0 0.0
    %5300 = vmatpush2.msra.mxu0 0.0
    %5301 = vmatprep.mubr.f32.mxu0 0.0
    %5302 = vmatmul.mubr.f32.gmra.mxu0 %v5235
    %v5303 = vpop.f32.mrf.mxu0
    %v5304 = vadd.f32 0.0, %v5303
    %v5305 = vpop.f32.mrf.mxu0
    %5306 = vdwg.mxu0
    %v5307 = vsel %vm3720, %v5228, 0.0
    %v5308 = vrot.slane %v5307, 4
    %v5309 = vadd.f32 %v5307, %v5308
    %v5310 = vrot.slane %v5309, 2
    %v5311 = vadd.f32 %v5309, %v5310
    %v5312 = vrot.slane %v5311, 1
    %v5313 = vadd.f32 %v5311, %v5312
    %v5314 = vsel %vm3720, %v5304, 0.0
    %v5315 = vrot.slane %v5314, 4
    %v5316 = vadd.f32 %v5314, %v5315
    %v5317 = vrot.slane %v5316, 2
    %v5318 = vadd.f32 %v5316, %v5317
    %v5319 = vrot.slane %v5318, 1
    %v5320 = vadd.f32 %v5318, %v5319
    %v5321 = vmul.f32 %v5313, %v4054
    %v5322 = vmul.f32 %v5320, %v4054
    %v5325 = vsel %vm3566, %v5322, %v5321
    %v5326 = vsel %vm3720, %v5325, 0
    %5328 = vmatprep.subr.mxu0 0.0
    %5329 = vmatpush1.msra.mxu0 0.0
    %5330 = vmatprep.subr.mxu0 0.0
    %5331 = vmatpush1.msra.mxu0 0.0
    %5332 = vmatprep.subr.mxu0 0.0
    %5333 = vmatpush1.msra.mxu0 0.0
    %5334 = vmatprep.subr.mxu0 0.0
    %5335 = vmatpush1.msra.mxu0 0.0
    %5336 = vmatprep.subr.mxu0 0.0
    %5337 = vmatpush1.msra.mxu0 0.0
    %5338 = vmatprep.subr.mxu0 0.0
    %5339 = vmatpush1.msra.mxu0 0.0
    %5340 = vmatprep.subr.mxu0 0.0
    %5341 = vmatpush1.msra.mxu0 0.0
    %5342 = vmatprep.subr.mxu0 0.0
    %5343 = vmatpush1.msra.mxu0 0.0
    %5344 = vmatprep.subr.mxu0 0.0
    %5345 = vmatpush1.msra.mxu0 0.0
    %5346 = vmatprep.subr.mxu0 0.0
    %5347 = vmatpush1.msra.mxu0 0.0
    %5348 = vmatprep.subr.mxu0 0.0
    %5349 = vmatpush1.msra.mxu0 0.0
    %5350 = vmatprep.subr.mxu0 0.0
    %5351 = vmatpush1.msra.mxu0 0.0
    %5352 = vmatprep.subr.mxu0 0.0
    %5353 = vmatpush1.msra.mxu0 0.0
    %5354 = vmatprep.subr.mxu0 0.0
    %5355 = vmatpush1.msra.mxu0 0.0
    %5356 = vmatprep.subr.mxu0 0.0
    %5357 = vmatpush1.msra.mxu0 %v3716
    %5358 = vmatprep.subr.mxu0 0.0
    %5359 = vmatpush1.msra.mxu0 %v3715
    %5360 = vmatprep.subr.mxu0 0.0
    %5361 = vmatpush2.msra.mxu0 0.0
    %5362 = vmatprep.subr.mxu0 0.0
    %5363 = vmatpush2.msra.mxu0 0.0
    %5364 = vmatprep.subr.mxu0 0.0
    %5365 = vmatpush2.msra.mxu0 0.0
    %5366 = vmatprep.subr.mxu0 0.0
    %5367 = vmatpush2.msra.mxu0 0.0
    %5368 = vmatprep.subr.mxu0 0.0
    %5369 = vmatpush2.msra.mxu0 0.0
    %5370 = vmatprep.subr.mxu0 0.0
    %5371 = vmatpush2.msra.mxu0 0.0
    %5372 = vmatprep.subr.mxu0 0.0
    %5373 = vmatpush2.msra.mxu0 0.0
    %5374 = vmatprep.subr.mxu0 0.0
    %5375 = vmatpush2.msra.mxu0 0.0
    %5376 = vmatprep.subr.mxu0 0.0
    %5377 = vmatpush2.msra.mxu0 0.0
    %5378 = vmatprep.subr.mxu0 0.0
    %5379 = vmatpush2.msra.mxu0 0.0
    %5380 = vmatprep.subr.mxu0 0.0
    %5381 = vmatpush2.msra.mxu0 0.0
    %5382 = vmatprep.subr.mxu0 0.0
    %5383 = vmatpush2.msra.mxu0 0.0
    %5384 = vmatprep.subr.mxu0 0.0
    %5385 = vmatpush2.msra.mxu0 0.0
    %5386 = vmatprep.subr.mxu0 0.0
    %5387 = vmatpush2.msra.mxu0 0.0
    %5388 = vmatprep.subr.mxu0 0.0
    %5389 = vmatpush2.msra.mxu0 0.0
    %5390 = vmatprep.subr.mxu0 0.0
    %5391 = vmatpush2.msra.mxu0 0.0
    %5392 = vmatprep.mubr.f32.mxu0 0.0
    %5393 = vmatmul.mubr.f32.gmra.mxu0 %v5326
    %v5394 = vpop.f32.mrf.mxu0
    %v5395 = vadd.f32 0.0, %v5394
    %v5396 = vpop.f32.mrf.mxu0
    %5397 = vdwg.mxu0
    %v5398 = vadd.f32 %v4976, %v5395
    %v5399 = vld [vmem:[#allocation16] sm:$0x1]
    %v5401 = vlaneseq
    %v5402 = vshrl.u32 %v5401, 7
    %v5403 = vsub.s32 0, %v5402
    %v5404 = vrot.slane %v5399, %v5403
    %v5406 = vadd.f32 %v5398, %v5404
    %v5407 = vld [vmem:[%s3] sm:$0x3]
    %v5408 = vld [vmem:[#allocation10] sm:$0xff]
    %v5409 = vld [vmem:[#allocation11] sm:$0x1]
    %v5411 = vlaneseq
    %v5412 = vshrl.u32 %v5411, 7
    %v5413 = vsub.s32 0, %v5412
    %v5414 = vrot.slane %v5409, %v5413
    %v5417 = vsel %vm653, %v5407, 0
    %5419 = vmatprep.subr.mxu0 0.0
    %5420 = vmatpush1.msra.mxu0 0.0
    %5421 = vmatprep.subr.mxu0 0.0
    %5422 = vmatpush1.msra.mxu0 0.0
    %5423 = vmatprep.subr.mxu0 0.0
    %5424 = vmatpush1.msra.mxu0 0.0
    %5425 = vmatprep.subr.mxu0 0.0
    %5426 = vmatpush1.msra.mxu0 0.0
    %5427 = vmatprep.subr.mxu0 0.0
    %5428 = vmatpush1.msra.mxu0 0.0
    %5429 = vmatprep.subr.mxu0 0.0
    %5430 = vmatpush1.msra.mxu0 0.0
    %5431 = vmatprep.subr.mxu0 0.0
    %5432 = vmatpush1.msra.mxu0 0.0
    %5433 = vmatprep.subr.mxu0 0.0
    %5434 = vmatpush1.msra.mxu0 0.0
    %5435 = vmatprep.subr.mxu0 0.0
    %5436 = vmatpush1.msra.mxu0 0.0
    %5437 = vmatprep.subr.mxu0 0.0
    %5438 = vmatpush1.msra.mxu0 0.0
    %5439 = vmatprep.subr.mxu0 0.0
    %5440 = vmatpush1.msra.mxu0 0.0
    %5441 = vmatprep.subr.mxu0 0.0
    %5442 = vmatpush1.msra.mxu0 0.0
    %5443 = vmatprep.subr.mxu0 0.0
    %5444 = vmatpush1.msra.mxu0 0.0
    %5445 = vmatprep.subr.mxu0 0.0
    %5446 = vmatpush1.msra.mxu0 0.0
    %5447 = vmatprep.subr.mxu0 0.0
    %5448 = vmatpush1.msra.mxu0 0.0
    %5449 = vmatprep.subr.mxu0 0.0
    %5450 = vmatpush1.msra.mxu0 %v5408
    %5451 = vmatprep.subr.mxu0 0.0
    %5452 = vmatpush2.msra.mxu0 0.0
    %5453 = vmatprep.subr.mxu0 0.0
    %5454 = vmatpush2.msra.mxu0 0.0
    %5455 = vmatprep.subr.mxu0 0.0
    %5456 = vmatpush2.msra.mxu0 0.0
    %5457 = vmatprep.subr.mxu0 0.0
    %5458 = vmatpush2.msra.mxu0 0.0
    %5459 = vmatprep.subr.mxu0 0.0
    %5460 = vmatpush2.msra.mxu0 0.0
    %5461 = vmatprep.subr.mxu0 0.0
    %5462 = vmatpush2.msra.mxu0 0.0
    %5463 = vmatprep.subr.mxu0 0.0
    %5464 = vmatpush2.msra.mxu0 0.0
    %5465 = vmatprep.subr.mxu0 0.0
    %5466 = vmatpush2.msra.mxu0 0.0
    %5467 = vmatprep.subr.mxu0 0.0
    %5468 = vmatpush2.msra.mxu0 0.0
    %5469 = vmatprep.subr.mxu0 0.0
    %5470 = vmatpush2.msra.mxu0 0.0
    %5471 = vmatprep.subr.mxu0 0.0
    %5472 = vmatpush2.msra.mxu0 0.0
    %5473 = vmatprep.subr.mxu0 0.0
    %5474 = vmatpush2.msra.mxu0 0.0
    %5475 = vmatprep.subr.mxu0 0.0
    %5476 = vmatpush2.msra.mxu0 0.0
    %5477 = vmatprep.subr.mxu0 0.0
    %5478 = vmatpush2.msra.mxu0 0.0
    %5479 = vmatprep.subr.mxu0 0.0
    %5480 = vmatpush2.msra.mxu0 0.0
    %5481 = vmatprep.subr.mxu0 0.0
    %5482 = vmatpush2.msra.mxu0 0.0
    %5483 = vmatprep.mubr.f32.mxu0 0.0
    %5484 = vmatmul.mubr.f32.gmra.mxu0 %v5417
    %v5485 = vpop.f32.mrf.mxu0
    %v5486 = vadd.f32 %v5414, %v5485
    %v5487 = vpop.f32.mrf.mxu0
    %5488 = vdwg.mxu0
    %v5489 = vadd.f32 %v5406, %v5486
    %v5490 = vld [vmem:[#allocation17] sm:$0x1]
    %v5491 = vld [vmem:[#allocation19] sm:$0x1]
    %vm5492 = vcmask 517120
    %v5493 = vsel %vm5492, %v5489, 0.0
    %5494 = vadd.xlane.f32.xlu0 %v5493
    %v5495 = vpop.xlane.xlu0 %5494
    %v5496 = vrcp.pop 64.0
    %v5497 = vmul.f32 %v5495, %v5496
    %v5498 = vsub.f32 %v5489, %v5497
    %v5499 = vmul.f32 %v5498, %v5498
    %v5500 = vsel %vm5492, %v5499, 0.0
    %5501 = vadd.xlane.f32.xlu0 %v5500
    %v5502 = vpop.xlane.xlu0 %5501
    %v5503 = vmul.f32 %v5502, %v5496
    %v5504 = vadd.f32 %v5503, 1e-05
    %v5505 = vrsqrt.pop %v5504
    %v5506 = vmul.f32 %v5498, %v5505
    %v5508 = vlaneseq
    %v5509 = vshrl.u32 %v5508, 7
    %v5510 = vsub.s32 0, %v5509
    %v5511 = vrot.slane %v5490, %v5510
    %v5513 = vmul.f32 %v5506, %v5511
    %v5515 = vlaneseq
    %v5516 = vshrl.u32 %v5515, 7
    %v5517 = vsub.s32 0, %v5516
    %v5518 = vrot.slane %v5491, %v5517
    %v5520 = vadd.f32 %v5513, %v5518
    %v5521 = vld [vmem:[%s33] sm:$0xff]
    %v5522 = vld [vmem:[%s33 + $0x8] sm:$0xff]
    %v5523 = vld [vmem:[%s33 + $0x10] sm:$0xff]
    %v5524 = vld [vmem:[%s33 + $0x18] sm:$0xff]
    %v5525 = vld [vmem:[%s33 + $0x20] sm:$0xff]
    %v5526 = vld [vmem:[%s33 + $0x28] sm:$0xff]
    %v5527 = vld [vmem:[%s33 + $0x30] sm:$0xff]
    %v5528 = vld [vmem:[%s33 + $0x38] sm:$0xff]
    %v5529 = vld [vmem:[#allocation20] sm:$0x1]
    %v5531 = vlaneseq
    %v5532 = vshrl.u32 %v5531, 7
    %v5533 = vsub.s32 0, %v5532
    %v5534 = vrot.slane %v5529, %v5533
    %v5537 = vsel %vm809, %v5520, 0
    %5539 = vmatprep.subr.mxu0 0.0
    %5540 = vmatpush1.msra.mxu0 0.0
    %5541 = vmatprep.subr.mxu0 0.0
    %5542 = vmatpush1.msra.mxu0 0.0
    %5543 = vmatprep.subr.mxu0 0.0
    %5544 = vmatpush1.msra.mxu0 0.0
    %5545 = vmatprep.subr.mxu0 0.0
    %5546 = vmatpush1.msra.mxu0 0.0
    %5547 = vmatprep.subr.mxu0 0.0
    %5548 = vmatpush1.msra.mxu0 0.0
    %5549 = vmatprep.subr.mxu0 0.0
    %5550 = vmatpush1.msra.mxu0 0.0
    %5551 = vmatprep.subr.mxu0 0.0
    %5552 = vmatpush1.msra.mxu0 0.0
    %5553 = vmatprep.subr.mxu0 0.0
    %5554 = vmatpush1.msra.mxu0 0.0
    %5555 = vmatprep.subr.mxu0 0.0
    %5556 = vmatpush1.msra.mxu0 %v5528
    %5557 = vmatprep.subr.mxu0 0.0
    %5558 = vmatpush1.msra.mxu0 %v5527
    %5559 = vmatprep.subr.mxu0 0.0
    %5560 = vmatpush1.msra.mxu0 %v5526
    %5561 = vmatprep.subr.mxu0 0.0
    %5562 = vmatpush1.msra.mxu0 %v5525
    %5563 = vmatprep.subr.mxu0 0.0
    %5564 = vmatpush1.msra.mxu0 %v5524
    %5565 = vmatprep.subr.mxu0 0.0
    %5566 = vmatpush1.msra.mxu0 %v5523
    %5567 = vmatprep.subr.mxu0 0.0
    %5568 = vmatpush1.msra.mxu0 %v5522
    %5569 = vmatprep.subr.mxu0 0.0
    %5570 = vmatpush1.msra.mxu0 %v5521
    %5571 = vmatprep.subr.mxu0 0.0
    %5572 = vmatpush2.msra.mxu0 0.0
    %5573 = vmatprep.subr.mxu0 0.0
    %5574 = vmatpush2.msra.mxu0 0.0
    %5575 = vmatprep.subr.mxu0 0.0
    %5576 = vmatpush2.msra.mxu0 0.0
    %5577 = vmatprep.subr.mxu0 0.0
    %5578 = vmatpush2.msra.mxu0 0.0
    %5579 = vmatprep.subr.mxu0 0.0
    %5580 = vmatpush2.msra.mxu0 0.0
    %5581 = vmatprep.subr.mxu0 0.0
    %5582 = vmatpush2.msra.mxu0 0.0
    %5583 = vmatprep.subr.mxu0 0.0
    %5584 = vmatpush2.msra.mxu0 0.0
    %5585 = vmatprep.subr.mxu0 0.0
    %5586 = vmatpush2.msra.mxu0 0.0
    %5587 = vmatprep.subr.mxu0 0.0
    %5588 = vmatpush2.msra.mxu0 0.0
    %5589 = vmatprep.subr.mxu0 0.0
    %5590 = vmatpush2.msra.mxu0 0.0
    %5591 = vmatprep.subr.mxu0 0.0
    %5592 = vmatpush2.msra.mxu0 0.0
    %5593 = vmatprep.subr.mxu0 0.0
    %5594 = vmatpush2.msra.mxu0 0.0
    %5595 = vmatprep.subr.mxu0 0.0
    %5596 = vmatpush2.msra.mxu0 0.0
    %5597 = vmatprep.subr.mxu0 0.0
    %5598 = vmatpush2.msra.mxu0 0.0
    %5599 = vmatprep.subr.mxu0 0.0
    %5600 = vmatpush2.msra.mxu0 0.0
    %5601 = vmatprep.subr.mxu0 0.0
    %5602 = vmatpush2.msra.mxu0 0.0
    %5603 = vmatprep.mubr.f32.mxu0 0.0
    %5604 = vmatmul.mubr.f32.gmra.mxu0 %v5537
    %v5605 = vpop.f32.mrf.mxu0
    %v5606 = vadd.f32 %v5534, %v5605
    %v5607 = vpop.f32.mrf.mxu0
    %5608 = vdwg.mxu0
    %v5609 = vld [vmem:[#allocation22] sm:$0xff]
    %v5610 = vld [vmem:[#allocation22 + $0x8] sm:$0x3]
    %v5611 = vld [vmem:[#allocation23] sm:$0xff]
    %v5612 = vld [vmem:[#allocation23 + $0x8] sm:$0x3]
    %v5613 = vld [vmem:[#allocation25] sm:$0xff]
    %v5614 = vld [vmem:[#allocation25 + $0x8] sm:$0xff]
    %v5615 = vld [vmem:[#allocation26] sm:$0x1]
    %v5617 = vlaneseq
    %v5618 = vshrl.u32 %v5617, 7
    %v5619 = vsub.s32 0, %v5618
    %v5620 = vrot.slane %v5615, %v5619
    %v5623 = vsel %vm3720, %v5611, 0
    %v5626 = vsel %vm3720, %v5612, 0
    %5628 = vmatprep.subr.mxu0 0.0
    %5629 = vmatpush1.msra.mxu0 0.0
    %5630 = vmatprep.subr.mxu0 0.0
    %5631 = vmatpush1.msra.mxu0 0.0
    %5632 = vmatprep.subr.mxu0 0.0
    %5633 = vmatpush1.msra.mxu0 0.0
    %5634 = vmatprep.subr.mxu0 0.0
    %5635 = vmatpush1.msra.mxu0 0.0
    %5636 = vmatprep.subr.mxu0 0.0
    %5637 = vmatpush1.msra.mxu0 0.0
    %5638 = vmatprep.subr.mxu0 0.0
    %5639 = vmatpush1.msra.mxu0 0.0
    %5640 = vmatprep.subr.mxu0 0.0
    %5641 = vmatpush1.msra.mxu0 0.0
    %5642 = vmatprep.subr.mxu0 0.0
    %5643 = vmatpush1.msra.mxu0 0.0
    %5644 = vmatprep.subr.mxu0 0.0
    %5645 = vmatpush1.msra.mxu0 0.0
    %5646 = vmatprep.subr.mxu0 0.0
    %5647 = vmatpush1.msra.mxu0 0.0
    %5648 = vmatprep.subr.mxu0 0.0
    %5649 = vmatpush1.msra.mxu0 0.0
    %5650 = vmatprep.subr.mxu0 0.0
    %5651 = vmatpush1.msra.mxu0 0.0
    %5652 = vmatprep.subr.mxu0 0.0
    %5653 = vmatpush1.msra.mxu0 0.0
    %5654 = vmatprep.subr.mxu0 0.0
    %5655 = vmatpush1.msra.mxu0 0.0
    %5656 = vmatprep.subr.mxu0 0.0
    %5657 = vmatpush1.msra.mxu0 %v5614
    %5658 = vmatprep.subr.mxu0 0.0
    %5659 = vmatpush1.msra.mxu0 %v5613
    %5660 = vmatprep.subr.mxu0 0.0
    %5661 = vmatpush2.msra.mxu0 0.0
    %5662 = vmatprep.subr.mxu0 0.0
    %5663 = vmatpush2.msra.mxu0 0.0
    %5664 = vmatprep.subr.mxu0 0.0
    %5665 = vmatpush2.msra.mxu0 0.0
    %5666 = vmatprep.subr.mxu0 0.0
    %5667 = vmatpush2.msra.mxu0 0.0
    %5668 = vmatprep.subr.mxu0 0.0
    %5669 = vmatpush2.msra.mxu0 0.0
    %5670 = vmatprep.subr.mxu0 0.0
    %5671 = vmatpush2.msra.mxu0 0.0
    %5672 = vmatprep.subr.mxu0 0.0
    %5673 = vmatpush2.msra.mxu0 0.0
    %5674 = vmatprep.subr.mxu0 0.0
    %5675 = vmatpush2.msra.mxu0 0.0
    %5676 = vmatprep.subr.mxu0 0.0
    %5677 = vmatpush2.msra.mxu0 0.0
    %5678 = vmatprep.subr.mxu0 0.0
    %5679 = vmatpush2.msra.mxu0 0.0
    %5680 = vmatprep.subr.mxu0 0.0
    %5681 = vmatpush2.msra.mxu0 0.0
    %5682 = vmatprep.subr.mxu0 0.0
    %5683 = vmatpush2.msra.mxu0 0.0
    %5684 = vmatprep.subr.mxu0 0.0
    %5685 = vmatpush2.msra.mxu0 0.0
    %5686 = vmatprep.subr.mxu0 0.0
    %5687 = vmatpush2.msra.mxu0 0.0
    %5688 = vmatprep.subr.mxu0 0.0
    %5689 = vmatpush2.msra.mxu0 0.0
    %5690 = vmatprep.subr.mxu0 0.0
    %5691 = vmatpush2.msra.mxu0 0.0
    %5692 = vmatprep.mubr.f32.mxu0 0.0
    %5693 = vmatmul.mubr.f32.gmra.mxu0 %v5623
    %v5694 = vpop.f32.mrf.mxu0
    %v5695 = vadd.f32 %v5620, %v5694
    %v5696 = vpop.f32.mrf.mxu0
    %5697 = vmatprep.mubr.f32.mxu0 0.0
    %5698 = vmatmul.mubr.f32.gmra.mxu0 %v5626
    %v5699 = vpop.f32.mrf.mxu0
    %v5700 = vadd.f32 %v5620, %v5699
    %v5701 = vpop.f32.mrf.mxu0
    %5702 = vdwg.mxu0
    %v5703 = vld [vmem:[#allocation28] sm:$0xff]
    %v5704 = vld [vmem:[#allocation28 + $0x8] sm:$0xff]
    %5705 = vmatprep.subr.mxu0 0.0
    %5706 = vmatpush1.msra.mxu0 0.0
    %5707 = vmatprep.subr.mxu0 0.0
    %5708 = vmatpush1.msra.mxu0 0.0
    %5709 = vmatprep.subr.mxu0 0.0
    %5710 = vmatpush1.msra.mxu0 0.0
    %5711 = vmatprep.subr.mxu0 0.0
    %5712 = vmatpush1.msra.mxu0 0.0
    %5713 = vmatprep.subr.mxu0 0.0
    %5714 = vmatpush1.msra.mxu0 0.0
    %5715 = vmatprep.subr.mxu0 0.0
    %5716 = vmatpush1.msra.mxu0 0.0
    %5717 = vmatprep.subr.mxu0 0.0
    %5718 = vmatpush1.msra.mxu0 0.0
    %5719 = vmatprep.subr.mxu0 0.0
    %5720 = vmatpush1.msra.mxu0 0.0
    %5721 = vmatprep.subr.mxu0 0.0
    %5722 = vmatpush1.msra.mxu0 0.0
    %5723 = vmatprep.subr.mxu0 0.0
    %5724 = vmatpush1.msra.mxu0 0.0
    %5725 = vmatprep.subr.mxu0 0.0
    %5726 = vmatpush1.msra.mxu0 0.0
    %5727 = vmatprep.subr.mxu0 0.0
    %5728 = vmatpush1.msra.mxu0 0.0
    %5729 = vmatprep.subr.mxu0 0.0
    %5730 = vmatpush1.msra.mxu0 0.0
    %5731 = vmatprep.subr.mxu0 0.0
    %5732 = vmatpush1.msra.mxu0 0.0
    %5733 = vmatprep.subr.mxu0 0.0
    %5734 = vmatpush1.msra.mxu0 %v5704
    %5735 = vmatprep.subr.mxu0 0.0
    %5736 = vmatpush1.msra.mxu0 %v5703
    %5737 = vmatprep.subr.mxu0 0.0
    %5738 = vmatpush2.msra.mxu0 0.0
    %5739 = vmatprep.subr.mxu0 0.0
    %5740 = vmatpush2.msra.mxu0 0.0
    %5741 = vmatprep.subr.mxu0 0.0
    %5742 = vmatpush2.msra.mxu0 0.0
    %5743 = vmatprep.subr.mxu0 0.0
    %5744 = vmatpush2.msra.mxu0 0.0
    %5745 = vmatprep.subr.mxu0 0.0
    %5746 = vmatpush2.msra.mxu0 0.0
    %5747 = vmatprep.subr.mxu0 0.0
    %5748 = vmatpush2.msra.mxu0 0.0
    %5749 = vmatprep.subr.mxu0 0.0
    %5750 = vmatpush2.msra.mxu0 0.0
    %5751 = vmatprep.subr.mxu0 0.0
    %5752 = vmatpush2.msra.mxu0 0.0
    %5753 = vmatprep.subr.mxu0 0.0
    %5754 = vmatpush2.msra.mxu0 0.0
    %5755 = vmatprep.subr.mxu0 0.0
    %5756 = vmatpush2.msra.mxu0 0.0
    %5757 = vmatprep.subr.mxu0 0.0
    %5758 = vmatpush2.msra.mxu0 0.0
    %5759 = vmatprep.subr.mxu0 0.0
    %5760 = vmatpush2.msra.mxu0 0.0
    %5761 = vmatprep.subr.mxu0 0.0
    %5762 = vmatpush2.msra.mxu0 0.0
    %5763 = vmatprep.subr.mxu0 0.0
    %5764 = vmatpush2.msra.mxu0 0.0
    %5765 = vmatprep.subr.mxu0 0.0
    %5766 = vmatpush2.msra.mxu0 0.0
    %5767 = vmatprep.subr.mxu0 0.0
    %5768 = vmatpush2.msra.mxu0 0.0
    %5769 = vmatprep.mubr.f32.mxu0 0.0
    %5770 = vmatmul.mubr.f32.gmra.mxu0 %v5623
    %v5771 = vpop.f32.mrf.mxu0
    %v5772 = vadd.f32 0.0, %v5771
    %v5773 = vpop.f32.mrf.mxu0
    %5774 = vmatprep.mubr.f32.mxu0 0.0
    %5775 = vmatmul.mubr.f32.gmra.mxu0 %v5626
    %v5776 = vpop.f32.mrf.mxu0
    %v5777 = vadd.f32 0.0, %v5776
    %v5778 = vpop.f32.mrf.mxu0
    %5779 = vdwg.mxu0
    %v5780 = vld [vmem:[#allocation29] sm:$0x1]
    %v5782 = vlaneseq
    %v5783 = vshrl.u32 %v5782, 7
    %v5784 = vsub.s32 0, %v5783
    %v5785 = vrot.slane %v5780, %v5784
    %vm5787 = vcmask 80896
    %v5789 = vsel %vm5787, %v5609, 0
    %v5792 = vsel %vm5787, %v5610, 0
    %vm5794 = vcmask 1041408
    %v5796 = vsel %vm5794, %v5777, 0
    %5798 = vmatprep.subr.mxu0 0.0
    %5799 = vmatpush1.msra.mxu0 0.0
    %5800 = vmatprep.subr.mxu0 0.0
    %5801 = vmatpush1.msra.mxu0 0.0
    %5802 = vmatprep.subr.mxu0 0.0
    %5803 = vmatpush1.msra.mxu0 0.0
    %5804 = vmatprep.subr.mxu0 0.0
    %5805 = vmatpush1.msra.mxu0 0.0
    %5806 = vmatprep.subr.mxu0 0.0
    %5807 = vmatpush1.msra.mxu0 0.0
    %5808 = vmatprep.subr.mxu0 0.0
    %5809 = vmatpush1.msra.mxu0 0.0
    %5810 = vmatprep.subr.mxu0 0.0
    %5811 = vmatpush1.msra.mxu0 0.0
    %5812 = vmatprep.subr.mxu0 0.0
    %5813 = vmatpush1.msra.mxu0 0.0
    %5814 = vmatprep.subr.mxu0 0.0
    %5815 = vmatpush1.msra.mxu0 0.0
    %5816 = vmatprep.subr.mxu0 0.0
    %5817 = vmatpush1.msra.mxu0 0.0
    %5818 = vmatprep.subr.mxu0 0.0
    %5819 = vmatpush1.msra.mxu0 0.0
    %5820 = vmatprep.subr.mxu0 0.0
    %5821 = vmatpush1.msra.mxu0 0.0
    %5822 = vmatprep.subr.mxu0 0.0
    %5823 = vmatpush1.msra.mxu0 0.0
    %5824 = vmatprep.subr.mxu0 0.0
    %5825 = vmatpush1.msra.mxu0 0.0
    %5826 = vmatprep.subr.mxu0 0.0
    %5827 = vmatpush1.msra.mxu0 %v5796
    %5828 = vmatprep.subr.mxu0 0.0
    %5829 = vmatpush1.msra.mxu0 %v5772
    %5830 = vmatprep.subr.mxu0 0.0
    %5831 = vmatpush2.msra.mxu0 0.0
    %5832 = vmatprep.subr.mxu0 0.0
    %5833 = vmatpush2.msra.mxu0 0.0
    %5834 = vmatprep.subr.mxu0 0.0
    %5835 = vmatpush2.msra.mxu0 0.0
    %5836 = vmatprep.subr.mxu0 0.0
    %5837 = vmatpush2.msra.mxu0 0.0
    %5838 = vmatprep.subr.mxu0 0.0
    %5839 = vmatpush2.msra.mxu0 0.0
    %5840 = vmatprep.subr.mxu0 0.0
    %5841 = vmatpush2.msra.mxu0 0.0
    %5842 = vmatprep.subr.mxu0 0.0
    %5843 = vmatpush2.msra.mxu0 0.0
    %5844 = vmatprep.subr.mxu0 0.0
    %5845 = vmatpush2.msra.mxu0 0.0
    %5846 = vmatprep.subr.mxu0 0.0
    %5847 = vmatpush2.msra.mxu0 0.0
    %5848 = vmatprep.subr.mxu0 0.0
    %5849 = vmatpush2.msra.mxu0 0.0
    %5850 = vmatprep.subr.mxu0 0.0
    %5851 = vmatpush2.msra.mxu0 0.0
    %5852 = vmatprep.subr.mxu0 0.0
    %5853 = vmatpush2.msra.mxu0 0.0
    %5854 = vmatprep.subr.mxu0 0.0
    %5855 = vmatpush2.msra.mxu0 0.0
    %5856 = vmatprep.subr.mxu0 0.0
    %5857 = vmatpush2.msra.mxu0 0.0
    %5858 = vmatprep.subr.mxu0 0.0
    %5859 = vmatpush2.msra.mxu0 0.0
    %5860 = vmatprep.subr.mxu0 0.0
    %5861 = vmatpush2.msra.mxu0 0.0
    %5862 = vmatprep.mubr.f32.mxu0 0.0
    %5863 = vmatmul.mubr.f32.gmra.mxu0 %v5789
    %v5864 = vpop.f32.mrf.mxu0
    %v5865 = vadd.f32 %v5785, %v5864
    %v5866 = vpop.f32.mrf.mxu0
    %5867 = vmatprep.mubr.f32.mxu0 0.0
    %5868 = vmatmul.mubr.f32.gmra.mxu0 %v5792
    %v5869 = vpop.f32.mrf.mxu0
    %v5870 = vadd.f32 %v5785, %v5869
    %v5871 = vpop.f32.mrf.mxu0
    %5872 = vdwg.mxu0
    %vm5873 = vcmp.ge.f32.partialorder %v5865, 0.0
    %vm5874 = vcmp.ge.f32.partialorder %v5870, 0.0
    %v5875 = vmul.f32 %v5865, 0.01
    %v5876 = vmul.f32 %v5870, 0.01
    %v5877 = vsel %vm5873, %v5865, %v5875
    %v5878 = vsel %vm5874, %v5870, %v5876
    %v5879 = vld [vmem:[#allocation31] sm:$0xff]
    %v5880 = vld [vmem:[#allocation31 + $0x8] sm:$0xff]
    %v5881 = vld [vmem:[#allocation31 + $0x10] sm:$0xff]
    %v5882 = vld [vmem:[#allocation31 + $0x18] sm:$0xff]
    %v5884 = vsel %vm962, %v5877, 0
    %v5887 = vsel %vm962, %v5878, 0
    %5889 = vmatprep.subr.mxu0 0.0
    %5890 = vmatpush1.msra.mxu0 0.0
    %5891 = vmatprep.subr.mxu0 0.0
    %5892 = vmatpush1.msra.mxu0 0.0
    %5893 = vmatprep.subr.mxu0 0.0
    %5894 = vmatpush1.msra.mxu0 0.0
    %5895 = vmatprep.subr.mxu0 0.0
    %5896 = vmatpush1.msra.mxu0 0.0
    %5897 = vmatprep.subr.mxu0 0.0
    %5898 = vmatpush1.msra.mxu0 0.0
    %5899 = vmatprep.subr.mxu0 0.0
    %5900 = vmatpush1.msra.mxu0 0.0
    %5901 = vmatprep.subr.mxu0 0.0
    %5902 = vmatpush1.msra.mxu0 0.0
    %5903 = vmatprep.subr.mxu0 0.0
    %5904 = vmatpush1.msra.mxu0 0.0
    %5905 = vmatprep.subr.mxu0 0.0
    %5906 = vmatpush1.msra.mxu0 0.0
    %5907 = vmatprep.subr.mxu0 0.0
    %5908 = vmatpush1.msra.mxu0 0.0
    %5909 = vmatprep.subr.mxu0 0.0
    %5910 = vmatpush1.msra.mxu0 0.0
    %5911 = vmatprep.subr.mxu0 0.0
    %5912 = vmatpush1.msra.mxu0 0.0
    %5913 = vmatprep.subr.mxu0 0.0
    %5914 = vmatpush1.msra.mxu0 %v5882
    %5915 = vmatprep.subr.mxu0 0.0
    %5916 = vmatpush1.msra.mxu0 %v5881
    %5917 = vmatprep.subr.mxu0 0.0
    %5918 = vmatpush1.msra.mxu0 %v5880
    %5919 = vmatprep.subr.mxu0 0.0
    %5920 = vmatpush1.msra.mxu0 %v5879
    %5921 = vmatprep.subr.mxu0 0.0
    %5922 = vmatpush2.msra.mxu0 0.0
    %5923 = vmatprep.subr.mxu0 0.0
    %5924 = vmatpush2.msra.mxu0 0.0
    %5925 = vmatprep.subr.mxu0 0.0
    %5926 = vmatpush2.msra.mxu0 0.0
    %5927 = vmatprep.subr.mxu0 0.0
    %5928 = vmatpush2.msra.mxu0 0.0
    %5929 = vmatprep.subr.mxu0 0.0
    %5930 = vmatpush2.msra.mxu0 0.0
    %5931 = vmatprep.subr.mxu0 0.0
    %5932 = vmatpush2.msra.mxu0 0.0
    %5933 = vmatprep.subr.mxu0 0.0
    %5934 = vmatpush2.msra.mxu0 0.0
    %5935 = vmatprep.subr.mxu0 0.0
    %5936 = vmatpush2.msra.mxu0 0.0
    %5937 = vmatprep.subr.mxu0 0.0
    %5938 = vmatpush2.msra.mxu0 0.0
    %5939 = vmatprep.subr.mxu0 0.0
    %5940 = vmatpush2.msra.mxu0 0.0
    %5941 = vmatprep.subr.mxu0 0.0
    %5942 = vmatpush2.msra.mxu0 0.0
    %5943 = vmatprep.subr.mxu0 0.0
    %5944 = vmatpush2.msra.mxu0 0.0
    %5945 = vmatprep.subr.mxu0 0.0
    %5946 = vmatpush2.msra.mxu0 0.0
    %5947 = vmatprep.subr.mxu0 0.0
    %5948 = vmatpush2.msra.mxu0 0.0
    %5949 = vmatprep.subr.mxu0 0.0
    %5950 = vmatpush2.msra.mxu0 0.0
    %5951 = vmatprep.subr.mxu0 0.0
    %5952 = vmatpush2.msra.mxu0 0.0
    %5953 = vmatprep.mubr.f32.mxu0 0.0
    %5954 = vmatmul.mubr.f32.gmra.mxu0 %v5884
    %v5955 = vpop.f32.mrf.mxu0
    %v5956 = vadd.f32 0.0, %v5955
    %v5957 = vpop.f32.mrf.mxu0
    %5958 = vmatprep.mubr.f32.mxu0 0.0
    %5959 = vmatmul.mubr.f32.gmra.mxu0 %v5887
    %v5960 = vpop.f32.mrf.mxu0
    %v5961 = vadd.f32 0.0, %v5960
    %v5962 = vpop.f32.mrf.mxu0
    %5963 = vdwg.mxu0
    %v5964 = vld [vmem:[#allocation32] sm:$0x1]
    %v5966 = vlaneseq
    %v5967 = vshrl.u32 %v5966, 7
    %v5968 = vsub.s32 0, %v5967
    %v5969 = vrot.slane %v5964, %v5968
    %v5972 = vsel %vm5794, %v5961, 0
    %5974 = vmatprep.subr.mxu0 0.0
    %5975 = vmatpush1.msra.mxu0 0.0
    %5976 = vmatprep.subr.mxu0 0.0
    %5977 = vmatpush1.msra.mxu0 0.0
    %5978 = vmatprep.subr.mxu0 0.0
    %5979 = vmatpush1.msra.mxu0 0.0
    %5980 = vmatprep.subr.mxu0 0.0
    %5981 = vmatpush1.msra.mxu0 0.0
    %5982 = vmatprep.subr.mxu0 0.0
    %5983 = vmatpush1.msra.mxu0 0.0
    %5984 = vmatprep.subr.mxu0 0.0
    %5985 = vmatpush1.msra.mxu0 0.0
    %5986 = vmatprep.subr.mxu0 0.0
    %5987 = vmatpush1.msra.mxu0 0.0
    %5988 = vmatprep.subr.mxu0 0.0
    %5989 = vmatpush1.msra.mxu0 0.0
    %5990 = vmatprep.subr.mxu0 0.0
    %5991 = vmatpush1.msra.mxu0 0.0
    %5992 = vmatprep.subr.mxu0 0.0
    %5993 = vmatpush1.msra.mxu0 0.0
    %5994 = vmatprep.subr.mxu0 0.0
    %5995 = vmatpush1.msra.mxu0 0.0
    %5996 = vmatprep.subr.mxu0 0.0
    %5997 = vmatpush1.msra.mxu0 0.0
    %5998 = vmatprep.subr.mxu0 0.0
    %5999 = vmatpush1.msra.mxu0 0.0
    %6000 = vmatprep.subr.mxu0 0.0
    %6001 = vmatpush1.msra.mxu0 0.0
    %6002 = vmatprep.subr.mxu0 0.0
    %6003 = vmatpush1.msra.mxu0 %v5972
    %6004 = vmatprep.subr.mxu0 0.0
    %6005 = vmatpush1.msra.mxu0 %v5956
    %6006 = vmatprep.subr.mxu0 0.0
    %6007 = vmatpush2.msra.mxu0 0.0
    %6008 = vmatprep.subr.mxu0 0.0
    %6009 = vmatpush2.msra.mxu0 0.0
    %6010 = vmatprep.subr.mxu0 0.0
    %6011 = vmatpush2.msra.mxu0 0.0
    %6012 = vmatprep.subr.mxu0 0.0
    %6013 = vmatpush2.msra.mxu0 0.0
    %6014 = vmatprep.subr.mxu0 0.0
    %6015 = vmatpush2.msra.mxu0 0.0
    %6016 = vmatprep.subr.mxu0 0.0
    %6017 = vmatpush2.msra.mxu0 0.0
    %6018 = vmatprep.subr.mxu0 0.0
    %6019 = vmatpush2.msra.mxu0 0.0
    %6020 = vmatprep.subr.mxu0 0.0
    %6021 = vmatpush2.msra.mxu0 0.0
    %6022 = vmatprep.subr.mxu0 0.0
    %6023 = vmatpush2.msra.mxu0 0.0
    %6024 = vmatprep.subr.mxu0 0.0
    %6025 = vmatpush2.msra.mxu0 0.0
    %6026 = vmatprep.subr.mxu0 0.0
    %6027 = vmatpush2.msra.mxu0 0.0
    %6028 = vmatprep.subr.mxu0 0.0
    %6029 = vmatpush2.msra.mxu0 0.0
    %6030 = vmatprep.subr.mxu0 0.0
    %6031 = vmatpush2.msra.mxu0 0.0
    %6032 = vmatprep.subr.mxu0 0.0
    %6033 = vmatpush2.msra.mxu0 0.0
    %6034 = vmatprep.subr.mxu0 0.0
    %6035 = vmatpush2.msra.mxu0 0.0
    %6036 = vmatprep.subr.mxu0 0.0
    %6037 = vmatpush2.msra.mxu0 0.0
    %6038 = vmatprep.mubr.f32.mxu0 0.0
    %6039 = vmatmul.mubr.f32.gmra.mxu0 %v5789
    %v6040 = vpop.f32.mrf.mxu0
    %v6041 = vadd.f32 %v5969, %v6040
    %v6042 = vpop.f32.mrf.mxu0
    %6043 = vmatprep.mubr.f32.mxu0 0.0
    %6044 = vmatmul.mubr.f32.gmra.mxu0 %v5792
    %v6045 = vpop.f32.mrf.mxu0
    %v6046 = vadd.f32 %v5969, %v6045
    %v6047 = vpop.f32.mrf.mxu0
    %6048 = vdwg.mxu0
    %vm6049 = vcmp.ge.f32.partialorder %v6041, 0.0
    %vm6050 = vcmp.ge.f32.partialorder %v6046, 0.0
    %v6051 = vmul.f32 %v6041, 0.01
    %v6052 = vmul.f32 %v6046, 0.01
    %v6053 = vsel %vm6049, %v6041, %v6051
    %v6054 = vsel %vm6050, %v6046, %v6052
    %v6055 = vld [vmem:[#allocation34] sm:$0xff]
    %v6056 = vld [vmem:[#allocation34 + $0x8] sm:$0xff]
    %v6057 = vld [vmem:[#allocation34 + $0x10] sm:$0xff]
    %v6058 = vld [vmem:[#allocation34 + $0x18] sm:$0xff]
    %v6060 = vsel %vm962, %v6053, 0
    %v6063 = vsel %vm962, %v6054, 0
    %6065 = vmatprep.subr.mxu0 0.0
    %6066 = vmatpush1.msra.mxu0 0.0
    %6067 = vmatprep.subr.mxu0 0.0
    %6068 = vmatpush1.msra.mxu0 0.0
    %6069 = vmatprep.subr.mxu0 0.0
    %6070 = vmatpush1.msra.mxu0 0.0
    %6071 = vmatprep.subr.mxu0 0.0
    %6072 = vmatpush1.msra.mxu0 0.0
    %6073 = vmatprep.subr.mxu0 0.0
    %6074 = vmatpush1.msra.mxu0 0.0
    %6075 = vmatprep.subr.mxu0 0.0
    %6076 = vmatpush1.msra.mxu0 0.0
    %6077 = vmatprep.subr.mxu0 0.0
    %6078 = vmatpush1.msra.mxu0 0.0
    %6079 = vmatprep.subr.mxu0 0.0
    %6080 = vmatpush1.msra.mxu0 0.0
    %6081 = vmatprep.subr.mxu0 0.0
    %6082 = vmatpush1.msra.mxu0 0.0
    %6083 = vmatprep.subr.mxu0 0.0
    %6084 = vmatpush1.msra.mxu0 0.0
    %6085 = vmatprep.subr.mxu0 0.0
    %6086 = vmatpush1.msra.mxu0 0.0
    %6087 = vmatprep.subr.mxu0 0.0
    %6088 = vmatpush1.msra.mxu0 0.0
    %6089 = vmatprep.subr.mxu0 0.0
    %6090 = vmatpush1.msra.mxu0 %v6058
    %6091 = vmatprep.subr.mxu0 0.0
    %6092 = vmatpush1.msra.mxu0 %v6057
    %6093 = vmatprep.subr.mxu0 0.0
    %6094 = vmatpush1.msra.mxu0 %v6056
    %6095 = vmatprep.subr.mxu0 0.0
    %6096 = vmatpush1.msra.mxu0 %v6055
    %6097 = vmatprep.subr.mxu0 0.0
    %6098 = vmatpush2.msra.mxu0 0.0
    %6099 = vmatprep.subr.mxu0 0.0
    %6100 = vmatpush2.msra.mxu0 0.0
    %6101 = vmatprep.subr.mxu0 0.0
    %6102 = vmatpush2.msra.mxu0 0.0
    %6103 = vmatprep.subr.mxu0 0.0
    %6104 = vmatpush2.msra.mxu0 0.0
    %6105 = vmatprep.subr.mxu0 0.0
    %6106 = vmatpush2.msra.mxu0 0.0
    %6107 = vmatprep.subr.mxu0 0.0
    %6108 = vmatpush2.msra.mxu0 0.0
    %6109 = vmatprep.subr.mxu0 0.0
    %6110 = vmatpush2.msra.mxu0 0.0
    %6111 = vmatprep.subr.mxu0 0.0
    %6112 = vmatpush2.msra.mxu0 0.0
    %6113 = vmatprep.subr.mxu0 0.0
    %6114 = vmatpush2.msra.mxu0 0.0
    %6115 = vmatprep.subr.mxu0 0.0
    %6116 = vmatpush2.msra.mxu0 0.0
    %6117 = vmatprep.subr.mxu0 0.0
    %6118 = vmatpush2.msra.mxu0 0.0
    %6119 = vmatprep.subr.mxu0 0.0
    %6120 = vmatpush2.msra.mxu0 0.0
    %6121 = vmatprep.subr.mxu0 0.0
    %6122 = vmatpush2.msra.mxu0 0.0
    %6123 = vmatprep.subr.mxu0 0.0
    %6124 = vmatpush2.msra.mxu0 0.0
    %6125 = vmatprep.subr.mxu0 0.0
    %6126 = vmatpush2.msra.mxu0 0.0
    %6127 = vmatprep.subr.mxu0 0.0
    %6128 = vmatpush2.msra.mxu0 0.0
    %6129 = vmatprep.mubr.f32.mxu0 0.0
    %6130 = vmatmul.mubr.f32.gmra.mxu0 %v6060
    %v6131 = vpop.f32.mrf.mxu0
    %v6132 = vadd.f32 0.0, %v6131
    %v6133 = vpop.f32.mrf.mxu0
    %6134 = vmatprep.mubr.f32.mxu0 0.0
    %6135 = vmatmul.mubr.f32.gmra.mxu0 %v6063
    %v6136 = vpop.f32.mrf.mxu0
    %v6137 = vadd.f32 0.0, %v6136
    %v6138 = vpop.f32.mrf.mxu0
    %6139 = vdwg.mxu0
    %v6140 = vld [vmem:[#allocation35] sm:$0x1]
    %v6142 = vlaneseq
    %v6143 = vshrl.u32 %v6142, 7
    %v6144 = vsub.s32 0, %v6143
    %v6145 = vrot.slane %v6140, %v6144
    %v6148 = vsel %vm5794, %v6137, 0
    %6150 = vmatprep.subr.mxu0 0.0
    %6151 = vmatpush1.msra.mxu0 0.0
    %6152 = vmatprep.subr.mxu0 0.0
    %6153 = vmatpush1.msra.mxu0 0.0
    %6154 = vmatprep.subr.mxu0 0.0
    %6155 = vmatpush1.msra.mxu0 0.0
    %6156 = vmatprep.subr.mxu0 0.0
    %6157 = vmatpush1.msra.mxu0 0.0
    %6158 = vmatprep.subr.mxu0 0.0
    %6159 = vmatpush1.msra.mxu0 0.0
    %6160 = vmatprep.subr.mxu0 0.0
    %6161 = vmatpush1.msra.mxu0 0.0
    %6162 = vmatprep.subr.mxu0 0.0
    %6163 = vmatpush1.msra.mxu0 0.0
    %6164 = vmatprep.subr.mxu0 0.0
    %6165 = vmatpush1.msra.mxu0 0.0
    %6166 = vmatprep.subr.mxu0 0.0
    %6167 = vmatpush1.msra.mxu0 0.0
    %6168 = vmatprep.subr.mxu0 0.0
    %6169 = vmatpush1.msra.mxu0 0.0
    %6170 = vmatprep.subr.mxu0 0.0
    %6171 = vmatpush1.msra.mxu0 0.0
    %6172 = vmatprep.subr.mxu0 0.0
    %6173 = vmatpush1.msra.mxu0 0.0
    %6174 = vmatprep.subr.mxu0 0.0
    %6175 = vmatpush1.msra.mxu0 0.0
    %6176 = vmatprep.subr.mxu0 0.0
    %6177 = vmatpush1.msra.mxu0 0.0
    %6178 = vmatprep.subr.mxu0 0.0
    %6179 = vmatpush1.msra.mxu0 %v6148
    %6180 = vmatprep.subr.mxu0 0.0
    %6181 = vmatpush1.msra.mxu0 %v6132
    %6182 = vmatprep.subr.mxu0 0.0
    %6183 = vmatpush2.msra.mxu0 0.0
    %6184 = vmatprep.subr.mxu0 0.0
    %6185 = vmatpush2.msra.mxu0 0.0
    %6186 = vmatprep.subr.mxu0 0.0
    %6187 = vmatpush2.msra.mxu0 0.0
    %6188 = vmatprep.subr.mxu0 0.0
    %6189 = vmatpush2.msra.mxu0 0.0
    %6190 = vmatprep.subr.mxu0 0.0
    %6191 = vmatpush2.msra.mxu0 0.0
    %6192 = vmatprep.subr.mxu0 0.0
    %6193 = vmatpush2.msra.mxu0 0.0
    %6194 = vmatprep.subr.mxu0 0.0
    %6195 = vmatpush2.msra.mxu0 0.0
    %6196 = vmatprep.subr.mxu0 0.0
    %6197 = vmatpush2.msra.mxu0 0.0
    %6198 = vmatprep.subr.mxu0 0.0
    %6199 = vmatpush2.msra.mxu0 0.0
    %6200 = vmatprep.subr.mxu0 0.0
    %6201 = vmatpush2.msra.mxu0 0.0
    %6202 = vmatprep.subr.mxu0 0.0
    %6203 = vmatpush2.msra.mxu0 0.0
    %6204 = vmatprep.subr.mxu0 0.0
    %6205 = vmatpush2.msra.mxu0 0.0
    %6206 = vmatprep.subr.mxu0 0.0
    %6207 = vmatpush2.msra.mxu0 0.0
    %6208 = vmatprep.subr.mxu0 0.0
    %6209 = vmatpush2.msra.mxu0 0.0
    %6210 = vmatprep.subr.mxu0 0.0
    %6211 = vmatpush2.msra.mxu0 0.0
    %6212 = vmatprep.subr.mxu0 0.0
    %6213 = vmatpush2.msra.mxu0 0.0
    %6214 = vmatprep.mubr.f32.mxu0 0.0
    %6215 = vmatmul.mubr.f32.gmra.mxu0 %v5789
    %v6216 = vpop.f32.mrf.mxu0
    %v6217 = vadd.f32 %v6145, %v6216
    %v6218 = vpop.f32.mrf.mxu0
    %6219 = vmatprep.mubr.f32.mxu0 0.0
    %6220 = vmatmul.mubr.f32.gmra.mxu0 %v5792
    %v6221 = vpop.f32.mrf.mxu0
    %v6222 = vadd.f32 %v6145, %v6221
    %v6223 = vpop.f32.mrf.mxu0
    %6224 = vdwg.mxu0
    %vm6225 = vcmp.ge.f32.partialorder %v6217, 0.0
    %vm6226 = vcmp.ge.f32.partialorder %v6222, 0.0
    %v6227 = vmul.f32 %v6217, 0.01
    %v6228 = vmul.f32 %v6222, 0.01
    %v6229 = vsel %vm6225, %v6217, %v6227
    %v6230 = vsel %vm6226, %v6222, %v6228
    %v6231 = vld [vmem:[%s57] sm:$0xff]
    %v6232 = vld [vmem:[%s57 + $0x8] sm:$0xff]
    %v6233 = vld [vmem:[%s57 + $0x10] sm:$0xff]
    %v6234 = vld [vmem:[%s57 + $0x18] sm:$0xff]
    %v6236 = vsel %vm962, %v6229, 0
    %v6239 = vsel %vm962, %v6230, 0
    %6241 = vmatprep.subr.mxu0 0.0
    %6242 = vmatpush1.msra.mxu0 0.0
    %6243 = vmatprep.subr.mxu0 0.0
    %6244 = vmatpush1.msra.mxu0 0.0
    %6245 = vmatprep.subr.mxu0 0.0
    %6246 = vmatpush1.msra.mxu0 0.0
    %6247 = vmatprep.subr.mxu0 0.0
    %6248 = vmatpush1.msra.mxu0 0.0
    %6249 = vmatprep.subr.mxu0 0.0
    %6250 = vmatpush1.msra.mxu0 0.0
    %6251 = vmatprep.subr.mxu0 0.0
    %6252 = vmatpush1.msra.mxu0 0.0
    %6253 = vmatprep.subr.mxu0 0.0
    %6254 = vmatpush1.msra.mxu0 0.0
    %6255 = vmatprep.subr.mxu0 0.0
    %6256 = vmatpush1.msra.mxu0 0.0
    %6257 = vmatprep.subr.mxu0 0.0
    %6258 = vmatpush1.msra.mxu0 0.0
    %6259 = vmatprep.subr.mxu0 0.0
    %6260 = vmatpush1.msra.mxu0 0.0
    %6261 = vmatprep.subr.mxu0 0.0
    %6262 = vmatpush1.msra.mxu0 0.0
    %6263 = vmatprep.subr.mxu0 0.0
    %6264 = vmatpush1.msra.mxu0 0.0
    %6265 = vmatprep.subr.mxu0 0.0
    %6266 = vmatpush1.msra.mxu0 %v6234
    %6267 = vmatprep.subr.mxu0 0.0
    %6268 = vmatpush1.msra.mxu0 %v6233
    %6269 = vmatprep.subr.mxu0 0.0
    %6270 = vmatpush1.msra.mxu0 %v6232
    %6271 = vmatprep.subr.mxu0 0.0
    %6272 = vmatpush1.msra.mxu0 %v6231
    %6273 = vmatprep.subr.mxu0 0.0
    %6274 = vmatpush2.msra.mxu0 0.0
    %6275 = vmatprep.subr.mxu0 0.0
    %6276 = vmatpush2.msra.mxu0 0.0
    %6277 = vmatprep.subr.mxu0 0.0
    %6278 = vmatpush2.msra.mxu0 0.0
    %6279 = vmatprep.subr.mxu0 0.0
    %6280 = vmatpush2.msra.mxu0 0.0
    %6281 = vmatprep.subr.mxu0 0.0
    %6282 = vmatpush2.msra.mxu0 0.0
    %6283 = vmatprep.subr.mxu0 0.0
    %6284 = vmatpush2.msra.mxu0 0.0
    %6285 = vmatprep.subr.mxu0 0.0
    %6286 = vmatpush2.msra.mxu0 0.0
    %6287 = vmatprep.subr.mxu0 0.0
    %6288 = vmatpush2.msra.mxu0 0.0
    %6289 = vmatprep.subr.mxu0 0.0
    %6290 = vmatpush2.msra.mxu0 0.0
    %6291 = vmatprep.subr.mxu0 0.0
    %6292 = vmatpush2.msra.mxu0 0.0
    %6293 = vmatprep.subr.mxu0 0.0
    %6294 = vmatpush2.msra.mxu0 0.0
    %6295 = vmatprep.subr.mxu0 0.0
    %6296 = vmatpush2.msra.mxu0 0.0
    %6297 = vmatprep.subr.mxu0 0.0
    %6298 = vmatpush2.msra.mxu0 0.0
    %6299 = vmatprep.subr.mxu0 0.0
    %6300 = vmatpush2.msra.mxu0 0.0
    %6301 = vmatprep.subr.mxu0 0.0
    %6302 = vmatpush2.msra.mxu0 0.0
    %6303 = vmatprep.subr.mxu0 0.0
    %6304 = vmatpush2.msra.mxu0 0.0
    %6305 = vmatprep.mubr.f32.mxu0 0.0
    %6306 = vmatmul.mubr.f32.gmra.mxu0 %v6236
    %v6307 = vpop.f32.mrf.mxu0
    %v6308 = vadd.f32 0.0, %v6307
    %v6309 = vpop.f32.mrf.mxu0
    %6310 = vmatprep.mubr.f32.mxu0 0.0
    %6311 = vmatmul.mubr.f32.gmra.mxu0 %v6239
    %v6312 = vpop.f32.mrf.mxu0
    %v6313 = vadd.f32 0.0, %v6312
    %v6314 = vpop.f32.mrf.mxu0
    %6315 = vdwg.mxu0
    %v6316 = vld [vmem:[#allocation37] sm:$0x1]
    %v6318 = vlaneseq
    %v6319 = vshrl.u32 %v6318, 7
    %v6320 = vsub.s32 0, %v6319
    %v6321 = vrot.slane %v6316, %v6320
    %v6324 = vsel %vm5794, %v6313, 0
    %6326 = vmatprep.subr.mxu0 0.0
    %6327 = vmatpush1.msra.mxu0 0.0
    %6328 = vmatprep.subr.mxu0 0.0
    %6329 = vmatpush1.msra.mxu0 0.0
    %6330 = vmatprep.subr.mxu0 0.0
    %6331 = vmatpush1.msra.mxu0 0.0
    %6332 = vmatprep.subr.mxu0 0.0
    %6333 = vmatpush1.msra.mxu0 0.0
    %6334 = vmatprep.subr.mxu0 0.0
    %6335 = vmatpush1.msra.mxu0 0.0
    %6336 = vmatprep.subr.mxu0 0.0
    %6337 = vmatpush1.msra.mxu0 0.0
    %6338 = vmatprep.subr.mxu0 0.0
    %6339 = vmatpush1.msra.mxu0 0.0
    %6340 = vmatprep.subr.mxu0 0.0
    %6341 = vmatpush1.msra.mxu0 0.0
    %6342 = vmatprep.subr.mxu0 0.0
    %6343 = vmatpush1.msra.mxu0 0.0
    %6344 = vmatprep.subr.mxu0 0.0
    %6345 = vmatpush1.msra.mxu0 0.0
    %6346 = vmatprep.subr.mxu0 0.0
    %6347 = vmatpush1.msra.mxu0 0.0
    %6348 = vmatprep.subr.mxu0 0.0
    %6349 = vmatpush1.msra.mxu0 0.0
    %6350 = vmatprep.subr.mxu0 0.0
    %6351 = vmatpush1.msra.mxu0 0.0
    %6352 = vmatprep.subr.mxu0 0.0
    %6353 = vmatpush1.msra.mxu0 0.0
    %6354 = vmatprep.subr.mxu0 0.0
    %6355 = vmatpush1.msra.mxu0 %v6324
    %6356 = vmatprep.subr.mxu0 0.0
    %6357 = vmatpush1.msra.mxu0 %v6308
    %6358 = vmatprep.subr.mxu0 0.0
    %6359 = vmatpush2.msra.mxu0 0.0
    %6360 = vmatprep.subr.mxu0 0.0
    %6361 = vmatpush2.msra.mxu0 0.0
    %6362 = vmatprep.subr.mxu0 0.0
    %6363 = vmatpush2.msra.mxu0 0.0
    %6364 = vmatprep.subr.mxu0 0.0
    %6365 = vmatpush2.msra.mxu0 0.0
    %6366 = vmatprep.subr.mxu0 0.0
    %6367 = vmatpush2.msra.mxu0 0.0
    %6368 = vmatprep.subr.mxu0 0.0
    %6369 = vmatpush2.msra.mxu0 0.0
    %6370 = vmatprep.subr.mxu0 0.0
    %6371 = vmatpush2.msra.mxu0 0.0
    %6372 = vmatprep.subr.mxu0 0.0
    %6373 = vmatpush2.msra.mxu0 0.0
    %6374 = vmatprep.subr.mxu0 0.0
    %6375 = vmatpush2.msra.mxu0 0.0
    %6376 = vmatprep.subr.mxu0 0.0
    %6377 = vmatpush2.msra.mxu0 0.0
    %6378 = vmatprep.subr.mxu0 0.0
    %6379 = vmatpush2.msra.mxu0 0.0
    %6380 = vmatprep.subr.mxu0 0.0
    %6381 = vmatpush2.msra.mxu0 0.0
    %6382 = vmatprep.subr.mxu0 0.0
    %6383 = vmatpush2.msra.mxu0 0.0
    %6384 = vmatprep.subr.mxu0 0.0
    %6385 = vmatpush2.msra.mxu0 0.0
    %6386 = vmatprep.subr.mxu0 0.0
    %6387 = vmatpush2.msra.mxu0 0.0
    %6388 = vmatprep.subr.mxu0 0.0
    %6389 = vmatpush2.msra.mxu0 0.0
    %6390 = vmatprep.mubr.f32.mxu0 0.0
    %6391 = vmatmul.mubr.f32.gmra.mxu0 %v5789
    %v6392 = vpop.f32.mrf.mxu0
    %v6393 = vadd.f32 %v6321, %v6392
    %v6394 = vpop.f32.mrf.mxu0
    %6395 = vmatprep.mubr.f32.mxu0 0.0
    %6396 = vmatmul.mubr.f32.gmra.mxu0 %v5792
    %v6397 = vpop.f32.mrf.mxu0
    %v6398 = vadd.f32 %v6321, %v6397
    %v6399 = vpop.f32.mrf.mxu0
    %6400 = vdwg.mxu0
    %v6401 = vadd.f32 %v6393, %v5695
    %v6402 = vadd.f32 %v6398, %v5700
    %v6403 = vld [vmem:[#allocation38] sm:$0x1]
    %v6405 = vlaneseq
    %v6406 = vshrl.u32 %v6405, 7
    %v6407 = vsub.s32 0, %v6406
    %v6408 = vrot.slane %v6403, %v6407
    %v6410 = vmul.f32 %v6401, %v6408
    %v6411 = vmul.f32 %v6402, %v6408
    %v6412 = vld [vmem:[#allocation40] sm:$0x1]
    %v6414 = vlaneseq
    %v6415 = vshrl.u32 %v6414, 7
    %v6416 = vsub.s32 0, %v6415
    %v6417 = vrot.slane %v6412, %v6416
    %v6419 = vadd.f32 %v6410, %v6417
    %v6420 = vadd.f32 %v6411, %v6417
    %v6421 = vld [vmem:[#allocation41] sm:$0x1]
    %v6422 = vld [vmem:[#allocation43] sm:$0x1]
    %vm6423 = vcmask 195584
    %v6424 = vsel %vm6423, %v6419, 0.0
    %6425 = vadd.xlane.f32.xlu0 %v6424
    %v6426 = vpop.xlane.xlu0 %6425
    %vm6427 = vcmask 189440
    %v6428 = vsel %vm6427, %v6420, 0.0
    %6429 = vadd.xlane.f32.xlu0 %v6428
    %v6430 = vpop.xlane.xlu0 %6429
    %v6431 = vrcp.pop 24.0
    %v6432 = vmul.f32 %v6426, %v6431
    %v6433 = vmul.f32 %v6430, %v6431
    %v6434 = vsub.f32 %v6419, %v6432
    %v6435 = vsub.f32 %v6420, %v6433
    %v6436 = vmul.f32 %v6434, %v6434
    %v6437 = vmul.f32 %v6435, %v6435
    %v6438 = vsel %vm6423, %v6436, 0.0
    %6439 = vadd.xlane.f32.xlu0 %v6438
    %v6440 = vpop.xlane.xlu0 %6439
    %v6441 = vsel %vm6427, %v6437, 0.0
    %6442 = vadd.xlane.f32.xlu0 %v6441
    %v6443 = vpop.xlane.xlu0 %6442
    %v6444 = vmul.f32 %v6440, %v6431
    %v6445 = vmul.f32 %v6443, %v6431
    %v6446 = vadd.f32 %v6444, 1e-05
    %v6447 = vadd.f32 %v6445, 1e-05
    %v6448 = vrsqrt.pop %v6446
    %v6449 = vrsqrt.pop %v6447
    %v6450 = vmul.f32 %v6434, %v6448
    %v6451 = vmul.f32 %v6435, %v6449
    %v6453 = vlaneseq
    %v6454 = vshrl.u32 %v6453, 7
    %v6455 = vsub.s32 0, %v6454
    %v6456 = vrot.slane %v6421, %v6455
    %v6458 = vmul.f32 %v6450, %v6456
    %v6459 = vmul.f32 %v6451, %v6456
    %v6461 = vlaneseq
    %v6462 = vshrl.u32 %v6461, 7
    %v6463 = vsub.s32 0, %v6462
    %v6464 = vrot.slane %v6422, %v6463
    %v6466 = vadd.f32 %v6458, %v6464
    %v6467 = vadd.f32 %v6459, %v6464
    %v6468 = vld [vmem:[#allocation44] sm:$0xff]
    %v6469 = vld [vmem:[#allocation44 + $0x8] sm:$0xff]
    %v6470 = vld [vmem:[#allocation44 + $0x10] sm:$0xff]
    %v6471 = vld [vmem:[#allocation46] sm:$0x1]
    %v6473 = vlaneseq
    %v6474 = vshrl.u32 %v6473, 7
    %v6475 = vsub.s32 0, %v6474
    %v6476 = vrot.slane %v6471, %v6475
    %v6479 = vsel %vm6423, %v6466, 0
    %v6482 = vsel %vm6423, %v6467, 0
    %6484 = vmatprep.subr.mxu0 0.0
    %6485 = vmatpush1.msra.mxu0 0.0
    %6486 = vmatprep.subr.mxu0 0.0
    %6487 = vmatpush1.msra.mxu0 0.0
    %6488 = vmatprep.subr.mxu0 0.0
    %6489 = vmatpush1.msra.mxu0 0.0
    %6490 = vmatprep.subr.mxu0 0.0
    %6491 = vmatpush1.msra.mxu0 0.0
    %6492 = vmatprep.subr.mxu0 0.0
    %6493 = vmatpush1.msra.mxu0 0.0
    %6494 = vmatprep.subr.mxu0 0.0
    %6495 = vmatpush1.msra.mxu0 0.0
    %6496 = vmatprep.subr.mxu0 0.0
    %6497 = vmatpush1.msra.mxu0 0.0
    %6498 = vmatprep.subr.mxu0 0.0
    %6499 = vmatpush1.msra.mxu0 0.0
    %6500 = vmatprep.subr.mxu0 0.0
    %6501 = vmatpush1.msra.mxu0 0.0
    %6502 = vmatprep.subr.mxu0 0.0
    %6503 = vmatpush1.msra.mxu0 0.0
    %6504 = vmatprep.subr.mxu0 0.0
    %6505 = vmatpush1.msra.mxu0 0.0
    %6506 = vmatprep.subr.mxu0 0.0
    %6507 = vmatpush1.msra.mxu0 0.0
    %6508 = vmatprep.subr.mxu0 0.0
    %6509 = vmatpush1.msra.mxu0 0.0
    %6510 = vmatprep.subr.mxu0 0.0
    %6511 = vmatpush1.msra.mxu0 %v6470
    %6512 = vmatprep.subr.mxu0 0.0
    %6513 = vmatpush1.msra.mxu0 %v6469
    %6514 = vmatprep.subr.mxu0 0.0
    %6515 = vmatpush1.msra.mxu0 %v6468
    %6516 = vmatprep.subr.mxu0 0.0
    %6517 = vmatpush2.msra.mxu0 0.0
    %6518 = vmatprep.subr.mxu0 0.0
    %6519 = vmatpush2.msra.mxu0 0.0
    %6520 = vmatprep.subr.mxu0 0.0
    %6521 = vmatpush2.msra.mxu0 0.0
    %6522 = vmatprep.subr.mxu0 0.0
    %6523 = vmatpush2.msra.mxu0 0.0
    %6524 = vmatprep.subr.mxu0 0.0
    %6525 = vmatpush2.msra.mxu0 0.0
    %6526 = vmatprep.subr.mxu0 0.0
    %6527 = vmatpush2.msra.mxu0 0.0
    %6528 = vmatprep.subr.mxu0 0.0
    %6529 = vmatpush2.msra.mxu0 0.0
    %6530 = vmatprep.subr.mxu0 0.0
    %6531 = vmatpush2.msra.mxu0 0.0
    %6532 = vmatprep.subr.mxu0 0.0
    %6533 = vmatpush2.msra.mxu0 0.0
    %6534 = vmatprep.subr.mxu0 0.0
    %6535 = vmatpush2.msra.mxu0 0.0
    %6536 = vmatprep.subr.mxu0 0.0
    %6537 = vmatpush2.msra.mxu0 0.0
    %6538 = vmatprep.subr.mxu0 0.0
    %6539 = vmatpush2.msra.mxu0 0.0
    %6540 = vmatprep.subr.mxu0 0.0
    %6541 = vmatpush2.msra.mxu0 0.0
    %6542 = vmatprep.subr.mxu0 0.0
    %6543 = vmatpush2.msra.mxu0 0.0
    %6544 = vmatprep.subr.mxu0 0.0
    %6545 = vmatpush2.msra.mxu0 0.0
    %6546 = vmatprep.subr.mxu0 0.0
    %6547 = vmatpush2.msra.mxu0 0.0
    %6548 = vmatprep.mubr.f32.mxu0 0.0
    %6549 = vmatmul.mubr.f32.gmra.mxu0 %v6479
    %v6550 = vpop.f32.mrf.mxu0
    %v6551 = vadd.f32 %v6476, %v6550
    %v6552 = vpop.f32.mrf.mxu0
    %6553 = vmatprep.mubr.f32.mxu0 0.0
    %6554 = vmatmul.mubr.f32.gmra.mxu0 %v6482
    %v6555 = vpop.f32.mrf.mxu0
    %v6556 = vadd.f32 %v6476, %v6555
    %v6557 = vpop.f32.mrf.mxu0
    %6558 = vdwg.mxu0
    %v6559 = vsel %vm962, %v6551, 0.0
    %v6560 = vsel %vm951, %v6556, 0.0
    %v6561 = vadd.f32 %v6559, %v6560
    %v6562 = vrot.slane %v6561, 4
    %v6563 = vadd.f32 %v6561, %v6562
    %v6564 = vrot.slane %v6563, 2
    %v6565 = vadd.f32 %v6563, %v6564
    %v6566 = vrot.slane %v6565, 1
    %v6567 = vadd.f32 %v6565, %v6566
    %v6568 = vrcp.pop 10.0
    %v6569 = vmul.f32 %v6567, %v6568
    %v6570 = vld [vmem:[#allocation49] sm:$0xff]
    %v6571 = vld [vmem:[#allocation49 + $0x8] sm:$0xff]
    %v6572 = vld [vmem:[#allocation49 + $0x10] sm:$0xff]
    %v6573 = vld [vmem:[#allocation49 + $0x18] sm:$0xff]
    %v6574 = vld [vmem:[#allocation50] sm:$0x1]
    %v6576 = vsel %vm962, %v6569, 0
    %6578 = vmatprep.subr.mxu0 0.0
    %6579 = vmatpush1.msra.mxu0 0.0
    %6580 = vmatprep.subr.mxu0 0.0
    %6581 = vmatpush1.msra.mxu0 0.0
    %6582 = vmatprep.subr.mxu0 0.0
    %6583 = vmatpush1.msra.mxu0 0.0
    %6584 = vmatprep.subr.mxu0 0.0
    %6585 = vmatpush1.msra.mxu0 0.0
    %6586 = vmatprep.subr.mxu0 0.0
    %6587 = vmatpush1.msra.mxu0 0.0
    %6588 = vmatprep.subr.mxu0 0.0
    %6589 = vmatpush1.msra.mxu0 0.0
    %6590 = vmatprep.subr.mxu0 0.0
    %6591 = vmatpush1.msra.mxu0 0.0
    %6592 = vmatprep.subr.mxu0 0.0
    %6593 = vmatpush1.msra.mxu0 0.0
    %6594 = vmatprep.subr.mxu0 0.0
    %6595 = vmatpush1.msra.mxu0 0.0
    %6596 = vmatprep.subr.mxu0 0.0
    %6597 = vmatpush1.msra.mxu0 0.0
    %6598 = vmatprep.subr.mxu0 0.0
    %6599 = vmatpush1.msra.mxu0 0.0
    %6600 = vmatprep.subr.mxu0 0.0
    %6601 = vmatpush1.msra.mxu0 0.0
    %6602 = vmatprep.subr.mxu0 0.0
    %6603 = vmatpush1.msra.mxu0 %v6573
    %6604 = vmatprep.subr.mxu0 0.0
    %6605 = vmatpush1.msra.mxu0 %v6572
    %6606 = vmatprep.subr.mxu0 0.0
    %6607 = vmatpush1.msra.mxu0 %v6571
    %6608 = vmatprep.subr.mxu0 0.0
    %6609 = vmatpush1.msra.mxu0 %v6570
    %6610 = vmatprep.subr.mxu0 0.0
    %6611 = vmatpush2.msra.mxu0 0.0
    %6612 = vmatprep.subr.mxu0 0.0
    %6613 = vmatpush2.msra.mxu0 0.0
    %6614 = vmatprep.subr.mxu0 0.0
    %6615 = vmatpush2.msra.mxu0 0.0
    %6616 = vmatprep.subr.mxu0 0.0
    %6617 = vmatpush2.msra.mxu0 0.0
    %6618 = vmatprep.subr.mxu0 0.0
    %6619 = vmatpush2.msra.mxu0 0.0
    %6620 = vmatprep.subr.mxu0 0.0
    %6621 = vmatpush2.msra.mxu0 0.0
    %6622 = vmatprep.subr.mxu0 0.0
    %6623 = vmatpush2.msra.mxu0 0.0
    %6624 = vmatprep.subr.mxu0 0.0
    %6625 = vmatpush2.msra.mxu0 0.0
    %6626 = vmatprep.subr.mxu0 0.0
    %6627 = vmatpush2.msra.mxu0 0.0
    %6628 = vmatprep.subr.mxu0 0.0
    %6629 = vmatpush2.msra.mxu0 0.0
    %6630 = vmatprep.subr.mxu0 0.0
    %6631 = vmatpush2.msra.mxu0 0.0
    %6632 = vmatprep.subr.mxu0 0.0
    %6633 = vmatpush2.msra.mxu0 0.0
    %6634 = vmatprep.subr.mxu0 0.0
    %6635 = vmatpush2.msra.mxu0 0.0
    %6636 = vmatprep.subr.mxu0 0.0
    %6637 = vmatpush2.msra.mxu0 0.0
    %6638 = vmatprep.subr.mxu0 0.0
    %6639 = vmatpush2.msra.mxu0 0.0
    %6640 = vmatprep.subr.mxu0 0.0
    %6641 = vmatpush2.msra.mxu0 0.0
    %6642 = vmatprep.mubr.f32.mxu0 0.0
    %6643 = vmatmul.mubr.f32.gmra.mxu0 %v6576
    %v6644 = vpop.f32.mrf.mxu0
    %v6645 = vadd.f32 %v6574, %v6644
    %v6646 = vpop.f32.mrf.mxu0
    %6647 = vdwg.mxu0
    %v6648 = vld [vmem:[#allocation47] sm:$0xff]
    %v6649 = vld [vmem:[#allocation47 + $0x8] sm:$0xff]
    %v6650 = vld [vmem:[#allocation47 + $0x10] sm:$0xff]
    %v6651 = vld [vmem:[#allocation47 + $0x18] sm:$0xff]
    %v6652 = vlaneseq
    %v6653 = vshrl.u32 %v6652, 7
    %v6654 = vsub.s32 0, %v6653
    %v6655 = vrot.slane %v6645, %v6654
    %v6657 = vsel %vm962, %v5606, 0
    %6659 = vmatprep.subr.mxu0 0.0
    %6660 = vmatpush1.msra.mxu0 0.0
    %6661 = vmatprep.subr.mxu0 0.0
    %6662 = vmatpush1.msra.mxu0 0.0
    %6663 = vmatprep.subr.mxu0 0.0
    %6664 = vmatpush1.msra.mxu0 0.0
    %6665 = vmatprep.subr.mxu0 0.0
    %6666 = vmatpush1.msra.mxu0 0.0
    %6667 = vmatprep.subr.mxu0 0.0
    %6668 = vmatpush1.msra.mxu0 0.0
    %6669 = vmatprep.subr.mxu0 0.0
    %6670 = vmatpush1.msra.mxu0 0.0
    %6671 = vmatprep.subr.mxu0 0.0
    %6672 = vmatpush1.msra.mxu0 0.0
    %6673 = vmatprep.subr.mxu0 0.0
    %6674 = vmatpush1.msra.mxu0 0.0
    %6675 = vmatprep.subr.mxu0 0.0
    %6676 = vmatpush1.msra.mxu0 0.0
    %6677 = vmatprep.subr.mxu0 0.0
    %6678 = vmatpush1.msra.mxu0 0.0
    %6679 = vmatprep.subr.mxu0 0.0
    %6680 = vmatpush1.msra.mxu0 0.0
    %6681 = vmatprep.subr.mxu0 0.0
    %6682 = vmatpush1.msra.mxu0 0.0
    %6683 = vmatprep.subr.mxu0 0.0
    %6684 = vmatpush1.msra.mxu0 %v6651
    %6685 = vmatprep.subr.mxu0 0.0
    %6686 = vmatpush1.msra.mxu0 %v6650
    %6687 = vmatprep.subr.mxu0 0.0
    %6688 = vmatpush1.msra.mxu0 %v6649
    %6689 = vmatprep.subr.mxu0 0.0
    %6690 = vmatpush1.msra.mxu0 %v6648
    %6691 = vmatprep.subr.mxu0 0.0
    %6692 = vmatpush2.msra.mxu0 0.0
    %6693 = vmatprep.subr.mxu0 0.0
    %6694 = vmatpush2.msra.mxu0 0.0
    %6695 = vmatprep.subr.mxu0 0.0
    %6696 = vmatpush2.msra.mxu0 0.0
    %6697 = vmatprep.subr.mxu0 0.0
    %6698 = vmatpush2.msra.mxu0 0.0
    %6699 = vmatprep.subr.mxu0 0.0
    %6700 = vmatpush2.msra.mxu0 0.0
    %6701 = vmatprep.subr.mxu0 0.0
    %6702 = vmatpush2.msra.mxu0 0.0
    %6703 = vmatprep.subr.mxu0 0.0
    %6704 = vmatpush2.msra.mxu0 0.0
    %6705 = vmatprep.subr.mxu0 0.0
    %6706 = vmatpush2.msra.mxu0 0.0
    %6707 = vmatprep.subr.mxu0 0.0
    %6708 = vmatpush2.msra.mxu0 0.0
    %6709 = vmatprep.subr.mxu0 0.0
    %6710 = vmatpush2.msra.mxu0 0.0
    %6711 = vmatprep.subr.mxu0 0.0
    %6712 = vmatpush2.msra.mxu0 0.0
    %6713 = vmatprep.subr.mxu0 0.0
    %6714 = vmatpush2.msra.mxu0 0.0
    %6715 = vmatprep.subr.mxu0 0.0
    %6716 = vmatpush2.msra.mxu0 0.0
    %6717 = vmatprep.subr.mxu0 0.0
    %6718 = vmatpush2.msra.mxu0 0.0
    %6719 = vmatprep.subr.mxu0 0.0
    %6720 = vmatpush2.msra.mxu0 0.0
    %6721 = vmatprep.subr.mxu0 0.0
    %6722 = vmatpush2.msra.mxu0 0.0
    %6723 = vmatprep.mubr.f32.mxu0 0.0
    %6724 = vmatmul.mubr.f32.gmra.mxu0 %v6657
    %v6725 = vpop.f32.mrf.mxu0
    %v6726 = vadd.f32 %v6655, %v6725
    %v6727 = vpop.f32.mrf.mxu0
    %6728 = vdwg.mxu0
    %v6729 = vld [vmem:[#allocation52] sm:$0xff]
    %v6730 = vld [vmem:[#allocation52 + $0x8] sm:$0xff]
    %v6731 = vld [vmem:[#allocation52 + $0x10] sm:$0xff]
    %v6732 = vld [vmem:[#allocation52 + $0x18] sm:$0xff]
    %v6733 = vld [vmem:[#allocation52 + $0x20] sm:$0xff]
    %v6734 = vld [vmem:[#allocation52 + $0x28] sm:$0xff]
    %v6735 = vld [vmem:[#allocation52 + $0x30] sm:$0xff]
    %v6736 = vld [vmem:[#allocation52 + $0x38] sm:$0xff]
    %v6737 = vld [vmem:[#allocation53] sm:$0x1]
    %v6739 = vlaneseq
    %v6740 = vshrl.u32 %v6739, 7
    %v6741 = vsub.s32 0, %v6740
    %v6742 = vrot.slane %v6737, %v6741
    %v6745 = vsel %vm809, %v6726, 0
    %6747 = vmatprep.subr.mxu0 0.0
    %6748 = vmatpush1.msra.mxu0 0.0
    %6749 = vmatprep.subr.mxu0 0.0
    %6750 = vmatpush1.msra.mxu0 0.0
    %6751 = vmatprep.subr.mxu0 0.0
    %6752 = vmatpush1.msra.mxu0 0.0
    %6753 = vmatprep.subr.mxu0 0.0
    %6754 = vmatpush1.msra.mxu0 0.0
    %6755 = vmatprep.subr.mxu0 0.0
    %6756 = vmatpush1.msra.mxu0 0.0
    %6757 = vmatprep.subr.mxu0 0.0
    %6758 = vmatpush1.msra.mxu0 0.0
    %6759 = vmatprep.subr.mxu0 0.0
    %6760 = vmatpush1.msra.mxu0 0.0
    %6761 = vmatprep.subr.mxu0 0.0
    %6762 = vmatpush1.msra.mxu0 0.0
    %6763 = vmatprep.subr.mxu0 0.0
    %6764 = vmatpush1.msra.mxu0 %v6736
    %6765 = vmatprep.subr.mxu0 0.0
    %6766 = vmatpush1.msra.mxu0 %v6735
    %6767 = vmatprep.subr.mxu0 0.0
    %6768 = vmatpush1.msra.mxu0 %v6734
    %6769 = vmatprep.subr.mxu0 0.0
    %6770 = vmatpush1.msra.mxu0 %v6733
    %6771 = vmatprep.subr.mxu0 0.0
    %6772 = vmatpush1.msra.mxu0 %v6732
    %6773 = vmatprep.subr.mxu0 0.0
    %6774 = vmatpush1.msra.mxu0 %v6731
    %6775 = vmatprep.subr.mxu0 0.0
    %6776 = vmatpush1.msra.mxu0 %v6730
    %6777 = vmatprep.subr.mxu0 0.0
    %6778 = vmatpush1.msra.mxu0 %v6729
    %6779 = vmatprep.subr.mxu0 0.0
    %6780 = vmatpush2.msra.mxu0 0.0
    %6781 = vmatprep.subr.mxu0 0.0
    %6782 = vmatpush2.msra.mxu0 0.0
    %6783 = vmatprep.subr.mxu0 0.0
    %6784 = vmatpush2.msra.mxu0 0.0
    %6785 = vmatprep.subr.mxu0 0.0
    %6786 = vmatpush2.msra.mxu0 0.0
    %6787 = vmatprep.subr.mxu0 0.0
    %6788 = vmatpush2.msra.mxu0 0.0
    %6789 = vmatprep.subr.mxu0 0.0
    %6790 = vmatpush2.msra.mxu0 0.0
    %6791 = vmatprep.subr.mxu0 0.0
    %6792 = vmatpush2.msra.mxu0 0.0
    %6793 = vmatprep.subr.mxu0 0.0
    %6794 = vmatpush2.msra.mxu0 0.0
    %6795 = vmatprep.subr.mxu0 0.0
    %6796 = vmatpush2.msra.mxu0 0.0
    %6797 = vmatprep.subr.mxu0 0.0
    %6798 = vmatpush2.msra.mxu0 0.0
    %6799 = vmatprep.subr.mxu0 0.0
    %6800 = vmatpush2.msra.mxu0 0.0
    %6801 = vmatprep.subr.mxu0 0.0
    %6802 = vmatpush2.msra.mxu0 0.0
    %6803 = vmatprep.subr.mxu0 0.0
    %6804 = vmatpush2.msra.mxu0 0.0
    %6805 = vmatprep.subr.mxu0 0.0
    %6806 = vmatpush2.msra.mxu0 0.0
    %6807 = vmatprep.subr.mxu0 0.0
    %6808 = vmatpush2.msra.mxu0 0.0
    %6809 = vmatprep.subr.mxu0 0.0
    %6810 = vmatpush2.msra.mxu0 0.0
    %6811 = vmatprep.mubr.f32.mxu0 0.0
    %6812 = vmatmul.mubr.f32.gmra.mxu0 %v6745
    %v6813 = vpop.f32.mrf.mxu0
    %v6814 = vadd.f32 %v6742, %v6813
    %v6815 = vpop.f32.mrf.mxu0
    %6816 = vdwg.mxu0
    %v6817 = vld [vmem:[#allocation55] sm:$0xff]
    %v6818 = vld [vmem:[#allocation55 + $0x8] sm:$0xff]
    %v6819 = vld [vmem:[#allocation55 + $0x10] sm:$0xff]
    %v6820 = vld [vmem:[#allocation55 + $0x18] sm:$0xff]
    %v6821 = vld [vmem:[#allocation55 + $0x20] sm:$0xff]
    %v6822 = vld [vmem:[#allocation55 + $0x28] sm:$0xff]
    %v6823 = vld [vmem:[#allocation55 + $0x30] sm:$0xff]
    %v6824 = vld [vmem:[#allocation55 + $0x38] sm:$0xff]
    %v6825 = vld [vmem:[#allocation56] sm:$0x1]
    %v6827 = vlaneseq
    %v6828 = vshrl.u32 %v6827, 7
    %v6829 = vsub.s32 0, %v6828
    %v6830 = vrot.slane %v6825, %v6829
    %v6833 = vsel %vm809, %v6814, 0
    %6835 = vmatprep.subr.mxu0 0.0
    %6836 = vmatpush1.msra.mxu0 0.0
    %6837 = vmatprep.subr.mxu0 0.0
    %6838 = vmatpush1.msra.mxu0 0.0
    %6839 = vmatprep.subr.mxu0 0.0
    %6840 = vmatpush1.msra.mxu0 0.0
    %6841 = vmatprep.subr.mxu0 0.0
    %6842 = vmatpush1.msra.mxu0 0.0
    %6843 = vmatprep.subr.mxu0 0.0
    %6844 = vmatpush1.msra.mxu0 0.0
    %6845 = vmatprep.subr.mxu0 0.0
    %6846 = vmatpush1.msra.mxu0 0.0
    %6847 = vmatprep.subr.mxu0 0.0
    %6848 = vmatpush1.msra.mxu0 0.0
    %6849 = vmatprep.subr.mxu0 0.0
    %6850 = vmatpush1.msra.mxu0 0.0
    %6851 = vmatprep.subr.mxu0 0.0
    %6852 = vmatpush1.msra.mxu0 %v6824
    %6853 = vmatprep.subr.mxu0 0.0
    %6854 = vmatpush1.msra.mxu0 %v6823
    %6855 = vmatprep.subr.mxu0 0.0
    %6856 = vmatpush1.msra.mxu0 %v6822
    %6857 = vmatprep.subr.mxu0 0.0
    %6858 = vmatpush1.msra.mxu0 %v6821
    %6859 = vmatprep.subr.mxu0 0.0
    %6860 = vmatpush1.msra.mxu0 %v6820
    %6861 = vmatprep.subr.mxu0 0.0
    %6862 = vmatpush1.msra.mxu0 %v6819
    %6863 = vmatprep.subr.mxu0 0.0
    %6864 = vmatpush1.msra.mxu0 %v6818
    %6865 = vmatprep.subr.mxu0 0.0
    %6866 = vmatpush1.msra.mxu0 %v6817
    %6867 = vmatprep.subr.mxu0 0.0
    %6868 = vmatpush2.msra.mxu0 0.0
    %6869 = vmatprep.subr.mxu0 0.0
    %6870 = vmatpush2.msra.mxu0 0.0
    %6871 = vmatprep.subr.mxu0 0.0
    %6872 = vmatpush2.msra.mxu0 0.0
    %6873 = vmatprep.subr.mxu0 0.0
    %6874 = vmatpush2.msra.mxu0 0.0
    %6875 = vmatprep.subr.mxu0 0.0
    %6876 = vmatpush2.msra.mxu0 0.0
    %6877 = vmatprep.subr.mxu0 0.0
    %6878 = vmatpush2.msra.mxu0 0.0
    %6879 = vmatprep.subr.mxu0 0.0
    %6880 = vmatpush2.msra.mxu0 0.0
    %6881 = vmatprep.subr.mxu0 0.0
    %6882 = vmatpush2.msra.mxu0 0.0
    %6883 = vmatprep.subr.mxu0 0.0
    %6884 = vmatpush2.msra.mxu0 0.0
    %6885 = vmatprep.subr.mxu0 0.0
    %6886 = vmatpush2.msra.mxu0 0.0
    %6887 = vmatprep.subr.mxu0 0.0
    %6888 = vmatpush2.msra.mxu0 0.0
    %6889 = vmatprep.subr.mxu0 0.0
    %6890 = vmatpush2.msra.mxu0 0.0
    %6891 = vmatprep.subr.mxu0 0.0
    %6892 = vmatpush2.msra.mxu0 0.0
    %6893 = vmatprep.subr.mxu0 0.0
    %6894 = vmatpush2.msra.mxu0 0.0
    %6895 = vmatprep.subr.mxu0 0.0
    %6896 = vmatpush2.msra.mxu0 0.0
    %6897 = vmatprep.subr.mxu0 0.0
    %6898 = vmatpush2.msra.mxu0 0.0
    %6899 = vmatprep.mubr.f32.mxu0 0.0
    %6900 = vmatmul.mubr.f32.gmra.mxu0 %v6833
    %v6901 = vpop.f32.mrf.mxu0
    %v6902 = vadd.f32 %v6830, %v6901
    %v6903 = vpop.f32.mrf.mxu0
    %6904 = vdwg.mxu0
    %v6905 = vld [vmem:[#allocation58] sm:$0x1]
    %v6906 = vld [vmem:[#allocation59] sm:$0x1]
    %v6907 = vsel %vm5492, %v6902, 0.0
    %6908 = vadd.xlane.f32.xlu0 %v6907
    %v6909 = vpop.xlane.xlu0 %6908
    %v6910 = vmul.f32 %v6909, %v5496
    %v6911 = vsub.f32 %v6902, %v6910
    %v6912 = vmul.f32 %v6911, %v6911
    %v6913 = vsel %vm5492, %v6912, 0.0
    %6914 = vadd.xlane.f32.xlu0 %v6913
    %v6915 = vpop.xlane.xlu0 %6914
    %v6916 = vmul.f32 %v6915, %v5496
    %v6917 = vadd.f32 %v6916, 1e-05
    %v6918 = vrsqrt.pop %v6917
    %v6919 = vmul.f32 %v6911, %v6918
    %v6921 = vlaneseq
    %v6922 = vshrl.u32 %v6921, 7
    %v6923 = vsub.s32 0, %v6922
    %v6924 = vrot.slane %v6905, %v6923
    %v6926 = vmul.f32 %v6919, %v6924
    %v6928 = vlaneseq
    %v6929 = vshrl.u32 %v6928, 7
    %v6930 = vsub.s32 0, %v6929
    %v6931 = vrot.slane %v6906, %v6930
    %v6933 = vadd.f32 %v6926, %v6931
    %v6934 = vld [vmem:[%s91] sm:$0xff]
    %v6935 = vld [vmem:[%s91 + $0x8] sm:$0xff]
    %v6936 = vld [vmem:[%s91 + $0x10] sm:$0xff]
    %v6937 = vld [vmem:[%s91 + $0x18] sm:$0xff]
    %v6938 = vld [vmem:[%s91 + $0x20] sm:$0xff]
    %v6939 = vld [vmem:[%s91 + $0x28] sm:$0xff]
    %v6940 = vld [vmem:[%s91 + $0x30] sm:$0xff]
    %v6941 = vld [vmem:[%s91 + $0x38] sm:$0xff]
    %v6942 = vld [vmem:[#allocation5] sm:$0x1]
    %v6944 = vlaneseq
    %v6945 = vshrl.u32 %v6944, 7
    %v6946 = vsub.s32 0, %v6945
    %v6947 = vrot.slane %v6942, %v6946
    %v6950 = vsel %vm809, %v6933, 0
    %6952 = vmatprep.subr.mxu0 0.0
    %6953 = vmatpush1.msra.mxu0 0.0
    %6954 = vmatprep.subr.mxu0 0.0
    %6955 = vmatpush1.msra.mxu0 0.0
    %6956 = vmatprep.subr.mxu0 0.0
    %6957 = vmatpush1.msra.mxu0 0.0
    %6958 = vmatprep.subr.mxu0 0.0
    %6959 = vmatpush1.msra.mxu0 0.0
    %6960 = vmatprep.subr.mxu0 0.0
    %6961 = vmatpush1.msra.mxu0 0.0
    %6962 = vmatprep.subr.mxu0 0.0
    %6963 = vmatpush1.msra.mxu0 0.0
    %6964 = vmatprep.subr.mxu0 0.0
    %6965 = vmatpush1.msra.mxu0 0.0
    %6966 = vmatprep.subr.mxu0 0.0
    %6967 = vmatpush1.msra.mxu0 0.0
    %6968 = vmatprep.subr.mxu0 0.0
    %6969 = vmatpush1.msra.mxu0 %v6941
    %6970 = vmatprep.subr.mxu0 0.0
    %6971 = vmatpush1.msra.mxu0 %v6940
    %6972 = vmatprep.subr.mxu0 0.0
    %6973 = vmatpush1.msra.mxu0 %v6939
    %6974 = vmatprep.subr.mxu0 0.0
    %6975 = vmatpush1.msra.mxu0 %v6938
    %6976 = vmatprep.subr.mxu0 0.0
    %6977 = vmatpush1.msra.mxu0 %v6937
    %6978 = vmatprep.subr.mxu0 0.0
    %6979 = vmatpush1.msra.mxu0 %v6936
    %6980 = vmatprep.subr.mxu0 0.0
    %6981 = vmatpush1.msra.mxu0 %v6935
    %6982 = vmatprep.subr.mxu0 0.0
    %6983 = vmatpush1.msra.mxu0 %v6934
    %6984 = vmatprep.subr.mxu0 0.0
    %6985 = vmatpush2.msra.mxu0 0.0
    %6986 = vmatprep.subr.mxu0 0.0
    %6987 = vmatpush2.msra.mxu0 0.0
    %6988 = vmatprep.subr.mxu0 0.0
    %6989 = vmatpush2.msra.mxu0 0.0
    %6990 = vmatprep.subr.mxu0 0.0
    %6991 = vmatpush2.msra.mxu0 0.0
    %6992 = vmatprep.subr.mxu0 0.0
    %6993 = vmatpush2.msra.mxu0 0.0
    %6994 = vmatprep.subr.mxu0 0.0
    %6995 = vmatpush2.msra.mxu0 0.0
    %6996 = vmatprep.subr.mxu0 0.0
    %6997 = vmatpush2.msra.mxu0 0.0
    %6998 = vmatprep.subr.mxu0 0.0
    %6999 = vmatpush2.msra.mxu0 0.0
    %7000 = vmatprep.subr.mxu0 0.0
    %7001 = vmatpush2.msra.mxu0 0.0
    %7002 = vmatprep.subr.mxu0 0.0
    %7003 = vmatpush2.msra.mxu0 0.0
    %7004 = vmatprep.subr.mxu0 0.0
    %7005 = vmatpush2.msra.mxu0 0.0
    %7006 = vmatprep.subr.mxu0 0.0
    %7007 = vmatpush2.msra.mxu0 0.0
    %7008 = vmatprep.subr.mxu0 0.0
    %7009 = vmatpush2.msra.mxu0 0.0
    %7010 = vmatprep.subr.mxu0 0.0
    %7011 = vmatpush2.msra.mxu0 0.0
    %7012 = vmatprep.subr.mxu0 0.0
    %7013 = vmatpush2.msra.mxu0 0.0
    %7014 = vmatprep.subr.mxu0 0.0
    %7015 = vmatpush2.msra.mxu0 0.0
    %7016 = vmatprep.mubr.f32.mxu0 0.0
    %7017 = vmatmul.mubr.f32.gmra.mxu0 %v6950
    %v7018 = vpop.f32.mrf.mxu0
    %v7019 = vadd.f32 %v6947, %v7018
    %v7020 = vpop.f32.mrf.mxu0
    %7021 = vdwg.mxu0
    %vm7022 = vcmask 1024
    %7023 = vst.msk [vmem:[%s95] sm:$0x3] %vm7022, %v7019
    // Predicated region
    $region334: #{lstm_gcn_forward.1} parent=1 // pred_check
      _
    $region335: #{lstm_gcn_forward.1} parent=1 // pred_check_branch
      %7025 = sbr.rel (0) target = $region337
    $region336: #{lstm_gcn_forward.1} parent=1 // pred_region
      _
    $region337: #{lstm_gcn_forward.1} parent=1 // pred_fallthru
      _
    // Predicated region
    $region338: #{lstm_gcn_forward.1} parent=1 // pred_check
      _
    $region339: #{lstm_gcn_forward.1} parent=1 // pred_check_branch
      %7027 = sbr.rel (0) target = $region341
    $region340: #{lstm_gcn_forward.1} parent=1 // pred_region
      _
    $region341: #{lstm_gcn_forward.1} parent=1 // pred_fallthru
      _
    %7028 = vsyncpa [#allocation7], 1
    %7029 = vsyncpa [#allocation9], 1
    %7030 = vsyncpa [#allocation12], 1
    %7031 = vsyncpa [#allocation15], 1
    %7032 = vsyncpa [#allocation18], 1
    %7033 = vsyncpa [#allocation21], 1
    %7034 = vsyncpa [#allocation24], 1
    %7035 = vsyncpa [#allocation27], 1
    %7036 = vsyncpa [#allocation30], 1
    %7037 = vsyncpa [#allocation33], 1
    %7038 = vsyncpa [#allocation36], 1
    %7039 = vsyncpa [#allocation39], 1
    %7040 = vsyncpa [#allocation42], 1
    %7041 = vsyncpa [#allocation45], 1
    %7042 = vsyncpa [#allocation48], 1
    %7043 = vsyncpa [#allocation51], 1
    %7044 = vsyncpa [#allocation54], 1
    %7045 = vsyncpa [#allocation57], 1
    %7046 = vsyncpa [#allocation60], 1

</llo_original>
